<compile_context>
chip_gen: v7x
topology: tpu7x:2x2x1
jax: 0.10.0
libtpu: 0.0.40
codegen_flags: <defaults>
</compile_context>

<pallas_src>
import functools

import jax
import jax.numpy as jnp
from jax import lax
from jax.experimental import pallas as pl
from jax.experimental.pallas import tpu as pltpu


# --------------------------------------------------------------------------
# Fused forward kernel
# --------------------------------------------------------------------------
def _make_net_kernel(TB, H, W):
    HW = H * W
    M = TB * HW

    def kernel(x_ref, w1_ref, b1_ref, w2_ref, b2_ref, w3_ref, b3_ref,
               hwT_ref, hb_ref, afw_ref, afb_ref,
               vf1w_ref, vf1b_ref, vf2w_ref, vf2b_ref,
               logp_ref, v_ref, pbuf):
        # pbuf: (TB, H+2, W+2, 64) VMEM scratch used as the SAME-padded input
        # of every 3x3 conv.  Zero it so the 1-pixel halo is always zero.
        pbuf[...] = jnp.zeros_like(pbuf)

        def conv3x3_relu(act4d, cin, w_ref, b_ref):
            # act4d: (TB, H, W, cin) value; w_ref: (9, cin, cout); b_ref: (1, cout)
            cout = w_ref.shape[2]
            pbuf[:, 1:H + 1, 1:W + 1, :cin] = act4d
            acc = jnp.zeros((M, cout), jnp.float32)
            for t in range(9):                      # static unroll, 9 MXU taps
                dy, dx = t // 3, t % 3
                patch = pbuf[:, dy:dy + H, dx:dx + W, :cin].reshape(M, cin)
                acc = acc + jnp.dot(patch, w_ref[t],
                                    preferred_element_type=jnp.float32)
            y = jnp.maximum(acc + b_ref[...], 0.0)
            return y.reshape(TB, H, W, cout)

        a = conv3x3_relu(x_ref[...].astype(jnp.float32), 4, w1_ref, b1_ref)
        a = conv3x3_relu(a, 32, w2_ref, b2_ref)
        a = conv3x3_relu(a, 64, w3_ref, b3_ref)          # (TB, H, W, 128)
        a3 = a.reshape(TB, HW, 128)                      # rows = (h, w) pixels

        hwT = hwT_ref[...]        # (6, 128)  rows 0:4 policy 1x1, 4:6 value 1x1
        hb = hb_ref[...]          # (6, 1)
        vf2w = vf2w_ref[...]      # (1, 64)

        # Heads, per board of the tile.  Computing the 1x1 convs with the
        # channel dim on sublanes makes each channel row xa[c, :] exactly the
        # PyTorch-NCHW-flatten slice c*HW:(c+1)*HW, so the FC layers consume
        # the original PyTorch weight rows with no activation transpose.
        for b in range(TB):
            a3_b = a3[b]                                     # (HW, 128)
            hz = lax.dot_general(hwT, a3_b, (((1,), (1,)), ((), ())),
                                 preferred_element_type=jnp.float32)
            hz = jnp.maximum(hz + hb, 0.0)                   # (6, HW)
            xa = hz[0:4, :]                                  # policy (4, HW)
            xv = hz[4:6, :]                                  # value  (2, HW)

            # ---- policy head: log_softmax(act_fc(x_act)) ----
            logits = afb_ref[...]                            # (1, HW)
            for c in range(4):
                logits = logits + jnp.dot(
                    xa[c:c + 1, :], afw_ref[c * HW:(c + 1) * HW, :],
                    preferred_element_type=jnp.float32)
            mx = jnp.max(logits, axis=1, keepdims=True)
            s = logits - mx
            lse = jnp.log(jnp.sum(jnp.exp(s), axis=1, keepdims=True))
            logp_ref[b:b + 1, :] = (s - lse).astype(logp_ref.dtype)

            # ---- value head: tanh(val_fc2(relu(val_fc1(x_val)))) ----
            h1 = vf1b_ref[...]                               # (1, 64)
            for c in range(2):
                h1 = h1 + jnp.dot(
                    xv[c:c + 1, :], vf1w_ref[c * HW:(c + 1) * HW, :],
                    preferred_element_type=jnp.float32)
            h1 = jnp.maximum(h1, 0.0)
            val = jnp.sum(h1 * vf2w, axis=1, keepdims=True) + vf2b_ref[...]
            v_ref[b:b + 1, :] = jnp.tanh(val).astype(v_ref.dtype)

    return kernel


# --------------------------------------------------------------------------
# Wrapper: one fused pallas_call over batch tiles
# --------------------------------------------------------------------------
def _batch_tile(B):
    # Keep output blocks (TB, ...) BlockSpec-legal: TB divisible by 8 or == B.
    # With B >= 16 this also yields >= 2 parallel grid steps (v7x megacore).
    return 8 if B % 8 == 0 else B


def net_forward_pallas(x_nchw, p):
    B, _, H, W = x_nchw.shape
    HW = H * W
    TB = _batch_tile(B)

    x = jnp.transpose(x_nchw, (0, 2, 3, 1))          # NCHW -> NHWC (tiny, once)

    # One-time (per call, wrapper-side) weight re-layouts — no kernel cost.
    w1 = p["conv1_w"].reshape(9, 4, 32)
    w2 = p["conv2_w"].reshape(9, 32, 64)
    w3 = p["conv3_w"].reshape(9, 64, 128)
    b1 = p["conv1_b"].reshape(1, 32)
    b2 = p["conv2_b"].reshape(1, 64)
    b3 = p["conv3_b"].reshape(1, 128)
    hwT = jnp.concatenate([p["act_conv_w"].T, p["val_conv_w"].T], axis=0)  # (6,128)
    hb = jnp.concatenate([p["act_conv_b"], p["val_conv_b"]]).reshape(6, 1)
    afw = p["act_fc_w"]                              # (4*HW, HW) PyTorch row order
    afb = p["act_fc_b"].reshape(1, HW)
    vf1w = p["val_fc1_w"]                            # (2*HW, 64)
    vf1b = p["val_fc1_b"].reshape(1, 64)
    vf2w = p["val_fc2_w"].reshape(1, 64)
    vf2b = p["val_fc2_b"].reshape(1, 1)

    kernel = _make_net_kernel(TB, H, W)

    in_specs = [
        pl.BlockSpec((TB, H, W, 4), lambda i: (i, 0, 0, 0)),
        pl.BlockSpec((9, 4, 32), lambda i: (0, 0, 0)),
        pl.BlockSpec((1, 32), lambda i: (0, 0)),
        pl.BlockSpec((9, 32, 64), lambda i: (0, 0, 0)),
        pl.BlockSpec((1, 64), lambda i: (0, 0)),
        pl.BlockSpec((9, 64, 128), lambda i: (0, 0, 0)),
        pl.BlockSpec((1, 128), lambda i: (0, 0)),
        pl.BlockSpec((6, 128), lambda i: (0, 0)),
        pl.BlockSpec((6, 1), lambda i: (0, 0)),
        pl.BlockSpec((4 * HW, HW), lambda i: (0, 0)),
        pl.BlockSpec((1, HW), lambda i: (0, 0)),
        pl.BlockSpec((2 * HW, 64), lambda i: (0, 0)),
        pl.BlockSpec((1, 64), lambda i: (0, 0)),
        pl.BlockSpec((1, 64), lambda i: (0, 0)),
        pl.BlockSpec((1, 1), lambda i: (0, 0)),
    ]
    out_specs = [
        pl.BlockSpec((TB, HW), lambda i: (i, 0)),
        pl.BlockSpec((TB, 1), lambda i: (i, 0)),
    ]
    out_shape = (jax.ShapeDtypeStruct((B, HW), jnp.float32),
                 jax.ShapeDtypeStruct((B, 1), jnp.float32))

    log_p, v = pl.pallas_call(
        kernel,
        out_shape=out_shape,
        grid=(B // TB,),
        in_specs=in_specs,
        out_specs=out_specs,
        scratch_shapes=[pltpu.VMEM((TB, H + 2, W + 2, 64), jnp.float32)],
        compiler_params=pltpu.CompilerParams(
            dimension_semantics=("parallel",)),
    )(x, w1, b1, w2, b2, w3, b3, hwT, hb, afw, afb, vf1w, vf1b, vf2w, vf2b)
    return log_p, v


@functools.partial(jax.jit, static_argnums=(2, 3))
def net_forward(x_nchw, p, board_w, board_h):
    del board_w, board_h  # shapes derived from x
    return net_forward_pallas(x_nchw, p)


# --------------------------------------------------------------------------
# Parameter construction (deterministic, synthetic)
# --------------------------------------------------------------------------
def init_params(key, board_w, board_h):
    ks = jax.random.split(key, 16)

    def w(k, shape, fan_in):
        return jax.random.normal(k, shape, jnp.float32) / jnp.sqrt(fan_in)

    p = {}
    p["conv1_w"] = w(ks[0], (3, 3, 4, 32), 3 * 3 * 4)
    p["conv1_b"] = w(ks[1], (32,), 32.0)
    p["conv2_w"] = w(ks[2], (3, 3, 32, 64), 3 * 3 * 32)
    p["conv2_b"] = w(ks[3], (64,), 64.0)
    p["conv3_w"] = w(ks[4], (3, 3, 64, 128), 3 * 3 * 64)
    p["conv3_b"] = w(ks[5], (128,), 128.0)
    p["act_conv_w"] = w(ks[6], (128, 4), 128)            # 1x1 conv as (Cin, Cout)
    p["act_conv_b"] = w(ks[7], (4,), 4.0)
    p["act_fc_w"] = w(ks[8], (4 * board_w * board_h, board_w * board_h),
                      4 * board_w * board_h)
    p["act_fc_b"] = w(ks[9], (board_w * board_h,), float(board_w * board_h))
    p["val_conv_w"] = w(ks[10], (128, 2), 128)
    p["val_conv_b"] = w(ks[11], (2,), 2.0)
    p["val_fc1_w"] = w(ks[12], (2 * board_w * board_h, 64),
                       2 * board_w * board_h)
    p["val_fc1_b"] = w(ks[13], (64,), 64.0)
    p["val_fc2_w"] = w(ks[14], (64, 1), 64)
    p["val_fc2_b"] = w(ks[15], (1,), 1.0)
    return p


# --------------------------------------------------------------------------
# Pure-JAX reference for verification
# --------------------------------------------------------------------------
def net_forward_ref(x_nchw, p, board_w, board_h):
    B = x_nchw.shape[0]
    x = jnp.transpose(x_nchw, (0, 2, 3, 1))
    dn = ("NHWC", "HWIO", "NHWC")

    def c3(x, w, b):
        y = lax.conv_general_dilated(x, w, (1, 1), "SAME",
                                     dimension_numbers=dn)
        return jax.nn.relu(y + b)

    x = c3(x, p["conv1_w"], p["conv1_b"])
    x = c3(x, p["conv2_w"], p["conv2_b"])
    x = c3(x, p["conv3_w"], p["conv3_b"])

    x_act = jax.nn.relu(jnp.einsum("bhwc,cd->bhwd", x, p["act_conv_w"])
                        + p["act_conv_b"])
    x_act = jnp.transpose(x_act, (0, 3, 1, 2)).reshape(B, -1)
    log_p = jax.nn.log_softmax(x_act @ p["act_fc_w"] + p["act_fc_b"], axis=1)

    x_val = jax.nn.relu(jnp.einsum("bhwc,cd->bhwd", x, p["val_conv_w"])
                        + p["val_conv_b"])
    x_val = jnp.transpose(x_val, (0, 3, 1, 2)).reshape(B, -1)
    h = jax.nn.relu(x_val @ p["val_fc1_w"] + p["val_fc1_b"])
    v = jnp.tanh(h @ p["val_fc2_w"] + p["val_fc2_b"])
    return log_p, v


# --------------------------------------------------------------------------
if __name__ == "__main__":
    board_w, board_h, batch = 8, 8, 2
    key = jax.random.PRNGKey(0)
    k_in, k_par = jax.random.split(key)

    x = jax.random.normal(k_in, (batch, 4, board_h, board_w), jnp.float32)  # NCHW
    params = init_params(k_par, board_w, board_h)

    log_p, v = net_forward(x, params, board_w, board_h)
    jax.block_until_ready((log_p, v))

    log_p_ref, v_ref = net_forward_ref(x, params, board_w, board_h)
    assert log_p.shape == (batch, board_w * board_h)
    assert v.shape == (batch, 1)
    assert jnp.allclose(log_p, log_p_ref, atol=1e-3, rtol=1e-3)
    assert jnp.allclose(v, v_ref, atol=1e-3, rtol=1e-3)

    # TODO(synk): matmul operands kept in f32 (not bf16) to stay within the
    # 1e-3 tolerance vs the f32 reference; flip to bf16 for v6e/v7x throughput.
    print("KERNEL_OK")
</pallas_src>

<mosaic_0001>
module attributes {stable_mosaic.version = 11 : i64} {
  func.func @kernel(%arg0: i32, %arg1: memref<2x8x8x4xf32, #tpu.memory_space<vmem>>, %arg2: memref<9x4x32xf32, #tpu.memory_space<vmem>>, %arg3: memref<1x32xf32, #tpu.memory_space<vmem>>, %arg4: memref<9x32x64xf32, #tpu.memory_space<vmem>>, %arg5: memref<1x64xf32, #tpu.memory_space<vmem>>, %arg6: memref<9x64x128xf32, #tpu.memory_space<vmem>>, %arg7: memref<1x128xf32, #tpu.memory_space<vmem>>, %arg8: memref<6x128xf32, #tpu.memory_space<vmem>>, %arg9: memref<6x1xf32, #tpu.memory_space<vmem>>, %arg10: memref<256x64xf32, #tpu.memory_space<vmem>>, %arg11: memref<1x64xf32, #tpu.memory_space<vmem>>, %arg12: memref<128x64xf32, #tpu.memory_space<vmem>>, %arg13: memref<1x64xf32, #tpu.memory_space<vmem>>, %arg14: memref<1x64xf32, #tpu.memory_space<vmem>>, %arg15: memref<1x1xf32, #tpu.memory_space<vmem>>, %arg16: memref<2x64xf32, #tpu.memory_space<vmem>>, %arg17: memref<2x1xf32, #tpu.memory_space<vmem>>, %arg18: memref<2x10x10x64xf32, #tpu.memory_space<vmem>>) attributes {dimension_semantics = [#tpu.dimension_semantics<parallel>], iteration_bounds = array<i64: 1>, scalar_prefetch = 0 : i64, scratch_operands = 1 : i64, tpu.core_type = #tpu.core_type<tc>, window_params = [{transform_indices = @transform_0, window_bounds = array<i64: 2, 8, 8, 4>}, {pipeline_mode = #tpu.pipeline_mode<synchronous>, transform_indices = @transform_1, window_bounds = array<i64: 9, 4, 32>}, {pipeline_mode = #tpu.pipeline_mode<synchronous>, transform_indices = @transform_2, window_bounds = array<i64: 1, 32>}, {pipeline_mode = #tpu.pipeline_mode<synchronous>, transform_indices = @transform_3, window_bounds = array<i64: 9, 32, 64>}, {pipeline_mode = #tpu.pipeline_mode<synchronous>, transform_indices = @transform_4, window_bounds = array<i64: 1, 64>}, {pipeline_mode = #tpu.pipeline_mode<synchronous>, transform_indices = @transform_5, window_bounds = array<i64: 9, 64, 128>}, {pipeline_mode = #tpu.pipeline_mode<synchronous>, transform_indices = @transform_6, window_bounds = array<i64: 1, 128>}, {pipeline_mode = #tpu.pipeline_mode<synchronous>, transform_indices = @transform_7, window_bounds = array<i64: 6, 128>}, {pipeline_mode = #tpu.pipeline_mode<synchronous>, transform_indices = @transform_8, window_bounds = array<i64: 6, 1>}, {pipeline_mode = #tpu.pipeline_mode<synchronous>, transform_indices = @transform_9, window_bounds = array<i64: 256, 64>}, {pipeline_mode = #tpu.pipeline_mode<synchronous>, transform_indices = @transform_10, window_bounds = array<i64: 1, 64>}, {pipeline_mode = #tpu.pipeline_mode<synchronous>, transform_indices = @transform_11, window_bounds = array<i64: 128, 64>}, {pipeline_mode = #tpu.pipeline_mode<synchronous>, transform_indices = @transform_12, window_bounds = array<i64: 1, 64>}, {pipeline_mode = #tpu.pipeline_mode<synchronous>, transform_indices = @transform_13, window_bounds = array<i64: 1, 64>}, {pipeline_mode = #tpu.pipeline_mode<synchronous>, transform_indices = @transform_14, window_bounds = array<i64: 1, 1>}, {transform_indices = @transform_15, window_bounds = array<i64: 2, 64>}, {transform_indices = @transform_16, window_bounds = array<i64: 2, 1>}]} {
    %cst = arith.constant 0.000000e+00 : f32
    %0 = vector.broadcast %cst : f32 to vector<2x10x10x64xf32>
    %c0 = arith.constant 0 : index
    %c0_0 = arith.constant 0 : index
    %c0_1 = arith.constant 0 : index
    %c0_2 = arith.constant 0 : index
    %1 = vector.load %arg18[%c0, %c0_0, %c0_1, %c0_2] : memref<2x10x10x64xf32, #tpu.memory_space<vmem>>, vector<2x10x10x64xf32>
    tpu.vector_store %arg18[%c0, %c0_0, %c0_1, %c0_2], %0 {strides = array<i32>} : memref<2x10x10x64xf32, #tpu.memory_space<vmem>>, vector<2x10x10x64xf32>,
    %c0_3 = arith.constant 0 : index
    %c0_4 = arith.constant 0 : index
    %c0_5 = arith.constant 0 : index
    %c0_6 = arith.constant 0 : index
    %2 = vector.load %arg1[%c0_3, %c0_4, %c0_5, %c0_6] : memref<2x8x8x4xf32, #tpu.memory_space<vmem>>, vector<2x8x8x4xf32>
    %c0_7 = arith.constant 0 : index
    %c1 = arith.constant 1 : index
    %c1_8 = arith.constant 1 : index
    %c0_9 = arith.constant 0 : index
    %3 = vector.load %arg18[%c0_7, %c1, %c1_8, %c0_9] : memref<2x10x10x64xf32, #tpu.memory_space<vmem>>, vector<2x8x8x4xf32>
    tpu.vector_store %arg18[%c0_7, %c1, %c1_8, %c0_9], %2 {strides = array<i32>} : memref<2x10x10x64xf32, #tpu.memory_space<vmem>>, vector<2x8x8x4xf32>,
    %cst_10 = arith.constant 0.000000e+00 : f32
    %4 = vector.broadcast %cst_10 : f32 to vector<128x32xf32>
    %c0_11 = arith.constant 0 : index
    %c0_12 = arith.constant 0 : index
    %c0_13 = arith.constant 0 : index
    %c0_14 = arith.constant 0 : index
    %5 = vector.load %arg18[%c0_11, %c0_12, %c0_13, %c0_14] : memref<2x10x10x64xf32, #tpu.memory_space<vmem>>, vector<2x8x8x4xf32>
    %6 = vector.shape_cast %5 : vector<2x8x8x4xf32> to vector<128x4xf32>
    %c0_15 = arith.constant 0 : index
    %c0_16 = arith.constant 0 : index
    %c0_17 = arith.constant 0 : index
    %7 = vector.load %arg2[%c0_15, %c0_16, %c0_17] : memref<9x4x32xf32, #tpu.memory_space<vmem>>, vector<1x4x32xf32>
    %8 = vector.shape_cast %7 : vector<1x4x32xf32> to vector<4x32xf32>
    %cst_18 = arith.constant dense<0.000000e+00> : vector<128x32xf32>
    %9 = tpu.matmul %6, %8, %cst_18 {dimension_numbers = #tpu.dot_dimension_numbers<[1], [0], [0], [1], [0, 0, 1, 1], [], []>} : vector<128x4xf32>, vector<4x32xf32>, vector<128x32xf32> -> vector<128x32xf32>
    %10 = arith.addf %4, %9 : vector<128x32xf32>
    %c0_19 = arith.constant 0 : index
    %c0_20 = arith.constant 0 : index
    %c1_21 = arith.constant 1 : index
    %c0_22 = arith.constant 0 : index
    %11 = vector.load %arg18[%c0_19, %c0_20, %c1_21, %c0_22] : memref<2x10x10x64xf32, #tpu.memory_space<vmem>>, vector<2x8x8x4xf32>
    %12 = vector.shape_cast %11 : vector<2x8x8x4xf32> to vector<128x4xf32>
    %c1_23 = arith.constant 1 : index
    %c0_24 = arith.constant 0 : index
    %c0_25 = arith.constant 0 : index
    %13 = vector.load %arg2[%c1_23, %c0_24, %c0_25] : memref<9x4x32xf32, #tpu.memory_space<vmem>>, vector<1x4x32xf32>
    %14 = vector.shape_cast %13 : vector<1x4x32xf32> to vector<4x32xf32>
    %cst_26 = arith.constant dense<0.000000e+00> : vector<128x32xf32>
    %15 = tpu.matmul %12, %14, %cst_26 {dimension_numbers = #tpu.dot_dimension_numbers<[1], [0], [0], [1], [0, 0, 1, 1], [], []>} : vector<128x4xf32>, vector<4x32xf32>, vector<128x32xf32> -> vector<128x32xf32>
    %16 = arith.addf %10, %15 : vector<128x32xf32>
    %c0_27 = arith.constant 0 : index
    %c0_28 = arith.constant 0 : index
    %c2 = arith.constant 2 : index
    %c0_29 = arith.constant 0 : index
    %17 = vector.load %arg18[%c0_27, %c0_28, %c2, %c0_29] : memref<2x10x10x64xf32, #tpu.memory_space<vmem>>, vector<2x8x8x4xf32>
    %18 = vector.shape_cast %17 : vector<2x8x8x4xf32> to vector<128x4xf32>
    %c2_30 = arith.constant 2 : index
    %c0_31 = arith.constant 0 : index
    %c0_32 = arith.constant 0 : index
    %19 = vector.load %arg2[%c2_30, %c0_31, %c0_32] : memref<9x4x32xf32, #tpu.memory_space<vmem>>, vector<1x4x32xf32>
    %20 = vector.shape_cast %19 : vector<1x4x32xf32> to vector<4x32xf32>
    %cst_33 = arith.constant dense<0.000000e+00> : vector<128x32xf32>
    %21 = tpu.matmul %18, %20, %cst_33 {dimension_numbers = #tpu.dot_dimension_numbers<[1], [0], [0], [1], [0, 0, 1, 1], [], []>} : vector<128x4xf32>, vector<4x32xf32>, vector<128x32xf32> -> vector<128x32xf32>
    %22 = arith.addf %16, %21 : vector<128x32xf32>
    %c0_34 = arith.constant 0 : index
    %c1_35 = arith.constant 1 : index
    %c0_36 = arith.constant 0 : index
    %c0_37 = arith.constant 0 : index
    %23 = vector.load %arg18[%c0_34, %c1_35, %c0_36, %c0_37] : memref<2x10x10x64xf32, #tpu.memory_space<vmem>>, vector<2x8x8x4xf32>
    %24 = vector.shape_cast %23 : vector<2x8x8x4xf32> to vector<128x4xf32>
    %c3 = arith.constant 3 : index
    %c0_38 = arith.constant 0 : index
    %c0_39 = arith.constant 0 : index
    %25 = vector.load %arg2[%c3, %c0_38, %c0_39] : memref<9x4x32xf32, #tpu.memory_space<vmem>>, vector<1x4x32xf32>
    %26 = vector.shape_cast %25 : vector<1x4x32xf32> to vector<4x32xf32>
    %cst_40 = arith.constant dense<0.000000e+00> : vector<128x32xf32>
    %27 = tpu.matmul %24, %26, %cst_40 {dimension_numbers = #tpu.dot_dimension_numbers<[1], [0], [0], [1], [0, 0, 1, 1], [], []>} : vector<128x4xf32>, vector<4x32xf32>, vector<128x32xf32> -> vector<128x32xf32>
    %28 = arith.addf %22, %27 : vector<128x32xf32>
    %c0_41 = arith.constant 0 : index
    %c1_42 = arith.constant 1 : index
    %c1_43 = arith.constant 1 : index
    %c0_44 = arith.constant 0 : index
    %29 = vector.load %arg18[%c0_41, %c1_42, %c1_43, %c0_44] : memref<2x10x10x64xf32, #tpu.memory_space<vmem>>, vector<2x8x8x4xf32>
    %30 = vector.shape_cast %29 : vector<2x8x8x4xf32> to vector<128x4xf32>
    %c4 = arith.constant 4 : index
    %c0_45 = arith.constant 0 : index
    %c0_46 = arith.constant 0 : index
    %31 = vector.load %arg2[%c4, %c0_45, %c0_46] : memref<9x4x32xf32, #tpu.memory_space<vmem>>, vector<1x4x32xf32>
    %32 = vector.shape_cast %31 : vector<1x4x32xf32> to vector<4x32xf32>
    %cst_47 = arith.constant dense<0.000000e+00> : vector<128x32xf32>
    %33 = tpu.matmul %30, %32, %cst_47 {dimension_numbers = #tpu.dot_dimension_numbers<[1], [0], [0], [1], [0, 0, 1, 1], [], []>} : vector<128x4xf32>, vector<4x32xf32>, vector<128x32xf32> -> vector<128x32xf32>
    %34 = arith.addf %28, %33 : vector<128x32xf32>
    %c0_48 = arith.constant 0 : index
    %c1_49 = arith.constant 1 : index
    %c2_50 = arith.constant 2 : index
    %c0_51 = arith.constant 0 : index
    %35 = vector.load %arg18[%c0_48, %c1_49, %c2_50, %c0_51] : memref<2x10x10x64xf32, #tpu.memory_space<vmem>>, vector<2x8x8x4xf32>
    %36 = vector.shape_cast %35 : vector<2x8x8x4xf32> to vector<128x4xf32>
    %c5 = arith.constant 5 : index
    %c0_52 = arith.constant 0 : index
    %c0_53 = arith.constant 0 : index
    %37 = vector.load %arg2[%c5, %c0_52, %c0_53] : memref<9x4x32xf32, #tpu.memory_space<vmem>>, vector<1x4x32xf32>
    %38 = vector.shape_cast %37 : vector<1x4x32xf32> to vector<4x32xf32>
    %cst_54 = arith.constant dense<0.000000e+00> : vector<128x32xf32>
    %39 = tpu.matmul %36, %38, %cst_54 {dimension_numbers = #tpu.dot_dimension_numbers<[1], [0], [0], [1], [0, 0, 1, 1], [], []>} : vector<128x4xf32>, vector<4x32xf32>, vector<128x32xf32> -> vector<128x32xf32>
    %40 = arith.addf %34, %39 : vector<128x32xf32>
    %c0_55 = arith.constant 0 : index
    %c2_56 = arith.constant 2 : index
    %c0_57 = arith.constant 0 : index
    %c0_58 = arith.constant 0 : index
    %41 = vector.load %arg18[%c0_55, %c2_56, %c0_57, %c0_58] : memref<2x10x10x64xf32, #tpu.memory_space<vmem>>, vector<2x8x8x4xf32>
    %42 = vector.shape_cast %41 : vector<2x8x8x4xf32> to vector<128x4xf32>
    %c6 = arith.constant 6 : index
    %c0_59 = arith.constant 0 : index
    %c0_60 = arith.constant 0 : index
    %43 = vector.load %arg2[%c6, %c0_59, %c0_60] : memref<9x4x32xf32, #tpu.memory_space<vmem>>, vector<1x4x32xf32>
    %44 = vector.shape_cast %43 : vector<1x4x32xf32> to vector<4x32xf32>
    %cst_61 = arith.constant dense<0.000000e+00> : vector<128x32xf32>
    %45 = tpu.matmul %42, %44, %cst_61 {dimension_numbers = #tpu.dot_dimension_numbers<[1], [0], [0], [1], [0, 0, 1, 1], [], []>} : vector<128x4xf32>, vector<4x32xf32>, vector<128x32xf32> -> vector<128x32xf32>
    %46 = arith.addf %40, %45 : vector<128x32xf32>
    %c0_62 = arith.constant 0 : index
    %c2_63 = arith.constant 2 : index
    %c1_64 = arith.constant 1 : index
    %c0_65 = arith.constant 0 : index
    %47 = vector.load %arg18[%c0_62, %c2_63, %c1_64, %c0_65] : memref<2x10x10x64xf32, #tpu.memory_space<vmem>>, vector<2x8x8x4xf32>
    %48 = vector.shape_cast %47 : vector<2x8x8x4xf32> to vector<128x4xf32>
    %c7 = arith.constant 7 : index
    %c0_66 = arith.constant 0 : index
    %c0_67 = arith.constant 0 : index
    %49 = vector.load %arg2[%c7, %c0_66, %c0_67] : memref<9x4x32xf32, #tpu.memory_space<vmem>>, vector<1x4x32xf32>
    %50 = vector.shape_cast %49 : vector<1x4x32xf32> to vector<4x32xf32>
    %cst_68 = arith.constant dense<0.000000e+00> : vector<128x32xf32>
    %51 = tpu.matmul %48, %50, %cst_68 {dimension_numbers = #tpu.dot_dimension_numbers<[1], [0], [0], [1], [0, 0, 1, 1], [], []>} : vector<128x4xf32>, vector<4x32xf32>, vector<128x32xf32> -> vector<128x32xf32>
    %52 = arith.addf %46, %51 : vector<128x32xf32>
    %c0_69 = arith.constant 0 : index
    %c2_70 = arith.constant 2 : index
    %c2_71 = arith.constant 2 : index
    %c0_72 = arith.constant 0 : index
    %53 = vector.load %arg18[%c0_69, %c2_70, %c2_71, %c0_72] : memref<2x10x10x64xf32, #tpu.memory_space<vmem>>, vector<2x8x8x4xf32>
    %54 = vector.shape_cast %53 : vector<2x8x8x4xf32> to vector<128x4xf32>
    %c8 = arith.constant 8 : index
    %c0_73 = arith.constant 0 : index
    %c0_74 = arith.constant 0 : index
    %55 = vector.load %arg2[%c8, %c0_73, %c0_74] : memref<9x4x32xf32, #tpu.memory_space<vmem>>, vector<1x4x32xf32>
    %56 = vector.shape_cast %55 : vector<1x4x32xf32> to vector<4x32xf32>
    %cst_75 = arith.constant dense<0.000000e+00> : vector<128x32xf32>
    %57 = tpu.matmul %54, %56, %cst_75 {dimension_numbers = #tpu.dot_dimension_numbers<[1], [0], [0], [1], [0, 0, 1, 1], [], []>} : vector<128x4xf32>, vector<4x32xf32>, vector<128x32xf32> -> vector<128x32xf32>
    %58 = arith.addf %52, %57 : vector<128x32xf32>
    %c0_76 = arith.constant 0 : index
    %c0_77 = arith.constant 0 : index
    %59 = vector.load %arg3[%c0_76, %c0_77] : memref<1x32xf32, #tpu.memory_space<vmem>>, vector<1x32xf32>
    %60 = vector.broadcast %59 : vector<1x32xf32> to vector<128x32xf32>
    %61 = arith.addf %58, %60 : vector<128x32xf32>
    %cst_78 = arith.constant 0.000000e+00 : f32
    %62 = vector.broadcast %cst_78 : f32 to vector<128x32xf32>
    %63 = arith.maximumf %61, %62 : vector<128x32xf32>
    %64 = vector.shape_cast %63 : vector<128x32xf32> to vector<2x8x8x32xf32>
    %c0_79 = arith.constant 0 : index
    %c1_80 = arith.constant 1 : index
    %c1_81 = arith.constant 1 : index
    %c0_82 = arith.constant 0 : index
    %65 = vector.load %arg18[%c0_79, %c1_80, %c1_81, %c0_82] : memref<2x10x10x64xf32, #tpu.memory_space<vmem>>, vector<2x8x8x32xf32>
    tpu.vector_store %arg18[%c0_79, %c1_80, %c1_81, %c0_82], %64 {strides = array<i32>} : memref<2x10x10x64xf32, #tpu.memory_space<vmem>>, vector<2x8x8x32xf32>,
    %cst_83 = arith.constant 0.000000e+00 : f32
    %66 = vector.broadcast %cst_83 : f32 to vector<128x64xf32>
    %c0_84 = arith.constant 0 : index
    %c0_85 = arith.constant 0 : index
    %c0_86 = arith.constant 0 : index
    %c0_87 = arith.constant 0 : index
    %67 = vector.load %arg18[%c0_84, %c0_85, %c0_86, %c0_87] : memref<2x10x10x64xf32, #tpu.memory_space<vmem>>, vector<2x8x8x32xf32>
    %68 = vector.shape_cast %67 : vector<2x8x8x32xf32> to vector<128x32xf32>
    %c0_88 = arith.constant 0 : index
    %c0_89 = arith.constant 0 : index
    %c0_90 = arith.constant 0 : index
    %69 = vector.load %arg4[%c0_88, %c0_89, %c0_90] : memref<9x32x64xf32, #tpu.memory_space<vmem>>, vector<1x32x64xf32>
    %70 = vector.shape_cast %69 : vector<1x32x64xf32> to vector<32x64xf32>
    %cst_91 = arith.constant dense<0.000000e+00> : vector<128x64xf32>
    %71 = tpu.matmul %68, %70, %cst_91 {dimension_numbers = #tpu.dot_dimension_numbers<[1], [0], [0], [1], [0, 0, 1, 1], [], []>} : vector<128x32xf32>, vector<32x64xf32>, vector<128x64xf32> -> vector<128x64xf32>
    %72 = arith.addf %66, %71 : vector<128x64xf32>
    %c0_92 = arith.constant 0 : index
    %c0_93 = arith.constant 0 : index
    %c1_94 = arith.constant 1 : index
    %c0_95 = arith.constant 0 : index
    %73 = vector.load %arg18[%c0_92, %c0_93, %c1_94, %c0_95] : memref<2x10x10x64xf32, #tpu.memory_space<vmem>>, vector<2x8x8x32xf32>
    %74 = vector.shape_cast %73 : vector<2x8x8x32xf32> to vector<128x32xf32>
    %c1_96 = arith.constant 1 : index
    %c0_97 = arith.constant 0 : index
    %c0_98 = arith.constant 0 : index
    %75 = vector.load %arg4[%c1_96, %c0_97, %c0_98] : memref<9x32x64xf32, #tpu.memory_space<vmem>>, vector<1x32x64xf32>
    %76 = vector.shape_cast %75 : vector<1x32x64xf32> to vector<32x64xf32>
    %cst_99 = arith.constant dense<0.000000e+00> : vector<128x64xf32>
    %77 = tpu.matmul %74, %76, %cst_99 {dimension_numbers = #tpu.dot_dimension_numbers<[1], [0], [0], [1], [0, 0, 1, 1], [], []>} : vector<128x32xf32>, vector<32x64xf32>, vector<128x64xf32> -> vector<128x64xf32>
    %78 = arith.addf %72, %77 : vector<128x64xf32>
    %c0_100 = arith.constant 0 : index
    %c0_101 = arith.constant 0 : index
    %c2_102 = arith.constant 2 : index
    %c0_103 = arith.constant 0 : index
    %79 = vector.load %arg18[%c0_100, %c0_101, %c2_102, %c0_103] : memref<2x10x10x64xf32, #tpu.memory_space<vmem>>, vector<2x8x8x32xf32>
    %80 = vector.shape_cast %79 : vector<2x8x8x32xf32> to vector<128x32xf32>
    %c2_104 = arith.constant 2 : index
    %c0_105 = arith.constant 0 : index
    %c0_106 = arith.constant 0 : index
    %81 = vector.load %arg4[%c2_104, %c0_105, %c0_106] : memref<9x32x64xf32, #tpu.memory_space<vmem>>, vector<1x32x64xf32>
    %82 = vector.shape_cast %81 : vector<1x32x64xf32> to vector<32x64xf32>
    %cst_107 = arith.constant dense<0.000000e+00> : vector<128x64xf32>
    %83 = tpu.matmul %80, %82, %cst_107 {dimension_numbers = #tpu.dot_dimension_numbers<[1], [0], [0], [1], [0, 0, 1, 1], [], []>} : vector<128x32xf32>, vector<32x64xf32>, vector<128x64xf32> -> vector<128x64xf32>
    %84 = arith.addf %78, %83 : vector<128x64xf32>
    %c0_108 = arith.constant 0 : index
    %c1_109 = arith.constant 1 : index
    %c0_110 = arith.constant 0 : index
    %c0_111 = arith.constant 0 : index
    %85 = vector.load %arg18[%c0_108, %c1_109, %c0_110, %c0_111] : memref<2x10x10x64xf32, #tpu.memory_space<vmem>>, vector<2x8x8x32xf32>
    %86 = vector.shape_cast %85 : vector<2x8x8x32xf32> to vector<128x32xf32>
    %c3_112 = arith.constant 3 : index
    %c0_113 = arith.constant 0 : index
    %c0_114 = arith.constant 0 : index
    %87 = vector.load %arg4[%c3_112, %c0_113, %c0_114] : memref<9x32x64xf32, #tpu.memory_space<vmem>>, vector<1x32x64xf32>
    %88 = vector.shape_cast %87 : vector<1x32x64xf32> to vector<32x64xf32>
    %cst_115 = arith.constant dense<0.000000e+00> : vector<128x64xf32>
    %89 = tpu.matmul %86, %88, %cst_115 {dimension_numbers = #tpu.dot_dimension_numbers<[1], [0], [0], [1], [0, 0, 1, 1], [], []>} : vector<128x32xf32>, vector<32x64xf32>, vector<128x64xf32> -> vector<128x64xf32>
    %90 = arith.addf %84, %89 : vector<128x64xf32>
    %c0_116 = arith.constant 0 : index
    %c1_117 = arith.constant 1 : index
    %c1_118 = arith.constant 1 : index
    %c0_119 = arith.constant 0 : index
    %91 = vector.load %arg18[%c0_116, %c1_117, %c1_118, %c0_119] : memref<2x10x10x64xf32, #tpu.memory_space<vmem>>, vector<2x8x8x32xf32>
    %92 = vector.shape_cast %91 : vector<2x8x8x32xf32> to vector<128x32xf32>
    %c4_120 = arith.constant 4 : index
    %c0_121 = arith.constant 0 : index
    %c0_122 = arith.constant 0 : index
    %93 = vector.load %arg4[%c4_120, %c0_121, %c0_122] : memref<9x32x64xf32, #tpu.memory_space<vmem>>, vector<1x32x64xf32>
    %94 = vector.shape_cast %93 : vector<1x32x64xf32> to vector<32x64xf32>
    %cst_123 = arith.constant dense<0.000000e+00> : vector<128x64xf32>
    %95 = tpu.matmul %92, %94, %cst_123 {dimension_numbers = #tpu.dot_dimension_numbers<[1], [0], [0], [1], [0, 0, 1, 1], [], []>} : vector<128x32xf32>, vector<32x64xf32>, vector<128x64xf32> -> vector<128x64xf32>
    %96 = arith.addf %90, %95 : vector<128x64xf32>
    %c0_124 = arith.constant 0 : index
    %c1_125 = arith.constant 1 : index
    %c2_126 = arith.constant 2 : index
    %c0_127 = arith.constant 0 : index
    %97 = vector.load %arg18[%c0_124, %c1_125, %c2_126, %c0_127] : memref<2x10x10x64xf32, #tpu.memory_space<vmem>>, vector<2x8x8x32xf32>
    %98 = vector.shape_cast %97 : vector<2x8x8x32xf32> to vector<128x32xf32>
    %c5_128 = arith.constant 5 : index
    %c0_129 = arith.constant 0 : index
    %c0_130 = arith.constant 0 : index
    %99 = vector.load %arg4[%c5_128, %c0_129, %c0_130] : memref<9x32x64xf32, #tpu.memory_space<vmem>>, vector<1x32x64xf32>
    %100 = vector.shape_cast %99 : vector<1x32x64xf32> to vector<32x64xf32>
    %cst_131 = arith.constant dense<0.000000e+00> : vector<128x64xf32>
    %101 = tpu.matmul %98, %100, %cst_131 {dimension_numbers = #tpu.dot_dimension_numbers<[1], [0], [0], [1], [0, 0, 1, 1], [], []>} : vector<128x32xf32>, vector<32x64xf32>, vector<128x64xf32> -> vector<128x64xf32>
    %102 = arith.addf %96, %101 : vector<128x64xf32>
    %c0_132 = arith.constant 0 : index
    %c2_133 = arith.constant 2 : index
    %c0_134 = arith.constant 0 : index
    %c0_135 = arith.constant 0 : index
    %103 = vector.load %arg18[%c0_132, %c2_133, %c0_134, %c0_135] : memref<2x10x10x64xf32, #tpu.memory_space<vmem>>, vector<2x8x8x32xf32>
    %104 = vector.shape_cast %103 : vector<2x8x8x32xf32> to vector<128x32xf32>
    %c6_136 = arith.constant 6 : index
    %c0_137 = arith.constant 0 : index
    %c0_138 = arith.constant 0 : index
    %105 = vector.load %arg4[%c6_136, %c0_137, %c0_138] : memref<9x32x64xf32, #tpu.memory_space<vmem>>, vector<1x32x64xf32>
    %106 = vector.shape_cast %105 : vector<1x32x64xf32> to vector<32x64xf32>
    %cst_139 = arith.constant dense<0.000000e+00> : vector<128x64xf32>
    %107 = tpu.matmul %104, %106, %cst_139 {dimension_numbers = #tpu.dot_dimension_numbers<[1], [0], [0], [1], [0, 0, 1, 1], [], []>} : vector<128x32xf32>, vector<32x64xf32>, vector<128x64xf32> -> vector<128x64xf32>
    %108 = arith.addf %102, %107 : vector<128x64xf32>
    %c0_140 = arith.constant 0 : index
    %c2_141 = arith.constant 2 : index
    %c1_142 = arith.constant 1 : index
    %c0_143 = arith.constant 0 : index
    %109 = vector.load %arg18[%c0_140, %c2_141, %c1_142, %c0_143] : memref<2x10x10x64xf32, #tpu.memory_space<vmem>>, vector<2x8x8x32xf32>
    %110 = vector.shape_cast %109 : vector<2x8x8x32xf32> to vector<128x32xf32>
    %c7_144 = arith.constant 7 : index
    %c0_145 = arith.constant 0 : index
    %c0_146 = arith.constant 0 : index
    %111 = vector.load %arg4[%c7_144, %c0_145, %c0_146] : memref<9x32x64xf32, #tpu.memory_space<vmem>>, vector<1x32x64xf32>
    %112 = vector.shape_cast %111 : vector<1x32x64xf32> to vector<32x64xf32>
    %cst_147 = arith.constant dense<0.000000e+00> : vector<128x64xf32>
    %113 = tpu.matmul %110, %112, %cst_147 {dimension_numbers = #tpu.dot_dimension_numbers<[1], [0], [0], [1], [0, 0, 1, 1], [], []>} : vector<128x32xf32>, vector<32x64xf32>, vector<128x64xf32> -> vector<128x64xf32>
    %114 = arith.addf %108, %113 : vector<128x64xf32>
    %c0_148 = arith.constant 0 : index
    %c2_149 = arith.constant 2 : index
    %c2_150 = arith.constant 2 : index
    %c0_151 = arith.constant 0 : index
    %115 = vector.load %arg18[%c0_148, %c2_149, %c2_150, %c0_151] : memref<2x10x10x64xf32, #tpu.memory_space<vmem>>, vector<2x8x8x32xf32>
    %116 = vector.shape_cast %115 : vector<2x8x8x32xf32> to vector<128x32xf32>
    %c8_152 = arith.constant 8 : index
    %c0_153 = arith.constant 0 : index
    %c0_154 = arith.constant 0 : index
    %117 = vector.load %arg4[%c8_152, %c0_153, %c0_154] : memref<9x32x64xf32, #tpu.memory_space<vmem>>, vector<1x32x64xf32>
    %118 = vector.shape_cast %117 : vector<1x32x64xf32> to vector<32x64xf32>
    %cst_155 = arith.constant dense<0.000000e+00> : vector<128x64xf32>
    %119 = tpu.matmul %116, %118, %cst_155 {dimension_numbers = #tpu.dot_dimension_numbers<[1], [0], [0], [1], [0, 0, 1, 1], [], []>} : vector<128x32xf32>, vector<32x64xf32>, vector<128x64xf32> -> vector<128x64xf32>
    %120 = arith.addf %114, %119 : vector<128x64xf32>
    %c0_156 = arith.constant 0 : index
    %c0_157 = arith.constant 0 : index
    %121 = vector.load %arg5[%c0_156, %c0_157] : memref<1x64xf32, #tpu.memory_space<vmem>>, vector<1x64xf32>
    %122 = vector.broadcast %121 : vector<1x64xf32> to vector<128x64xf32>
    %123 = arith.addf %120, %122 : vector<128x64xf32>
    %cst_158 = arith.constant 0.000000e+00 : f32
    %124 = vector.broadcast %cst_158 : f32 to vector<128x64xf32>
    %125 = arith.maximumf %123, %124 : vector<128x64xf32>
    %126 = vector.shape_cast %125 : vector<128x64xf32> to vector<2x8x8x64xf32>
    %c0_159 = arith.constant 0 : index
    %c1_160 = arith.constant 1 : index
    %c1_161 = arith.constant 1 : index
    %c0_162 = arith.constant 0 : index
    %127 = vector.load %arg18[%c0_159, %c1_160, %c1_161, %c0_162] : memref<2x10x10x64xf32, #tpu.memory_space<vmem>>, vector<2x8x8x64xf32>
    tpu.vector_store %arg18[%c0_159, %c1_160, %c1_161, %c0_162], %126 {strides = array<i32>} : memref<2x10x10x64xf32, #tpu.memory_space<vmem>>, vector<2x8x8x64xf32>,
    %cst_163 = arith.constant 0.000000e+00 : f32
    %128 = vector.broadcast %cst_163 : f32 to vector<128x128xf32>
    %c0_164 = arith.constant 0 : index
    %c0_165 = arith.constant 0 : index
    %c0_166 = arith.constant 0 : index
    %c0_167 = arith.constant 0 : index
    %129 = vector.load %arg18[%c0_164, %c0_165, %c0_166, %c0_167] : memref<2x10x10x64xf32, #tpu.memory_space<vmem>>, vector<2x8x8x64xf32>
    %130 = vector.shape_cast %129 : vector<2x8x8x64xf32> to vector<128x64xf32>
    %c0_168 = arith.constant 0 : index
    %c0_169 = arith.constant 0 : index
    %c0_170 = arith.constant 0 : index
    %131 = vector.load %arg6[%c0_168, %c0_169, %c0_170] : memref<9x64x128xf32, #tpu.memory_space<vmem>>, vector<1x64x128xf32>
    %132 = vector.shape_cast %131 : vector<1x64x128xf32> to vector<64x128xf32>
    %cst_171 = arith.constant dense<0.000000e+00> : vector<128x128xf32>
    %133 = tpu.matmul %130, %132, %cst_171 {dimension_numbers = #tpu.dot_dimension_numbers<[1], [0], [0], [1], [0, 0, 1, 1], [], []>} : vector<128x64xf32>, vector<64x128xf32>, vector<128x128xf32> -> vector<128x128xf32>
    %134 = arith.addf %128, %133 : vector<128x128xf32>
    %c0_172 = arith.constant 0 : index
    %c0_173 = arith.constant 0 : index
    %c1_174 = arith.constant 1 : index
    %c0_175 = arith.constant 0 : index
    %135 = vector.load %arg18[%c0_172, %c0_173, %c1_174, %c0_175] : memref<2x10x10x64xf32, #tpu.memory_space<vmem>>, vector<2x8x8x64xf32>
    %136 = vector.shape_cast %135 : vector<2x8x8x64xf32> to vector<128x64xf32>
    %c1_176 = arith.constant 1 : index
    %c0_177 = arith.constant 0 : index
    %c0_178 = arith.constant 0 : index
    %137 = vector.load %arg6[%c1_176, %c0_177, %c0_178] : memref<9x64x128xf32, #tpu.memory_space<vmem>>, vector<1x64x128xf32>
    %138 = vector.shape_cast %137 : vector<1x64x128xf32> to vector<64x128xf32>
    %cst_179 = arith.constant dense<0.000000e+00> : vector<128x128xf32>
    %139 = tpu.matmul %136, %138, %cst_179 {dimension_numbers = #tpu.dot_dimension_numbers<[1], [0], [0], [1], [0, 0, 1, 1], [], []>} : vector<128x64xf32>, vector<64x128xf32>, vector<128x128xf32> -> vector<128x128xf32>
    %140 = arith.addf %134, %139 : vector<128x128xf32>
    %c0_180 = arith.constant 0 : index
    %c0_181 = arith.constant 0 : index
    %c2_182 = arith.constant 2 : index
    %c0_183 = arith.constant 0 : index
    %141 = vector.load %arg18[%c0_180, %c0_181, %c2_182, %c0_183] : memref<2x10x10x64xf32, #tpu.memory_space<vmem>>, vector<2x8x8x64xf32>
    %142 = vector.shape_cast %141 : vector<2x8x8x64xf32> to vector<128x64xf32>
    %c2_184 = arith.constant 2 : index
    %c0_185 = arith.constant 0 : index
    %c0_186 = arith.constant 0 : index
    %143 = vector.load %arg6[%c2_184, %c0_185, %c0_186] : memref<9x64x128xf32, #tpu.memory_space<vmem>>, vector<1x64x128xf32>
    %144 = vector.shape_cast %143 : vector<1x64x128xf32> to vector<64x128xf32>
    %cst_187 = arith.constant dense<0.000000e+00> : vector<128x128xf32>
    %145 = tpu.matmul %142, %144, %cst_187 {dimension_numbers = #tpu.dot_dimension_numbers<[1], [0], [0], [1], [0, 0, 1, 1], [], []>} : vector<128x64xf32>, vector<64x128xf32>, vector<128x128xf32> -> vector<128x128xf32>
    %146 = arith.addf %140, %145 : vector<128x128xf32>
    %c0_188 = arith.constant 0 : index
    %c1_189 = arith.constant 1 : index
    %c0_190 = arith.constant 0 : index
    %c0_191 = arith.constant 0 : index
    %147 = vector.load %arg18[%c0_188, %c1_189, %c0_190, %c0_191] : memref<2x10x10x64xf32, #tpu.memory_space<vmem>>, vector<2x8x8x64xf32>
    %148 = vector.shape_cast %147 : vector<2x8x8x64xf32> to vector<128x64xf32>
    %c3_192 = arith.constant 3 : index
    %c0_193 = arith.constant 0 : index
    %c0_194 = arith.constant 0 : index
    %149 = vector.load %arg6[%c3_192, %c0_193, %c0_194] : memref<9x64x128xf32, #tpu.memory_space<vmem>>, vector<1x64x128xf32>
    %150 = vector.shape_cast %149 : vector<1x64x128xf32> to vector<64x128xf32>
    %cst_195 = arith.constant dense<0.000000e+00> : vector<128x128xf32>
    %151 = tpu.matmul %148, %150, %cst_195 {dimension_numbers = #tpu.dot_dimension_numbers<[1], [0], [0], [1], [0, 0, 1, 1], [], []>} : vector<128x64xf32>, vector<64x128xf32>, vector<128x128xf32> -> vector<128x128xf32>
    %152 = arith.addf %146, %151 : vector<128x128xf32>
    %c0_196 = arith.constant 0 : index
    %c1_197 = arith.constant 1 : index
    %c1_198 = arith.constant 1 : index
    %c0_199 = arith.constant 0 : index
    %153 = vector.load %arg18[%c0_196, %c1_197, %c1_198, %c0_199] : memref<2x10x10x64xf32, #tpu.memory_space<vmem>>, vector<2x8x8x64xf32>
    %154 = vector.shape_cast %153 : vector<2x8x8x64xf32> to vector<128x64xf32>
    %c4_200 = arith.constant 4 : index
    %c0_201 = arith.constant 0 : index
    %c0_202 = arith.constant 0 : index
    %155 = vector.load %arg6[%c4_200, %c0_201, %c0_202] : memref<9x64x128xf32, #tpu.memory_space<vmem>>, vector<1x64x128xf32>
    %156 = vector.shape_cast %155 : vector<1x64x128xf32> to vector<64x128xf32>
    %cst_203 = arith.constant dense<0.000000e+00> : vector<128x128xf32>
    %157 = tpu.matmul %154, %156, %cst_203 {dimension_numbers = #tpu.dot_dimension_numbers<[1], [0], [0], [1], [0, 0, 1, 1], [], []>} : vector<128x64xf32>, vector<64x128xf32>, vector<128x128xf32> -> vector<128x128xf32>
    %158 = arith.addf %152, %157 : vector<128x128xf32>
    %c0_204 = arith.constant 0 : index
    %c1_205 = arith.constant 1 : index
    %c2_206 = arith.constant 2 : index
    %c0_207 = arith.constant 0 : index
    %159 = vector.load %arg18[%c0_204, %c1_205, %c2_206, %c0_207] : memref<2x10x10x64xf32, #tpu.memory_space<vmem>>, vector<2x8x8x64xf32>
    %160 = vector.shape_cast %159 : vector<2x8x8x64xf32> to vector<128x64xf32>
    %c5_208 = arith.constant 5 : index
    %c0_209 = arith.constant 0 : index
    %c0_210 = arith.constant 0 : index
    %161 = vector.load %arg6[%c5_208, %c0_209, %c0_210] : memref<9x64x128xf32, #tpu.memory_space<vmem>>, vector<1x64x128xf32>
    %162 = vector.shape_cast %161 : vector<1x64x128xf32> to vector<64x128xf32>
    %cst_211 = arith.constant dense<0.000000e+00> : vector<128x128xf32>
    %163 = tpu.matmul %160, %162, %cst_211 {dimension_numbers = #tpu.dot_dimension_numbers<[1], [0], [0], [1], [0, 0, 1, 1], [], []>} : vector<128x64xf32>, vector<64x128xf32>, vector<128x128xf32> -> vector<128x128xf32>
    %164 = arith.addf %158, %163 : vector<128x128xf32>
    %c0_212 = arith.constant 0 : index
    %c2_213 = arith.constant 2 : index
    %c0_214 = arith.constant 0 : index
    %c0_215 = arith.constant 0 : index
    %165 = vector.load %arg18[%c0_212, %c2_213, %c0_214, %c0_215] : memref<2x10x10x64xf32, #tpu.memory_space<vmem>>, vector<2x8x8x64xf32>
    %166 = vector.shape_cast %165 : vector<2x8x8x64xf32> to vector<128x64xf32>
    %c6_216 = arith.constant 6 : index
    %c0_217 = arith.constant 0 : index
    %c0_218 = arith.constant 0 : index
    %167 = vector.load %arg6[%c6_216, %c0_217, %c0_218] : memref<9x64x128xf32, #tpu.memory_space<vmem>>, vector<1x64x128xf32>
    %168 = vector.shape_cast %167 : vector<1x64x128xf32> to vector<64x128xf32>
    %cst_219 = arith.constant dense<0.000000e+00> : vector<128x128xf32>
    %169 = tpu.matmul %166, %168, %cst_219 {dimension_numbers = #tpu.dot_dimension_numbers<[1], [0], [0], [1], [0, 0, 1, 1], [], []>} : vector<128x64xf32>, vector<64x128xf32>, vector<128x128xf32> -> vector<128x128xf32>
    %170 = arith.addf %164, %169 : vector<128x128xf32>
    %c0_220 = arith.constant 0 : index
    %c2_221 = arith.constant 2 : index
    %c1_222 = arith.constant 1 : index
    %c0_223 = arith.constant 0 : index
    %171 = vector.load %arg18[%c0_220, %c2_221, %c1_222, %c0_223] : memref<2x10x10x64xf32, #tpu.memory_space<vmem>>, vector<2x8x8x64xf32>
    %172 = vector.shape_cast %171 : vector<2x8x8x64xf32> to vector<128x64xf32>
    %c7_224 = arith.constant 7 : index
    %c0_225 = arith.constant 0 : index
    %c0_226 = arith.constant 0 : index
    %173 = vector.load %arg6[%c7_224, %c0_225, %c0_226] : memref<9x64x128xf32, #tpu.memory_space<vmem>>, vector<1x64x128xf32>
    %174 = vector.shape_cast %173 : vector<1x64x128xf32> to vector<64x128xf32>
    %cst_227 = arith.constant dense<0.000000e+00> : vector<128x128xf32>
    %175 = tpu.matmul %172, %174, %cst_227 {dimension_numbers = #tpu.dot_dimension_numbers<[1], [0], [0], [1], [0, 0, 1, 1], [], []>} : vector<128x64xf32>, vector<64x128xf32>, vector<128x128xf32> -> vector<128x128xf32>
    %176 = arith.addf %170, %175 : vector<128x128xf32>
    %c0_228 = arith.constant 0 : index
    %c2_229 = arith.constant 2 : index
    %c2_230 = arith.constant 2 : index
    %c0_231 = arith.constant 0 : index
    %177 = vector.load %arg18[%c0_228, %c2_229, %c2_230, %c0_231] : memref<2x10x10x64xf32, #tpu.memory_space<vmem>>, vector<2x8x8x64xf32>
    %178 = vector.shape_cast %177 : vector<2x8x8x64xf32> to vector<128x64xf32>
    %c8_232 = arith.constant 8 : index
    %c0_233 = arith.constant 0 : index
    %c0_234 = arith.constant 0 : index
    %179 = vector.load %arg6[%c8_232, %c0_233, %c0_234] : memref<9x64x128xf32, #tpu.memory_space<vmem>>, vector<1x64x128xf32>
    %180 = vector.shape_cast %179 : vector<1x64x128xf32> to vector<64x128xf32>
    %cst_235 = arith.constant dense<0.000000e+00> : vector<128x128xf32>
    %181 = tpu.matmul %178, %180, %cst_235 {dimension_numbers = #tpu.dot_dimension_numbers<[1], [0], [0], [1], [0, 0, 1, 1], [], []>} : vector<128x64xf32>, vector<64x128xf32>, vector<128x128xf32> -> vector<128x128xf32>
    %182 = arith.addf %176, %181 : vector<128x128xf32>
    %c0_236 = arith.constant 0 : index
    %c0_237 = arith.constant 0 : index
    %183 = vector.load %arg7[%c0_236, %c0_237] : memref<1x128xf32, #tpu.memory_space<vmem>>, vector<1x128xf32>
    %184 = vector.broadcast %183 : vector<1x128xf32> to vector<128x128xf32>
    %185 = arith.addf %182, %184 : vector<128x128xf32>
    %cst_238 = arith.constant 0.000000e+00 : f32
    %186 = vector.broadcast %cst_238 : f32 to vector<128x128xf32>
    %187 = arith.maximumf %185, %186 : vector<128x128xf32>
    %188 = vector.shape_cast %187 : vector<128x128xf32> to vector<2x8x8x128xf32>
    %189 = vector.shape_cast %188 : vector<2x8x8x128xf32> to vector<2x64x128xf32>
    %c0_239 = arith.constant 0 : index
    %c0_240 = arith.constant 0 : index
    %190 = vector.load %arg8[%c0_239, %c0_240] : memref<6x128xf32, #tpu.memory_space<vmem>>, vector<6x128xf32>
    %c0_241 = arith.constant 0 : index
    %c0_242 = arith.constant 0 : index
    %191 = vector.load %arg9[%c0_241, %c0_242] : memref<6x1xf32, #tpu.memory_space<vmem>>, vector<6x1xf32>
    %c0_243 = arith.constant 0 : index
    %c0_244 = arith.constant 0 : index
    %192 = vector.load %arg14[%c0_243, %c0_244] : memref<1x64xf32, #tpu.memory_space<vmem>>, vector<1x64xf32>
    %193 = vector.extract_strided_slice %189 {offsets = [0, 0, 0], sizes = [1, 64, 128], strides = [1, 1, 1]} : vector<2x64x128xf32> to vector<1x64x128xf32>
    %194 = vector.shape_cast %193 : vector<1x64x128xf32> to vector<64x128xf32>
    %cst_245 = arith.constant dense<0.000000e+00> : vector<6x64xf32>
    %195 = tpu.matmul %190, %194, %cst_245 {dimension_numbers = #tpu.dot_dimension_numbers<[1], [1], [0], [0], [0, 0, 1, 0], [], []>} : vector<6x128xf32>, vector<64x128xf32>, vector<6x64xf32> -> vector<6x64xf32>
    %196 = vector.broadcast %191 : vector<6x1xf32> to vector<6x64xf32>
    %197 = arith.addf %195, %196 : vector<6x64xf32>
    %cst_246 = arith.constant 0.000000e+00 : f32
    %198 = vector.broadcast %cst_246 : f32 to vector<6x64xf32>
    %199 = arith.maximumf %197, %198 : vector<6x64xf32>
    %200 = vector.extract_strided_slice %199 {offsets = [0, 0], sizes = [4, 64], strides = [1, 1]} : vector<6x64xf32> to vector<4x64xf32>
    %201 = vector.extract_strided_slice %199 {offsets = [4, 0], sizes = [2, 64], strides = [1, 1]} : vector<6x64xf32> to vector<2x64xf32>
    %c0_247 = arith.constant 0 : index
    %c0_248 = arith.constant 0 : index
    %202 = vector.load %arg11[%c0_247, %c0_248] : memref<1x64xf32, #tpu.memory_space<vmem>>, vector<1x64xf32>
    %203 = vector.extract_strided_slice %200 {offsets = [0, 0], sizes = [1, 64], strides = [1, 1]} : vector<4x64xf32> to vector<1x64xf32>
    %c0_249 = arith.constant 0 : index
    %c0_250 = arith.constant 0 : index
    %204 = vector.load %arg10[%c0_249, %c0_250] : memref<256x64xf32, #tpu.memory_space<vmem>>, vector<64x64xf32>
    %cst_251 = arith.constant dense<0.000000e+00> : vector<1x64xf32>
    %205 = tpu.matmul %203, %204, %cst_251 {dimension_numbers = #tpu.dot_dimension_numbers<[1], [0], [0], [1], [0, 0, 1, 1], [], []>} : vector<1x64xf32>, vector<64x64xf32>, vector<1x64xf32> -> vector<1x64xf32>
    %206 = arith.addf %202, %205 : vector<1x64xf32>
    %207 = vector.extract_strided_slice %200 {offsets = [1, 0], sizes = [1, 64], strides = [1, 1]} : vector<4x64xf32> to vector<1x64xf32>
    %c64 = arith.constant 64 : index
    %c0_252 = arith.constant 0 : index
    %208 = vector.load %arg10[%c64, %c0_252] : memref<256x64xf32, #tpu.memory_space<vmem>>, vector<64x64xf32>
    %cst_253 = arith.constant dense<0.000000e+00> : vector<1x64xf32>
    %209 = tpu.matmul %207, %208, %cst_253 {dimension_numbers = #tpu.dot_dimension_numbers<[1], [0], [0], [1], [0, 0, 1, 1], [], []>} : vector<1x64xf32>, vector<64x64xf32>, vector<1x64xf32> -> vector<1x64xf32>
    %210 = arith.addf %206, %209 : vector<1x64xf32>
    %211 = vector.extract_strided_slice %200 {offsets = [2, 0], sizes = [1, 64], strides = [1, 1]} : vector<4x64xf32> to vector<1x64xf32>
    %c128 = arith.constant 128 : index
    %c0_254 = arith.constant 0 : index
    %212 = vector.load %arg10[%c128, %c0_254] : memref<256x64xf32, #tpu.memory_space<vmem>>, vector<64x64xf32>
    %cst_255 = arith.constant dense<0.000000e+00> : vector<1x64xf32>
    %213 = tpu.matmul %211, %212, %cst_255 {dimension_numbers = #tpu.dot_dimension_numbers<[1], [0], [0], [1], [0, 0, 1, 1], [], []>} : vector<1x64xf32>, vector<64x64xf32>, vector<1x64xf32> -> vector<1x64xf32>
    %214 = arith.addf %210, %213 : vector<1x64xf32>
    %215 = vector.extract_strided_slice %200 {offsets = [3, 0], sizes = [1, 64], strides = [1, 1]} : vector<4x64xf32> to vector<1x64xf32>
    %c192 = arith.constant 192 : index
    %c0_256 = arith.constant 0 : index
    %216 = vector.load %arg10[%c192, %c0_256] : memref<256x64xf32, #tpu.memory_space<vmem>>, vector<64x64xf32>
    %cst_257 = arith.constant dense<0.000000e+00> : vector<1x64xf32>
    %217 = tpu.matmul %215, %216, %cst_257 {dimension_numbers = #tpu.dot_dimension_numbers<[1], [0], [0], [1], [0, 0, 1, 1], [], []>} : vector<1x64xf32>, vector<64x64xf32>, vector<1x64xf32> -> vector<1x64xf32>
    %218 = arith.addf %214, %217 : vector<1x64xf32>
    %cst_258 = arith.constant dense<0xFF800000> : vector<1xf32>
    %219 = vector.multi_reduction <maximumf>, %218, %cst_258 [1] : vector<1x64xf32> to vector<1xf32>
    %220 = vector.shape_cast %219 : vector<1xf32> to vector<1x1xf32>
    %221 = vector.broadcast %220 : vector<1x1xf32> to vector<1x64xf32>
    %222 = arith.subf %218, %221 : vector<1x64xf32>
    %223 = math.exp %222 : vector<1x64xf32>
    %cst_259 = arith.constant dense<0.000000e+00> : vector<1xf32>
    %224 = vector.multi_reduction <add>, %223, %cst_259 [1] : vector<1x64xf32> to vector<1xf32>
    %225 = vector.shape_cast %224 : vector<1xf32> to vector<1x1xf32>
    %226 = math.log %225 : vector<1x1xf32>
    %227 = vector.broadcast %226 : vector<1x1xf32> to vector<1x64xf32>
    %228 = arith.subf %222, %227 : vector<1x64xf32>
    %c0_260 = arith.constant 0 : index
    %c0_261 = arith.constant 0 : index
    %229 = vector.load %arg16[%c0_260, %c0_261] : memref<2x64xf32, #tpu.memory_space<vmem>>, vector<1x64xf32>
    tpu.vector_store %arg16[%c0_260, %c0_261], %228 {strides = array<i32>} : memref<2x64xf32, #tpu.memory_space<vmem>>, vector<1x64xf32>,
    %c0_262 = arith.constant 0 : index
    %c0_263 = arith.constant 0 : index
    %230 = vector.load %arg13[%c0_262, %c0_263] : memref<1x64xf32, #tpu.memory_space<vmem>>, vector<1x64xf32>
    %231 = vector.extract_strided_slice %201 {offsets = [0, 0], sizes = [1, 64], strides = [1, 1]} : vector<2x64xf32> to vector<1x64xf32>
    %c0_264 = arith.constant 0 : index
    %c0_265 = arith.constant 0 : index
    %232 = vector.load %arg12[%c0_264, %c0_265] : memref<128x64xf32, #tpu.memory_space<vmem>>, vector<64x64xf32>
    %cst_266 = arith.constant dense<0.000000e+00> : vector<1x64xf32>
    %233 = tpu.matmul %231, %232, %cst_266 {dimension_numbers = #tpu.dot_dimension_numbers<[1], [0], [0], [1], [0, 0, 1, 1], [], []>} : vector<1x64xf32>, vector<64x64xf32>, vector<1x64xf32> -> vector<1x64xf32>
    %234 = arith.addf %230, %233 : vector<1x64xf32>
    %235 = vector.extract_strided_slice %201 {offsets = [1, 0], sizes = [1, 64], strides = [1, 1]} : vector<2x64xf32> to vector<1x64xf32>
    %c64_267 = arith.constant 64 : index
    %c0_268 = arith.constant 0 : index
    %236 = vector.load %arg12[%c64_267, %c0_268] : memref<128x64xf32, #tpu.memory_space<vmem>>, vector<64x64xf32>
    %cst_269 = arith.constant dense<0.000000e+00> : vector<1x64xf32>
    %237 = tpu.matmul %235, %236, %cst_269 {dimension_numbers = #tpu.dot_dimension_numbers<[1], [0], [0], [1], [0, 0, 1, 1], [], []>} : vector<1x64xf32>, vector<64x64xf32>, vector<1x64xf32> -> vector<1x64xf32>
    %238 = arith.addf %234, %237 : vector<1x64xf32>
    %cst_270 = arith.constant 0.000000e+00 : f32
    %239 = vector.broadcast %cst_270 : f32 to vector<1x64xf32>
    %240 = arith.maximumf %238, %239 : vector<1x64xf32>
    %241 = arith.mulf %240, %192 : vector<1x64xf32>
    %cst_271 = arith.constant dense<0.000000e+00> : vector<1xf32>
    %242 = vector.multi_reduction <add>, %241, %cst_271 [1] : vector<1x64xf32> to vector<1xf32>
    %243 = vector.shape_cast %242 : vector<1xf32> to vector<1x1xf32>
    %c0_272 = arith.constant 0 : index
    %c0_273 = arith.constant 0 : index
    %244 = vector.load %arg15[%c0_272, %c0_273] : memref<1x1xf32, #tpu.memory_space<vmem>>, vector<1x1xf32>
    %245 = arith.addf %243, %244 : vector<1x1xf32>
    %246 = math.tanh %245 : vector<1x1xf32>
    %c0_274 = arith.constant 0 : index
    %c0_275 = arith.constant 0 : index
    %247 = vector.load %arg17[%c0_274, %c0_275] : memref<2x1xf32, #tpu.memory_space<vmem>>, vector<1x1xf32>
    tpu.vector_store %arg17[%c0_274, %c0_275], %246 {strides = array<i32>} : memref<2x1xf32, #tpu.memory_space<vmem>>, vector<1x1xf32>,
    %248 = vector.extract_strided_slice %189 {offsets = [1, 0, 0], sizes = [1, 64, 128], strides = [1, 1, 1]} : vector<2x64x128xf32> to vector<1x64x128xf32>
    %249 = vector.shape_cast %248 : vector<1x64x128xf32> to vector<64x128xf32>
    %cst_276 = arith.constant dense<0.000000e+00> : vector<6x64xf32>
    %250 = tpu.matmul %190, %249, %cst_276 {dimension_numbers = #tpu.dot_dimension_numbers<[1], [1], [0], [0], [0, 0, 1, 0], [], []>} : vector<6x128xf32>, vector<64x128xf32>, vector<6x64xf32> -> vector<6x64xf32>
    %251 = vector.broadcast %191 : vector<6x1xf32> to vector<6x64xf32>
    %252 = arith.addf %250, %251 : vector<6x64xf32>
    %cst_277 = arith.constant 0.000000e+00 : f32
    %253 = vector.broadcast %cst_277 : f32 to vector<6x64xf32>
    %254 = arith.maximumf %252, %253 : vector<6x64xf32>
    %255 = vector.extract_strided_slice %254 {offsets = [0, 0], sizes = [4, 64], strides = [1, 1]} : vector<6x64xf32> to vector<4x64xf32>
    %256 = vector.extract_strided_slice %254 {offsets = [4, 0], sizes = [2, 64], strides = [1, 1]} : vector<6x64xf32> to vector<2x64xf32>
    %c0_278 = arith.constant 0 : index
    %c0_279 = arith.constant 0 : index
    %257 = vector.load %arg11[%c0_278, %c0_279] : memref<1x64xf32, #tpu.memory_space<vmem>>, vector<1x64xf32>
    %258 = vector.extract_strided_slice %255 {offsets = [0, 0], sizes = [1, 64], strides = [1, 1]} : vector<4x64xf32> to vector<1x64xf32>
    %c0_280 = arith.constant 0 : index
    %c0_281 = arith.constant 0 : index
    %259 = vector.load %arg10[%c0_280, %c0_281] : memref<256x64xf32, #tpu.memory_space<vmem>>, vector<64x64xf32>
    %cst_282 = arith.constant dense<0.000000e+00> : vector<1x64xf32>
    %260 = tpu.matmul %258, %259, %cst_282 {dimension_numbers = #tpu.dot_dimension_numbers<[1], [0], [0], [1], [0, 0, 1, 1], [], []>} : vector<1x64xf32>, vector<64x64xf32>, vector<1x64xf32> -> vector<1x64xf32>
    %261 = arith.addf %257, %260 : vector<1x64xf32>
    %262 = vector.extract_strided_slice %255 {offsets = [1, 0], sizes = [1, 64], strides = [1, 1]} : vector<4x64xf32> to vector<1x64xf32>
    %c64_283 = arith.constant 64 : index
    %c0_284 = arith.constant 0 : index
    %263 = vector.load %arg10[%c64_283, %c0_284] : memref<256x64xf32, #tpu.memory_space<vmem>>, vector<64x64xf32>
    %cst_285 = arith.constant dense<0.000000e+00> : vector<1x64xf32>
    %264 = tpu.matmul %262, %263, %cst_285 {dimension_numbers = #tpu.dot_dimension_numbers<[1], [0], [0], [1], [0, 0, 1, 1], [], []>} : vector<1x64xf32>, vector<64x64xf32>, vector<1x64xf32> -> vector<1x64xf32>
    %265 = arith.addf %261, %264 : vector<1x64xf32>
    %266 = vector.extract_strided_slice %255 {offsets = [2, 0], sizes = [1, 64], strides = [1, 1]} : vector<4x64xf32> to vector<1x64xf32>
    %c128_286 = arith.constant 128 : index
    %c0_287 = arith.constant 0 : index
    %267 = vector.load %arg10[%c128_286, %c0_287] : memref<256x64xf32, #tpu.memory_space<vmem>>, vector<64x64xf32>
    %cst_288 = arith.constant dense<0.000000e+00> : vector<1x64xf32>
    %268 = tpu.matmul %266, %267, %cst_288 {dimension_numbers = #tpu.dot_dimension_numbers<[1], [0], [0], [1], [0, 0, 1, 1], [], []>} : vector<1x64xf32>, vector<64x64xf32>, vector<1x64xf32> -> vector<1x64xf32>
    %269 = arith.addf %265, %268 : vector<1x64xf32>
    %270 = vector.extract_strided_slice %255 {offsets = [3, 0], sizes = [1, 64], strides = [1, 1]} : vector<4x64xf32> to vector<1x64xf32>
    %c192_289 = arith.constant 192 : index
    %c0_290 = arith.constant 0 : index
    %271 = vector.load %arg10[%c192_289, %c0_290] : memref<256x64xf32, #tpu.memory_space<vmem>>, vector<64x64xf32>
    %cst_291 = arith.constant dense<0.000000e+00> : vector<1x64xf32>
    %272 = tpu.matmul %270, %271, %cst_291 {dimension_numbers = #tpu.dot_dimension_numbers<[1], [0], [0], [1], [0, 0, 1, 1], [], []>} : vector<1x64xf32>, vector<64x64xf32>, vector<1x64xf32> -> vector<1x64xf32>
    %273 = arith.addf %269, %272 : vector<1x64xf32>
    %cst_292 = arith.constant dense<0xFF800000> : vector<1xf32>
    %274 = vector.multi_reduction <maximumf>, %273, %cst_292 [1] : vector<1x64xf32> to vector<1xf32>
    %275 = vector.shape_cast %274 : vector<1xf32> to vector<1x1xf32>
    %276 = vector.broadcast %275 : vector<1x1xf32> to vector<1x64xf32>
    %277 = arith.subf %273, %276 : vector<1x64xf32>
    %278 = math.exp %277 : vector<1x64xf32>
    %cst_293 = arith.constant dense<0.000000e+00> : vector<1xf32>
    %279 = vector.multi_reduction <add>, %278, %cst_293 [1] : vector<1x64xf32> to vector<1xf32>
    %280 = vector.shape_cast %279 : vector<1xf32> to vector<1x1xf32>
    %281 = math.log %280 : vector<1x1xf32>
    %282 = vector.broadcast %281 : vector<1x1xf32> to vector<1x64xf32>
    %283 = arith.subf %277, %282 : vector<1x64xf32>
    %c1_294 = arith.constant 1 : index
    %c0_295 = arith.constant 0 : index
    %284 = vector.load %arg16[%c1_294, %c0_295] : memref<2x64xf32, #tpu.memory_space<vmem>>, vector<1x64xf32>
    tpu.vector_store %arg16[%c1_294, %c0_295], %283 {strides = array<i32>} : memref<2x64xf32, #tpu.memory_space<vmem>>, vector<1x64xf32>,
    %c0_296 = arith.constant 0 : index
    %c0_297 = arith.constant 0 : index
    %285 = vector.load %arg13[%c0_296, %c0_297] : memref<1x64xf32, #tpu.memory_space<vmem>>, vector<1x64xf32>
    %286 = vector.extract_strided_slice %256 {offsets = [0, 0], sizes = [1, 64], strides = [1, 1]} : vector<2x64xf32> to vector<1x64xf32>
    %c0_298 = arith.constant 0 : index
    %c0_299 = arith.constant 0 : index
    %287 = vector.load %arg12[%c0_298, %c0_299] : memref<128x64xf32, #tpu.memory_space<vmem>>, vector<64x64xf32>
    %cst_300 = arith.constant dense<0.000000e+00> : vector<1x64xf32>
    %288 = tpu.matmul %286, %287, %cst_300 {dimension_numbers = #tpu.dot_dimension_numbers<[1], [0], [0], [1], [0, 0, 1, 1], [], []>} : vector<1x64xf32>, vector<64x64xf32>, vector<1x64xf32> -> vector<1x64xf32>
    %289 = arith.addf %285, %288 : vector<1x64xf32>
    %290 = vector.extract_strided_slice %256 {offsets = [1, 0], sizes = [1, 64], strides = [1, 1]} : vector<2x64xf32> to vector<1x64xf32>
    %c64_301 = arith.constant 64 : index
    %c0_302 = arith.constant 0 : index
    %291 = vector.load %arg12[%c64_301, %c0_302] : memref<128x64xf32, #tpu.memory_space<vmem>>, vector<64x64xf32>
    %cst_303 = arith.constant dense<0.000000e+00> : vector<1x64xf32>
    %292 = tpu.matmul %290, %291, %cst_303 {dimension_numbers = #tpu.dot_dimension_numbers<[1], [0], [0], [1], [0, 0, 1, 1], [], []>} : vector<1x64xf32>, vector<64x64xf32>, vector<1x64xf32> -> vector<1x64xf32>
    %293 = arith.addf %289, %292 : vector<1x64xf32>
    %cst_304 = arith.constant 0.000000e+00 : f32
    %294 = vector.broadcast %cst_304 : f32 to vector<1x64xf32>
    %295 = arith.maximumf %293, %294 : vector<1x64xf32>
    %296 = arith.mulf %295, %192 : vector<1x64xf32>
    %cst_305 = arith.constant dense<0.000000e+00> : vector<1xf32>
    %297 = vector.multi_reduction <add>, %296, %cst_305 [1] : vector<1x64xf32> to vector<1xf32>
    %298 = vector.shape_cast %297 : vector<1xf32> to vector<1x1xf32>
    %c0_306 = arith.constant 0 : index
    %c0_307 = arith.constant 0 : index
    %299 = vector.load %arg15[%c0_306, %c0_307] : memref<1x1xf32, #tpu.memory_space<vmem>>, vector<1x1xf32>
    %300 = arith.addf %298, %299 : vector<1x1xf32>
    %301 = math.tanh %300 : vector<1x1xf32>
    %c1_308 = arith.constant 1 : index
    %c0_309 = arith.constant 0 : index
    %302 = vector.load %arg17[%c1_308, %c0_309] : memref<2x1xf32, #tpu.memory_space<vmem>>, vector<1x1xf32>
    tpu.vector_store %arg17[%c1_308, %c0_309], %301 {strides = array<i32>} : memref<2x1xf32, #tpu.memory_space<vmem>>, vector<1x1xf32>,
    return
  }
  func.func @transform_0(%arg0: i32) -> (i32, i32, i32, i32) {
    %c0_i32 = arith.constant 0 : i32
    %c0_i32_0 = arith.constant 0 : i32
    %c0_i32_1 = arith.constant 0 : i32
    %c0_i32_2 = arith.constant 0 : i32
    return %arg0, %c0_i32, %c0_i32_0, %c0_i32_1 : i32, i32, i32, i32
  }
  func.func @transform_1(%arg0: i32) -> (i32, i32, i32) {
    %c0_i32 = arith.constant 0 : i32
    %c0_i32_0 = arith.constant 0 : i32
    %c0_i32_1 = arith.constant 0 : i32
    %c0_i32_2 = arith.constant 0 : i32
    return %c0_i32, %c0_i32_0, %c0_i32_1 : i32, i32, i32
  }
  func.func @transform_2(%arg0: i32) -> (i32, i32) {
    %c0_i32 = arith.constant 0 : i32
    %c0_i32_0 = arith.constant 0 : i32
    %c0_i32_1 = arith.constant 0 : i32
    return %c0_i32, %c0_i32_0 : i32, i32
  }
  func.func @transform_3(%arg0: i32) -> (i32, i32, i32) {
    %c0_i32 = arith.constant 0 : i32
    %c0_i32_0 = arith.constant 0 : i32
    %c0_i32_1 = arith.constant 0 : i32
    %c0_i32_2 = arith.constant 0 : i32
    return %c0_i32, %c0_i32_0, %c0_i32_1 : i32, i32, i32
  }
  func.func @transform_4(%arg0: i32) -> (i32, i32) {
    %c0_i32 = arith.constant 0 : i32
    %c0_i32_0 = arith.constant 0 : i32
    %c0_i32_1 = arith.constant 0 : i32
    return %c0_i32, %c0_i32_0 : i32, i32
  }
  func.func @transform_5(%arg0: i32) -> (i32, i32, i32) {
    %c0_i32 = arith.constant 0 : i32
    %c0_i32_0 = arith.constant 0 : i32
    %c0_i32_1 = arith.constant 0 : i32
    %c0_i32_2 = arith.constant 0 : i32
    return %c0_i32, %c0_i32_0, %c0_i32_1 : i32, i32, i32
  }
  func.func @transform_6(%arg0: i32) -> (i32, i32) {
    %c0_i32 = arith.constant 0 : i32
    %c0_i32_0 = arith.constant 0 : i32
    %c0_i32_1 = arith.constant 0 : i32
    return %c0_i32, %c0_i32_0 : i32, i32
  }
  func.func @transform_7(%arg0: i32) -> (i32, i32) {
    %c0_i32 = arith.constant 0 : i32
    %c0_i32_0 = arith.constant 0 : i32
    %c0_i32_1 = arith.constant 0 : i32
    return %c0_i32, %c0_i32_0 : i32, i32
  }
  func.func @transform_8(%arg0: i32) -> (i32, i32) {
    %c0_i32 = arith.constant 0 : i32
    %c0_i32_0 = arith.constant 0 : i32
    %c0_i32_1 = arith.constant 0 : i32
    return %c0_i32, %c0_i32_0 : i32, i32
  }
  func.func @transform_9(%arg0: i32) -> (i32, i32) {
    %c0_i32 = arith.constant 0 : i32
    %c0_i32_0 = arith.constant 0 : i32
    %c0_i32_1 = arith.constant 0 : i32
    return %c0_i32, %c0_i32_0 : i32, i32
  }
  func.func @transform_10(%arg0: i32) -> (i32, i32) {
    %c0_i32 = arith.constant 0 : i32
    %c0_i32_0 = arith.constant 0 : i32
    %c0_i32_1 = arith.constant 0 : i32
    return %c0_i32, %c0_i32_0 : i32, i32
  }
  func.func @transform_11(%arg0: i32) -> (i32, i32) {
    %c0_i32 = arith.constant 0 : i32
    %c0_i32_0 = arith.constant 0 : i32
    %c0_i32_1 = arith.constant 0 : i32
    return %c0_i32, %c0_i32_0 : i32, i32
  }
  func.func @transform_12(%arg0: i32) -> (i32, i32) {
    %c0_i32 = arith.constant 0 : i32
    %c0_i32_0 = arith.constant 0 : i32
    %c0_i32_1 = arith.constant 0 : i32
    return %c0_i32, %c0_i32_0 : i32, i32
  }
  func.func @transform_13(%arg0: i32) -> (i32, i32) {
    %c0_i32 = arith.constant 0 : i32
    %c0_i32_0 = arith.constant 0 : i32
    %c0_i32_1 = arith.constant 0 : i32
    return %c0_i32, %c0_i32_0 : i32, i32
  }
  func.func @transform_14(%arg0: i32) -> (i32, i32) {
    %c0_i32 = arith.constant 0 : i32
    %c0_i32_0 = arith.constant 0 : i32
    %c0_i32_1 = arith.constant 0 : i32
    return %c0_i32, %c0_i32_0 : i32, i32
  }
  func.func @transform_15(%arg0: i32) -> (i32, i32) {
    %c0_i32 = arith.constant 0 : i32
    %c0_i32_0 = arith.constant 0 : i32
    return %arg0, %c0_i32 : i32, i32
  }
  func.func @transform_16(%arg0: i32) -> (i32, i32) {
    %c0_i32 = arith.constant 0 : i32
    %c0_i32_0 = arith.constant 0 : i32
    return %arg0, %c0_i32 : i32, i32
  }
}

</mosaic_0001>

<llo_original>
// kernel: net_forward.1
$region0: #{net_forward.1}
  #allocation0 [shape = 'u32[]', space=smem, size = 0x4, offset = 0x4, fixed_abs, tag = 'smem constant byte address 0x4 - core index']
  #allocation1 [shape = 'u32[144,128]{1,0:T(1,128)}', space=vmem, size = 0x12000, scoped, tag = 'internal scratch']
  #allocation2 [shape = 'f32[2,10,10,64]{3,2,1,0:T(8,128)}', space=vmem, size = 0x28000, scoped, tag = 'scratch operand']
  #allocation3 [shape = 'f32[1,1]{1,0:T(1,128)S(1)}', space=vmem, size = 0x200, scoped, tag = 'scoped memory for net_forward.1']
  %s0 = inlined_call_operand.vmem [shape: f32[2,8,8,4], index: 0, kind: input, shape index: {}]
  %s1 = inlined_call_operand.hbm [shape: f32[9,4,32], index: 1, kind: input, shape index: {}]
  %s2 = inlined_call_operand.vmem [shape: f32[1,32], index: 2, kind: input, shape index: {}]
  %s3 = inlined_call_operand.vmem [shape: f32[9,32,64], index: 3, kind: input, shape index: {}]
  %s4 = inlined_call_operand.vmem [shape: f32[1,64], index: 4, kind: input, shape index: {}]
  %s5 = inlined_call_operand.vmem [shape: f32[9,64,128], index: 5, kind: input, shape index: {}]
  %s6 = inlined_call_operand.vmem [shape: f32[1,128], index: 6, kind: input, shape index: {}]
  %s7 = inlined_call_operand.vmem [shape: f32[6,128], index: 7, kind: input, shape index: {}]
  %s8 = inlined_call_operand.vmem [shape: f32[6,1], index: 8, kind: input, shape index: {}]
  %s9 = inlined_call_operand.vmem [shape: f32[256,64], index: 9, kind: input, shape index: {}]
  %s10 = inlined_call_operand.vmem [shape: f32[1,64], index: 10, kind: input, shape index: {}]
  %s11 = inlined_call_operand.vmem [shape: f32[128,64], index: 11, kind: input, shape index: {}]
  %s12 = inlined_call_operand.vmem [shape: f32[1,64], index: 12, kind: input, shape index: {}]
  %s13 = inlined_call_operand.vmem [shape: f32[1,64], index: 13, kind: input, shape index: {}]
  %s14 = inlined_call_operand.<no memory space> [shape: f32[1,1], index: 14, kind: input, shape index: {}]
  %s15 = inlined_call_operand.hbm [shape: f32[2,64], index: 15, kind: output, shape index: {0}]
  %s16 = inlined_call_operand.vmem [shape: f32[2,1], index: 16, kind: output, shape index: {1}]
  %17 = xla_tuple %s15, %s16
  %s18 = sld [smem:[#allocation0]]
  $region82: #{net_forward.1} parent=0
    _
  %s20 = ssub.s32 1, %s18
  %s21 = scalar_select 0, %s20, %s18
  %v22 = vstv %s14
  %23 = vst [vmem:[#allocation3] sm:$0x1] %v22
  $region1: #{net_forward.1} parent=0
    #allocation4 [shape = 'u8[18432]{0}', space=vmem, size = 0x4800, scoped, tag = 'input window, operand 1, single buffered']
    #allocation5 [shape = 's32[1]{0}', space=sflag, size = 0x4, scoped, tag = 'scoped memory for net_forward.1']
    #allocation6 [shape = 's32[1]{0}', space=sflag, size = 0x4, scoped, tag = 'scoped memory for net_forward.1']
    #allocation7 [shape = 'u8[1024]{0}', space=vmem, size = 0x400, scoped, tag = 'output window, operand 0, single buffered']
    %24 = vsyncpa [#allocation5], 0
    %25 = vsyncpa [#allocation6], 0
    // Predicated region
    $region2: #{net_forward.1} parent=1 // pred_check
      _
    $region3: #{net_forward.1} parent=1 // pred_check_branch
      %27 = sbr.rel (0) target = $region5
    $region4: #{net_forward.1} parent=1 // pred_region
      _
    $region5: #{net_forward.1} parent=1 // pred_fallthru
      _
    // Predicated region
    $region6: #{net_forward.1} parent=1 // pred_check
      _
    $region7: #{net_forward.1} parent=1 // pred_check_branch
      %29 = sbr.rel (0) target = $region9
    $region8: #{net_forward.1} parent=1 // pred_region
      %s31 = ssub.s32 576, 576
      %32 = vsyncadd [#allocation5], %s31
      %s33 = sshll.u32 [#allocation4], 4
      %s34 = int_to_ptr.vmem [resolvable:$true] %s33
      %39 = dma.hbm_to_vmem [thread:$0]  %s1, 576, %s34, [#allocation5], 64, 64, 4
    $region9: #{net_forward.1} parent=1 // pred_fallthru
      _
    // Predicated region
    $region10: #{net_forward.1} parent=1 // pred_check
      _
    $region11: #{net_forward.1} parent=1 // pred_check_branch
      %41 = sbr.rel (0) target = $region13
    $region12: #{net_forward.1} parent=1 // pred_region
      _
    $region13: #{net_forward.1} parent=1 // pred_fallthru
      _
    // Predicated region
    $region14: #{net_forward.1} parent=1 // pred_check
      _
    $region15: #{net_forward.1} parent=1 // pred_check_branch
      %43 = sbr.rel (0) target = $region17
    $region16: #{net_forward.1} parent=1 // pred_region
      _
    $region17: #{net_forward.1} parent=1 // pred_fallthru
      _
    // Predicated region
    $region18: #{net_forward.1} parent=1 // pred_check
      _
    $region19: #{net_forward.1} parent=1 // pred_check_branch
      %45 = sbr.rel (0) target = $region21
    $region20: #{net_forward.1} parent=1 // pred_region
      _
    $region21: #{net_forward.1} parent=1 // pred_fallthru
      _
    // Predicated region
    $region22: #{net_forward.1} parent=1 // pred_check
      _
    $region23: #{net_forward.1} parent=1 // pred_check_branch
      %47 = sbr.rel (0) target = $region25
    $region24: #{net_forward.1} parent=1 // pred_region
      _
    $region25: #{net_forward.1} parent=1 // pred_fallthru
      _
    // Predicated region
    $region26: #{net_forward.1} parent=1 // pred_check
      _
    $region27: #{net_forward.1} parent=1 // pred_check_branch
      %49 = sbr.rel (0) target = $region29
    $region28: #{net_forward.1} parent=1 // pred_region
      _
    $region29: #{net_forward.1} parent=1 // pred_fallthru
      _
    // Predicated region
    $region30: #{net_forward.1} parent=1 // pred_check
      _
    $region31: #{net_forward.1} parent=1 // pred_check_branch
      %51 = sbr.rel (0) target = $region33
    $region32: #{net_forward.1} parent=1 // pred_region
      _
    $region33: #{net_forward.1} parent=1 // pred_fallthru
      _
    // Predicated region
    $region34: #{net_forward.1} parent=1 // pred_check
      _
    $region35: #{net_forward.1} parent=1 // pred_check_branch
      %53 = sbr.rel (0) target = $region37
    $region36: #{net_forward.1} parent=1 // pred_region
      _
    $region37: #{net_forward.1} parent=1 // pred_fallthru
      _
    // Predicated region
    $region38: #{net_forward.1} parent=1 // pred_check
      _
    $region39: #{net_forward.1} parent=1 // pred_check_branch
      %55 = sbr.rel (0) target = $region41
    $region40: #{net_forward.1} parent=1 // pred_region
      _
    $region41: #{net_forward.1} parent=1 // pred_fallthru
      _
    // Predicated region
    $region42: #{net_forward.1} parent=1 // pred_check
      _
    $region43: #{net_forward.1} parent=1 // pred_check_branch
      %57 = sbr.rel (0) target = $region45
    $region44: #{net_forward.1} parent=1 // pred_region
      _
    $region45: #{net_forward.1} parent=1 // pred_fallthru
      _
    // Predicated region
    $region46: #{net_forward.1} parent=1 // pred_check
      _
    $region47: #{net_forward.1} parent=1 // pred_check_branch
      %59 = sbr.rel (0) target = $region49
    $region48: #{net_forward.1} parent=1 // pred_region
      _
    $region49: #{net_forward.1} parent=1 // pred_fallthru
      _
    // Predicated region
    $region50: #{net_forward.1} parent=1 // pred_check
      _
    $region51: #{net_forward.1} parent=1 // pred_check_branch
      %61 = sbr.rel (0) target = $region53
    $region52: #{net_forward.1} parent=1 // pred_region
      _
    $region53: #{net_forward.1} parent=1 // pred_fallthru
      _
    // Predicated region
    $region54: #{net_forward.1} parent=1 // pred_check
      _
    $region55: #{net_forward.1} parent=1 // pred_check_branch
      %63 = sbr.rel (0) target = $region57
    $region56: #{net_forward.1} parent=1 // pred_region
      _
    $region57: #{net_forward.1} parent=1 // pred_fallthru
      _
    // Predicated region
    $region58: #{net_forward.1} parent=1 // pred_check
      _
    $region59: #{net_forward.1} parent=1 // pred_check_branch
      %65 = sbr.rel (0) target = $region61
    $region60: #{net_forward.1} parent=1 // pred_region
      _
    $region61: #{net_forward.1} parent=1 // pred_fallthru
      _
    // Predicated region
    $region62: #{net_forward.1} parent=1 // pred_check
      _
    $region63: #{net_forward.1} parent=1 // pred_check_branch
      %67 = sbr.rel (0) target = $region65
    $region64: #{net_forward.1} parent=1 // pred_region
      %68 = dma.done [#allocation5], 576
    $region65: #{net_forward.1} parent=1 // pred_fallthru
      _
    %vm69 = vcmask 523264
    %70 = vst.msk [vmem:[#allocation2] sm:$0xff] %vm69, 0.0
    %vm71 = vcmask 517120
    %72 = vst.msk [vmem:[#allocation2 + $0x8] sm:$0x3] %vm71, 0.0
    %73 = vst.msk [vmem:[#allocation2 + $0x10] sm:$0xff] %vm69, 0.0
    %74 = vst.msk [vmem:[#allocation2 + $0x18] sm:$0x3] %vm71, 0.0
    %75 = vst.msk [vmem:[#allocation2 + $0x20] sm:$0xff] %vm69, 0.0
    %76 = vst.msk [vmem:[#allocation2 + $0x28] sm:$0x3] %vm71, 0.0
    %77 = vst.msk [vmem:[#allocation2 + $0x30] sm:$0xff] %vm69, 0.0
    %78 = vst.msk [vmem:[#allocation2 + $0x38] sm:$0x3] %vm71, 0.0
    %79 = vst.msk [vmem:[#allocation2 + $0x40] sm:$0xff] %vm69, 0.0
    %80 = vst.msk [vmem:[#allocation2 + $0x48] sm:$0x3] %vm71, 0.0
    %81 = vst.msk [vmem:[#allocation2 + $0x50] sm:$0xff] %vm69, 0.0
    %82 = vst.msk [vmem:[#allocation2 + $0x58] sm:$0x3] %vm71, 0.0
    %83 = vst.msk [vmem:[#allocation2 + $0x60] sm:$0xff] %vm69, 0.0
    %84 = vst.msk [vmem:[#allocation2 + $0x68] sm:$0x3] %vm71, 0.0
    %85 = vst.msk [vmem:[#allocation2 + $0x70] sm:$0xff] %vm69, 0.0
    %86 = vst.msk [vmem:[#allocation2 + $0x78] sm:$0x3] %vm71, 0.0
    %87 = vst.msk [vmem:[#allocation2 + $0x80] sm:$0xff] %vm69, 0.0
    %88 = vst.msk [vmem:[#allocation2 + $0x88] sm:$0x3] %vm71, 0.0
    %89 = vst.msk [vmem:[#allocation2 + $0x90] sm:$0xff] %vm69, 0.0
    %90 = vst.msk [vmem:[#allocation2 + $0x98] sm:$0x3] %vm71, 0.0
    %91 = vst.msk [vmem:[#allocation2 + $0xa0] sm:$0xff] %vm69, 0.0
    %92 = vst.msk [vmem:[#allocation2 + $0xa8] sm:$0x3] %vm71, 0.0
    %93 = vst.msk [vmem:[#allocation2 + $0xb0] sm:$0xff] %vm69, 0.0
    %94 = vst.msk [vmem:[#allocation2 + $0xb8] sm:$0x3] %vm71, 0.0
    %95 = vst.msk [vmem:[#allocation2 + $0xc0] sm:$0xff] %vm69, 0.0
    %96 = vst.msk [vmem:[#allocation2 + $0xc8] sm:$0x3] %vm71, 0.0
    %97 = vst.msk [vmem:[#allocation2 + $0xd0] sm:$0xff] %vm69, 0.0
    %98 = vst.msk [vmem:[#allocation2 + $0xd8] sm:$0x3] %vm71, 0.0
    %99 = vst.msk [vmem:[#allocation2 + $0xe0] sm:$0xff] %vm69, 0.0
    %100 = vst.msk [vmem:[#allocation2 + $0xe8] sm:$0x3] %vm71, 0.0
    %101 = vst.msk [vmem:[#allocation2 + $0xf0] sm:$0xff] %vm69, 0.0
    %102 = vst.msk [vmem:[#allocation2 + $0xf8] sm:$0x3] %vm71, 0.0
    %103 = vst.msk [vmem:[#allocation2 + $0x100] sm:$0xff] %vm69, 0.0
    %104 = vst.msk [vmem:[#allocation2 + $0x108] sm:$0x3] %vm71, 0.0
    %105 = vst.msk [vmem:[#allocation2 + $0x110] sm:$0xff] %vm69, 0.0
    %106 = vst.msk [vmem:[#allocation2 + $0x118] sm:$0x3] %vm71, 0.0
    %107 = vst.msk [vmem:[#allocation2 + $0x120] sm:$0xff] %vm69, 0.0
    %108 = vst.msk [vmem:[#allocation2 + $0x128] sm:$0x3] %vm71, 0.0
    %109 = vst.msk [vmem:[#allocation2 + $0x130] sm:$0xff] %vm69, 0.0
    %110 = vst.msk [vmem:[#allocation2 + $0x138] sm:$0x3] %vm71, 0.0
    %v111 = vld [vmem:[%s0] sm:$0xff]
    %v112 = vld [vmem:[%s0 + $0x8] sm:$0xff]
    %v113 = vld [vmem:[%s0 + $0x10] sm:$0xff]
    %v114 = vld [vmem:[%s0 + $0x18] sm:$0xff]
    %v115 = vld [vmem:[%s0 + $0x20] sm:$0xff]
    %v116 = vld [vmem:[%s0 + $0x28] sm:$0xff]
    %v117 = vld [vmem:[%s0 + $0x30] sm:$0xff]
    %v118 = vld [vmem:[%s0 + $0x38] sm:$0xff]
    %v119 = vld [vmem:[%s0 + $0x40] sm:$0xff]
    %v120 = vld [vmem:[%s0 + $0x48] sm:$0xff]
    %v121 = vld [vmem:[%s0 + $0x50] sm:$0xff]
    %v122 = vld [vmem:[%s0 + $0x58] sm:$0xff]
    %v123 = vld [vmem:[%s0 + $0x60] sm:$0xff]
    %v124 = vld [vmem:[%s0 + $0x68] sm:$0xff]
    %v125 = vld [vmem:[%s0 + $0x70] sm:$0xff]
    %v126 = vld [vmem:[%s0 + $0x78] sm:$0xff]
    %s127 = scalar_lea.vmem [#allocation2], 16
    %vm128 = vcmask 31744
    %129 = vst.msk [vmem:[%s127 + $0x1] sm:$0xff] %vm128, %v111
    %130 = vst.msk [vmem:[%s127 + $0x11] sm:$0xff] %vm128, %v112
    %131 = vst.msk [vmem:[%s127 + $0x21] sm:$0xff] %vm128, %v113
    %132 = vst.msk [vmem:[%s127 + $0x31] sm:$0xff] %vm128, %v114
    %133 = vst.msk [vmem:[%s127 + $0x41] sm:$0xff] %vm128, %v115
    %134 = vst.msk [vmem:[%s127 + $0x51] sm:$0xff] %vm128, %v116
    %135 = vst.msk [vmem:[%s127 + $0x61] sm:$0xff] %vm128, %v117
    %136 = vst.msk [vmem:[%s127 + $0x71] sm:$0xff] %vm128, %v118
    %137 = vst.msk [vmem:[%s127 + $0xa1] sm:$0xff] %vm128, %v119
    %138 = vst.msk [vmem:[%s127 + $0xb1] sm:$0xff] %vm128, %v120
    %139 = vst.msk [vmem:[%s127 + $0xc1] sm:$0xff] %vm128, %v121
    %140 = vst.msk [vmem:[%s127 + $0xd1] sm:$0xff] %vm128, %v122
    %141 = vst.msk [vmem:[%s127 + $0xe1] sm:$0xff] %vm128, %v123
    %142 = vst.msk [vmem:[%s127 + $0xf1] sm:$0xff] %vm128, %v124
    %143 = vst.msk [vmem:[%s127 + $0x101] sm:$0xff] %vm128, %v125
    %144 = vst.msk [vmem:[%s127 + $0x111] sm:$0xff] %vm128, %v126
    %v145 = vld [vmem:[#allocation2] sm:$0xff]
    %v146 = vld [vmem:[#allocation2 + $0x10] sm:$0xff]
    %v147 = vld [vmem:[#allocation2 + $0x20] sm:$0xff]
    %v148 = vld [vmem:[#allocation2 + $0x30] sm:$0xff]
    %v149 = vld [vmem:[#allocation2 + $0x40] sm:$0xff]
    %v150 = vld [vmem:[#allocation2 + $0x50] sm:$0xff]
    %v151 = vld [vmem:[#allocation2 + $0x60] sm:$0xff]
    %v152 = vld [vmem:[#allocation2 + $0x70] sm:$0xff]
    %v153 = vld [vmem:[#allocation2 + $0xa0] sm:$0xff]
    %v154 = vld [vmem:[#allocation2 + $0xb0] sm:$0xff]
    %v155 = vld [vmem:[#allocation2 + $0xc0] sm:$0xff]
    %v156 = vld [vmem:[#allocation2 + $0xd0] sm:$0xff]
    %v157 = vld [vmem:[#allocation2 + $0xe0] sm:$0xff]
    %v158 = vld [vmem:[#allocation2 + $0xf0] sm:$0xff]
    %v159 = vld [vmem:[#allocation2 + $0x100] sm:$0xff]
    %v160 = vld [vmem:[#allocation2 + $0x110] sm:$0xff]
    %v161 = vld [vmem:[#allocation4] sm:$0xf]
    %v162 = vld [vmem:[#allocation2 + $0x1] sm:$0xff]
    %v163 = vld [vmem:[#allocation2 + $0x11] sm:$0xff]
    %v164 = vld [vmem:[#allocation2 + $0x21] sm:$0xff]
    %v165 = vld [vmem:[#allocation2 + $0x31] sm:$0xff]
    %v166 = vld [vmem:[#allocation2 + $0x41] sm:$0xff]
    %v167 = vld [vmem:[#allocation2 + $0x51] sm:$0xff]
    %v168 = vld [vmem:[#allocation2 + $0x61] sm:$0xff]
    %v169 = vld [vmem:[#allocation2 + $0x71] sm:$0xff]
    %v170 = vld [vmem:[#allocation2 + $0xa1] sm:$0xff]
    %v171 = vld [vmem:[#allocation2 + $0xb1] sm:$0xff]
    %v172 = vld [vmem:[#allocation2 + $0xc1] sm:$0xff]
    %v173 = vld [vmem:[#allocation2 + $0xd1] sm:$0xff]
    %v174 = vld [vmem:[#allocation2 + $0xe1] sm:$0xff]
    %v175 = vld [vmem:[#allocation2 + $0xf1] sm:$0xff]
    %v176 = vld [vmem:[#allocation2 + $0x101] sm:$0xff]
    %v177 = vld [vmem:[#allocation2 + $0x111] sm:$0xff]
    %s178 = scalar_lea.vmem [#allocation4], 4
    %v179 = vld [vmem:[%s178] sm:$0xf]
    %v181 = vsel %vm128, %v162, 0
    %v184 = vsel %vm128, %v163, 0
    %v187 = vsel %vm128, %v164, 0
    %v190 = vsel %vm128, %v165, 0
    %v193 = vsel %vm128, %v166, 0
    %v196 = vsel %vm128, %v167, 0
    %v199 = vsel %vm128, %v168, 0
    %v202 = vsel %vm128, %v169, 0
    %v205 = vsel %vm128, %v170, 0
    %v208 = vsel %vm128, %v171, 0
    %v211 = vsel %vm128, %v172, 0
    %v214 = vsel %vm128, %v173, 0
    %v217 = vsel %vm128, %v174, 0
    %v220 = vsel %vm128, %v175, 0
    %v223 = vsel %vm128, %v176, 0
    %v226 = vsel %vm128, %v177, 0
    %vm228 = vcmask 1043456
    %v230 = vsel %vm228, %v179, 0
    %232 = vmatprep.subr.mxu0 0.0
    %233 = vmatpush1.msra.mxu0 %v230
    %234 = vmatprep.subr.mxu0 0.0
    %235 = vmatpush1.msra.mxu0 0.0
    %236 = vmatprep.subr.mxu0 0.0
    %237 = vmatpush1.msra.mxu0 0.0
    %238 = vmatprep.subr.mxu0 0.0
    %239 = vmatpush1.msra.mxu0 0.0
    %240 = vmatprep.subr.mxu0 0.0
    %241 = vmatpush1.msra.mxu0 0.0
    %242 = vmatprep.subr.mxu0 0.0
    %243 = vmatpush1.msra.mxu0 0.0
    %244 = vmatprep.subr.mxu0 0.0
    %245 = vmatpush1.msra.mxu0 0.0
    %246 = vmatprep.subr.mxu0 0.0
    %247 = vmatpush1.msra.mxu0 0.0
    %248 = vmatprep.subr.mxu0 0.0
    %249 = vmatpush1.msra.mxu0 0.0
    %250 = vmatprep.subr.mxu0 0.0
    %251 = vmatpush1.msra.mxu0 0.0
    %252 = vmatprep.subr.mxu0 0.0
    %253 = vmatpush1.msra.mxu0 0.0
    %254 = vmatprep.subr.mxu0 0.0
    %255 = vmatpush1.msra.mxu0 0.0
    %256 = vmatprep.subr.mxu0 0.0
    %257 = vmatpush1.msra.mxu0 0.0
    %258 = vmatprep.subr.mxu0 0.0
    %259 = vmatpush1.msra.mxu0 0.0
    %260 = vmatprep.subr.mxu0 0.0
    %261 = vmatpush1.msra.mxu0 0.0
    %262 = vmatprep.subr.mxu0 0.0
    %263 = vmatpush1.msra.mxu0 0.0
    %264 = vmatprep.subr.mxu0 0.0
    %265 = vmatpush1.msra.mxu0 0.0
    %266 = vmatprep.subr.mxu0 0.0
    %267 = vmatpush1.msra.mxu0 0.0
    %268 = vmatprep.subr.mxu0 0.0
    %269 = vmatpush1.msra.mxu0 0.0
    %270 = vmatprep.subr.mxu0 0.0
    %271 = vmatpush1.msra.mxu0 0.0
    %272 = vmatprep.subr.mxu0 0.0
    %273 = vmatpush1.msra.mxu0 0.0
    %274 = vmatprep.subr.mxu0 0.0
    %275 = vmatpush1.msra.mxu0 0.0
    %276 = vmatprep.subr.mxu0 0.0
    %277 = vmatpush1.msra.mxu0 0.0
    %278 = vmatprep.subr.mxu0 0.0
    %279 = vmatpush1.msra.mxu0 0.0
    %280 = vmatprep.subr.mxu0 0.0
    %281 = vmatpush1.msra.mxu0 0.0
    %282 = vmatprep.subr.mxu0 0.0
    %283 = vmatpush1.msra.mxu0 0.0
    %284 = vmatprep.subr.mxu0 0.0
    %285 = vmatpush1.msra.mxu0 0.0
    %286 = vmatprep.subr.mxu0 0.0
    %287 = vmatpush1.msra.mxu0 0.0
    %288 = vmatprep.subr.mxu0 0.0
    %289 = vmatpush1.msra.mxu0 0.0
    %290 = vmatprep.subr.mxu0 0.0
    %291 = vmatpush1.msra.mxu0 0.0
    %292 = vmatprep.subr.mxu0 0.0
    %293 = vmatpush1.msra.mxu0 0.0
    %294 = vmatprep.subr.mxu0 0.0
    %295 = vmatpush1.msra.mxu0 0.0
    %296 = vmatprep.mubr.f32.mxu0 0.0
    %297 = vmatmul.mubr.f32.gmra.mrb[0].mxu0 %v181
    %v298 = vpop.f32.mrb[0].mxu0
    %v299 = vadd.f32 0.0, %v298
    %v300 = vpop.f32.mrb[0].mxu0
    %301 = vmatprep.mubr.f32.mxu0 0.0
    %302 = vmatmul.mubr.f32.gmra.mrb[0].mxu0 %v184
    %v303 = vpop.f32.mrb[0].mxu0
    %v304 = vadd.f32 0.0, %v303
    %v305 = vpop.f32.mrb[0].mxu0
    %306 = vmatprep.mubr.f32.mxu0 0.0
    %307 = vmatmul.mubr.f32.gmra.mrb[0].mxu0 %v187
    %v308 = vpop.f32.mrb[0].mxu0
    %v309 = vadd.f32 0.0, %v308
    %v310 = vpop.f32.mrb[0].mxu0
    %311 = vmatprep.mubr.f32.mxu0 0.0
    %312 = vmatmul.mubr.f32.gmra.mrb[0].mxu0 %v190
    %v313 = vpop.f32.mrb[0].mxu0
    %v314 = vadd.f32 0.0, %v313
    %v315 = vpop.f32.mrb[0].mxu0
    %316 = vmatprep.mubr.f32.mxu0 0.0
    %317 = vmatmul.mubr.f32.gmra.mrb[0].mxu0 %v193
    %v318 = vpop.f32.mrb[0].mxu0
    %v319 = vadd.f32 0.0, %v318
    %v320 = vpop.f32.mrb[0].mxu0
    %321 = vmatprep.mubr.f32.mxu0 0.0
    %322 = vmatmul.mubr.f32.gmra.mrb[0].mxu0 %v196
    %v323 = vpop.f32.mrb[0].mxu0
    %v324 = vadd.f32 0.0, %v323
    %v325 = vpop.f32.mrb[0].mxu0
    %326 = vmatprep.mubr.f32.mxu0 0.0
    %327 = vmatmul.mubr.f32.gmra.mrb[0].mxu0 %v199
    %v328 = vpop.f32.mrb[0].mxu0
    %v329 = vadd.f32 0.0, %v328
    %v330 = vpop.f32.mrb[0].mxu0
    %331 = vmatprep.mubr.f32.mxu0 0.0
    %332 = vmatmul.mubr.f32.gmra.mrb[0].mxu0 %v202
    %v333 = vpop.f32.mrb[0].mxu0
    %v334 = vadd.f32 0.0, %v333
    %v335 = vpop.f32.mrb[0].mxu0
    %336 = vmatprep.mubr.f32.mxu0 0.0
    %337 = vmatmul.mubr.f32.gmra.mrb[0].mxu0 %v205
    %v338 = vpop.f32.mrb[0].mxu0
    %v339 = vadd.f32 0.0, %v338
    %v340 = vpop.f32.mrb[0].mxu0
    %341 = vmatprep.mubr.f32.mxu0 0.0
    %342 = vmatmul.mubr.f32.gmra.mrb[0].mxu0 %v208
    %v343 = vpop.f32.mrb[0].mxu0
    %v344 = vadd.f32 0.0, %v343
    %v345 = vpop.f32.mrb[0].mxu0
    %346 = vmatprep.mubr.f32.mxu0 0.0
    %347 = vmatmul.mubr.f32.gmra.mrb[0].mxu0 %v211
    %v348 = vpop.f32.mrb[0].mxu0
    %v349 = vadd.f32 0.0, %v348
    %v350 = vpop.f32.mrb[0].mxu0
    %351 = vmatprep.mubr.f32.mxu0 0.0
    %352 = vmatmul.mubr.f32.gmra.mrb[0].mxu0 %v214
    %v353 = vpop.f32.mrb[0].mxu0
    %v354 = vadd.f32 0.0, %v353
    %v355 = vpop.f32.mrb[0].mxu0
    %356 = vmatprep.mubr.f32.mxu0 0.0
    %357 = vmatmul.mubr.f32.gmra.mrb[0].mxu0 %v217
    %v358 = vpop.f32.mrb[0].mxu0
    %v359 = vadd.f32 0.0, %v358
    %v360 = vpop.f32.mrb[0].mxu0
    %361 = vmatprep.mubr.f32.mxu0 0.0
    %362 = vmatmul.mubr.f32.gmra.mrb[0].mxu0 %v220
    %v363 = vpop.f32.mrb[0].mxu0
    %v364 = vadd.f32 0.0, %v363
    %v365 = vpop.f32.mrb[0].mxu0
    %366 = vmatprep.mubr.f32.mxu0 0.0
    %367 = vmatmul.mubr.f32.gmra.mrb[0].mxu0 %v223
    %v368 = vpop.f32.mrb[0].mxu0
    %v369 = vadd.f32 0.0, %v368
    %v370 = vpop.f32.mrb[0].mxu0
    %371 = vmatprep.mubr.f32.mxu0 0.0
    %372 = vmatmul.mubr.f32.gmra.mrb[0].mxu0 %v226
    %v373 = vpop.f32.mrb[0].mxu0
    %v374 = vadd.f32 0.0, %v373
    %v375 = vpop.f32.mrb[0].mxu0
    %376 = vdwg.mxu0
    %v378 = vsel %vm128, %v145, 0
    %v381 = vsel %vm128, %v146, 0
    %v384 = vsel %vm128, %v147, 0
    %v387 = vsel %vm128, %v148, 0
    %v390 = vsel %vm128, %v149, 0
    %v393 = vsel %vm128, %v150, 0
    %v396 = vsel %vm128, %v151, 0
    %v399 = vsel %vm128, %v152, 0
    %v402 = vsel %vm128, %v153, 0
    %v405 = vsel %vm128, %v154, 0
    %v408 = vsel %vm128, %v155, 0
    %v411 = vsel %vm128, %v156, 0
    %v414 = vsel %vm128, %v157, 0
    %v417 = vsel %vm128, %v158, 0
    %v420 = vsel %vm128, %v159, 0
    %v423 = vsel %vm128, %v160, 0
    %v426 = vsel %vm228, %v161, 0
    %428 = vmatprep.subr.mxu0 0.0
    %429 = vmatpush1.msra.mxu0 %v426
    %430 = vmatprep.subr.mxu0 0.0
    %431 = vmatpush1.msra.mxu0 0.0
    %432 = vmatprep.subr.mxu0 0.0
    %433 = vmatpush1.msra.mxu0 0.0
    %434 = vmatprep.subr.mxu0 0.0
    %435 = vmatpush1.msra.mxu0 0.0
    %436 = vmatprep.subr.mxu0 0.0
    %437 = vmatpush1.msra.mxu0 0.0
    %438 = vmatprep.subr.mxu0 0.0
    %439 = vmatpush1.msra.mxu0 0.0
    %440 = vmatprep.subr.mxu0 0.0
    %441 = vmatpush1.msra.mxu0 0.0
    %442 = vmatprep.subr.mxu0 0.0
    %443 = vmatpush1.msra.mxu0 0.0
    %444 = vmatprep.subr.mxu0 0.0
    %445 = vmatpush1.msra.mxu0 0.0
    %446 = vmatprep.subr.mxu0 0.0
    %447 = vmatpush1.msra.mxu0 0.0
    %448 = vmatprep.subr.mxu0 0.0
    %449 = vmatpush1.msra.mxu0 0.0
    %450 = vmatprep.subr.mxu0 0.0
    %451 = vmatpush1.msra.mxu0 0.0
    %452 = vmatprep.subr.mxu0 0.0
    %453 = vmatpush1.msra.mxu0 0.0
    %454 = vmatprep.subr.mxu0 0.0
    %455 = vmatpush1.msra.mxu0 0.0
    %456 = vmatprep.subr.mxu0 0.0
    %457 = vmatpush1.msra.mxu0 0.0
    %458 = vmatprep.subr.mxu0 0.0
    %459 = vmatpush1.msra.mxu0 0.0
    %460 = vmatprep.subr.mxu0 0.0
    %461 = vmatpush1.msra.mxu0 0.0
    %462 = vmatprep.subr.mxu0 0.0
    %463 = vmatpush1.msra.mxu0 0.0
    %464 = vmatprep.subr.mxu0 0.0
    %465 = vmatpush1.msra.mxu0 0.0
    %466 = vmatprep.subr.mxu0 0.0
    %467 = vmatpush1.msra.mxu0 0.0
    %468 = vmatprep.subr.mxu0 0.0
    %469 = vmatpush1.msra.mxu0 0.0
    %470 = vmatprep.subr.mxu0 0.0
    %471 = vmatpush1.msra.mxu0 0.0
    %472 = vmatprep.subr.mxu0 0.0
    %473 = vmatpush1.msra.mxu0 0.0
    %474 = vmatprep.subr.mxu0 0.0
    %475 = vmatpush1.msra.mxu0 0.0
    %476 = vmatprep.subr.mxu0 0.0
    %477 = vmatpush1.msra.mxu0 0.0
    %478 = vmatprep.subr.mxu0 0.0
    %479 = vmatpush1.msra.mxu0 0.0
    %480 = vmatprep.subr.mxu0 0.0
    %481 = vmatpush1.msra.mxu0 0.0
    %482 = vmatprep.subr.mxu0 0.0
    %483 = vmatpush1.msra.mxu0 0.0
    %484 = vmatprep.subr.mxu0 0.0
    %485 = vmatpush1.msra.mxu0 0.0
    %486 = vmatprep.subr.mxu0 0.0
    %487 = vmatpush1.msra.mxu0 0.0
    %488 = vmatprep.subr.mxu0 0.0
    %489 = vmatpush1.msra.mxu0 0.0
    %490 = vmatprep.subr.mxu0 0.0
    %491 = vmatpush1.msra.mxu0 0.0
    %492 = vmatprep.mubr.f32.mxu0 0.0
    %493 = vmatmul.mubr.f32.gmra.mrb[0].mxu0 %v378
    %v494 = vpop.f32.mrb[0].mxu0
    %v495 = vadd.f32 %v299, %v494
    %v496 = vpop.f32.mrb[0].mxu0
    %497 = vmatprep.mubr.f32.mxu0 0.0
    %498 = vmatmul.mubr.f32.gmra.mrb[0].mxu0 %v381
    %v499 = vpop.f32.mrb[0].mxu0
    %v500 = vadd.f32 %v304, %v499
    %v501 = vpop.f32.mrb[0].mxu0
    %502 = vmatprep.mubr.f32.mxu0 0.0
    %503 = vmatmul.mubr.f32.gmra.mrb[0].mxu0 %v384
    %v504 = vpop.f32.mrb[0].mxu0
    %v505 = vadd.f32 %v309, %v504
    %v506 = vpop.f32.mrb[0].mxu0
    %507 = vmatprep.mubr.f32.mxu0 0.0
    %508 = vmatmul.mubr.f32.gmra.mrb[0].mxu0 %v387
    %v509 = vpop.f32.mrb[0].mxu0
    %v510 = vadd.f32 %v314, %v509
    %v511 = vpop.f32.mrb[0].mxu0
    %512 = vmatprep.mubr.f32.mxu0 0.0
    %513 = vmatmul.mubr.f32.gmra.mrb[0].mxu0 %v390
    %v514 = vpop.f32.mrb[0].mxu0
    %v515 = vadd.f32 %v319, %v514
    %v516 = vpop.f32.mrb[0].mxu0
    %517 = vmatprep.mubr.f32.mxu0 0.0
    %518 = vmatmul.mubr.f32.gmra.mrb[0].mxu0 %v393
    %v519 = vpop.f32.mrb[0].mxu0
    %v520 = vadd.f32 %v324, %v519
    %v521 = vpop.f32.mrb[0].mxu0
    %522 = vmatprep.mubr.f32.mxu0 0.0
    %523 = vmatmul.mubr.f32.gmra.mrb[0].mxu0 %v396
    %v524 = vpop.f32.mrb[0].mxu0
    %v525 = vadd.f32 %v329, %v524
    %v526 = vpop.f32.mrb[0].mxu0
    %527 = vmatprep.mubr.f32.mxu0 0.0
    %528 = vmatmul.mubr.f32.gmra.mrb[0].mxu0 %v399
    %v529 = vpop.f32.mrb[0].mxu0
    %v530 = vadd.f32 %v334, %v529
    %v531 = vpop.f32.mrb[0].mxu0
    %532 = vmatprep.mubr.f32.mxu0 0.0
    %533 = vmatmul.mubr.f32.gmra.mrb[0].mxu0 %v402
    %v534 = vpop.f32.mrb[0].mxu0
    %v535 = vadd.f32 %v339, %v534
    %v536 = vpop.f32.mrb[0].mxu0
    %537 = vmatprep.mubr.f32.mxu0 0.0
    %538 = vmatmul.mubr.f32.gmra.mrb[0].mxu0 %v405
    %v539 = vpop.f32.mrb[0].mxu0
    %v540 = vadd.f32 %v344, %v539
    %v541 = vpop.f32.mrb[0].mxu0
    %542 = vmatprep.mubr.f32.mxu0 0.0
    %543 = vmatmul.mubr.f32.gmra.mrb[0].mxu0 %v408
    %v544 = vpop.f32.mrb[0].mxu0
    %v545 = vadd.f32 %v349, %v544
    %v546 = vpop.f32.mrb[0].mxu0
    %547 = vmatprep.mubr.f32.mxu0 0.0
    %548 = vmatmul.mubr.f32.gmra.mrb[0].mxu0 %v411
    %v549 = vpop.f32.mrb[0].mxu0
    %v550 = vadd.f32 %v354, %v549
    %v551 = vpop.f32.mrb[0].mxu0
    %552 = vmatprep.mubr.f32.mxu0 0.0
    %553 = vmatmul.mubr.f32.gmra.mrb[0].mxu0 %v414
    %v554 = vpop.f32.mrb[0].mxu0
    %v555 = vadd.f32 %v359, %v554
    %v556 = vpop.f32.mrb[0].mxu0
    %557 = vmatprep.mubr.f32.mxu0 0.0
    %558 = vmatmul.mubr.f32.gmra.mrb[0].mxu0 %v417
    %v559 = vpop.f32.mrb[0].mxu0
    %v560 = vadd.f32 %v364, %v559
    %v561 = vpop.f32.mrb[0].mxu0
    %562 = vmatprep.mubr.f32.mxu0 0.0
    %563 = vmatmul.mubr.f32.gmra.mrb[0].mxu0 %v420
    %v564 = vpop.f32.mrb[0].mxu0
    %v565 = vadd.f32 %v369, %v564
    %v566 = vpop.f32.mrb[0].mxu0
    %567 = vmatprep.mubr.f32.mxu0 0.0
    %568 = vmatmul.mubr.f32.gmra.mrb[0].mxu0 %v423
    %v569 = vpop.f32.mrb[0].mxu0
    %v570 = vadd.f32 %v374, %v569
    %v571 = vpop.f32.mrb[0].mxu0
    %572 = vdwg.mxu0
    %v573 = vld [vmem:[#allocation2 + $0x2] sm:$0xff]
    %v574 = vld [vmem:[#allocation2 + $0x12] sm:$0xff]
    %v575 = vld [vmem:[#allocation2 + $0x22] sm:$0xff]
    %v576 = vld [vmem:[#allocation2 + $0x32] sm:$0xff]
    %v577 = vld [vmem:[#allocation2 + $0x42] sm:$0xff]
    %v578 = vld [vmem:[#allocation2 + $0x52] sm:$0xff]
    %v579 = vld [vmem:[#allocation2 + $0x62] sm:$0xff]
    %v580 = vld [vmem:[#allocation2 + $0x72] sm:$0xff]
    %v581 = vld [vmem:[#allocation2 + $0xa2] sm:$0xff]
    %v582 = vld [vmem:[#allocation2 + $0xb2] sm:$0xff]
    %v583 = vld [vmem:[#allocation2 + $0xc2] sm:$0xff]
    %v584 = vld [vmem:[#allocation2 + $0xd2] sm:$0xff]
    %v585 = vld [vmem:[#allocation2 + $0xe2] sm:$0xff]
    %v586 = vld [vmem:[#allocation2 + $0xf2] sm:$0xff]
    %v587 = vld [vmem:[#allocation2 + $0x102] sm:$0xff]
    %v588 = vld [vmem:[#allocation2 + $0x112] sm:$0xff]
    %s589 = scalar_lea.vmem [#allocation4], 8
    %v590 = vld [vmem:[%s589] sm:$0xf]
    %v592 = vsel %vm128, %v573, 0
    %v595 = vsel %vm128, %v574, 0
    %v598 = vsel %vm128, %v575, 0
    %v601 = vsel %vm128, %v576, 0
    %v604 = vsel %vm128, %v577, 0
    %v607 = vsel %vm128, %v578, 0
    %v610 = vsel %vm128, %v579, 0
    %v613 = vsel %vm128, %v580, 0
    %v616 = vsel %vm128, %v581, 0
    %v619 = vsel %vm128, %v582, 0
    %v622 = vsel %vm128, %v583, 0
    %v625 = vsel %vm128, %v584, 0
    %v628 = vsel %vm128, %v585, 0
    %v631 = vsel %vm128, %v586, 0
    %v634 = vsel %vm128, %v587, 0
    %v637 = vsel %vm128, %v588, 0
    %v640 = vsel %vm228, %v590, 0
    %642 = vmatprep.subr.mxu0 0.0
    %643 = vmatpush1.msra.mxu0 %v640
    %644 = vmatprep.subr.mxu0 0.0
    %645 = vmatpush1.msra.mxu0 0.0
    %646 = vmatprep.subr.mxu0 0.0
    %647 = vmatpush1.msra.mxu0 0.0
    %648 = vmatprep.subr.mxu0 0.0
    %649 = vmatpush1.msra.mxu0 0.0
    %650 = vmatprep.subr.mxu0 0.0
    %651 = vmatpush1.msra.mxu0 0.0
    %652 = vmatprep.subr.mxu0 0.0
    %653 = vmatpush1.msra.mxu0 0.0
    %654 = vmatprep.subr.mxu0 0.0
    %655 = vmatpush1.msra.mxu0 0.0
    %656 = vmatprep.subr.mxu0 0.0
    %657 = vmatpush1.msra.mxu0 0.0
    %658 = vmatprep.subr.mxu0 0.0
    %659 = vmatpush1.msra.mxu0 0.0
    %660 = vmatprep.subr.mxu0 0.0
    %661 = vmatpush1.msra.mxu0 0.0
    %662 = vmatprep.subr.mxu0 0.0
    %663 = vmatpush1.msra.mxu0 0.0
    %664 = vmatprep.subr.mxu0 0.0
    %665 = vmatpush1.msra.mxu0 0.0
    %666 = vmatprep.subr.mxu0 0.0
    %667 = vmatpush1.msra.mxu0 0.0
    %668 = vmatprep.subr.mxu0 0.0
    %669 = vmatpush1.msra.mxu0 0.0
    %670 = vmatprep.subr.mxu0 0.0
    %671 = vmatpush1.msra.mxu0 0.0
    %672 = vmatprep.subr.mxu0 0.0
    %673 = vmatpush1.msra.mxu0 0.0
    %674 = vmatprep.subr.mxu0 0.0
    %675 = vmatpush1.msra.mxu0 0.0
    %676 = vmatprep.subr.mxu0 0.0
    %677 = vmatpush1.msra.mxu0 0.0
    %678 = vmatprep.subr.mxu0 0.0
    %679 = vmatpush1.msra.mxu0 0.0
    %680 = vmatprep.subr.mxu0 0.0
    %681 = vmatpush1.msra.mxu0 0.0
    %682 = vmatprep.subr.mxu0 0.0
    %683 = vmatpush1.msra.mxu0 0.0
    %684 = vmatprep.subr.mxu0 0.0
    %685 = vmatpush1.msra.mxu0 0.0
    %686 = vmatprep.subr.mxu0 0.0
    %687 = vmatpush1.msra.mxu0 0.0
    %688 = vmatprep.subr.mxu0 0.0
    %689 = vmatpush1.msra.mxu0 0.0
    %690 = vmatprep.subr.mxu0 0.0
    %691 = vmatpush1.msra.mxu0 0.0
    %692 = vmatprep.subr.mxu0 0.0
    %693 = vmatpush1.msra.mxu0 0.0
    %694 = vmatprep.subr.mxu0 0.0
    %695 = vmatpush1.msra.mxu0 0.0
    %696 = vmatprep.subr.mxu0 0.0
    %697 = vmatpush1.msra.mxu0 0.0
    %698 = vmatprep.subr.mxu0 0.0
    %699 = vmatpush1.msra.mxu0 0.0
    %700 = vmatprep.subr.mxu0 0.0
    %701 = vmatpush1.msra.mxu0 0.0
    %702 = vmatprep.subr.mxu0 0.0
    %703 = vmatpush1.msra.mxu0 0.0
    %704 = vmatprep.subr.mxu0 0.0
    %705 = vmatpush1.msra.mxu0 0.0
    %706 = vmatprep.mubr.f32.mxu0 0.0
    %707 = vmatmul.mubr.f32.gmra.mrb[0].mxu0 %v592
    %v708 = vpop.f32.mrb[0].mxu0
    %v709 = vadd.f32 0.0, %v708
    %v710 = vpop.f32.mrb[0].mxu0
    %711 = vmatprep.mubr.f32.mxu0 0.0
    %712 = vmatmul.mubr.f32.gmra.mrb[0].mxu0 %v595
    %v713 = vpop.f32.mrb[0].mxu0
    %v714 = vadd.f32 0.0, %v713
    %v715 = vpop.f32.mrb[0].mxu0
    %716 = vmatprep.mubr.f32.mxu0 0.0
    %717 = vmatmul.mubr.f32.gmra.mrb[0].mxu0 %v598
    %v718 = vpop.f32.mrb[0].mxu0
    %v719 = vadd.f32 0.0, %v718
    %v720 = vpop.f32.mrb[0].mxu0
    %721 = vmatprep.mubr.f32.mxu0 0.0
    %722 = vmatmul.mubr.f32.gmra.mrb[0].mxu0 %v601
    %v723 = vpop.f32.mrb[0].mxu0
    %v724 = vadd.f32 0.0, %v723
    %v725 = vpop.f32.mrb[0].mxu0
    %726 = vmatprep.mubr.f32.mxu0 0.0
    %727 = vmatmul.mubr.f32.gmra.mrb[0].mxu0 %v604
    %v728 = vpop.f32.mrb[0].mxu0
    %v729 = vadd.f32 0.0, %v728
    %v730 = vpop.f32.mrb[0].mxu0
    %731 = vmatprep.mubr.f32.mxu0 0.0
    %732 = vmatmul.mubr.f32.gmra.mrb[0].mxu0 %v607
    %v733 = vpop.f32.mrb[0].mxu0
    %v734 = vadd.f32 0.0, %v733
    %v735 = vpop.f32.mrb[0].mxu0
    %736 = vmatprep.mubr.f32.mxu0 0.0
    %737 = vmatmul.mubr.f32.gmra.mrb[0].mxu0 %v610
    %v738 = vpop.f32.mrb[0].mxu0
    %v739 = vadd.f32 0.0, %v738
    %v740 = vpop.f32.mrb[0].mxu0
    %741 = vmatprep.mubr.f32.mxu0 0.0
    %742 = vmatmul.mubr.f32.gmra.mrb[0].mxu0 %v613
    %v743 = vpop.f32.mrb[0].mxu0
    %v744 = vadd.f32 0.0, %v743
    %v745 = vpop.f32.mrb[0].mxu0
    %746 = vmatprep.mubr.f32.mxu0 0.0
    %747 = vmatmul.mubr.f32.gmra.mrb[0].mxu0 %v616
    %v748 = vpop.f32.mrb[0].mxu0
    %v749 = vadd.f32 0.0, %v748
    %v750 = vpop.f32.mrb[0].mxu0
    %751 = vmatprep.mubr.f32.mxu0 0.0
    %752 = vmatmul.mubr.f32.gmra.mrb[0].mxu0 %v619
    %v753 = vpop.f32.mrb[0].mxu0
    %v754 = vadd.f32 0.0, %v753
    %v755 = vpop.f32.mrb[0].mxu0
    %756 = vmatprep.mubr.f32.mxu0 0.0
    %757 = vmatmul.mubr.f32.gmra.mrb[0].mxu0 %v622
    %v758 = vpop.f32.mrb[0].mxu0
    %v759 = vadd.f32 0.0, %v758
    %v760 = vpop.f32.mrb[0].mxu0
    %761 = vmatprep.mubr.f32.mxu0 0.0
    %762 = vmatmul.mubr.f32.gmra.mrb[0].mxu0 %v625
    %v763 = vpop.f32.mrb[0].mxu0
    %v764 = vadd.f32 0.0, %v763
    %v765 = vpop.f32.mrb[0].mxu0
    %766 = vmatprep.mubr.f32.mxu0 0.0
    %767 = vmatmul.mubr.f32.gmra.mrb[0].mxu0 %v628
    %v768 = vpop.f32.mrb[0].mxu0
    %v769 = vadd.f32 0.0, %v768
    %v770 = vpop.f32.mrb[0].mxu0
    %771 = vmatprep.mubr.f32.mxu0 0.0
    %772 = vmatmul.mubr.f32.gmra.mrb[0].mxu0 %v631
    %v773 = vpop.f32.mrb[0].mxu0
    %v774 = vadd.f32 0.0, %v773
    %v775 = vpop.f32.mrb[0].mxu0
    %776 = vmatprep.mubr.f32.mxu0 0.0
    %777 = vmatmul.mubr.f32.gmra.mrb[0].mxu0 %v634
    %v778 = vpop.f32.mrb[0].mxu0
    %v779 = vadd.f32 0.0, %v778
    %v780 = vpop.f32.mrb[0].mxu0
    %781 = vmatprep.mubr.f32.mxu0 0.0
    %782 = vmatmul.mubr.f32.gmra.mrb[0].mxu0 %v637
    %v783 = vpop.f32.mrb[0].mxu0
    %v784 = vadd.f32 0.0, %v783
    %v785 = vpop.f32.mrb[0].mxu0
    %786 = vdwg.mxu0
    %v787 = vadd.f32 %v495, %v709
    %v788 = vadd.f32 %v500, %v714
    %v789 = vadd.f32 %v505, %v719
    %v790 = vadd.f32 %v510, %v724
    %v791 = vadd.f32 %v515, %v729
    %v792 = vadd.f32 %v520, %v734
    %v793 = vadd.f32 %v525, %v739
    %v794 = vadd.f32 %v530, %v744
    %v795 = vadd.f32 %v535, %v749
    %v796 = vadd.f32 %v540, %v754
    %v797 = vadd.f32 %v545, %v759
    %v798 = vadd.f32 %v550, %v764
    %v799 = vadd.f32 %v555, %v769
    %v800 = vadd.f32 %v560, %v774
    %v801 = vadd.f32 %v565, %v779
    %v802 = vadd.f32 %v570, %v784
    %v803 = vld [vmem:[%s127] sm:$0xff]
    %v804 = vld [vmem:[%s127 + $0x10] sm:$0xff]
    %v805 = vld [vmem:[%s127 + $0x20] sm:$0xff]
    %v806 = vld [vmem:[%s127 + $0x30] sm:$0xff]
    %v807 = vld [vmem:[%s127 + $0x40] sm:$0xff]
    %v808 = vld [vmem:[%s127 + $0x50] sm:$0xff]
    %v809 = vld [vmem:[%s127 + $0x60] sm:$0xff]
    %v810 = vld [vmem:[%s127 + $0x70] sm:$0xff]
    %v811 = vld [vmem:[%s127 + $0xa0] sm:$0xff]
    %v812 = vld [vmem:[%s127 + $0xb0] sm:$0xff]
    %v813 = vld [vmem:[%s127 + $0xc0] sm:$0xff]
    %v814 = vld [vmem:[%s127 + $0xd0] sm:$0xff]
    %v815 = vld [vmem:[%s127 + $0xe0] sm:$0xff]
    %v816 = vld [vmem:[%s127 + $0xf0] sm:$0xff]
    %v817 = vld [vmem:[%s127 + $0x100] sm:$0xff]
    %v818 = vld [vmem:[%s127 + $0x110] sm:$0xff]
    %s819 = scalar_lea.vmem [#allocation4], 12
    %v820 = vld [vmem:[%s819] sm:$0xf]
    %v822 = vsel %vm128, %v803, 0
    %v825 = vsel %vm128, %v804, 0
    %v828 = vsel %vm128, %v805, 0
    %v831 = vsel %vm128, %v806, 0
    %v834 = vsel %vm128, %v807, 0
    %v837 = vsel %vm128, %v808, 0
    %v840 = vsel %vm128, %v809, 0
    %v843 = vsel %vm128, %v810, 0
    %v846 = vsel %vm128, %v811, 0
    %v849 = vsel %vm128, %v812, 0
    %v852 = vsel %vm128, %v813, 0
    %v855 = vsel %vm128, %v814, 0
    %v858 = vsel %vm128, %v815, 0
    %v861 = vsel %vm128, %v816, 0
    %v864 = vsel %vm128, %v817, 0
    %v867 = vsel %vm128, %v818, 0
    %v870 = vsel %vm228, %v820, 0
    %872 = vmatprep.subr.mxu0 0.0
    %873 = vmatpush1.msra.mxu0 %v870
    %874 = vmatprep.subr.mxu0 0.0
    %875 = vmatpush1.msra.mxu0 0.0
    %876 = vmatprep.subr.mxu0 0.0
    %877 = vmatpush1.msra.mxu0 0.0
    %878 = vmatprep.subr.mxu0 0.0
    %879 = vmatpush1.msra.mxu0 0.0
    %880 = vmatprep.subr.mxu0 0.0
    %881 = vmatpush1.msra.mxu0 0.0
    %882 = vmatprep.subr.mxu0 0.0
    %883 = vmatpush1.msra.mxu0 0.0
    %884 = vmatprep.subr.mxu0 0.0
    %885 = vmatpush1.msra.mxu0 0.0
    %886 = vmatprep.subr.mxu0 0.0
    %887 = vmatpush1.msra.mxu0 0.0
    %888 = vmatprep.subr.mxu0 0.0
    %889 = vmatpush1.msra.mxu0 0.0
    %890 = vmatprep.subr.mxu0 0.0
    %891 = vmatpush1.msra.mxu0 0.0
    %892 = vmatprep.subr.mxu0 0.0
    %893 = vmatpush1.msra.mxu0 0.0
    %894 = vmatprep.subr.mxu0 0.0
    %895 = vmatpush1.msra.mxu0 0.0
    %896 = vmatprep.subr.mxu0 0.0
    %897 = vmatpush1.msra.mxu0 0.0
    %898 = vmatprep.subr.mxu0 0.0
    %899 = vmatpush1.msra.mxu0 0.0
    %900 = vmatprep.subr.mxu0 0.0
    %901 = vmatpush1.msra.mxu0 0.0
    %902 = vmatprep.subr.mxu0 0.0
    %903 = vmatpush1.msra.mxu0 0.0
    %904 = vmatprep.subr.mxu0 0.0
    %905 = vmatpush1.msra.mxu0 0.0
    %906 = vmatprep.subr.mxu0 0.0
    %907 = vmatpush1.msra.mxu0 0.0
    %908 = vmatprep.subr.mxu0 0.0
    %909 = vmatpush1.msra.mxu0 0.0
    %910 = vmatprep.subr.mxu0 0.0
    %911 = vmatpush1.msra.mxu0 0.0
    %912 = vmatprep.subr.mxu0 0.0
    %913 = vmatpush1.msra.mxu0 0.0
    %914 = vmatprep.subr.mxu0 0.0
    %915 = vmatpush1.msra.mxu0 0.0
    %916 = vmatprep.subr.mxu0 0.0
    %917 = vmatpush1.msra.mxu0 0.0
    %918 = vmatprep.subr.mxu0 0.0
    %919 = vmatpush1.msra.mxu0 0.0
    %920 = vmatprep.subr.mxu0 0.0
    %921 = vmatpush1.msra.mxu0 0.0
    %922 = vmatprep.subr.mxu0 0.0
    %923 = vmatpush1.msra.mxu0 0.0
    %924 = vmatprep.subr.mxu0 0.0
    %925 = vmatpush1.msra.mxu0 0.0
    %926 = vmatprep.subr.mxu0 0.0
    %927 = vmatpush1.msra.mxu0 0.0
    %928 = vmatprep.subr.mxu0 0.0
    %929 = vmatpush1.msra.mxu0 0.0
    %930 = vmatprep.subr.mxu0 0.0
    %931 = vmatpush1.msra.mxu0 0.0
    %932 = vmatprep.subr.mxu0 0.0
    %933 = vmatpush1.msra.mxu0 0.0
    %934 = vmatprep.subr.mxu0 0.0
    %935 = vmatpush1.msra.mxu0 0.0
    %936 = vmatprep.mubr.f32.mxu0 0.0
    %937 = vmatmul.mubr.f32.gmra.mrb[0].mxu0 %v822
    %v938 = vpop.f32.mrb[0].mxu0
    %v939 = vadd.f32 0.0, %v938
    %v940 = vpop.f32.mrb[0].mxu0
    %941 = vmatprep.mubr.f32.mxu0 0.0
    %942 = vmatmul.mubr.f32.gmra.mrb[0].mxu0 %v825
    %v943 = vpop.f32.mrb[0].mxu0
    %v944 = vadd.f32 0.0, %v943
    %v945 = vpop.f32.mrb[0].mxu0
    %946 = vmatprep.mubr.f32.mxu0 0.0
    %947 = vmatmul.mubr.f32.gmra.mrb[0].mxu0 %v828
    %v948 = vpop.f32.mrb[0].mxu0
    %v949 = vadd.f32 0.0, %v948
    %v950 = vpop.f32.mrb[0].mxu0
    %951 = vmatprep.mubr.f32.mxu0 0.0
    %952 = vmatmul.mubr.f32.gmra.mrb[0].mxu0 %v831
    %v953 = vpop.f32.mrb[0].mxu0
    %v954 = vadd.f32 0.0, %v953
    %v955 = vpop.f32.mrb[0].mxu0
    %956 = vmatprep.mubr.f32.mxu0 0.0
    %957 = vmatmul.mubr.f32.gmra.mrb[0].mxu0 %v834
    %v958 = vpop.f32.mrb[0].mxu0
    %v959 = vadd.f32 0.0, %v958
    %v960 = vpop.f32.mrb[0].mxu0
    %961 = vmatprep.mubr.f32.mxu0 0.0
    %962 = vmatmul.mubr.f32.gmra.mrb[0].mxu0 %v837
    %v963 = vpop.f32.mrb[0].mxu0
    %v964 = vadd.f32 0.0, %v963
    %v965 = vpop.f32.mrb[0].mxu0
    %966 = vmatprep.mubr.f32.mxu0 0.0
    %967 = vmatmul.mubr.f32.gmra.mrb[0].mxu0 %v840
    %v968 = vpop.f32.mrb[0].mxu0
    %v969 = vadd.f32 0.0, %v968
    %v970 = vpop.f32.mrb[0].mxu0
    %971 = vmatprep.mubr.f32.mxu0 0.0
    %972 = vmatmul.mubr.f32.gmra.mrb[0].mxu0 %v843
    %v973 = vpop.f32.mrb[0].mxu0
    %v974 = vadd.f32 0.0, %v973
    %v975 = vpop.f32.mrb[0].mxu0
    %976 = vmatprep.mubr.f32.mxu0 0.0
    %977 = vmatmul.mubr.f32.gmra.mrb[0].mxu0 %v846
    %v978 = vpop.f32.mrb[0].mxu0
    %v979 = vadd.f32 0.0, %v978
    %v980 = vpop.f32.mrb[0].mxu0
    %981 = vmatprep.mubr.f32.mxu0 0.0
    %982 = vmatmul.mubr.f32.gmra.mrb[0].mxu0 %v849
    %v983 = vpop.f32.mrb[0].mxu0
    %v984 = vadd.f32 0.0, %v983
    %v985 = vpop.f32.mrb[0].mxu0
    %986 = vmatprep.mubr.f32.mxu0 0.0
    %987 = vmatmul.mubr.f32.gmra.mrb[0].mxu0 %v852
    %v988 = vpop.f32.mrb[0].mxu0
    %v989 = vadd.f32 0.0, %v988
    %v990 = vpop.f32.mrb[0].mxu0
    %991 = vmatprep.mubr.f32.mxu0 0.0
    %992 = vmatmul.mubr.f32.gmra.mrb[0].mxu0 %v855
    %v993 = vpop.f32.mrb[0].mxu0
    %v994 = vadd.f32 0.0, %v993
    %v995 = vpop.f32.mrb[0].mxu0
    %996 = vmatprep.mubr.f32.mxu0 0.0
    %997 = vmatmul.mubr.f32.gmra.mrb[0].mxu0 %v858
    %v998 = vpop.f32.mrb[0].mxu0
    %v999 = vadd.f32 0.0, %v998
    %v1000 = vpop.f32.mrb[0].mxu0
    %1001 = vmatprep.mubr.f32.mxu0 0.0
    %1002 = vmatmul.mubr.f32.gmra.mrb[0].mxu0 %v861
    %v1003 = vpop.f32.mrb[0].mxu0
    %v1004 = vadd.f32 0.0, %v1003
    %v1005 = vpop.f32.mrb[0].mxu0
    %1006 = vmatprep.mubr.f32.mxu0 0.0
    %1007 = vmatmul.mubr.f32.gmra.mrb[0].mxu0 %v864
    %v1008 = vpop.f32.mrb[0].mxu0
    %v1009 = vadd.f32 0.0, %v1008
    %v1010 = vpop.f32.mrb[0].mxu0
    %1011 = vmatprep.mubr.f32.mxu0 0.0
    %1012 = vmatmul.mubr.f32.gmra.mrb[0].mxu0 %v867
    %v1013 = vpop.f32.mrb[0].mxu0
    %v1014 = vadd.f32 0.0, %v1013
    %v1015 = vpop.f32.mrb[0].mxu0
    %1016 = vdwg.mxu0
    %v1017 = vadd.f32 %v787, %v939
    %v1018 = vadd.f32 %v788, %v944
    %v1019 = vadd.f32 %v789, %v949
    %v1020 = vadd.f32 %v790, %v954
    %v1021 = vadd.f32 %v791, %v959
    %v1022 = vadd.f32 %v792, %v964
    %v1023 = vadd.f32 %v793, %v969
    %v1024 = vadd.f32 %v794, %v974
    %v1025 = vadd.f32 %v795, %v979
    %v1026 = vadd.f32 %v796, %v984
    %v1027 = vadd.f32 %v797, %v989
    %v1028 = vadd.f32 %v798, %v994
    %v1029 = vadd.f32 %v799, %v999
    %v1030 = vadd.f32 %v800, %v1004
    %v1031 = vadd.f32 %v801, %v1009
    %v1032 = vadd.f32 %v802, %v1014
    %v1033 = vld [vmem:[%s127 + $0x1] sm:$0xff]
    %v1034 = vld [vmem:[%s127 + $0x11] sm:$0xff]
    %v1035 = vld [vmem:[%s127 + $0x21] sm:$0xff]
    %v1036 = vld [vmem:[%s127 + $0x31] sm:$0xff]
    %v1037 = vld [vmem:[%s127 + $0x41] sm:$0xff]
    %v1038 = vld [vmem:[%s127 + $0x51] sm:$0xff]
    %v1039 = vld [vmem:[%s127 + $0x61] sm:$0xff]
    %v1040 = vld [vmem:[%s127 + $0x71] sm:$0xff]
    %v1041 = vld [vmem:[%s127 + $0xa1] sm:$0xff]
    %v1042 = vld [vmem:[%s127 + $0xb1] sm:$0xff]
    %v1043 = vld [vmem:[%s127 + $0xc1] sm:$0xff]
    %v1044 = vld [vmem:[%s127 + $0xd1] sm:$0xff]
    %v1045 = vld [vmem:[%s127 + $0xe1] sm:$0xff]
    %v1046 = vld [vmem:[%s127 + $0xf1] sm:$0xff]
    %v1047 = vld [vmem:[%s127 + $0x101] sm:$0xff]
    %v1048 = vld [vmem:[%s127 + $0x111] sm:$0xff]
    %s1049 = scalar_lea.vmem [#allocation4], 16
    %v1050 = vld [vmem:[%s1049] sm:$0xf]
    %v1052 = vsel %vm128, %v1033, 0
    %v1055 = vsel %vm128, %v1034, 0
    %v1058 = vsel %vm128, %v1035, 0
    %v1061 = vsel %vm128, %v1036, 0
    %v1064 = vsel %vm128, %v1037, 0
    %v1067 = vsel %vm128, %v1038, 0
    %v1070 = vsel %vm128, %v1039, 0
    %v1073 = vsel %vm128, %v1040, 0
    %v1076 = vsel %vm128, %v1041, 0
    %v1079 = vsel %vm128, %v1042, 0
    %v1082 = vsel %vm128, %v1043, 0
    %v1085 = vsel %vm128, %v1044, 0
    %v1088 = vsel %vm128, %v1045, 0
    %v1091 = vsel %vm128, %v1046, 0
    %v1094 = vsel %vm128, %v1047, 0
    %v1097 = vsel %vm128, %v1048, 0
    %v1100 = vsel %vm228, %v1050, 0
    %1102 = vmatprep.subr.mxu0 0.0
    %1103 = vmatpush1.msra.mxu0 %v1100
    %1104 = vmatprep.subr.mxu0 0.0
    %1105 = vmatpush1.msra.mxu0 0.0
    %1106 = vmatprep.subr.mxu0 0.0
    %1107 = vmatpush1.msra.mxu0 0.0
    %1108 = vmatprep.subr.mxu0 0.0
    %1109 = vmatpush1.msra.mxu0 0.0
    %1110 = vmatprep.subr.mxu0 0.0
    %1111 = vmatpush1.msra.mxu0 0.0
    %1112 = vmatprep.subr.mxu0 0.0
    %1113 = vmatpush1.msra.mxu0 0.0
    %1114 = vmatprep.subr.mxu0 0.0
    %1115 = vmatpush1.msra.mxu0 0.0
    %1116 = vmatprep.subr.mxu0 0.0
    %1117 = vmatpush1.msra.mxu0 0.0
    %1118 = vmatprep.subr.mxu0 0.0
    %1119 = vmatpush1.msra.mxu0 0.0
    %1120 = vmatprep.subr.mxu0 0.0
    %1121 = vmatpush1.msra.mxu0 0.0
    %1122 = vmatprep.subr.mxu0 0.0
    %1123 = vmatpush1.msra.mxu0 0.0
    %1124 = vmatprep.subr.mxu0 0.0
    %1125 = vmatpush1.msra.mxu0 0.0
    %1126 = vmatprep.subr.mxu0 0.0
    %1127 = vmatpush1.msra.mxu0 0.0
    %1128 = vmatprep.subr.mxu0 0.0
    %1129 = vmatpush1.msra.mxu0 0.0
    %1130 = vmatprep.subr.mxu0 0.0
    %1131 = vmatpush1.msra.mxu0 0.0
    %1132 = vmatprep.subr.mxu0 0.0
    %1133 = vmatpush1.msra.mxu0 0.0
    %1134 = vmatprep.subr.mxu0 0.0
    %1135 = vmatpush1.msra.mxu0 0.0
    %1136 = vmatprep.subr.mxu0 0.0
    %1137 = vmatpush1.msra.mxu0 0.0
    %1138 = vmatprep.subr.mxu0 0.0
    %1139 = vmatpush1.msra.mxu0 0.0
    %1140 = vmatprep.subr.mxu0 0.0
    %1141 = vmatpush1.msra.mxu0 0.0
    %1142 = vmatprep.subr.mxu0 0.0
    %1143 = vmatpush1.msra.mxu0 0.0
    %1144 = vmatprep.subr.mxu0 0.0
    %1145 = vmatpush1.msra.mxu0 0.0
    %1146 = vmatprep.subr.mxu0 0.0
    %1147 = vmatpush1.msra.mxu0 0.0
    %1148 = vmatprep.subr.mxu0 0.0
    %1149 = vmatpush1.msra.mxu0 0.0
    %1150 = vmatprep.subr.mxu0 0.0
    %1151 = vmatpush1.msra.mxu0 0.0
    %1152 = vmatprep.subr.mxu0 0.0
    %1153 = vmatpush1.msra.mxu0 0.0
    %1154 = vmatprep.subr.mxu0 0.0
    %1155 = vmatpush1.msra.mxu0 0.0
    %1156 = vmatprep.subr.mxu0 0.0
    %1157 = vmatpush1.msra.mxu0 0.0
    %1158 = vmatprep.subr.mxu0 0.0
    %1159 = vmatpush1.msra.mxu0 0.0
    %1160 = vmatprep.subr.mxu0 0.0
    %1161 = vmatpush1.msra.mxu0 0.0
    %1162 = vmatprep.subr.mxu0 0.0
    %1163 = vmatpush1.msra.mxu0 0.0
    %1164 = vmatprep.subr.mxu0 0.0
    %1165 = vmatpush1.msra.mxu0 0.0
    %1166 = vmatprep.mubr.f32.mxu0 0.0
    %1167 = vmatmul.mubr.f32.gmra.mrb[0].mxu0 %v1052
    %v1168 = vpop.f32.mrb[0].mxu0
    %v1169 = vadd.f32 0.0, %v1168
    %v1170 = vpop.f32.mrb[0].mxu0
    %1171 = vmatprep.mubr.f32.mxu0 0.0
    %1172 = vmatmul.mubr.f32.gmra.mrb[0].mxu0 %v1055
    %v1173 = vpop.f32.mrb[0].mxu0
    %v1174 = vadd.f32 0.0, %v1173
    %v1175 = vpop.f32.mrb[0].mxu0
    %1176 = vmatprep.mubr.f32.mxu0 0.0
    %1177 = vmatmul.mubr.f32.gmra.mrb[0].mxu0 %v1058
    %v1178 = vpop.f32.mrb[0].mxu0
    %v1179 = vadd.f32 0.0, %v1178
    %v1180 = vpop.f32.mrb[0].mxu0
    %1181 = vmatprep.mubr.f32.mxu0 0.0
    %1182 = vmatmul.mubr.f32.gmra.mrb[0].mxu0 %v1061
    %v1183 = vpop.f32.mrb[0].mxu0
    %v1184 = vadd.f32 0.0, %v1183
    %v1185 = vpop.f32.mrb[0].mxu0
    %1186 = vmatprep.mubr.f32.mxu0 0.0
    %1187 = vmatmul.mubr.f32.gmra.mrb[0].mxu0 %v1064
    %v1188 = vpop.f32.mrb[0].mxu0
    %v1189 = vadd.f32 0.0, %v1188
    %v1190 = vpop.f32.mrb[0].mxu0
    %1191 = vmatprep.mubr.f32.mxu0 0.0
    %1192 = vmatmul.mubr.f32.gmra.mrb[0].mxu0 %v1067
    %v1193 = vpop.f32.mrb[0].mxu0
    %v1194 = vadd.f32 0.0, %v1193
    %v1195 = vpop.f32.mrb[0].mxu0
    %1196 = vmatprep.mubr.f32.mxu0 0.0
    %1197 = vmatmul.mubr.f32.gmra.mrb[0].mxu0 %v1070
    %v1198 = vpop.f32.mrb[0].mxu0
    %v1199 = vadd.f32 0.0, %v1198
    %v1200 = vpop.f32.mrb[0].mxu0
    %1201 = vmatprep.mubr.f32.mxu0 0.0
    %1202 = vmatmul.mubr.f32.gmra.mrb[0].mxu0 %v1073
    %v1203 = vpop.f32.mrb[0].mxu0
    %v1204 = vadd.f32 0.0, %v1203
    %v1205 = vpop.f32.mrb[0].mxu0
    %1206 = vmatprep.mubr.f32.mxu0 0.0
    %1207 = vmatmul.mubr.f32.gmra.mrb[0].mxu0 %v1076
    %v1208 = vpop.f32.mrb[0].mxu0
    %v1209 = vadd.f32 0.0, %v1208
    %v1210 = vpop.f32.mrb[0].mxu0
    %1211 = vmatprep.mubr.f32.mxu0 0.0
    %1212 = vmatmul.mubr.f32.gmra.mrb[0].mxu0 %v1079
    %v1213 = vpop.f32.mrb[0].mxu0
    %v1214 = vadd.f32 0.0, %v1213
    %v1215 = vpop.f32.mrb[0].mxu0
    %1216 = vmatprep.mubr.f32.mxu0 0.0
    %1217 = vmatmul.mubr.f32.gmra.mrb[0].mxu0 %v1082
    %v1218 = vpop.f32.mrb[0].mxu0
    %v1219 = vadd.f32 0.0, %v1218
    %v1220 = vpop.f32.mrb[0].mxu0
    %1221 = vmatprep.mubr.f32.mxu0 0.0
    %1222 = vmatmul.mubr.f32.gmra.mrb[0].mxu0 %v1085
    %v1223 = vpop.f32.mrb[0].mxu0
    %v1224 = vadd.f32 0.0, %v1223
    %v1225 = vpop.f32.mrb[0].mxu0
    %1226 = vmatprep.mubr.f32.mxu0 0.0
    %1227 = vmatmul.mubr.f32.gmra.mrb[0].mxu0 %v1088
    %v1228 = vpop.f32.mrb[0].mxu0
    %v1229 = vadd.f32 0.0, %v1228
    %v1230 = vpop.f32.mrb[0].mxu0
    %1231 = vmatprep.mubr.f32.mxu0 0.0
    %1232 = vmatmul.mubr.f32.gmra.mrb[0].mxu0 %v1091
    %v1233 = vpop.f32.mrb[0].mxu0
    %v1234 = vadd.f32 0.0, %v1233
    %v1235 = vpop.f32.mrb[0].mxu0
    %1236 = vmatprep.mubr.f32.mxu0 0.0
    %1237 = vmatmul.mubr.f32.gmra.mrb[0].mxu0 %v1094
    %v1238 = vpop.f32.mrb[0].mxu0
    %v1239 = vadd.f32 0.0, %v1238
    %v1240 = vpop.f32.mrb[0].mxu0
    %1241 = vmatprep.mubr.f32.mxu0 0.0
    %1242 = vmatmul.mubr.f32.gmra.mrb[0].mxu0 %v1097
    %v1243 = vpop.f32.mrb[0].mxu0
    %v1244 = vadd.f32 0.0, %v1243
    %v1245 = vpop.f32.mrb[0].mxu0
    %1246 = vdwg.mxu0
    %v1247 = vadd.f32 %v1017, %v1169
    %v1248 = vadd.f32 %v1018, %v1174
    %v1249 = vadd.f32 %v1019, %v1179
    %v1250 = vadd.f32 %v1020, %v1184
    %v1251 = vadd.f32 %v1021, %v1189
    %v1252 = vadd.f32 %v1022, %v1194
    %v1253 = vadd.f32 %v1023, %v1199
    %v1254 = vadd.f32 %v1024, %v1204
    %v1255 = vadd.f32 %v1025, %v1209
    %v1256 = vadd.f32 %v1026, %v1214
    %v1257 = vadd.f32 %v1027, %v1219
    %v1258 = vadd.f32 %v1028, %v1224
    %v1259 = vadd.f32 %v1029, %v1229
    %v1260 = vadd.f32 %v1030, %v1234
    %v1261 = vadd.f32 %v1031, %v1239
    %v1262 = vadd.f32 %v1032, %v1244
    %v1263 = vld [vmem:[%s127 + $0x2] sm:$0xff]
    %v1264 = vld [vmem:[%s127 + $0x12] sm:$0xff]
    %v1265 = vld [vmem:[%s127 + $0x22] sm:$0xff]
    %v1266 = vld [vmem:[%s127 + $0x32] sm:$0xff]
    %v1267 = vld [vmem:[%s127 + $0x42] sm:$0xff]
    %v1268 = vld [vmem:[%s127 + $0x52] sm:$0xff]
    %v1269 = vld [vmem:[%s127 + $0x62] sm:$0xff]
    %v1270 = vld [vmem:[%s127 + $0x72] sm:$0xff]
    %v1271 = vld [vmem:[%s127 + $0xa2] sm:$0xff]
    %v1272 = vld [vmem:[%s127 + $0xb2] sm:$0xff]
    %v1273 = vld [vmem:[%s127 + $0xc2] sm:$0xff]
    %v1274 = vld [vmem:[%s127 + $0xd2] sm:$0xff]
    %v1275 = vld [vmem:[%s127 + $0xe2] sm:$0xff]
    %v1276 = vld [vmem:[%s127 + $0xf2] sm:$0xff]
    %v1277 = vld [vmem:[%s127 + $0x102] sm:$0xff]
    %v1278 = vld [vmem:[%s127 + $0x112] sm:$0xff]
    %s1279 = scalar_lea.vmem [#allocation4], 20
    %v1280 = vld [vmem:[%s1279] sm:$0xf]
    %v1282 = vsel %vm128, %v1263, 0
    %v1285 = vsel %vm128, %v1264, 0
    %v1288 = vsel %vm128, %v1265, 0
    %v1291 = vsel %vm128, %v1266, 0
    %v1294 = vsel %vm128, %v1267, 0
    %v1297 = vsel %vm128, %v1268, 0
    %v1300 = vsel %vm128, %v1269, 0
    %v1303 = vsel %vm128, %v1270, 0
    %v1306 = vsel %vm128, %v1271, 0
    %v1309 = vsel %vm128, %v1272, 0
    %v1312 = vsel %vm128, %v1273, 0
    %v1315 = vsel %vm128, %v1274, 0
    %v1318 = vsel %vm128, %v1275, 0
    %v1321 = vsel %vm128, %v1276, 0
    %v1324 = vsel %vm128, %v1277, 0
    %v1327 = vsel %vm128, %v1278, 0
    %v1330 = vsel %vm228, %v1280, 0
    %1332 = vmatprep.subr.mxu0 0.0
    %1333 = vmatpush1.msra.mxu0 %v1330
    %1334 = vmatprep.subr.mxu0 0.0
    %1335 = vmatpush1.msra.mxu0 0.0
    %1336 = vmatprep.subr.mxu0 0.0
    %1337 = vmatpush1.msra.mxu0 0.0
    %1338 = vmatprep.subr.mxu0 0.0
    %1339 = vmatpush1.msra.mxu0 0.0
    %1340 = vmatprep.subr.mxu0 0.0
    %1341 = vmatpush1.msra.mxu0 0.0
    %1342 = vmatprep.subr.mxu0 0.0
    %1343 = vmatpush1.msra.mxu0 0.0
    %1344 = vmatprep.subr.mxu0 0.0
    %1345 = vmatpush1.msra.mxu0 0.0
    %1346 = vmatprep.subr.mxu0 0.0
    %1347 = vmatpush1.msra.mxu0 0.0
    %1348 = vmatprep.subr.mxu0 0.0
    %1349 = vmatpush1.msra.mxu0 0.0
    %1350 = vmatprep.subr.mxu0 0.0
    %1351 = vmatpush1.msra.mxu0 0.0
    %1352 = vmatprep.subr.mxu0 0.0
    %1353 = vmatpush1.msra.mxu0 0.0
    %1354 = vmatprep.subr.mxu0 0.0
    %1355 = vmatpush1.msra.mxu0 0.0
    %1356 = vmatprep.subr.mxu0 0.0
    %1357 = vmatpush1.msra.mxu0 0.0
    %1358 = vmatprep.subr.mxu0 0.0
    %1359 = vmatpush1.msra.mxu0 0.0
    %1360 = vmatprep.subr.mxu0 0.0
    %1361 = vmatpush1.msra.mxu0 0.0
    %1362 = vmatprep.subr.mxu0 0.0
    %1363 = vmatpush1.msra.mxu0 0.0
    %1364 = vmatprep.subr.mxu0 0.0
    %1365 = vmatpush1.msra.mxu0 0.0
    %1366 = vmatprep.subr.mxu0 0.0
    %1367 = vmatpush1.msra.mxu0 0.0
    %1368 = vmatprep.subr.mxu0 0.0
    %1369 = vmatpush1.msra.mxu0 0.0
    %1370 = vmatprep.subr.mxu0 0.0
    %1371 = vmatpush1.msra.mxu0 0.0
    %1372 = vmatprep.subr.mxu0 0.0
    %1373 = vmatpush1.msra.mxu0 0.0
    %1374 = vmatprep.subr.mxu0 0.0
    %1375 = vmatpush1.msra.mxu0 0.0
    %1376 = vmatprep.subr.mxu0 0.0
    %1377 = vmatpush1.msra.mxu0 0.0
    %1378 = vmatprep.subr.mxu0 0.0
    %1379 = vmatpush1.msra.mxu0 0.0
    %1380 = vmatprep.subr.mxu0 0.0
    %1381 = vmatpush1.msra.mxu0 0.0
    %1382 = vmatprep.subr.mxu0 0.0
    %1383 = vmatpush1.msra.mxu0 0.0
    %1384 = vmatprep.subr.mxu0 0.0
    %1385 = vmatpush1.msra.mxu0 0.0
    %1386 = vmatprep.subr.mxu0 0.0
    %1387 = vmatpush1.msra.mxu0 0.0
    %1388 = vmatprep.subr.mxu0 0.0
    %1389 = vmatpush1.msra.mxu0 0.0
    %1390 = vmatprep.subr.mxu0 0.0
    %1391 = vmatpush1.msra.mxu0 0.0
    %1392 = vmatprep.subr.mxu0 0.0
    %1393 = vmatpush1.msra.mxu0 0.0
    %1394 = vmatprep.subr.mxu0 0.0
    %1395 = vmatpush1.msra.mxu0 0.0
    %1396 = vmatprep.mubr.f32.mxu0 0.0
    %1397 = vmatmul.mubr.f32.gmra.mrb[0].mxu0 %v1282
    %v1398 = vpop.f32.mrb[0].mxu0
    %v1399 = vadd.f32 0.0, %v1398
    %v1400 = vpop.f32.mrb[0].mxu0
    %1401 = vmatprep.mubr.f32.mxu0 0.0
    %1402 = vmatmul.mubr.f32.gmra.mrb[0].mxu0 %v1285
    %v1403 = vpop.f32.mrb[0].mxu0
    %v1404 = vadd.f32 0.0, %v1403
    %v1405 = vpop.f32.mrb[0].mxu0
    %1406 = vmatprep.mubr.f32.mxu0 0.0
    %1407 = vmatmul.mubr.f32.gmra.mrb[0].mxu0 %v1288
    %v1408 = vpop.f32.mrb[0].mxu0
    %v1409 = vadd.f32 0.0, %v1408
    %v1410 = vpop.f32.mrb[0].mxu0
    %1411 = vmatprep.mubr.f32.mxu0 0.0
    %1412 = vmatmul.mubr.f32.gmra.mrb[0].mxu0 %v1291
    %v1413 = vpop.f32.mrb[0].mxu0
    %v1414 = vadd.f32 0.0, %v1413
    %v1415 = vpop.f32.mrb[0].mxu0
    %1416 = vmatprep.mubr.f32.mxu0 0.0
    %1417 = vmatmul.mubr.f32.gmra.mrb[0].mxu0 %v1294
    %v1418 = vpop.f32.mrb[0].mxu0
    %v1419 = vadd.f32 0.0, %v1418
    %v1420 = vpop.f32.mrb[0].mxu0
    %1421 = vmatprep.mubr.f32.mxu0 0.0
    %1422 = vmatmul.mubr.f32.gmra.mrb[0].mxu0 %v1297
    %v1423 = vpop.f32.mrb[0].mxu0
    %v1424 = vadd.f32 0.0, %v1423
    %v1425 = vpop.f32.mrb[0].mxu0
    %1426 = vmatprep.mubr.f32.mxu0 0.0
    %1427 = vmatmul.mubr.f32.gmra.mrb[0].mxu0 %v1300
    %v1428 = vpop.f32.mrb[0].mxu0
    %v1429 = vadd.f32 0.0, %v1428
    %v1430 = vpop.f32.mrb[0].mxu0
    %1431 = vmatprep.mubr.f32.mxu0 0.0
    %1432 = vmatmul.mubr.f32.gmra.mrb[0].mxu0 %v1303
    %v1433 = vpop.f32.mrb[0].mxu0
    %v1434 = vadd.f32 0.0, %v1433
    %v1435 = vpop.f32.mrb[0].mxu0
    %1436 = vmatprep.mubr.f32.mxu0 0.0
    %1437 = vmatmul.mubr.f32.gmra.mrb[0].mxu0 %v1306
    %v1438 = vpop.f32.mrb[0].mxu0
    %v1439 = vadd.f32 0.0, %v1438
    %v1440 = vpop.f32.mrb[0].mxu0
    %1441 = vmatprep.mubr.f32.mxu0 0.0
    %1442 = vmatmul.mubr.f32.gmra.mrb[0].mxu0 %v1309
    %v1443 = vpop.f32.mrb[0].mxu0
    %v1444 = vadd.f32 0.0, %v1443
    %v1445 = vpop.f32.mrb[0].mxu0
    %1446 = vmatprep.mubr.f32.mxu0 0.0
    %1447 = vmatmul.mubr.f32.gmra.mrb[0].mxu0 %v1312
    %v1448 = vpop.f32.mrb[0].mxu0
    %v1449 = vadd.f32 0.0, %v1448
    %v1450 = vpop.f32.mrb[0].mxu0
    %1451 = vmatprep.mubr.f32.mxu0 0.0
    %1452 = vmatmul.mubr.f32.gmra.mrb[0].mxu0 %v1315
    %v1453 = vpop.f32.mrb[0].mxu0
    %v1454 = vadd.f32 0.0, %v1453
    %v1455 = vpop.f32.mrb[0].mxu0
    %1456 = vmatprep.mubr.f32.mxu0 0.0
    %1457 = vmatmul.mubr.f32.gmra.mrb[0].mxu0 %v1318
    %v1458 = vpop.f32.mrb[0].mxu0
    %v1459 = vadd.f32 0.0, %v1458
    %v1460 = vpop.f32.mrb[0].mxu0
    %1461 = vmatprep.mubr.f32.mxu0 0.0
    %1462 = vmatmul.mubr.f32.gmra.mrb[0].mxu0 %v1321
    %v1463 = vpop.f32.mrb[0].mxu0
    %v1464 = vadd.f32 0.0, %v1463
    %v1465 = vpop.f32.mrb[0].mxu0
    %1466 = vmatprep.mubr.f32.mxu0 0.0
    %1467 = vmatmul.mubr.f32.gmra.mrb[0].mxu0 %v1324
    %v1468 = vpop.f32.mrb[0].mxu0
    %v1469 = vadd.f32 0.0, %v1468
    %v1470 = vpop.f32.mrb[0].mxu0
    %1471 = vmatprep.mubr.f32.mxu0 0.0
    %1472 = vmatmul.mubr.f32.gmra.mrb[0].mxu0 %v1327
    %v1473 = vpop.f32.mrb[0].mxu0
    %v1474 = vadd.f32 0.0, %v1473
    %v1475 = vpop.f32.mrb[0].mxu0
    %1476 = vdwg.mxu0
    %v1477 = vadd.f32 %v1247, %v1399
    %v1478 = vadd.f32 %v1248, %v1404
    %v1479 = vadd.f32 %v1249, %v1409
    %v1480 = vadd.f32 %v1250, %v1414
    %v1481 = vadd.f32 %v1251, %v1419
    %v1482 = vadd.f32 %v1252, %v1424
    %v1483 = vadd.f32 %v1253, %v1429
    %v1484 = vadd.f32 %v1254, %v1434
    %v1485 = vadd.f32 %v1255, %v1439
    %v1486 = vadd.f32 %v1256, %v1444
    %v1487 = vadd.f32 %v1257, %v1449
    %v1488 = vadd.f32 %v1258, %v1454
    %v1489 = vadd.f32 %v1259, %v1459
    %v1490 = vadd.f32 %v1260, %v1464
    %v1491 = vadd.f32 %v1261, %v1469
    %v1492 = vadd.f32 %v1262, %v1474
    %s1493 = scalar_lea.vmem [#allocation2], 32
    %v1494 = vld [vmem:[%s1493] sm:$0xff]
    %v1495 = vld [vmem:[%s1493 + $0x10] sm:$0xff]
    %v1496 = vld [vmem:[%s1493 + $0x20] sm:$0xff]
    %v1497 = vld [vmem:[%s1493 + $0x30] sm:$0xff]
    %v1498 = vld [vmem:[%s1493 + $0x40] sm:$0xff]
    %v1499 = vld [vmem:[%s1493 + $0x50] sm:$0xff]
    %v1500 = vld [vmem:[%s1493 + $0x60] sm:$0xff]
    %v1501 = vld [vmem:[%s1493 + $0x70] sm:$0xff]
    %v1502 = vld [vmem:[%s1493 + $0xa0] sm:$0xff]
    %v1503 = vld [vmem:[%s1493 + $0xb0] sm:$0xff]
    %v1504 = vld [vmem:[%s1493 + $0xc0] sm:$0xff]
    %v1505 = vld [vmem:[%s1493 + $0xd0] sm:$0xff]
    %v1506 = vld [vmem:[%s1493 + $0xe0] sm:$0xff]
    %v1507 = vld [vmem:[%s1493 + $0xf0] sm:$0xff]
    %v1508 = vld [vmem:[%s1493 + $0x100] sm:$0xff]
    %v1509 = vld [vmem:[%s1493 + $0x110] sm:$0xff]
    %s1510 = scalar_lea.vmem [#allocation4], 24
    %v1511 = vld [vmem:[%s1510] sm:$0xf]
    %v1513 = vsel %vm128, %v1494, 0
    %v1516 = vsel %vm128, %v1495, 0
    %v1519 = vsel %vm128, %v1496, 0
    %v1522 = vsel %vm128, %v1497, 0
    %v1525 = vsel %vm128, %v1498, 0
    %v1528 = vsel %vm128, %v1499, 0
    %v1531 = vsel %vm128, %v1500, 0
    %v1534 = vsel %vm128, %v1501, 0
    %v1537 = vsel %vm128, %v1502, 0
    %v1540 = vsel %vm128, %v1503, 0
    %v1543 = vsel %vm128, %v1504, 0
    %v1546 = vsel %vm128, %v1505, 0
    %v1549 = vsel %vm128, %v1506, 0
    %v1552 = vsel %vm128, %v1507, 0
    %v1555 = vsel %vm128, %v1508, 0
    %v1558 = vsel %vm128, %v1509, 0
    %v1561 = vsel %vm228, %v1511, 0
    %1563 = vmatprep.subr.mxu0 0.0
    %1564 = vmatpush1.msra.mxu0 %v1561
    %1565 = vmatprep.subr.mxu0 0.0
    %1566 = vmatpush1.msra.mxu0 0.0
    %1567 = vmatprep.subr.mxu0 0.0
    %1568 = vmatpush1.msra.mxu0 0.0
    %1569 = vmatprep.subr.mxu0 0.0
    %1570 = vmatpush1.msra.mxu0 0.0
    %1571 = vmatprep.subr.mxu0 0.0
    %1572 = vmatpush1.msra.mxu0 0.0
    %1573 = vmatprep.subr.mxu0 0.0
    %1574 = vmatpush1.msra.mxu0 0.0
    %1575 = vmatprep.subr.mxu0 0.0
    %1576 = vmatpush1.msra.mxu0 0.0
    %1577 = vmatprep.subr.mxu0 0.0
    %1578 = vmatpush1.msra.mxu0 0.0
    %1579 = vmatprep.subr.mxu0 0.0
    %1580 = vmatpush1.msra.mxu0 0.0
    %1581 = vmatprep.subr.mxu0 0.0
    %1582 = vmatpush1.msra.mxu0 0.0
    %1583 = vmatprep.subr.mxu0 0.0
    %1584 = vmatpush1.msra.mxu0 0.0
    %1585 = vmatprep.subr.mxu0 0.0
    %1586 = vmatpush1.msra.mxu0 0.0
    %1587 = vmatprep.subr.mxu0 0.0
    %1588 = vmatpush1.msra.mxu0 0.0
    %1589 = vmatprep.subr.mxu0 0.0
    %1590 = vmatpush1.msra.mxu0 0.0
    %1591 = vmatprep.subr.mxu0 0.0
    %1592 = vmatpush1.msra.mxu0 0.0
    %1593 = vmatprep.subr.mxu0 0.0
    %1594 = vmatpush1.msra.mxu0 0.0
    %1595 = vmatprep.subr.mxu0 0.0
    %1596 = vmatpush1.msra.mxu0 0.0
    %1597 = vmatprep.subr.mxu0 0.0
    %1598 = vmatpush1.msra.mxu0 0.0
    %1599 = vmatprep.subr.mxu0 0.0
    %1600 = vmatpush1.msra.mxu0 0.0
    %1601 = vmatprep.subr.mxu0 0.0
    %1602 = vmatpush1.msra.mxu0 0.0
    %1603 = vmatprep.subr.mxu0 0.0
    %1604 = vmatpush1.msra.mxu0 0.0
    %1605 = vmatprep.subr.mxu0 0.0
    %1606 = vmatpush1.msra.mxu0 0.0
    %1607 = vmatprep.subr.mxu0 0.0
    %1608 = vmatpush1.msra.mxu0 0.0
    %1609 = vmatprep.subr.mxu0 0.0
    %1610 = vmatpush1.msra.mxu0 0.0
    %1611 = vmatprep.subr.mxu0 0.0
    %1612 = vmatpush1.msra.mxu0 0.0
    %1613 = vmatprep.subr.mxu0 0.0
    %1614 = vmatpush1.msra.mxu0 0.0
    %1615 = vmatprep.subr.mxu0 0.0
    %1616 = vmatpush1.msra.mxu0 0.0
    %1617 = vmatprep.subr.mxu0 0.0
    %1618 = vmatpush1.msra.mxu0 0.0
    %1619 = vmatprep.subr.mxu0 0.0
    %1620 = vmatpush1.msra.mxu0 0.0
    %1621 = vmatprep.subr.mxu0 0.0
    %1622 = vmatpush1.msra.mxu0 0.0
    %1623 = vmatprep.subr.mxu0 0.0
    %1624 = vmatpush1.msra.mxu0 0.0
    %1625 = vmatprep.subr.mxu0 0.0
    %1626 = vmatpush1.msra.mxu0 0.0
    %1627 = vmatprep.mubr.f32.mxu0 0.0
    %1628 = vmatmul.mubr.f32.gmra.mrb[0].mxu0 %v1513
    %v1629 = vpop.f32.mrb[0].mxu0
    %v1630 = vadd.f32 0.0, %v1629
    %v1631 = vpop.f32.mrb[0].mxu0
    %1632 = vmatprep.mubr.f32.mxu0 0.0
    %1633 = vmatmul.mubr.f32.gmra.mrb[0].mxu0 %v1516
    %v1634 = vpop.f32.mrb[0].mxu0
    %v1635 = vadd.f32 0.0, %v1634
    %v1636 = vpop.f32.mrb[0].mxu0
    %1637 = vmatprep.mubr.f32.mxu0 0.0
    %1638 = vmatmul.mubr.f32.gmra.mrb[0].mxu0 %v1519
    %v1639 = vpop.f32.mrb[0].mxu0
    %v1640 = vadd.f32 0.0, %v1639
    %v1641 = vpop.f32.mrb[0].mxu0
    %1642 = vmatprep.mubr.f32.mxu0 0.0
    %1643 = vmatmul.mubr.f32.gmra.mrb[0].mxu0 %v1522
    %v1644 = vpop.f32.mrb[0].mxu0
    %v1645 = vadd.f32 0.0, %v1644
    %v1646 = vpop.f32.mrb[0].mxu0
    %1647 = vmatprep.mubr.f32.mxu0 0.0
    %1648 = vmatmul.mubr.f32.gmra.mrb[0].mxu0 %v1525
    %v1649 = vpop.f32.mrb[0].mxu0
    %v1650 = vadd.f32 0.0, %v1649
    %v1651 = vpop.f32.mrb[0].mxu0
    %1652 = vmatprep.mubr.f32.mxu0 0.0
    %1653 = vmatmul.mubr.f32.gmra.mrb[0].mxu0 %v1528
    %v1654 = vpop.f32.mrb[0].mxu0
    %v1655 = vadd.f32 0.0, %v1654
    %v1656 = vpop.f32.mrb[0].mxu0
    %1657 = vmatprep.mubr.f32.mxu0 0.0
    %1658 = vmatmul.mubr.f32.gmra.mrb[0].mxu0 %v1531
    %v1659 = vpop.f32.mrb[0].mxu0
    %v1660 = vadd.f32 0.0, %v1659
    %v1661 = vpop.f32.mrb[0].mxu0
    %1662 = vmatprep.mubr.f32.mxu0 0.0
    %1663 = vmatmul.mubr.f32.gmra.mrb[0].mxu0 %v1534
    %v1664 = vpop.f32.mrb[0].mxu0
    %v1665 = vadd.f32 0.0, %v1664
    %v1666 = vpop.f32.mrb[0].mxu0
    %1667 = vmatprep.mubr.f32.mxu0 0.0
    %1668 = vmatmul.mubr.f32.gmra.mrb[0].mxu0 %v1537
    %v1669 = vpop.f32.mrb[0].mxu0
    %v1670 = vadd.f32 0.0, %v1669
    %v1671 = vpop.f32.mrb[0].mxu0
    %1672 = vmatprep.mubr.f32.mxu0 0.0
    %1673 = vmatmul.mubr.f32.gmra.mrb[0].mxu0 %v1540
    %v1674 = vpop.f32.mrb[0].mxu0
    %v1675 = vadd.f32 0.0, %v1674
    %v1676 = vpop.f32.mrb[0].mxu0
    %1677 = vmatprep.mubr.f32.mxu0 0.0
    %1678 = vmatmul.mubr.f32.gmra.mrb[0].mxu0 %v1543
    %v1679 = vpop.f32.mrb[0].mxu0
    %v1680 = vadd.f32 0.0, %v1679
    %v1681 = vpop.f32.mrb[0].mxu0
    %1682 = vmatprep.mubr.f32.mxu0 0.0
    %1683 = vmatmul.mubr.f32.gmra.mrb[0].mxu0 %v1546
    %v1684 = vpop.f32.mrb[0].mxu0
    %v1685 = vadd.f32 0.0, %v1684
    %v1686 = vpop.f32.mrb[0].mxu0
    %1687 = vmatprep.mubr.f32.mxu0 0.0
    %1688 = vmatmul.mubr.f32.gmra.mrb[0].mxu0 %v1549
    %v1689 = vpop.f32.mrb[0].mxu0
    %v1690 = vadd.f32 0.0, %v1689
    %v1691 = vpop.f32.mrb[0].mxu0
    %1692 = vmatprep.mubr.f32.mxu0 0.0
    %1693 = vmatmul.mubr.f32.gmra.mrb[0].mxu0 %v1552
    %v1694 = vpop.f32.mrb[0].mxu0
    %v1695 = vadd.f32 0.0, %v1694
    %v1696 = vpop.f32.mrb[0].mxu0
    %1697 = vmatprep.mubr.f32.mxu0 0.0
    %1698 = vmatmul.mubr.f32.gmra.mrb[0].mxu0 %v1555
    %v1699 = vpop.f32.mrb[0].mxu0
    %v1700 = vadd.f32 0.0, %v1699
    %v1701 = vpop.f32.mrb[0].mxu0
    %1702 = vmatprep.mubr.f32.mxu0 0.0
    %1703 = vmatmul.mubr.f32.gmra.mrb[0].mxu0 %v1558
    %v1704 = vpop.f32.mrb[0].mxu0
    %v1705 = vadd.f32 0.0, %v1704
    %v1706 = vpop.f32.mrb[0].mxu0
    %1707 = vdwg.mxu0
    %v1708 = vadd.f32 %v1477, %v1630
    %v1709 = vadd.f32 %v1478, %v1635
    %v1710 = vadd.f32 %v1479, %v1640
    %v1711 = vadd.f32 %v1480, %v1645
    %v1712 = vadd.f32 %v1481, %v1650
    %v1713 = vadd.f32 %v1482, %v1655
    %v1714 = vadd.f32 %v1483, %v1660
    %v1715 = vadd.f32 %v1484, %v1665
    %v1716 = vadd.f32 %v1485, %v1670
    %v1717 = vadd.f32 %v1486, %v1675
    %v1718 = vadd.f32 %v1487, %v1680
    %v1719 = vadd.f32 %v1488, %v1685
    %v1720 = vadd.f32 %v1489, %v1690
    %v1721 = vadd.f32 %v1490, %v1695
    %v1722 = vadd.f32 %v1491, %v1700
    %v1723 = vadd.f32 %v1492, %v1705
    %v1724 = vld [vmem:[%s1493 + $0x1] sm:$0xff]
    %v1725 = vld [vmem:[%s1493 + $0x11] sm:$0xff]
    %v1726 = vld [vmem:[%s1493 + $0x21] sm:$0xff]
    %v1727 = vld [vmem:[%s1493 + $0x31] sm:$0xff]
    %v1728 = vld [vmem:[%s1493 + $0x41] sm:$0xff]
    %v1729 = vld [vmem:[%s1493 + $0x51] sm:$0xff]
    %v1730 = vld [vmem:[%s1493 + $0x61] sm:$0xff]
    %v1731 = vld [vmem:[%s1493 + $0x71] sm:$0xff]
    %v1732 = vld [vmem:[%s1493 + $0xa1] sm:$0xff]
    %v1733 = vld [vmem:[%s1493 + $0xb1] sm:$0xff]
    %v1734 = vld [vmem:[%s1493 + $0xc1] sm:$0xff]
    %v1735 = vld [vmem:[%s1493 + $0xd1] sm:$0xff]
    %v1736 = vld [vmem:[%s1493 + $0xe1] sm:$0xff]
    %v1737 = vld [vmem:[%s1493 + $0xf1] sm:$0xff]
    %v1738 = vld [vmem:[%s1493 + $0x101] sm:$0xff]
    %v1739 = vld [vmem:[%s1493 + $0x111] sm:$0xff]
    %s1740 = scalar_lea.vmem [#allocation4], 28
    %v1741 = vld [vmem:[%s1740] sm:$0xf]
    %v1743 = vsel %vm128, %v1724, 0
    %v1746 = vsel %vm128, %v1725, 0
    %v1749 = vsel %vm128, %v1726, 0
    %v1752 = vsel %vm128, %v1727, 0
    %v1755 = vsel %vm128, %v1728, 0
    %v1758 = vsel %vm128, %v1729, 0
    %v1761 = vsel %vm128, %v1730, 0
    %v1764 = vsel %vm128, %v1731, 0
    %v1767 = vsel %vm128, %v1732, 0
    %v1770 = vsel %vm128, %v1733, 0
    %v1773 = vsel %vm128, %v1734, 0
    %v1776 = vsel %vm128, %v1735, 0
    %v1779 = vsel %vm128, %v1736, 0
    %v1782 = vsel %vm128, %v1737, 0
    %v1785 = vsel %vm128, %v1738, 0
    %v1788 = vsel %vm128, %v1739, 0
    %v1791 = vsel %vm228, %v1741, 0
    %1793 = vmatprep.subr.mxu0 0.0
    %1794 = vmatpush1.msra.mxu0 %v1791
    %1795 = vmatprep.subr.mxu0 0.0
    %1796 = vmatpush1.msra.mxu0 0.0
    %1797 = vmatprep.subr.mxu0 0.0
    %1798 = vmatpush1.msra.mxu0 0.0
    %1799 = vmatprep.subr.mxu0 0.0
    %1800 = vmatpush1.msra.mxu0 0.0
    %1801 = vmatprep.subr.mxu0 0.0
    %1802 = vmatpush1.msra.mxu0 0.0
    %1803 = vmatprep.subr.mxu0 0.0
    %1804 = vmatpush1.msra.mxu0 0.0
    %1805 = vmatprep.subr.mxu0 0.0
    %1806 = vmatpush1.msra.mxu0 0.0
    %1807 = vmatprep.subr.mxu0 0.0
    %1808 = vmatpush1.msra.mxu0 0.0
    %1809 = vmatprep.subr.mxu0 0.0
    %1810 = vmatpush1.msra.mxu0 0.0
    %1811 = vmatprep.subr.mxu0 0.0
    %1812 = vmatpush1.msra.mxu0 0.0
    %1813 = vmatprep.subr.mxu0 0.0
    %1814 = vmatpush1.msra.mxu0 0.0
    %1815 = vmatprep.subr.mxu0 0.0
    %1816 = vmatpush1.msra.mxu0 0.0
    %1817 = vmatprep.subr.mxu0 0.0
    %1818 = vmatpush1.msra.mxu0 0.0
    %1819 = vmatprep.subr.mxu0 0.0
    %1820 = vmatpush1.msra.mxu0 0.0
    %1821 = vmatprep.subr.mxu0 0.0
    %1822 = vmatpush1.msra.mxu0 0.0
    %1823 = vmatprep.subr.mxu0 0.0
    %1824 = vmatpush1.msra.mxu0 0.0
    %1825 = vmatprep.subr.mxu0 0.0
    %1826 = vmatpush1.msra.mxu0 0.0
    %1827 = vmatprep.subr.mxu0 0.0
    %1828 = vmatpush1.msra.mxu0 0.0
    %1829 = vmatprep.subr.mxu0 0.0
    %1830 = vmatpush1.msra.mxu0 0.0
    %1831 = vmatprep.subr.mxu0 0.0
    %1832 = vmatpush1.msra.mxu0 0.0
    %1833 = vmatprep.subr.mxu0 0.0
    %1834 = vmatpush1.msra.mxu0 0.0
    %1835 = vmatprep.subr.mxu0 0.0
    %1836 = vmatpush1.msra.mxu0 0.0
    %1837 = vmatprep.subr.mxu0 0.0
    %1838 = vmatpush1.msra.mxu0 0.0
    %1839 = vmatprep.subr.mxu0 0.0
    %1840 = vmatpush1.msra.mxu0 0.0
    %1841 = vmatprep.subr.mxu0 0.0
    %1842 = vmatpush1.msra.mxu0 0.0
    %1843 = vmatprep.subr.mxu0 0.0
    %1844 = vmatpush1.msra.mxu0 0.0
    %1845 = vmatprep.subr.mxu0 0.0
    %1846 = vmatpush1.msra.mxu0 0.0
    %1847 = vmatprep.subr.mxu0 0.0
    %1848 = vmatpush1.msra.mxu0 0.0
    %1849 = vmatprep.subr.mxu0 0.0
    %1850 = vmatpush1.msra.mxu0 0.0
    %1851 = vmatprep.subr.mxu0 0.0
    %1852 = vmatpush1.msra.mxu0 0.0
    %1853 = vmatprep.subr.mxu0 0.0
    %1854 = vmatpush1.msra.mxu0 0.0
    %1855 = vmatprep.subr.mxu0 0.0
    %1856 = vmatpush1.msra.mxu0 0.0
    %1857 = vmatprep.mubr.f32.mxu0 0.0
    %1858 = vmatmul.mubr.f32.gmra.mrb[0].mxu0 %v1743
    %v1859 = vpop.f32.mrb[0].mxu0
    %v1860 = vadd.f32 0.0, %v1859
    %v1861 = vpop.f32.mrb[0].mxu0
    %1862 = vmatprep.mubr.f32.mxu0 0.0
    %1863 = vmatmul.mubr.f32.gmra.mrb[0].mxu0 %v1746
    %v1864 = vpop.f32.mrb[0].mxu0
    %v1865 = vadd.f32 0.0, %v1864
    %v1866 = vpop.f32.mrb[0].mxu0
    %1867 = vmatprep.mubr.f32.mxu0 0.0
    %1868 = vmatmul.mubr.f32.gmra.mrb[0].mxu0 %v1749
    %v1869 = vpop.f32.mrb[0].mxu0
    %v1870 = vadd.f32 0.0, %v1869
    %v1871 = vpop.f32.mrb[0].mxu0
    %1872 = vmatprep.mubr.f32.mxu0 0.0
    %1873 = vmatmul.mubr.f32.gmra.mrb[0].mxu0 %v1752
    %v1874 = vpop.f32.mrb[0].mxu0
    %v1875 = vadd.f32 0.0, %v1874
    %v1876 = vpop.f32.mrb[0].mxu0
    %1877 = vmatprep.mubr.f32.mxu0 0.0
    %1878 = vmatmul.mubr.f32.gmra.mrb[0].mxu0 %v1755
    %v1879 = vpop.f32.mrb[0].mxu0
    %v1880 = vadd.f32 0.0, %v1879
    %v1881 = vpop.f32.mrb[0].mxu0
    %1882 = vmatprep.mubr.f32.mxu0 0.0
    %1883 = vmatmul.mubr.f32.gmra.mrb[0].mxu0 %v1758
    %v1884 = vpop.f32.mrb[0].mxu0
    %v1885 = vadd.f32 0.0, %v1884
    %v1886 = vpop.f32.mrb[0].mxu0
    %1887 = vmatprep.mubr.f32.mxu0 0.0
    %1888 = vmatmul.mubr.f32.gmra.mrb[0].mxu0 %v1761
    %v1889 = vpop.f32.mrb[0].mxu0
    %v1890 = vadd.f32 0.0, %v1889
    %v1891 = vpop.f32.mrb[0].mxu0
    %1892 = vmatprep.mubr.f32.mxu0 0.0
    %1893 = vmatmul.mubr.f32.gmra.mrb[0].mxu0 %v1764
    %v1894 = vpop.f32.mrb[0].mxu0
    %v1895 = vadd.f32 0.0, %v1894
    %v1896 = vpop.f32.mrb[0].mxu0
    %1897 = vmatprep.mubr.f32.mxu0 0.0
    %1898 = vmatmul.mubr.f32.gmra.mrb[0].mxu0 %v1767
    %v1899 = vpop.f32.mrb[0].mxu0
    %v1900 = vadd.f32 0.0, %v1899
    %v1901 = vpop.f32.mrb[0].mxu0
    %1902 = vmatprep.mubr.f32.mxu0 0.0
    %1903 = vmatmul.mubr.f32.gmra.mrb[0].mxu0 %v1770
    %v1904 = vpop.f32.mrb[0].mxu0
    %v1905 = vadd.f32 0.0, %v1904
    %v1906 = vpop.f32.mrb[0].mxu0
    %1907 = vmatprep.mubr.f32.mxu0 0.0
    %1908 = vmatmul.mubr.f32.gmra.mrb[0].mxu0 %v1773
    %v1909 = vpop.f32.mrb[0].mxu0
    %v1910 = vadd.f32 0.0, %v1909
    %v1911 = vpop.f32.mrb[0].mxu0
    %1912 = vmatprep.mubr.f32.mxu0 0.0
    %1913 = vmatmul.mubr.f32.gmra.mrb[0].mxu0 %v1776
    %v1914 = vpop.f32.mrb[0].mxu0
    %v1915 = vadd.f32 0.0, %v1914
    %v1916 = vpop.f32.mrb[0].mxu0
    %1917 = vmatprep.mubr.f32.mxu0 0.0
    %1918 = vmatmul.mubr.f32.gmra.mrb[0].mxu0 %v1779
    %v1919 = vpop.f32.mrb[0].mxu0
    %v1920 = vadd.f32 0.0, %v1919
    %v1921 = vpop.f32.mrb[0].mxu0
    %1922 = vmatprep.mubr.f32.mxu0 0.0
    %1923 = vmatmul.mubr.f32.gmra.mrb[0].mxu0 %v1782
    %v1924 = vpop.f32.mrb[0].mxu0
    %v1925 = vadd.f32 0.0, %v1924
    %v1926 = vpop.f32.mrb[0].mxu0
    %1927 = vmatprep.mubr.f32.mxu0 0.0
    %1928 = vmatmul.mubr.f32.gmra.mrb[0].mxu0 %v1785
    %v1929 = vpop.f32.mrb[0].mxu0
    %v1930 = vadd.f32 0.0, %v1929
    %v1931 = vpop.f32.mrb[0].mxu0
    %1932 = vmatprep.mubr.f32.mxu0 0.0
    %1933 = vmatmul.mubr.f32.gmra.mrb[0].mxu0 %v1788
    %v1934 = vpop.f32.mrb[0].mxu0
    %v1935 = vadd.f32 0.0, %v1934
    %v1936 = vpop.f32.mrb[0].mxu0
    %1937 = vdwg.mxu0
    %v1938 = vadd.f32 %v1708, %v1860
    %v1939 = vadd.f32 %v1709, %v1865
    %v1940 = vadd.f32 %v1710, %v1870
    %v1941 = vadd.f32 %v1711, %v1875
    %v1942 = vadd.f32 %v1712, %v1880
    %v1943 = vadd.f32 %v1713, %v1885
    %v1944 = vadd.f32 %v1714, %v1890
    %v1945 = vadd.f32 %v1715, %v1895
    %v1946 = vadd.f32 %v1716, %v1900
    %v1947 = vadd.f32 %v1717, %v1905
    %v1948 = vadd.f32 %v1718, %v1910
    %v1949 = vadd.f32 %v1719, %v1915
    %v1950 = vadd.f32 %v1720, %v1920
    %v1951 = vadd.f32 %v1721, %v1925
    %v1952 = vadd.f32 %v1722, %v1930
    %v1953 = vadd.f32 %v1723, %v1935
    %v1954 = vld [vmem:[%s1493 + $0x2] sm:$0xff]
    %v1955 = vld [vmem:[%s1493 + $0x12] sm:$0xff]
    %v1956 = vld [vmem:[%s1493 + $0x22] sm:$0xff]
    %v1957 = vld [vmem:[%s1493 + $0x32] sm:$0xff]
    %v1958 = vld [vmem:[%s1493 + $0x42] sm:$0xff]
    %v1959 = vld [vmem:[%s1493 + $0x52] sm:$0xff]
    %v1960 = vld [vmem:[%s1493 + $0x62] sm:$0xff]
    %v1961 = vld [vmem:[%s1493 + $0x72] sm:$0xff]
    %v1962 = vld [vmem:[%s1493 + $0xa2] sm:$0xff]
    %v1963 = vld [vmem:[%s1493 + $0xb2] sm:$0xff]
    %v1964 = vld [vmem:[%s1493 + $0xc2] sm:$0xff]
    %v1965 = vld [vmem:[%s1493 + $0xd2] sm:$0xff]
    %v1966 = vld [vmem:[%s1493 + $0xe2] sm:$0xff]
    %v1967 = vld [vmem:[%s1493 + $0xf2] sm:$0xff]
    %v1968 = vld [vmem:[%s1493 + $0x102] sm:$0xff]
    %v1969 = vld [vmem:[%s1493 + $0x112] sm:$0xff]
    %s1970 = scalar_lea.vmem [#allocation4], 32
    %v1971 = vld [vmem:[%s1970] sm:$0xf]
    %v1973 = vsel %vm128, %v1954, 0
    %v1976 = vsel %vm128, %v1955, 0
    %v1979 = vsel %vm128, %v1956, 0
    %v1982 = vsel %vm128, %v1957, 0
    %v1985 = vsel %vm128, %v1958, 0
    %v1988 = vsel %vm128, %v1959, 0
    %v1991 = vsel %vm128, %v1960, 0
    %v1994 = vsel %vm128, %v1961, 0
    %v1997 = vsel %vm128, %v1962, 0
    %v2000 = vsel %vm128, %v1963, 0
    %v2003 = vsel %vm128, %v1964, 0
    %v2006 = vsel %vm128, %v1965, 0
    %v2009 = vsel %vm128, %v1966, 0
    %v2012 = vsel %vm128, %v1967, 0
    %v2015 = vsel %vm128, %v1968, 0
    %v2018 = vsel %vm128, %v1969, 0
    %v2021 = vsel %vm228, %v1971, 0
    %2023 = vmatprep.subr.mxu0 0.0
    %2024 = vmatpush1.msra.mxu0 %v2021
    %2025 = vmatprep.subr.mxu0 0.0
    %2026 = vmatpush1.msra.mxu0 0.0
    %2027 = vmatprep.subr.mxu0 0.0
    %2028 = vmatpush1.msra.mxu0 0.0
    %2029 = vmatprep.subr.mxu0 0.0
    %2030 = vmatpush1.msra.mxu0 0.0
    %2031 = vmatprep.subr.mxu0 0.0
    %2032 = vmatpush1.msra.mxu0 0.0
    %2033 = vmatprep.subr.mxu0 0.0
    %2034 = vmatpush1.msra.mxu0 0.0
    %2035 = vmatprep.subr.mxu0 0.0
    %2036 = vmatpush1.msra.mxu0 0.0
    %2037 = vmatprep.subr.mxu0 0.0
    %2038 = vmatpush1.msra.mxu0 0.0
    %2039 = vmatprep.subr.mxu0 0.0
    %2040 = vmatpush1.msra.mxu0 0.0
    %2041 = vmatprep.subr.mxu0 0.0
    %2042 = vmatpush1.msra.mxu0 0.0
    %2043 = vmatprep.subr.mxu0 0.0
    %2044 = vmatpush1.msra.mxu0 0.0
    %2045 = vmatprep.subr.mxu0 0.0
    %2046 = vmatpush1.msra.mxu0 0.0
    %2047 = vmatprep.subr.mxu0 0.0
    %2048 = vmatpush1.msra.mxu0 0.0
    %2049 = vmatprep.subr.mxu0 0.0
    %2050 = vmatpush1.msra.mxu0 0.0
    %2051 = vmatprep.subr.mxu0 0.0
    %2052 = vmatpush1.msra.mxu0 0.0
    %2053 = vmatprep.subr.mxu0 0.0
    %2054 = vmatpush1.msra.mxu0 0.0
    %2055 = vmatprep.subr.mxu0 0.0
    %2056 = vmatpush1.msra.mxu0 0.0
    %2057 = vmatprep.subr.mxu0 0.0
    %2058 = vmatpush1.msra.mxu0 0.0
    %2059 = vmatprep.subr.mxu0 0.0
    %2060 = vmatpush1.msra.mxu0 0.0
    %2061 = vmatprep.subr.mxu0 0.0
    %2062 = vmatpush1.msra.mxu0 0.0
    %2063 = vmatprep.subr.mxu0 0.0
    %2064 = vmatpush1.msra.mxu0 0.0
    %2065 = vmatprep.subr.mxu0 0.0
    %2066 = vmatpush1.msra.mxu0 0.0
    %2067 = vmatprep.subr.mxu0 0.0
    %2068 = vmatpush1.msra.mxu0 0.0
    %2069 = vmatprep.subr.mxu0 0.0
    %2070 = vmatpush1.msra.mxu0 0.0
    %2071 = vmatprep.subr.mxu0 0.0
    %2072 = vmatpush1.msra.mxu0 0.0
    %2073 = vmatprep.subr.mxu0 0.0
    %2074 = vmatpush1.msra.mxu0 0.0
    %2075 = vmatprep.subr.mxu0 0.0
    %2076 = vmatpush1.msra.mxu0 0.0
    %2077 = vmatprep.subr.mxu0 0.0
    %2078 = vmatpush1.msra.mxu0 0.0
    %2079 = vmatprep.subr.mxu0 0.0
    %2080 = vmatpush1.msra.mxu0 0.0
    %2081 = vmatprep.subr.mxu0 0.0
    %2082 = vmatpush1.msra.mxu0 0.0
    %2083 = vmatprep.subr.mxu0 0.0
    %2084 = vmatpush1.msra.mxu0 0.0
    %2085 = vmatprep.subr.mxu0 0.0
    %2086 = vmatpush1.msra.mxu0 0.0
    %2087 = vmatprep.mubr.f32.mxu0 0.0
    %2088 = vmatmul.mubr.f32.gmra.mrb[0].mxu0 %v1973
    %v2089 = vpop.f32.mrb[0].mxu0
    %v2090 = vadd.f32 0.0, %v2089
    %v2091 = vpop.f32.mrb[0].mxu0
    %2092 = vmatprep.mubr.f32.mxu0 0.0
    %2093 = vmatmul.mubr.f32.gmra.mrb[0].mxu0 %v1976
    %v2094 = vpop.f32.mrb[0].mxu0
    %v2095 = vadd.f32 0.0, %v2094
    %v2096 = vpop.f32.mrb[0].mxu0
    %2097 = vmatprep.mubr.f32.mxu0 0.0
    %2098 = vmatmul.mubr.f32.gmra.mrb[0].mxu0 %v1979
    %v2099 = vpop.f32.mrb[0].mxu0
    %v2100 = vadd.f32 0.0, %v2099
    %v2101 = vpop.f32.mrb[0].mxu0
    %2102 = vmatprep.mubr.f32.mxu0 0.0
    %2103 = vmatmul.mubr.f32.gmra.mrb[0].mxu0 %v1982
    %v2104 = vpop.f32.mrb[0].mxu0
    %v2105 = vadd.f32 0.0, %v2104
    %v2106 = vpop.f32.mrb[0].mxu0
    %2107 = vmatprep.mubr.f32.mxu0 0.0
    %2108 = vmatmul.mubr.f32.gmra.mrb[0].mxu0 %v1985
    %v2109 = vpop.f32.mrb[0].mxu0
    %v2110 = vadd.f32 0.0, %v2109
    %v2111 = vpop.f32.mrb[0].mxu0
    %2112 = vmatprep.mubr.f32.mxu0 0.0
    %2113 = vmatmul.mubr.f32.gmra.mrb[0].mxu0 %v1988
    %v2114 = vpop.f32.mrb[0].mxu0
    %v2115 = vadd.f32 0.0, %v2114
    %v2116 = vpop.f32.mrb[0].mxu0
    %2117 = vmatprep.mubr.f32.mxu0 0.0
    %2118 = vmatmul.mubr.f32.gmra.mrb[0].mxu0 %v1991
    %v2119 = vpop.f32.mrb[0].mxu0
    %v2120 = vadd.f32 0.0, %v2119
    %v2121 = vpop.f32.mrb[0].mxu0
    %2122 = vmatprep.mubr.f32.mxu0 0.0
    %2123 = vmatmul.mubr.f32.gmra.mrb[0].mxu0 %v1994
    %v2124 = vpop.f32.mrb[0].mxu0
    %v2125 = vadd.f32 0.0, %v2124
    %v2126 = vpop.f32.mrb[0].mxu0
    %2127 = vmatprep.mubr.f32.mxu0 0.0
    %2128 = vmatmul.mubr.f32.gmra.mrb[0].mxu0 %v1997
    %v2129 = vpop.f32.mrb[0].mxu0
    %v2130 = vadd.f32 0.0, %v2129
    %v2131 = vpop.f32.mrb[0].mxu0
    %2132 = vmatprep.mubr.f32.mxu0 0.0
    %2133 = vmatmul.mubr.f32.gmra.mrb[0].mxu0 %v2000
    %v2134 = vpop.f32.mrb[0].mxu0
    %v2135 = vadd.f32 0.0, %v2134
    %v2136 = vpop.f32.mrb[0].mxu0
    %2137 = vmatprep.mubr.f32.mxu0 0.0
    %2138 = vmatmul.mubr.f32.gmra.mrb[0].mxu0 %v2003
    %v2139 = vpop.f32.mrb[0].mxu0
    %v2140 = vadd.f32 0.0, %v2139
    %v2141 = vpop.f32.mrb[0].mxu0
    %2142 = vmatprep.mubr.f32.mxu0 0.0
    %2143 = vmatmul.mubr.f32.gmra.mrb[0].mxu0 %v2006
    %v2144 = vpop.f32.mrb[0].mxu0
    %v2145 = vadd.f32 0.0, %v2144
    %v2146 = vpop.f32.mrb[0].mxu0
    %2147 = vmatprep.mubr.f32.mxu0 0.0
    %2148 = vmatmul.mubr.f32.gmra.mrb[0].mxu0 %v2009
    %v2149 = vpop.f32.mrb[0].mxu0
    %v2150 = vadd.f32 0.0, %v2149
    %v2151 = vpop.f32.mrb[0].mxu0
    %2152 = vmatprep.mubr.f32.mxu0 0.0
    %2153 = vmatmul.mubr.f32.gmra.mrb[0].mxu0 %v2012
    %v2154 = vpop.f32.mrb[0].mxu0
    %v2155 = vadd.f32 0.0, %v2154
    %v2156 = vpop.f32.mrb[0].mxu0
    %2157 = vmatprep.mubr.f32.mxu0 0.0
    %2158 = vmatmul.mubr.f32.gmra.mrb[0].mxu0 %v2015
    %v2159 = vpop.f32.mrb[0].mxu0
    %v2160 = vadd.f32 0.0, %v2159
    %v2161 = vpop.f32.mrb[0].mxu0
    %2162 = vmatprep.mubr.f32.mxu0 0.0
    %2163 = vmatmul.mubr.f32.gmra.mrb[0].mxu0 %v2018
    %v2164 = vpop.f32.mrb[0].mxu0
    %v2165 = vadd.f32 0.0, %v2164
    %v2166 = vpop.f32.mrb[0].mxu0
    %2167 = vdwg.mxu0
    %v2168 = vadd.f32 %v1938, %v2090
    %v2169 = vadd.f32 %v1939, %v2095
    %v2170 = vadd.f32 %v1940, %v2100
    %v2171 = vadd.f32 %v1941, %v2105
    %v2172 = vadd.f32 %v1942, %v2110
    %v2173 = vadd.f32 %v1943, %v2115
    %v2174 = vadd.f32 %v1944, %v2120
    %v2175 = vadd.f32 %v1945, %v2125
    %v2176 = vadd.f32 %v1946, %v2130
    %v2177 = vadd.f32 %v1947, %v2135
    %v2178 = vadd.f32 %v1948, %v2140
    %v2179 = vadd.f32 %v1949, %v2145
    %v2180 = vadd.f32 %v1950, %v2150
    %v2181 = vadd.f32 %v1951, %v2155
    %v2182 = vadd.f32 %v1952, %v2160
    %v2183 = vadd.f32 %v1953, %v2165
    %v2184 = vld [vmem:[%s2] sm:$0x1]
    %v2186 = vlaneseq
    %v2187 = vshrl.u32 %v2186, 7
    %v2188 = vsub.s32 0, %v2187
    %v2189 = vrot.slane %v2184, %v2188
    %v2191 = vadd.f32 %v2168, %v2189
    %v2192 = vadd.f32 %v2169, %v2189
    %v2193 = vadd.f32 %v2170, %v2189
    %v2194 = vadd.f32 %v2171, %v2189
    %v2195 = vadd.f32 %v2172, %v2189
    %v2196 = vadd.f32 %v2173, %v2189
    %v2197 = vadd.f32 %v2174, %v2189
    %v2198 = vadd.f32 %v2175, %v2189
    %v2199 = vadd.f32 %v2176, %v2189
    %v2200 = vadd.f32 %v2177, %v2189
    %v2201 = vadd.f32 %v2178, %v2189
    %v2202 = vadd.f32 %v2179, %v2189
    %v2203 = vadd.f32 %v2180, %v2189
    %v2204 = vadd.f32 %v2181, %v2189
    %v2205 = vadd.f32 %v2182, %v2189
    %v2206 = vadd.f32 %v2183, %v2189
    %v2207 = vmax.f32 %v2191, 0.0
    %v2208 = vmax.f32 %v2192, 0.0
    %v2209 = vmax.f32 %v2193, 0.0
    %v2210 = vmax.f32 %v2194, 0.0
    %v2211 = vmax.f32 %v2195, 0.0
    %v2212 = vmax.f32 %v2196, 0.0
    %v2213 = vmax.f32 %v2197, 0.0
    %v2214 = vmax.f32 %v2198, 0.0
    %v2215 = vmax.f32 %v2199, 0.0
    %v2216 = vmax.f32 %v2200, 0.0
    %v2217 = vmax.f32 %v2201, 0.0
    %v2218 = vmax.f32 %v2202, 0.0
    %v2219 = vmax.f32 %v2203, 0.0
    %v2220 = vmax.f32 %v2204, 0.0
    %v2221 = vmax.f32 %v2205, 0.0
    %v2222 = vmax.f32 %v2206, 0.0
    %vm2223 = vcmask 261120
    %2224 = vst.msk [vmem:[%s127 + $0x1] sm:$0xff] %vm2223, %v2207
    %2225 = vst.msk [vmem:[%s127 + $0x11] sm:$0xff] %vm2223, %v2208
    %2226 = vst.msk [vmem:[%s127 + $0x21] sm:$0xff] %vm2223, %v2209
    %2227 = vst.msk [vmem:[%s127 + $0x31] sm:$0xff] %vm2223, %v2210
    %2228 = vst.msk [vmem:[%s127 + $0x41] sm:$0xff] %vm2223, %v2211
    %2229 = vst.msk [vmem:[%s127 + $0x51] sm:$0xff] %vm2223, %v2212
    %2230 = vst.msk [vmem:[%s127 + $0x61] sm:$0xff] %vm2223, %v2213
    %2231 = vst.msk [vmem:[%s127 + $0x71] sm:$0xff] %vm2223, %v2214
    %2232 = vst.msk [vmem:[%s127 + $0xa1] sm:$0xff] %vm2223, %v2215
    %2233 = vst.msk [vmem:[%s127 + $0xb1] sm:$0xff] %vm2223, %v2216
    %2234 = vst.msk [vmem:[%s127 + $0xc1] sm:$0xff] %vm2223, %v2217
    %2235 = vst.msk [vmem:[%s127 + $0xd1] sm:$0xff] %vm2223, %v2218
    %2236 = vst.msk [vmem:[%s127 + $0xe1] sm:$0xff] %vm2223, %v2219
    %2237 = vst.msk [vmem:[%s127 + $0xf1] sm:$0xff] %vm2223, %v2220
    %2238 = vst.msk [vmem:[%s127 + $0x101] sm:$0xff] %vm2223, %v2221
    %2239 = vst.msk [vmem:[%s127 + $0x111] sm:$0xff] %vm2223, %v2222
    %v2240 = vld [vmem:[#allocation2] sm:$0xff]
    %v2241 = vld [vmem:[#allocation2 + $0x10] sm:$0xff]
    %v2242 = vld [vmem:[#allocation2 + $0x20] sm:$0xff]
    %v2243 = vld [vmem:[#allocation2 + $0x30] sm:$0xff]
    %v2244 = vld [vmem:[#allocation2 + $0x40] sm:$0xff]
    %v2245 = vld [vmem:[#allocation2 + $0x50] sm:$0xff]
    %v2246 = vld [vmem:[#allocation2 + $0x60] sm:$0xff]
    %v2247 = vld [vmem:[#allocation2 + $0x70] sm:$0xff]
    %v2248 = vld [vmem:[#allocation2 + $0xa0] sm:$0xff]
    %v2249 = vld [vmem:[#allocation2 + $0xb0] sm:$0xff]
    %v2250 = vld [vmem:[#allocation2 + $0xc0] sm:$0xff]
    %v2251 = vld [vmem:[#allocation2 + $0xd0] sm:$0xff]
    %v2252 = vld [vmem:[#allocation2 + $0xe0] sm:$0xff]
    %v2253 = vld [vmem:[#allocation2 + $0xf0] sm:$0xff]
    %v2254 = vld [vmem:[#allocation2 + $0x100] sm:$0xff]
    %v2255 = vld [vmem:[#allocation2 + $0x110] sm:$0xff]
    %v2256 = vld [vmem:[%s3] sm:$0xff]
    %v2257 = vld [vmem:[%s3 + $0x8] sm:$0xff]
    %v2258 = vld [vmem:[%s3 + $0x10] sm:$0xff]
    %v2259 = vld [vmem:[%s3 + $0x18] sm:$0xff]
    %v2260 = vld [vmem:[#allocation2 + $0x1] sm:$0xff]
    %v2261 = vld [vmem:[#allocation2 + $0x11] sm:$0xff]
    %v2262 = vld [vmem:[#allocation2 + $0x21] sm:$0xff]
    %v2263 = vld [vmem:[#allocation2 + $0x31] sm:$0xff]
    %v2264 = vld [vmem:[#allocation2 + $0x41] sm:$0xff]
    %v2265 = vld [vmem:[#allocation2 + $0x51] sm:$0xff]
    %v2266 = vld [vmem:[#allocation2 + $0x61] sm:$0xff]
    %v2267 = vld [vmem:[#allocation2 + $0x71] sm:$0xff]
    %v2268 = vld [vmem:[#allocation2 + $0xa1] sm:$0xff]
    %v2269 = vld [vmem:[#allocation2 + $0xb1] sm:$0xff]
    %v2270 = vld [vmem:[#allocation2 + $0xc1] sm:$0xff]
    %v2271 = vld [vmem:[#allocation2 + $0xd1] sm:$0xff]
    %v2272 = vld [vmem:[#allocation2 + $0xe1] sm:$0xff]
    %v2273 = vld [vmem:[#allocation2 + $0xf1] sm:$0xff]
    %v2274 = vld [vmem:[#allocation2 + $0x101] sm:$0xff]
    %v2275 = vld [vmem:[#allocation2 + $0x111] sm:$0xff]
    %s2276 = scalar_lea.vmem %s3, 32
    %v2277 = vld [vmem:[%s2276] sm:$0xff]
    %v2278 = vld [vmem:[%s2276 + $0x8] sm:$0xff]
    %v2279 = vld [vmem:[%s2276 + $0x10] sm:$0xff]
    %v2280 = vld [vmem:[%s2276 + $0x18] sm:$0xff]
    %v2282 = vsel %vm2223, %v2260, 0
    %v2285 = vsel %vm2223, %v2261, 0
    %v2288 = vsel %vm2223, %v2262, 0
    %v2291 = vsel %vm2223, %v2263, 0
    %v2294 = vsel %vm2223, %v2264, 0
    %v2297 = vsel %vm2223, %v2265, 0
    %v2300 = vsel %vm2223, %v2266, 0
    %v2303 = vsel %vm2223, %v2267, 0
    %v2306 = vsel %vm2223, %v2268, 0
    %v2309 = vsel %vm2223, %v2269, 0
    %v2312 = vsel %vm2223, %v2270, 0
    %v2315 = vsel %vm2223, %v2271, 0
    %v2318 = vsel %vm2223, %v2272, 0
    %v2321 = vsel %vm2223, %v2273, 0
    %v2324 = vsel %vm2223, %v2274, 0
    %v2327 = vsel %vm2223, %v2275, 0
    %2329 = vmatprep.subr.mxu0 0.0
    %2330 = vmatpush1.msra.mxu0 %v2277
    %2331 = vmatprep.subr.mxu0 0.0
    %2332 = vmatpush1.msra.mxu0 %v2278
    %2333 = vmatprep.subr.mxu0 0.0
    %2334 = vmatpush1.msra.mxu0 %v2279
    %2335 = vmatprep.subr.mxu0 0.0
    %2336 = vmatpush1.msra.mxu0 %v2280
    %2337 = vmatprep.subr.mxu0 0.0
    %2338 = vmatpush1.msra.mxu0 0.0
    %2339 = vmatprep.subr.mxu0 0.0
    %2340 = vmatpush1.msra.mxu0 0.0
    %2341 = vmatprep.subr.mxu0 0.0
    %2342 = vmatpush1.msra.mxu0 0.0
    %2343 = vmatprep.subr.mxu0 0.0
    %2344 = vmatpush1.msra.mxu0 0.0
    %2345 = vmatprep.subr.mxu0 0.0
    %2346 = vmatpush1.msra.mxu0 0.0
    %2347 = vmatprep.subr.mxu0 0.0
    %2348 = vmatpush1.msra.mxu0 0.0
    %2349 = vmatprep.subr.mxu0 0.0
    %2350 = vmatpush1.msra.mxu0 0.0
    %2351 = vmatprep.subr.mxu0 0.0
    %2352 = vmatpush1.msra.mxu0 0.0
    %2353 = vmatprep.subr.mxu0 0.0
    %2354 = vmatpush1.msra.mxu0 0.0
    %2355 = vmatprep.subr.mxu0 0.0
    %2356 = vmatpush1.msra.mxu0 0.0
    %2357 = vmatprep.subr.mxu0 0.0
    %2358 = vmatpush1.msra.mxu0 0.0
    %2359 = vmatprep.subr.mxu0 0.0
    %2360 = vmatpush1.msra.mxu0 0.0
    %2361 = vmatprep.subr.mxu0 0.0
    %2362 = vmatpush1.msra.mxu0 0.0
    %2363 = vmatprep.subr.mxu0 0.0
    %2364 = vmatpush1.msra.mxu0 0.0
    %2365 = vmatprep.subr.mxu0 0.0
    %2366 = vmatpush1.msra.mxu0 0.0
    %2367 = vmatprep.subr.mxu0 0.0
    %2368 = vmatpush1.msra.mxu0 0.0
    %2369 = vmatprep.subr.mxu0 0.0
    %2370 = vmatpush1.msra.mxu0 0.0
    %2371 = vmatprep.subr.mxu0 0.0
    %2372 = vmatpush1.msra.mxu0 0.0
    %2373 = vmatprep.subr.mxu0 0.0
    %2374 = vmatpush1.msra.mxu0 0.0
    %2375 = vmatprep.subr.mxu0 0.0
    %2376 = vmatpush1.msra.mxu0 0.0
    %2377 = vmatprep.subr.mxu0 0.0
    %2378 = vmatpush1.msra.mxu0 0.0
    %2379 = vmatprep.subr.mxu0 0.0
    %2380 = vmatpush1.msra.mxu0 0.0
    %2381 = vmatprep.subr.mxu0 0.0
    %2382 = vmatpush1.msra.mxu0 0.0
    %2383 = vmatprep.subr.mxu0 0.0
    %2384 = vmatpush1.msra.mxu0 0.0
    %2385 = vmatprep.subr.mxu0 0.0
    %2386 = vmatpush1.msra.mxu0 0.0
    %2387 = vmatprep.subr.mxu0 0.0
    %2388 = vmatpush1.msra.mxu0 0.0
    %2389 = vmatprep.subr.mxu0 0.0
    %2390 = vmatpush1.msra.mxu0 0.0
    %2391 = vmatprep.subr.mxu0 0.0
    %2392 = vmatpush1.msra.mxu0 0.0
    %2393 = vmatprep.mubr.f32.mxu0 0.0
    %2394 = vmatmul.mubr.f32.gmra.mrb[0].mxu0 %v2282
    %v2395 = vpop.f32.mrb[0].mxu0
    %v2396 = vadd.f32 0.0, %v2395
    %v2397 = vpop.f32.mrb[0].mxu0
    %2398 = vmatprep.mubr.f32.mxu0 0.0
    %2399 = vmatmul.mubr.f32.gmra.mrb[0].mxu0 %v2285
    %v2400 = vpop.f32.mrb[0].mxu0
    %v2401 = vadd.f32 0.0, %v2400
    %v2402 = vpop.f32.mrb[0].mxu0
    %2403 = vmatprep.mubr.f32.mxu0 0.0
    %2404 = vmatmul.mubr.f32.gmra.mrb[0].mxu0 %v2288
    %v2405 = vpop.f32.mrb[0].mxu0
    %v2406 = vadd.f32 0.0, %v2405
    %v2407 = vpop.f32.mrb[0].mxu0
    %2408 = vmatprep.mubr.f32.mxu0 0.0
    %2409 = vmatmul.mubr.f32.gmra.mrb[0].mxu0 %v2291
    %v2410 = vpop.f32.mrb[0].mxu0
    %v2411 = vadd.f32 0.0, %v2410
    %v2412 = vpop.f32.mrb[0].mxu0
    %2413 = vmatprep.mubr.f32.mxu0 0.0
    %2414 = vmatmul.mubr.f32.gmra.mrb[0].mxu0 %v2294
    %v2415 = vpop.f32.mrb[0].mxu0
    %v2416 = vadd.f32 0.0, %v2415
    %v2417 = vpop.f32.mrb[0].mxu0
    %2418 = vmatprep.mubr.f32.mxu0 0.0
    %2419 = vmatmul.mubr.f32.gmra.mrb[0].mxu0 %v2297
    %v2420 = vpop.f32.mrb[0].mxu0
    %v2421 = vadd.f32 0.0, %v2420
    %v2422 = vpop.f32.mrb[0].mxu0
    %2423 = vmatprep.mubr.f32.mxu0 0.0
    %2424 = vmatmul.mubr.f32.gmra.mrb[0].mxu0 %v2300
    %v2425 = vpop.f32.mrb[0].mxu0
    %v2426 = vadd.f32 0.0, %v2425
    %v2427 = vpop.f32.mrb[0].mxu0
    %2428 = vmatprep.mubr.f32.mxu0 0.0
    %2429 = vmatmul.mubr.f32.gmra.mrb[0].mxu0 %v2303
    %v2430 = vpop.f32.mrb[0].mxu0
    %v2431 = vadd.f32 0.0, %v2430
    %v2432 = vpop.f32.mrb[0].mxu0
    %2433 = vmatprep.mubr.f32.mxu0 0.0
    %2434 = vmatmul.mubr.f32.gmra.mrb[0].mxu0 %v2306
    %v2435 = vpop.f32.mrb[0].mxu0
    %v2436 = vadd.f32 0.0, %v2435
    %v2437 = vpop.f32.mrb[0].mxu0
    %2438 = vmatprep.mubr.f32.mxu0 0.0
    %2439 = vmatmul.mubr.f32.gmra.mrb[0].mxu0 %v2309
    %v2440 = vpop.f32.mrb[0].mxu0
    %v2441 = vadd.f32 0.0, %v2440
    %v2442 = vpop.f32.mrb[0].mxu0
    %2443 = vmatprep.mubr.f32.mxu0 0.0
    %2444 = vmatmul.mubr.f32.gmra.mrb[0].mxu0 %v2312
    %v2445 = vpop.f32.mrb[0].mxu0
    %v2446 = vadd.f32 0.0, %v2445
    %v2447 = vpop.f32.mrb[0].mxu0
    %2448 = vmatprep.mubr.f32.mxu0 0.0
    %2449 = vmatmul.mubr.f32.gmra.mrb[0].mxu0 %v2315
    %v2450 = vpop.f32.mrb[0].mxu0
    %v2451 = vadd.f32 0.0, %v2450
    %v2452 = vpop.f32.mrb[0].mxu0
    %2453 = vmatprep.mubr.f32.mxu0 0.0
    %2454 = vmatmul.mubr.f32.gmra.mrb[0].mxu0 %v2318
    %v2455 = vpop.f32.mrb[0].mxu0
    %v2456 = vadd.f32 0.0, %v2455
    %v2457 = vpop.f32.mrb[0].mxu0
    %2458 = vmatprep.mubr.f32.mxu0 0.0
    %2459 = vmatmul.mubr.f32.gmra.mrb[0].mxu0 %v2321
    %v2460 = vpop.f32.mrb[0].mxu0
    %v2461 = vadd.f32 0.0, %v2460
    %v2462 = vpop.f32.mrb[0].mxu0
    %2463 = vmatprep.mubr.f32.mxu0 0.0
    %2464 = vmatmul.mubr.f32.gmra.mrb[0].mxu0 %v2324
    %v2465 = vpop.f32.mrb[0].mxu0
    %v2466 = vadd.f32 0.0, %v2465
    %v2467 = vpop.f32.mrb[0].mxu0
    %2468 = vmatprep.mubr.f32.mxu0 0.0
    %2469 = vmatmul.mubr.f32.gmra.mrb[0].mxu0 %v2327
    %v2470 = vpop.f32.mrb[0].mxu0
    %v2471 = vadd.f32 0.0, %v2470
    %v2472 = vpop.f32.mrb[0].mxu0
    %2473 = vdwg.mxu0
    %v2475 = vsel %vm2223, %v2240, 0
    %v2478 = vsel %vm2223, %v2241, 0
    %v2481 = vsel %vm2223, %v2242, 0
    %v2484 = vsel %vm2223, %v2243, 0
    %v2487 = vsel %vm2223, %v2244, 0
    %v2490 = vsel %vm2223, %v2245, 0
    %v2493 = vsel %vm2223, %v2246, 0
    %v2496 = vsel %vm2223, %v2247, 0
    %v2499 = vsel %vm2223, %v2248, 0
    %v2502 = vsel %vm2223, %v2249, 0
    %v2505 = vsel %vm2223, %v2250, 0
    %v2508 = vsel %vm2223, %v2251, 0
    %v2511 = vsel %vm2223, %v2252, 0
    %v2514 = vsel %vm2223, %v2253, 0
    %v2517 = vsel %vm2223, %v2254, 0
    %v2520 = vsel %vm2223, %v2255, 0
    %2522 = vmatprep.subr.mxu0 0.0
    %2523 = vmatpush1.msra.mxu0 %v2256
    %2524 = vmatprep.subr.mxu0 0.0
    %2525 = vmatpush1.msra.mxu0 %v2257
    %2526 = vmatprep.subr.mxu0 0.0
    %2527 = vmatpush1.msra.mxu0 %v2258
    %2528 = vmatprep.subr.mxu0 0.0
    %2529 = vmatpush1.msra.mxu0 %v2259
    %2530 = vmatprep.subr.mxu0 0.0
    %2531 = vmatpush1.msra.mxu0 0.0
    %2532 = vmatprep.subr.mxu0 0.0
    %2533 = vmatpush1.msra.mxu0 0.0
    %2534 = vmatprep.subr.mxu0 0.0
    %2535 = vmatpush1.msra.mxu0 0.0
    %2536 = vmatprep.subr.mxu0 0.0
    %2537 = vmatpush1.msra.mxu0 0.0
    %2538 = vmatprep.subr.mxu0 0.0
    %2539 = vmatpush1.msra.mxu0 0.0
    %2540 = vmatprep.subr.mxu0 0.0
    %2541 = vmatpush1.msra.mxu0 0.0
    %2542 = vmatprep.subr.mxu0 0.0
    %2543 = vmatpush1.msra.mxu0 0.0
    %2544 = vmatprep.subr.mxu0 0.0
    %2545 = vmatpush1.msra.mxu0 0.0
    %2546 = vmatprep.subr.mxu0 0.0
    %2547 = vmatpush1.msra.mxu0 0.0
    %2548 = vmatprep.subr.mxu0 0.0
    %2549 = vmatpush1.msra.mxu0 0.0
    %2550 = vmatprep.subr.mxu0 0.0
    %2551 = vmatpush1.msra.mxu0 0.0
    %2552 = vmatprep.subr.mxu0 0.0
    %2553 = vmatpush1.msra.mxu0 0.0
    %2554 = vmatprep.subr.mxu0 0.0
    %2555 = vmatpush1.msra.mxu0 0.0
    %2556 = vmatprep.subr.mxu0 0.0
    %2557 = vmatpush1.msra.mxu0 0.0
    %2558 = vmatprep.subr.mxu0 0.0
    %2559 = vmatpush1.msra.mxu0 0.0
    %2560 = vmatprep.subr.mxu0 0.0
    %2561 = vmatpush1.msra.mxu0 0.0
    %2562 = vmatprep.subr.mxu0 0.0
    %2563 = vmatpush1.msra.mxu0 0.0
    %2564 = vmatprep.subr.mxu0 0.0
    %2565 = vmatpush1.msra.mxu0 0.0
    %2566 = vmatprep.subr.mxu0 0.0
    %2567 = vmatpush1.msra.mxu0 0.0
    %2568 = vmatprep.subr.mxu0 0.0
    %2569 = vmatpush1.msra.mxu0 0.0
    %2570 = vmatprep.subr.mxu0 0.0
    %2571 = vmatpush1.msra.mxu0 0.0
    %2572 = vmatprep.subr.mxu0 0.0
    %2573 = vmatpush1.msra.mxu0 0.0
    %2574 = vmatprep.subr.mxu0 0.0
    %2575 = vmatpush1.msra.mxu0 0.0
    %2576 = vmatprep.subr.mxu0 0.0
    %2577 = vmatpush1.msra.mxu0 0.0
    %2578 = vmatprep.subr.mxu0 0.0
    %2579 = vmatpush1.msra.mxu0 0.0
    %2580 = vmatprep.subr.mxu0 0.0
    %2581 = vmatpush1.msra.mxu0 0.0
    %2582 = vmatprep.subr.mxu0 0.0
    %2583 = vmatpush1.msra.mxu0 0.0
    %2584 = vmatprep.subr.mxu0 0.0
    %2585 = vmatpush1.msra.mxu0 0.0
    %2586 = vmatprep.mubr.f32.mxu0 0.0
    %2587 = vmatmul.mubr.f32.gmra.mrb[0].mxu0 %v2475
    %v2588 = vpop.f32.mrb[0].mxu0
    %v2589 = vadd.f32 %v2396, %v2588
    %v2590 = vpop.f32.mrb[0].mxu0
    %2591 = vmatprep.mubr.f32.mxu0 0.0
    %2592 = vmatmul.mubr.f32.gmra.mrb[0].mxu0 %v2478
    %v2593 = vpop.f32.mrb[0].mxu0
    %v2594 = vadd.f32 %v2401, %v2593
    %v2595 = vpop.f32.mrb[0].mxu0
    %2596 = vmatprep.mubr.f32.mxu0 0.0
    %2597 = vmatmul.mubr.f32.gmra.mrb[0].mxu0 %v2481
    %v2598 = vpop.f32.mrb[0].mxu0
    %v2599 = vadd.f32 %v2406, %v2598
    %v2600 = vpop.f32.mrb[0].mxu0
    %2601 = vmatprep.mubr.f32.mxu0 0.0
    %2602 = vmatmul.mubr.f32.gmra.mrb[0].mxu0 %v2484
    %v2603 = vpop.f32.mrb[0].mxu0
    %v2604 = vadd.f32 %v2411, %v2603
    %v2605 = vpop.f32.mrb[0].mxu0
    %2606 = vmatprep.mubr.f32.mxu0 0.0
    %2607 = vmatmul.mubr.f32.gmra.mrb[0].mxu0 %v2487
    %v2608 = vpop.f32.mrb[0].mxu0
    %v2609 = vadd.f32 %v2416, %v2608
    %v2610 = vpop.f32.mrb[0].mxu0
    %2611 = vmatprep.mubr.f32.mxu0 0.0
    %2612 = vmatmul.mubr.f32.gmra.mrb[0].mxu0 %v2490
    %v2613 = vpop.f32.mrb[0].mxu0
    %v2614 = vadd.f32 %v2421, %v2613
    %v2615 = vpop.f32.mrb[0].mxu0
    %2616 = vmatprep.mubr.f32.mxu0 0.0
    %2617 = vmatmul.mubr.f32.gmra.mrb[0].mxu0 %v2493
    %v2618 = vpop.f32.mrb[0].mxu0
    %v2619 = vadd.f32 %v2426, %v2618
    %v2620 = vpop.f32.mrb[0].mxu0
    %2621 = vmatprep.mubr.f32.mxu0 0.0
    %2622 = vmatmul.mubr.f32.gmra.mrb[0].mxu0 %v2496
    %v2623 = vpop.f32.mrb[0].mxu0
    %v2624 = vadd.f32 %v2431, %v2623
    %v2625 = vpop.f32.mrb[0].mxu0
    %2626 = vmatprep.mubr.f32.mxu0 0.0
    %2627 = vmatmul.mubr.f32.gmra.mrb[0].mxu0 %v2499
    %v2628 = vpop.f32.mrb[0].mxu0
    %v2629 = vadd.f32 %v2436, %v2628
    %v2630 = vpop.f32.mrb[0].mxu0
    %2631 = vmatprep.mubr.f32.mxu0 0.0
    %2632 = vmatmul.mubr.f32.gmra.mrb[0].mxu0 %v2502
    %v2633 = vpop.f32.mrb[0].mxu0
    %v2634 = vadd.f32 %v2441, %v2633
    %v2635 = vpop.f32.mrb[0].mxu0
    %2636 = vmatprep.mubr.f32.mxu0 0.0
    %2637 = vmatmul.mubr.f32.gmra.mrb[0].mxu0 %v2505
    %v2638 = vpop.f32.mrb[0].mxu0
    %v2639 = vadd.f32 %v2446, %v2638
    %v2640 = vpop.f32.mrb[0].mxu0
    %2641 = vmatprep.mubr.f32.mxu0 0.0
    %2642 = vmatmul.mubr.f32.gmra.mrb[0].mxu0 %v2508
    %v2643 = vpop.f32.mrb[0].mxu0
    %v2644 = vadd.f32 %v2451, %v2643
    %v2645 = vpop.f32.mrb[0].mxu0
    %2646 = vmatprep.mubr.f32.mxu0 0.0
    %2647 = vmatmul.mubr.f32.gmra.mrb[0].mxu0 %v2511
    %v2648 = vpop.f32.mrb[0].mxu0
    %v2649 = vadd.f32 %v2456, %v2648
    %v2650 = vpop.f32.mrb[0].mxu0
    %2651 = vmatprep.mubr.f32.mxu0 0.0
    %2652 = vmatmul.mubr.f32.gmra.mrb[0].mxu0 %v2514
    %v2653 = vpop.f32.mrb[0].mxu0
    %v2654 = vadd.f32 %v2461, %v2653
    %v2655 = vpop.f32.mrb[0].mxu0
    %2656 = vmatprep.mubr.f32.mxu0 0.0
    %2657 = vmatmul.mubr.f32.gmra.mrb[0].mxu0 %v2517
    %v2658 = vpop.f32.mrb[0].mxu0
    %v2659 = vadd.f32 %v2466, %v2658
    %v2660 = vpop.f32.mrb[0].mxu0
    %2661 = vmatprep.mubr.f32.mxu0 0.0
    %2662 = vmatmul.mubr.f32.gmra.mrb[0].mxu0 %v2520
    %v2663 = vpop.f32.mrb[0].mxu0
    %v2664 = vadd.f32 %v2471, %v2663
    %v2665 = vpop.f32.mrb[0].mxu0
    %2666 = vdwg.mxu0
    %v2667 = vld [vmem:[#allocation2 + $0x2] sm:$0xff]
    %v2668 = vld [vmem:[#allocation2 + $0x12] sm:$0xff]
    %v2669 = vld [vmem:[#allocation2 + $0x22] sm:$0xff]
    %v2670 = vld [vmem:[#allocation2 + $0x32] sm:$0xff]
    %v2671 = vld [vmem:[#allocation2 + $0x42] sm:$0xff]
    %v2672 = vld [vmem:[#allocation2 + $0x52] sm:$0xff]
    %v2673 = vld [vmem:[#allocation2 + $0x62] sm:$0xff]
    %v2674 = vld [vmem:[#allocation2 + $0x72] sm:$0xff]
    %v2675 = vld [vmem:[#allocation2 + $0xa2] sm:$0xff]
    %v2676 = vld [vmem:[#allocation2 + $0xb2] sm:$0xff]
    %v2677 = vld [vmem:[#allocation2 + $0xc2] sm:$0xff]
    %v2678 = vld [vmem:[#allocation2 + $0xd2] sm:$0xff]
    %v2679 = vld [vmem:[#allocation2 + $0xe2] sm:$0xff]
    %v2680 = vld [vmem:[#allocation2 + $0xf2] sm:$0xff]
    %v2681 = vld [vmem:[#allocation2 + $0x102] sm:$0xff]
    %v2682 = vld [vmem:[#allocation2 + $0x112] sm:$0xff]
    %s2683 = scalar_lea.vmem %s3, 64
    %v2684 = vld [vmem:[%s2683] sm:$0xff]
    %v2685 = vld [vmem:[%s2683 + $0x8] sm:$0xff]
    %v2686 = vld [vmem:[%s2683 + $0x10] sm:$0xff]
    %v2687 = vld [vmem:[%s2683 + $0x18] sm:$0xff]
    %v2689 = vsel %vm2223, %v2667, 0
    %v2692 = vsel %vm2223, %v2668, 0
    %v2695 = vsel %vm2223, %v2669, 0
    %v2698 = vsel %vm2223, %v2670, 0
    %v2701 = vsel %vm2223, %v2671, 0
    %v2704 = vsel %vm2223, %v2672, 0
    %v2707 = vsel %vm2223, %v2673, 0
    %v2710 = vsel %vm2223, %v2674, 0
    %v2713 = vsel %vm2223, %v2675, 0
    %v2716 = vsel %vm2223, %v2676, 0
    %v2719 = vsel %vm2223, %v2677, 0
    %v2722 = vsel %vm2223, %v2678, 0
    %v2725 = vsel %vm2223, %v2679, 0
    %v2728 = vsel %vm2223, %v2680, 0
    %v2731 = vsel %vm2223, %v2681, 0
    %v2734 = vsel %vm2223, %v2682, 0
    %2736 = vmatprep.subr.mxu0 0.0
    %2737 = vmatpush1.msra.mxu0 %v2684
    %2738 = vmatprep.subr.mxu0 0.0
    %2739 = vmatpush1.msra.mxu0 %v2685
    %2740 = vmatprep.subr.mxu0 0.0
    %2741 = vmatpush1.msra.mxu0 %v2686
    %2742 = vmatprep.subr.mxu0 0.0
    %2743 = vmatpush1.msra.mxu0 %v2687
    %2744 = vmatprep.subr.mxu0 0.0
    %2745 = vmatpush1.msra.mxu0 0.0
    %2746 = vmatprep.subr.mxu0 0.0
    %2747 = vmatpush1.msra.mxu0 0.0
    %2748 = vmatprep.subr.mxu0 0.0
    %2749 = vmatpush1.msra.mxu0 0.0
    %2750 = vmatprep.subr.mxu0 0.0
    %2751 = vmatpush1.msra.mxu0 0.0
    %2752 = vmatprep.subr.mxu0 0.0
    %2753 = vmatpush1.msra.mxu0 0.0
    %2754 = vmatprep.subr.mxu0 0.0
    %2755 = vmatpush1.msra.mxu0 0.0
    %2756 = vmatprep.subr.mxu0 0.0
    %2757 = vmatpush1.msra.mxu0 0.0
    %2758 = vmatprep.subr.mxu0 0.0
    %2759 = vmatpush1.msra.mxu0 0.0
    %2760 = vmatprep.subr.mxu0 0.0
    %2761 = vmatpush1.msra.mxu0 0.0
    %2762 = vmatprep.subr.mxu0 0.0
    %2763 = vmatpush1.msra.mxu0 0.0
    %2764 = vmatprep.subr.mxu0 0.0
    %2765 = vmatpush1.msra.mxu0 0.0
    %2766 = vmatprep.subr.mxu0 0.0
    %2767 = vmatpush1.msra.mxu0 0.0
    %2768 = vmatprep.subr.mxu0 0.0
    %2769 = vmatpush1.msra.mxu0 0.0
    %2770 = vmatprep.subr.mxu0 0.0
    %2771 = vmatpush1.msra.mxu0 0.0
    %2772 = vmatprep.subr.mxu0 0.0
    %2773 = vmatpush1.msra.mxu0 0.0
    %2774 = vmatprep.subr.mxu0 0.0
    %2775 = vmatpush1.msra.mxu0 0.0
    %2776 = vmatprep.subr.mxu0 0.0
    %2777 = vmatpush1.msra.mxu0 0.0
    %2778 = vmatprep.subr.mxu0 0.0
    %2779 = vmatpush1.msra.mxu0 0.0
    %2780 = vmatprep.subr.mxu0 0.0
    %2781 = vmatpush1.msra.mxu0 0.0
    %2782 = vmatprep.subr.mxu0 0.0
    %2783 = vmatpush1.msra.mxu0 0.0
    %2784 = vmatprep.subr.mxu0 0.0
    %2785 = vmatpush1.msra.mxu0 0.0
    %2786 = vmatprep.subr.mxu0 0.0
    %2787 = vmatpush1.msra.mxu0 0.0
    %2788 = vmatprep.subr.mxu0 0.0
    %2789 = vmatpush1.msra.mxu0 0.0
    %2790 = vmatprep.subr.mxu0 0.0
    %2791 = vmatpush1.msra.mxu0 0.0
    %2792 = vmatprep.subr.mxu0 0.0
    %2793 = vmatpush1.msra.mxu0 0.0
    %2794 = vmatprep.subr.mxu0 0.0
    %2795 = vmatpush1.msra.mxu0 0.0
    %2796 = vmatprep.subr.mxu0 0.0
    %2797 = vmatpush1.msra.mxu0 0.0
    %2798 = vmatprep.subr.mxu0 0.0
    %2799 = vmatpush1.msra.mxu0 0.0
    %2800 = vmatprep.mubr.f32.mxu0 0.0
    %2801 = vmatmul.mubr.f32.gmra.mrb[0].mxu0 %v2689
    %v2802 = vpop.f32.mrb[0].mxu0
    %v2803 = vadd.f32 0.0, %v2802
    %v2804 = vpop.f32.mrb[0].mxu0
    %2805 = vmatprep.mubr.f32.mxu0 0.0
    %2806 = vmatmul.mubr.f32.gmra.mrb[0].mxu0 %v2692
    %v2807 = vpop.f32.mrb[0].mxu0
    %v2808 = vadd.f32 0.0, %v2807
    %v2809 = vpop.f32.mrb[0].mxu0
    %2810 = vmatprep.mubr.f32.mxu0 0.0
    %2811 = vmatmul.mubr.f32.gmra.mrb[0].mxu0 %v2695
    %v2812 = vpop.f32.mrb[0].mxu0
    %v2813 = vadd.f32 0.0, %v2812
    %v2814 = vpop.f32.mrb[0].mxu0
    %2815 = vmatprep.mubr.f32.mxu0 0.0
    %2816 = vmatmul.mubr.f32.gmra.mrb[0].mxu0 %v2698
    %v2817 = vpop.f32.mrb[0].mxu0
    %v2818 = vadd.f32 0.0, %v2817
    %v2819 = vpop.f32.mrb[0].mxu0
    %2820 = vmatprep.mubr.f32.mxu0 0.0
    %2821 = vmatmul.mubr.f32.gmra.mrb[0].mxu0 %v2701
    %v2822 = vpop.f32.mrb[0].mxu0
    %v2823 = vadd.f32 0.0, %v2822
    %v2824 = vpop.f32.mrb[0].mxu0
    %2825 = vmatprep.mubr.f32.mxu0 0.0
    %2826 = vmatmul.mubr.f32.gmra.mrb[0].mxu0 %v2704
    %v2827 = vpop.f32.mrb[0].mxu0
    %v2828 = vadd.f32 0.0, %v2827
    %v2829 = vpop.f32.mrb[0].mxu0
    %2830 = vmatprep.mubr.f32.mxu0 0.0
    %2831 = vmatmul.mubr.f32.gmra.mrb[0].mxu0 %v2707
    %v2832 = vpop.f32.mrb[0].mxu0
    %v2833 = vadd.f32 0.0, %v2832
    %v2834 = vpop.f32.mrb[0].mxu0
    %2835 = vmatprep.mubr.f32.mxu0 0.0
    %2836 = vmatmul.mubr.f32.gmra.mrb[0].mxu0 %v2710
    %v2837 = vpop.f32.mrb[0].mxu0
    %v2838 = vadd.f32 0.0, %v2837
    %v2839 = vpop.f32.mrb[0].mxu0
    %2840 = vmatprep.mubr.f32.mxu0 0.0
    %2841 = vmatmul.mubr.f32.gmra.mrb[0].mxu0 %v2713
    %v2842 = vpop.f32.mrb[0].mxu0
    %v2843 = vadd.f32 0.0, %v2842
    %v2844 = vpop.f32.mrb[0].mxu0
    %2845 = vmatprep.mubr.f32.mxu0 0.0
    %2846 = vmatmul.mubr.f32.gmra.mrb[0].mxu0 %v2716
    %v2847 = vpop.f32.mrb[0].mxu0
    %v2848 = vadd.f32 0.0, %v2847
    %v2849 = vpop.f32.mrb[0].mxu0
    %2850 = vmatprep.mubr.f32.mxu0 0.0
    %2851 = vmatmul.mubr.f32.gmra.mrb[0].mxu0 %v2719
    %v2852 = vpop.f32.mrb[0].mxu0
    %v2853 = vadd.f32 0.0, %v2852
    %v2854 = vpop.f32.mrb[0].mxu0
    %2855 = vmatprep.mubr.f32.mxu0 0.0
    %2856 = vmatmul.mubr.f32.gmra.mrb[0].mxu0 %v2722
    %v2857 = vpop.f32.mrb[0].mxu0
    %v2858 = vadd.f32 0.0, %v2857
    %v2859 = vpop.f32.mrb[0].mxu0
    %2860 = vmatprep.mubr.f32.mxu0 0.0
    %2861 = vmatmul.mubr.f32.gmra.mrb[0].mxu0 %v2725
    %v2862 = vpop.f32.mrb[0].mxu0
    %v2863 = vadd.f32 0.0, %v2862
    %v2864 = vpop.f32.mrb[0].mxu0
    %2865 = vmatprep.mubr.f32.mxu0 0.0
    %2866 = vmatmul.mubr.f32.gmra.mrb[0].mxu0 %v2728
    %v2867 = vpop.f32.mrb[0].mxu0
    %v2868 = vadd.f32 0.0, %v2867
    %v2869 = vpop.f32.mrb[0].mxu0
    %2870 = vmatprep.mubr.f32.mxu0 0.0
    %2871 = vmatmul.mubr.f32.gmra.mrb[0].mxu0 %v2731
    %v2872 = vpop.f32.mrb[0].mxu0
    %v2873 = vadd.f32 0.0, %v2872
    %v2874 = vpop.f32.mrb[0].mxu0
    %2875 = vmatprep.mubr.f32.mxu0 0.0
    %2876 = vmatmul.mubr.f32.gmra.mrb[0].mxu0 %v2734
    %v2877 = vpop.f32.mrb[0].mxu0
    %v2878 = vadd.f32 0.0, %v2877
    %v2879 = vpop.f32.mrb[0].mxu0
    %2880 = vdwg.mxu0
    %v2881 = vadd.f32 %v2589, %v2803
    %v2882 = vadd.f32 %v2594, %v2808
    %v2883 = vadd.f32 %v2599, %v2813
    %v2884 = vadd.f32 %v2604, %v2818
    %v2885 = vadd.f32 %v2609, %v2823
    %v2886 = vadd.f32 %v2614, %v2828
    %v2887 = vadd.f32 %v2619, %v2833
    %v2888 = vadd.f32 %v2624, %v2838
    %v2889 = vadd.f32 %v2629, %v2843
    %v2890 = vadd.f32 %v2634, %v2848
    %v2891 = vadd.f32 %v2639, %v2853
    %v2892 = vadd.f32 %v2644, %v2858
    %v2893 = vadd.f32 %v2649, %v2863
    %v2894 = vadd.f32 %v2654, %v2868
    %v2895 = vadd.f32 %v2659, %v2873
    %v2896 = vadd.f32 %v2664, %v2878
    %v2897 = vld [vmem:[%s127] sm:$0xff]
    %v2898 = vld [vmem:[%s127 + $0x10] sm:$0xff]
    %v2899 = vld [vmem:[%s127 + $0x20] sm:$0xff]
    %v2900 = vld [vmem:[%s127 + $0x30] sm:$0xff]
    %v2901 = vld [vmem:[%s127 + $0x40] sm:$0xff]
    %v2902 = vld [vmem:[%s127 + $0x50] sm:$0xff]
    %v2903 = vld [vmem:[%s127 + $0x60] sm:$0xff]
    %v2904 = vld [vmem:[%s127 + $0x70] sm:$0xff]
    %v2905 = vld [vmem:[%s127 + $0xa0] sm:$0xff]
    %v2906 = vld [vmem:[%s127 + $0xb0] sm:$0xff]
    %v2907 = vld [vmem:[%s127 + $0xc0] sm:$0xff]
    %v2908 = vld [vmem:[%s127 + $0xd0] sm:$0xff]
    %v2909 = vld [vmem:[%s127 + $0xe0] sm:$0xff]
    %v2910 = vld [vmem:[%s127 + $0xf0] sm:$0xff]
    %v2911 = vld [vmem:[%s127 + $0x100] sm:$0xff]
    %v2912 = vld [vmem:[%s127 + $0x110] sm:$0xff]
    %s2913 = scalar_lea.vmem %s3, 96
    %v2914 = vld [vmem:[%s2913] sm:$0xff]
    %v2915 = vld [vmem:[%s2913 + $0x8] sm:$0xff]
    %v2916 = vld [vmem:[%s2913 + $0x10] sm:$0xff]
    %v2917 = vld [vmem:[%s2913 + $0x18] sm:$0xff]
    %v2919 = vsel %vm2223, %v2897, 0
    %v2922 = vsel %vm2223, %v2898, 0
    %v2925 = vsel %vm2223, %v2899, 0
    %v2928 = vsel %vm2223, %v2900, 0
    %v2931 = vsel %vm2223, %v2901, 0
    %v2934 = vsel %vm2223, %v2902, 0
    %v2937 = vsel %vm2223, %v2903, 0
    %v2940 = vsel %vm2223, %v2904, 0
    %v2943 = vsel %vm2223, %v2905, 0
    %v2946 = vsel %vm2223, %v2906, 0
    %v2949 = vsel %vm2223, %v2907, 0
    %v2952 = vsel %vm2223, %v2908, 0
    %v2955 = vsel %vm2223, %v2909, 0
    %v2958 = vsel %vm2223, %v2910, 0
    %v2961 = vsel %vm2223, %v2911, 0
    %v2964 = vsel %vm2223, %v2912, 0
    %2966 = vmatprep.subr.mxu0 0.0
    %2967 = vmatpush1.msra.mxu0 %v2914
    %2968 = vmatprep.subr.mxu0 0.0
    %2969 = vmatpush1.msra.mxu0 %v2915
    %2970 = vmatprep.subr.mxu0 0.0
    %2971 = vmatpush1.msra.mxu0 %v2916
    %2972 = vmatprep.subr.mxu0 0.0
    %2973 = vmatpush1.msra.mxu0 %v2917
    %2974 = vmatprep.subr.mxu0 0.0
    %2975 = vmatpush1.msra.mxu0 0.0
    %2976 = vmatprep.subr.mxu0 0.0
    %2977 = vmatpush1.msra.mxu0 0.0
    %2978 = vmatprep.subr.mxu0 0.0
    %2979 = vmatpush1.msra.mxu0 0.0
    %2980 = vmatprep.subr.mxu0 0.0
    %2981 = vmatpush1.msra.mxu0 0.0
    %2982 = vmatprep.subr.mxu0 0.0
    %2983 = vmatpush1.msra.mxu0 0.0
    %2984 = vmatprep.subr.mxu0 0.0
    %2985 = vmatpush1.msra.mxu0 0.0
    %2986 = vmatprep.subr.mxu0 0.0
    %2987 = vmatpush1.msra.mxu0 0.0
    %2988 = vmatprep.subr.mxu0 0.0
    %2989 = vmatpush1.msra.mxu0 0.0
    %2990 = vmatprep.subr.mxu0 0.0
    %2991 = vmatpush1.msra.mxu0 0.0
    %2992 = vmatprep.subr.mxu0 0.0
    %2993 = vmatpush1.msra.mxu0 0.0
    %2994 = vmatprep.subr.mxu0 0.0
    %2995 = vmatpush1.msra.mxu0 0.0
    %2996 = vmatprep.subr.mxu0 0.0
    %2997 = vmatpush1.msra.mxu0 0.0
    %2998 = vmatprep.subr.mxu0 0.0
    %2999 = vmatpush1.msra.mxu0 0.0
    %3000 = vmatprep.subr.mxu0 0.0
    %3001 = vmatpush1.msra.mxu0 0.0
    %3002 = vmatprep.subr.mxu0 0.0
    %3003 = vmatpush1.msra.mxu0 0.0
    %3004 = vmatprep.subr.mxu0 0.0
    %3005 = vmatpush1.msra.mxu0 0.0
    %3006 = vmatprep.subr.mxu0 0.0
    %3007 = vmatpush1.msra.mxu0 0.0
    %3008 = vmatprep.subr.mxu0 0.0
    %3009 = vmatpush1.msra.mxu0 0.0
    %3010 = vmatprep.subr.mxu0 0.0
    %3011 = vmatpush1.msra.mxu0 0.0
    %3012 = vmatprep.subr.mxu0 0.0
    %3013 = vmatpush1.msra.mxu0 0.0
    %3014 = vmatprep.subr.mxu0 0.0
    %3015 = vmatpush1.msra.mxu0 0.0
    %3016 = vmatprep.subr.mxu0 0.0
    %3017 = vmatpush1.msra.mxu0 0.0
    %3018 = vmatprep.subr.mxu0 0.0
    %3019 = vmatpush1.msra.mxu0 0.0
    %3020 = vmatprep.subr.mxu0 0.0
    %3021 = vmatpush1.msra.mxu0 0.0
    %3022 = vmatprep.subr.mxu0 0.0
    %3023 = vmatpush1.msra.mxu0 0.0
    %3024 = vmatprep.subr.mxu0 0.0
    %3025 = vmatpush1.msra.mxu0 0.0
    %3026 = vmatprep.subr.mxu0 0.0
    %3027 = vmatpush1.msra.mxu0 0.0
    %3028 = vmatprep.subr.mxu0 0.0
    %3029 = vmatpush1.msra.mxu0 0.0
    %3030 = vmatprep.mubr.f32.mxu0 0.0
    %3031 = vmatmul.mubr.f32.gmra.mrb[0].mxu0 %v2919
    %v3032 = vpop.f32.mrb[0].mxu0
    %v3033 = vadd.f32 0.0, %v3032
    %v3034 = vpop.f32.mrb[0].mxu0
    %3035 = vmatprep.mubr.f32.mxu0 0.0
    %3036 = vmatmul.mubr.f32.gmra.mrb[0].mxu0 %v2922
    %v3037 = vpop.f32.mrb[0].mxu0
    %v3038 = vadd.f32 0.0, %v3037
    %v3039 = vpop.f32.mrb[0].mxu0
    %3040 = vmatprep.mubr.f32.mxu0 0.0
    %3041 = vmatmul.mubr.f32.gmra.mrb[0].mxu0 %v2925
    %v3042 = vpop.f32.mrb[0].mxu0
    %v3043 = vadd.f32 0.0, %v3042
    %v3044 = vpop.f32.mrb[0].mxu0
    %3045 = vmatprep.mubr.f32.mxu0 0.0
    %3046 = vmatmul.mubr.f32.gmra.mrb[0].mxu0 %v2928
    %v3047 = vpop.f32.mrb[0].mxu0
    %v3048 = vadd.f32 0.0, %v3047
    %v3049 = vpop.f32.mrb[0].mxu0
    %3050 = vmatprep.mubr.f32.mxu0 0.0
    %3051 = vmatmul.mubr.f32.gmra.mrb[0].mxu0 %v2931
    %v3052 = vpop.f32.mrb[0].mxu0
    %v3053 = vadd.f32 0.0, %v3052
    %v3054 = vpop.f32.mrb[0].mxu0
    %3055 = vmatprep.mubr.f32.mxu0 0.0
    %3056 = vmatmul.mubr.f32.gmra.mrb[0].mxu0 %v2934
    %v3057 = vpop.f32.mrb[0].mxu0
    %v3058 = vadd.f32 0.0, %v3057
    %v3059 = vpop.f32.mrb[0].mxu0
    %3060 = vmatprep.mubr.f32.mxu0 0.0
    %3061 = vmatmul.mubr.f32.gmra.mrb[0].mxu0 %v2937
    %v3062 = vpop.f32.mrb[0].mxu0
    %v3063 = vadd.f32 0.0, %v3062
    %v3064 = vpop.f32.mrb[0].mxu0
    %3065 = vmatprep.mubr.f32.mxu0 0.0
    %3066 = vmatmul.mubr.f32.gmra.mrb[0].mxu0 %v2940
    %v3067 = vpop.f32.mrb[0].mxu0
    %v3068 = vadd.f32 0.0, %v3067
    %v3069 = vpop.f32.mrb[0].mxu0
    %3070 = vmatprep.mubr.f32.mxu0 0.0
    %3071 = vmatmul.mubr.f32.gmra.mrb[0].mxu0 %v2943
    %v3072 = vpop.f32.mrb[0].mxu0
    %v3073 = vadd.f32 0.0, %v3072
    %v3074 = vpop.f32.mrb[0].mxu0
    %3075 = vmatprep.mubr.f32.mxu0 0.0
    %3076 = vmatmul.mubr.f32.gmra.mrb[0].mxu0 %v2946
    %v3077 = vpop.f32.mrb[0].mxu0
    %v3078 = vadd.f32 0.0, %v3077
    %v3079 = vpop.f32.mrb[0].mxu0
    %3080 = vmatprep.mubr.f32.mxu0 0.0
    %3081 = vmatmul.mubr.f32.gmra.mrb[0].mxu0 %v2949
    %v3082 = vpop.f32.mrb[0].mxu0
    %v3083 = vadd.f32 0.0, %v3082
    %v3084 = vpop.f32.mrb[0].mxu0
    %3085 = vmatprep.mubr.f32.mxu0 0.0
    %3086 = vmatmul.mubr.f32.gmra.mrb[0].mxu0 %v2952
    %v3087 = vpop.f32.mrb[0].mxu0
    %v3088 = vadd.f32 0.0, %v3087
    %v3089 = vpop.f32.mrb[0].mxu0
    %3090 = vmatprep.mubr.f32.mxu0 0.0
    %3091 = vmatmul.mubr.f32.gmra.mrb[0].mxu0 %v2955
    %v3092 = vpop.f32.mrb[0].mxu0
    %v3093 = vadd.f32 0.0, %v3092
    %v3094 = vpop.f32.mrb[0].mxu0
    %3095 = vmatprep.mubr.f32.mxu0 0.0
    %3096 = vmatmul.mubr.f32.gmra.mrb[0].mxu0 %v2958
    %v3097 = vpop.f32.mrb[0].mxu0
    %v3098 = vadd.f32 0.0, %v3097
    %v3099 = vpop.f32.mrb[0].mxu0
    %3100 = vmatprep.mubr.f32.mxu0 0.0
    %3101 = vmatmul.mubr.f32.gmra.mrb[0].mxu0 %v2961
    %v3102 = vpop.f32.mrb[0].mxu0
    %v3103 = vadd.f32 0.0, %v3102
    %v3104 = vpop.f32.mrb[0].mxu0
    %3105 = vmatprep.mubr.f32.mxu0 0.0
    %3106 = vmatmul.mubr.f32.gmra.mrb[0].mxu0 %v2964
    %v3107 = vpop.f32.mrb[0].mxu0
    %v3108 = vadd.f32 0.0, %v3107
    %v3109 = vpop.f32.mrb[0].mxu0
    %3110 = vdwg.mxu0
    %v3111 = vadd.f32 %v2881, %v3033
    %v3112 = vadd.f32 %v2882, %v3038
    %v3113 = vadd.f32 %v2883, %v3043
    %v3114 = vadd.f32 %v2884, %v3048
    %v3115 = vadd.f32 %v2885, %v3053
    %v3116 = vadd.f32 %v2886, %v3058
    %v3117 = vadd.f32 %v2887, %v3063
    %v3118 = vadd.f32 %v2888, %v3068
    %v3119 = vadd.f32 %v2889, %v3073
    %v3120 = vadd.f32 %v2890, %v3078
    %v3121 = vadd.f32 %v2891, %v3083
    %v3122 = vadd.f32 %v2892, %v3088
    %v3123 = vadd.f32 %v2893, %v3093
    %v3124 = vadd.f32 %v2894, %v3098
    %v3125 = vadd.f32 %v2895, %v3103
    %v3126 = vadd.f32 %v2896, %v3108
    %v3127 = vld [vmem:[%s127 + $0x1] sm:$0xff]
    %v3128 = vld [vmem:[%s127 + $0x11] sm:$0xff]
    %v3129 = vld [vmem:[%s127 + $0x21] sm:$0xff]
    %v3130 = vld [vmem:[%s127 + $0x31] sm:$0xff]
    %v3131 = vld [vmem:[%s127 + $0x41] sm:$0xff]
    %v3132 = vld [vmem:[%s127 + $0x51] sm:$0xff]
    %v3133 = vld [vmem:[%s127 + $0x61] sm:$0xff]
    %v3134 = vld [vmem:[%s127 + $0x71] sm:$0xff]
    %v3135 = vld [vmem:[%s127 + $0xa1] sm:$0xff]
    %v3136 = vld [vmem:[%s127 + $0xb1] sm:$0xff]
    %v3137 = vld [vmem:[%s127 + $0xc1] sm:$0xff]
    %v3138 = vld [vmem:[%s127 + $0xd1] sm:$0xff]
    %v3139 = vld [vmem:[%s127 + $0xe1] sm:$0xff]
    %v3140 = vld [vmem:[%s127 + $0xf1] sm:$0xff]
    %v3141 = vld [vmem:[%s127 + $0x101] sm:$0xff]
    %v3142 = vld [vmem:[%s127 + $0x111] sm:$0xff]
    %s3143 = scalar_lea.vmem %s3, 128
    %v3144 = vld [vmem:[%s3143] sm:$0xff]
    %v3145 = vld [vmem:[%s3143 + $0x8] sm:$0xff]
    %v3146 = vld [vmem:[%s3143 + $0x10] sm:$0xff]
    %v3147 = vld [vmem:[%s3143 + $0x18] sm:$0xff]
    %v3149 = vsel %vm2223, %v3127, 0
    %v3152 = vsel %vm2223, %v3128, 0
    %v3155 = vsel %vm2223, %v3129, 0
    %v3158 = vsel %vm2223, %v3130, 0
    %v3161 = vsel %vm2223, %v3131, 0
    %v3164 = vsel %vm2223, %v3132, 0
    %v3167 = vsel %vm2223, %v3133, 0
    %v3170 = vsel %vm2223, %v3134, 0
    %v3173 = vsel %vm2223, %v3135, 0
    %v3176 = vsel %vm2223, %v3136, 0
    %v3179 = vsel %vm2223, %v3137, 0
    %v3182 = vsel %vm2223, %v3138, 0
    %v3185 = vsel %vm2223, %v3139, 0
    %v3188 = vsel %vm2223, %v3140, 0
    %v3191 = vsel %vm2223, %v3141, 0
    %v3194 = vsel %vm2223, %v3142, 0
    %3196 = vmatprep.subr.mxu0 0.0
    %3197 = vmatpush1.msra.mxu0 %v3144
    %3198 = vmatprep.subr.mxu0 0.0
    %3199 = vmatpush1.msra.mxu0 %v3145
    %3200 = vmatprep.subr.mxu0 0.0
    %3201 = vmatpush1.msra.mxu0 %v3146
    %3202 = vmatprep.subr.mxu0 0.0
    %3203 = vmatpush1.msra.mxu0 %v3147
    %3204 = vmatprep.subr.mxu0 0.0
    %3205 = vmatpush1.msra.mxu0 0.0
    %3206 = vmatprep.subr.mxu0 0.0
    %3207 = vmatpush1.msra.mxu0 0.0
    %3208 = vmatprep.subr.mxu0 0.0
    %3209 = vmatpush1.msra.mxu0 0.0
    %3210 = vmatprep.subr.mxu0 0.0
    %3211 = vmatpush1.msra.mxu0 0.0
    %3212 = vmatprep.subr.mxu0 0.0
    %3213 = vmatpush1.msra.mxu0 0.0
    %3214 = vmatprep.subr.mxu0 0.0
    %3215 = vmatpush1.msra.mxu0 0.0
    %3216 = vmatprep.subr.mxu0 0.0
    %3217 = vmatpush1.msra.mxu0 0.0
    %3218 = vmatprep.subr.mxu0 0.0
    %3219 = vmatpush1.msra.mxu0 0.0
    %3220 = vmatprep.subr.mxu0 0.0
    %3221 = vmatpush1.msra.mxu0 0.0
    %3222 = vmatprep.subr.mxu0 0.0
    %3223 = vmatpush1.msra.mxu0 0.0
    %3224 = vmatprep.subr.mxu0 0.0
    %3225 = vmatpush1.msra.mxu0 0.0
    %3226 = vmatprep.subr.mxu0 0.0
    %3227 = vmatpush1.msra.mxu0 0.0
    %3228 = vmatprep.subr.mxu0 0.0
    %3229 = vmatpush1.msra.mxu0 0.0
    %3230 = vmatprep.subr.mxu0 0.0
    %3231 = vmatpush1.msra.mxu0 0.0
    %3232 = vmatprep.subr.mxu0 0.0
    %3233 = vmatpush1.msra.mxu0 0.0
    %3234 = vmatprep.subr.mxu0 0.0
    %3235 = vmatpush1.msra.mxu0 0.0
    %3236 = vmatprep.subr.mxu0 0.0
    %3237 = vmatpush1.msra.mxu0 0.0
    %3238 = vmatprep.subr.mxu0 0.0
    %3239 = vmatpush1.msra.mxu0 0.0
    %3240 = vmatprep.subr.mxu0 0.0
    %3241 = vmatpush1.msra.mxu0 0.0
    %3242 = vmatprep.subr.mxu0 0.0
    %3243 = vmatpush1.msra.mxu0 0.0
    %3244 = vmatprep.subr.mxu0 0.0
    %3245 = vmatpush1.msra.mxu0 0.0
    %3246 = vmatprep.subr.mxu0 0.0
    %3247 = vmatpush1.msra.mxu0 0.0
    %3248 = vmatprep.subr.mxu0 0.0
    %3249 = vmatpush1.msra.mxu0 0.0
    %3250 = vmatprep.subr.mxu0 0.0
    %3251 = vmatpush1.msra.mxu0 0.0
    %3252 = vmatprep.subr.mxu0 0.0
    %3253 = vmatpush1.msra.mxu0 0.0
    %3254 = vmatprep.subr.mxu0 0.0
    %3255 = vmatpush1.msra.mxu0 0.0
    %3256 = vmatprep.subr.mxu0 0.0
    %3257 = vmatpush1.msra.mxu0 0.0
    %3258 = vmatprep.subr.mxu0 0.0
    %3259 = vmatpush1.msra.mxu0 0.0
    %3260 = vmatprep.mubr.f32.mxu0 0.0
    %3261 = vmatmul.mubr.f32.gmra.mrb[0].mxu0 %v3149
    %v3262 = vpop.f32.mrb[0].mxu0
    %v3263 = vadd.f32 0.0, %v3262
    %v3264 = vpop.f32.mrb[0].mxu0
    %3265 = vmatprep.mubr.f32.mxu0 0.0
    %3266 = vmatmul.mubr.f32.gmra.mrb[0].mxu0 %v3152
    %v3267 = vpop.f32.mrb[0].mxu0
    %v3268 = vadd.f32 0.0, %v3267
    %v3269 = vpop.f32.mrb[0].mxu0
    %3270 = vmatprep.mubr.f32.mxu0 0.0
    %3271 = vmatmul.mubr.f32.gmra.mrb[0].mxu0 %v3155
    %v3272 = vpop.f32.mrb[0].mxu0
    %v3273 = vadd.f32 0.0, %v3272
    %v3274 = vpop.f32.mrb[0].mxu0
    %3275 = vmatprep.mubr.f32.mxu0 0.0
    %3276 = vmatmul.mubr.f32.gmra.mrb[0].mxu0 %v3158
    %v3277 = vpop.f32.mrb[0].mxu0
    %v3278 = vadd.f32 0.0, %v3277
    %v3279 = vpop.f32.mrb[0].mxu0
    %3280 = vmatprep.mubr.f32.mxu0 0.0
    %3281 = vmatmul.mubr.f32.gmra.mrb[0].mxu0 %v3161
    %v3282 = vpop.f32.mrb[0].mxu0
    %v3283 = vadd.f32 0.0, %v3282
    %v3284 = vpop.f32.mrb[0].mxu0
    %3285 = vmatprep.mubr.f32.mxu0 0.0
    %3286 = vmatmul.mubr.f32.gmra.mrb[0].mxu0 %v3164
    %v3287 = vpop.f32.mrb[0].mxu0
    %v3288 = vadd.f32 0.0, %v3287
    %v3289 = vpop.f32.mrb[0].mxu0
    %3290 = vmatprep.mubr.f32.mxu0 0.0
    %3291 = vmatmul.mubr.f32.gmra.mrb[0].mxu0 %v3167
    %v3292 = vpop.f32.mrb[0].mxu0
    %v3293 = vadd.f32 0.0, %v3292
    %v3294 = vpop.f32.mrb[0].mxu0
    %3295 = vmatprep.mubr.f32.mxu0 0.0
    %3296 = vmatmul.mubr.f32.gmra.mrb[0].mxu0 %v3170
    %v3297 = vpop.f32.mrb[0].mxu0
    %v3298 = vadd.f32 0.0, %v3297
    %v3299 = vpop.f32.mrb[0].mxu0
    %3300 = vmatprep.mubr.f32.mxu0 0.0
    %3301 = vmatmul.mubr.f32.gmra.mrb[0].mxu0 %v3173
    %v3302 = vpop.f32.mrb[0].mxu0
    %v3303 = vadd.f32 0.0, %v3302
    %v3304 = vpop.f32.mrb[0].mxu0
    %3305 = vmatprep.mubr.f32.mxu0 0.0
    %3306 = vmatmul.mubr.f32.gmra.mrb[0].mxu0 %v3176
    %v3307 = vpop.f32.mrb[0].mxu0
    %v3308 = vadd.f32 0.0, %v3307
    %v3309 = vpop.f32.mrb[0].mxu0
    %3310 = vmatprep.mubr.f32.mxu0 0.0
    %3311 = vmatmul.mubr.f32.gmra.mrb[0].mxu0 %v3179
    %v3312 = vpop.f32.mrb[0].mxu0
    %v3313 = vadd.f32 0.0, %v3312
    %v3314 = vpop.f32.mrb[0].mxu0
    %3315 = vmatprep.mubr.f32.mxu0 0.0
    %3316 = vmatmul.mubr.f32.gmra.mrb[0].mxu0 %v3182
    %v3317 = vpop.f32.mrb[0].mxu0
    %v3318 = vadd.f32 0.0, %v3317
    %v3319 = vpop.f32.mrb[0].mxu0
    %3320 = vmatprep.mubr.f32.mxu0 0.0
    %3321 = vmatmul.mubr.f32.gmra.mrb[0].mxu0 %v3185
    %v3322 = vpop.f32.mrb[0].mxu0
    %v3323 = vadd.f32 0.0, %v3322
    %v3324 = vpop.f32.mrb[0].mxu0
    %3325 = vmatprep.mubr.f32.mxu0 0.0
    %3326 = vmatmul.mubr.f32.gmra.mrb[0].mxu0 %v3188
    %v3327 = vpop.f32.mrb[0].mxu0
    %v3328 = vadd.f32 0.0, %v3327
    %v3329 = vpop.f32.mrb[0].mxu0
    %3330 = vmatprep.mubr.f32.mxu0 0.0
    %3331 = vmatmul.mubr.f32.gmra.mrb[0].mxu0 %v3191
    %v3332 = vpop.f32.mrb[0].mxu0
    %v3333 = vadd.f32 0.0, %v3332
    %v3334 = vpop.f32.mrb[0].mxu0
    %3335 = vmatprep.mubr.f32.mxu0 0.0
    %3336 = vmatmul.mubr.f32.gmra.mrb[0].mxu0 %v3194
    %v3337 = vpop.f32.mrb[0].mxu0
    %v3338 = vadd.f32 0.0, %v3337
    %v3339 = vpop.f32.mrb[0].mxu0
    %3340 = vdwg.mxu0
    %v3341 = vadd.f32 %v3111, %v3263
    %v3342 = vadd.f32 %v3112, %v3268
    %v3343 = vadd.f32 %v3113, %v3273
    %v3344 = vadd.f32 %v3114, %v3278
    %v3345 = vadd.f32 %v3115, %v3283
    %v3346 = vadd.f32 %v3116, %v3288
    %v3347 = vadd.f32 %v3117, %v3293
    %v3348 = vadd.f32 %v3118, %v3298
    %v3349 = vadd.f32 %v3119, %v3303
    %v3350 = vadd.f32 %v3120, %v3308
    %v3351 = vadd.f32 %v3121, %v3313
    %v3352 = vadd.f32 %v3122, %v3318
    %v3353 = vadd.f32 %v3123, %v3323
    %v3354 = vadd.f32 %v3124, %v3328
    %v3355 = vadd.f32 %v3125, %v3333
    %v3356 = vadd.f32 %v3126, %v3338
    %v3357 = vld [vmem:[%s127 + $0x2] sm:$0xff]
    %v3358 = vld [vmem:[%s127 + $0x12] sm:$0xff]
    %v3359 = vld [vmem:[%s127 + $0x22] sm:$0xff]
    %v3360 = vld [vmem:[%s127 + $0x32] sm:$0xff]
    %v3361 = vld [vmem:[%s127 + $0x42] sm:$0xff]
    %v3362 = vld [vmem:[%s127 + $0x52] sm:$0xff]
    %v3363 = vld [vmem:[%s127 + $0x62] sm:$0xff]
    %v3364 = vld [vmem:[%s127 + $0x72] sm:$0xff]
    %v3365 = vld [vmem:[%s127 + $0xa2] sm:$0xff]
    %v3366 = vld [vmem:[%s127 + $0xb2] sm:$0xff]
    %v3367 = vld [vmem:[%s127 + $0xc2] sm:$0xff]
    %v3368 = vld [vmem:[%s127 + $0xd2] sm:$0xff]
    %v3369 = vld [vmem:[%s127 + $0xe2] sm:$0xff]
    %v3370 = vld [vmem:[%s127 + $0xf2] sm:$0xff]
    %v3371 = vld [vmem:[%s127 + $0x102] sm:$0xff]
    %v3372 = vld [vmem:[%s127 + $0x112] sm:$0xff]
    %s3373 = scalar_lea.vmem %s3, 160
    %v3374 = vld [vmem:[%s3373] sm:$0xff]
    %v3375 = vld [vmem:[%s3373 + $0x8] sm:$0xff]
    %v3376 = vld [vmem:[%s3373 + $0x10] sm:$0xff]
    %v3377 = vld [vmem:[%s3373 + $0x18] sm:$0xff]
    %v3379 = vsel %vm2223, %v3357, 0
    %v3382 = vsel %vm2223, %v3358, 0
    %v3385 = vsel %vm2223, %v3359, 0
    %v3388 = vsel %vm2223, %v3360, 0
    %v3391 = vsel %vm2223, %v3361, 0
    %v3394 = vsel %vm2223, %v3362, 0
    %v3397 = vsel %vm2223, %v3363, 0
    %v3400 = vsel %vm2223, %v3364, 0
    %v3403 = vsel %vm2223, %v3365, 0
    %v3406 = vsel %vm2223, %v3366, 0
    %v3409 = vsel %vm2223, %v3367, 0
    %v3412 = vsel %vm2223, %v3368, 0
    %v3415 = vsel %vm2223, %v3369, 0
    %v3418 = vsel %vm2223, %v3370, 0
    %v3421 = vsel %vm2223, %v3371, 0
    %v3424 = vsel %vm2223, %v3372, 0
    %3426 = vmatprep.subr.mxu0 0.0
    %3427 = vmatpush1.msra.mxu0 %v3374
    %3428 = vmatprep.subr.mxu0 0.0
    %3429 = vmatpush1.msra.mxu0 %v3375
    %3430 = vmatprep.subr.mxu0 0.0
    %3431 = vmatpush1.msra.mxu0 %v3376
    %3432 = vmatprep.subr.mxu0 0.0
    %3433 = vmatpush1.msra.mxu0 %v3377
    %3434 = vmatprep.subr.mxu0 0.0
    %3435 = vmatpush1.msra.mxu0 0.0
    %3436 = vmatprep.subr.mxu0 0.0
    %3437 = vmatpush1.msra.mxu0 0.0
    %3438 = vmatprep.subr.mxu0 0.0
    %3439 = vmatpush1.msra.mxu0 0.0
    %3440 = vmatprep.subr.mxu0 0.0
    %3441 = vmatpush1.msra.mxu0 0.0
    %3442 = vmatprep.subr.mxu0 0.0
    %3443 = vmatpush1.msra.mxu0 0.0
    %3444 = vmatprep.subr.mxu0 0.0
    %3445 = vmatpush1.msra.mxu0 0.0
    %3446 = vmatprep.subr.mxu0 0.0
    %3447 = vmatpush1.msra.mxu0 0.0
    %3448 = vmatprep.subr.mxu0 0.0
    %3449 = vmatpush1.msra.mxu0 0.0
    %3450 = vmatprep.subr.mxu0 0.0
    %3451 = vmatpush1.msra.mxu0 0.0
    %3452 = vmatprep.subr.mxu0 0.0
    %3453 = vmatpush1.msra.mxu0 0.0
    %3454 = vmatprep.subr.mxu0 0.0
    %3455 = vmatpush1.msra.mxu0 0.0
    %3456 = vmatprep.subr.mxu0 0.0
    %3457 = vmatpush1.msra.mxu0 0.0
    %3458 = vmatprep.subr.mxu0 0.0
    %3459 = vmatpush1.msra.mxu0 0.0
    %3460 = vmatprep.subr.mxu0 0.0
    %3461 = vmatpush1.msra.mxu0 0.0
    %3462 = vmatprep.subr.mxu0 0.0
    %3463 = vmatpush1.msra.mxu0 0.0
    %3464 = vmatprep.subr.mxu0 0.0
    %3465 = vmatpush1.msra.mxu0 0.0
    %3466 = vmatprep.subr.mxu0 0.0
    %3467 = vmatpush1.msra.mxu0 0.0
    %3468 = vmatprep.subr.mxu0 0.0
    %3469 = vmatpush1.msra.mxu0 0.0
    %3470 = vmatprep.subr.mxu0 0.0
    %3471 = vmatpush1.msra.mxu0 0.0
    %3472 = vmatprep.subr.mxu0 0.0
    %3473 = vmatpush1.msra.mxu0 0.0
    %3474 = vmatprep.subr.mxu0 0.0
    %3475 = vmatpush1.msra.mxu0 0.0
    %3476 = vmatprep.subr.mxu0 0.0
    %3477 = vmatpush1.msra.mxu0 0.0
    %3478 = vmatprep.subr.mxu0 0.0
    %3479 = vmatpush1.msra.mxu0 0.0
    %3480 = vmatprep.subr.mxu0 0.0
    %3481 = vmatpush1.msra.mxu0 0.0
    %3482 = vmatprep.subr.mxu0 0.0
    %3483 = vmatpush1.msra.mxu0 0.0
    %3484 = vmatprep.subr.mxu0 0.0
    %3485 = vmatpush1.msra.mxu0 0.0
    %3486 = vmatprep.subr.mxu0 0.0
    %3487 = vmatpush1.msra.mxu0 0.0
    %3488 = vmatprep.subr.mxu0 0.0
    %3489 = vmatpush1.msra.mxu0 0.0
    %3490 = vmatprep.mubr.f32.mxu0 0.0
    %3491 = vmatmul.mubr.f32.gmra.mrb[0].mxu0 %v3379
    %v3492 = vpop.f32.mrb[0].mxu0
    %v3493 = vadd.f32 0.0, %v3492
    %v3494 = vpop.f32.mrb[0].mxu0
    %3495 = vmatprep.mubr.f32.mxu0 0.0
    %3496 = vmatmul.mubr.f32.gmra.mrb[0].mxu0 %v3382
    %v3497 = vpop.f32.mrb[0].mxu0
    %v3498 = vadd.f32 0.0, %v3497
    %v3499 = vpop.f32.mrb[0].mxu0
    %3500 = vmatprep.mubr.f32.mxu0 0.0
    %3501 = vmatmul.mubr.f32.gmra.mrb[0].mxu0 %v3385
    %v3502 = vpop.f32.mrb[0].mxu0
    %v3503 = vadd.f32 0.0, %v3502
    %v3504 = vpop.f32.mrb[0].mxu0
    %3505 = vmatprep.mubr.f32.mxu0 0.0
    %3506 = vmatmul.mubr.f32.gmra.mrb[0].mxu0 %v3388
    %v3507 = vpop.f32.mrb[0].mxu0
    %v3508 = vadd.f32 0.0, %v3507
    %v3509 = vpop.f32.mrb[0].mxu0
    %3510 = vmatprep.mubr.f32.mxu0 0.0
    %3511 = vmatmul.mubr.f32.gmra.mrb[0].mxu0 %v3391
    %v3512 = vpop.f32.mrb[0].mxu0
    %v3513 = vadd.f32 0.0, %v3512
    %v3514 = vpop.f32.mrb[0].mxu0
    %3515 = vmatprep.mubr.f32.mxu0 0.0
    %3516 = vmatmul.mubr.f32.gmra.mrb[0].mxu0 %v3394
    %v3517 = vpop.f32.mrb[0].mxu0
    %v3518 = vadd.f32 0.0, %v3517
    %v3519 = vpop.f32.mrb[0].mxu0
    %3520 = vmatprep.mubr.f32.mxu0 0.0
    %3521 = vmatmul.mubr.f32.gmra.mrb[0].mxu0 %v3397
    %v3522 = vpop.f32.mrb[0].mxu0
    %v3523 = vadd.f32 0.0, %v3522
    %v3524 = vpop.f32.mrb[0].mxu0
    %3525 = vmatprep.mubr.f32.mxu0 0.0
    %3526 = vmatmul.mubr.f32.gmra.mrb[0].mxu0 %v3400
    %v3527 = vpop.f32.mrb[0].mxu0
    %v3528 = vadd.f32 0.0, %v3527
    %v3529 = vpop.f32.mrb[0].mxu0
    %3530 = vmatprep.mubr.f32.mxu0 0.0
    %3531 = vmatmul.mubr.f32.gmra.mrb[0].mxu0 %v3403
    %v3532 = vpop.f32.mrb[0].mxu0
    %v3533 = vadd.f32 0.0, %v3532
    %v3534 = vpop.f32.mrb[0].mxu0
    %3535 = vmatprep.mubr.f32.mxu0 0.0
    %3536 = vmatmul.mubr.f32.gmra.mrb[0].mxu0 %v3406
    %v3537 = vpop.f32.mrb[0].mxu0
    %v3538 = vadd.f32 0.0, %v3537
    %v3539 = vpop.f32.mrb[0].mxu0
    %3540 = vmatprep.mubr.f32.mxu0 0.0
    %3541 = vmatmul.mubr.f32.gmra.mrb[0].mxu0 %v3409
    %v3542 = vpop.f32.mrb[0].mxu0
    %v3543 = vadd.f32 0.0, %v3542
    %v3544 = vpop.f32.mrb[0].mxu0
    %3545 = vmatprep.mubr.f32.mxu0 0.0
    %3546 = vmatmul.mubr.f32.gmra.mrb[0].mxu0 %v3412
    %v3547 = vpop.f32.mrb[0].mxu0
    %v3548 = vadd.f32 0.0, %v3547
    %v3549 = vpop.f32.mrb[0].mxu0
    %3550 = vmatprep.mubr.f32.mxu0 0.0
    %3551 = vmatmul.mubr.f32.gmra.mrb[0].mxu0 %v3415
    %v3552 = vpop.f32.mrb[0].mxu0
    %v3553 = vadd.f32 0.0, %v3552
    %v3554 = vpop.f32.mrb[0].mxu0
    %3555 = vmatprep.mubr.f32.mxu0 0.0
    %3556 = vmatmul.mubr.f32.gmra.mrb[0].mxu0 %v3418
    %v3557 = vpop.f32.mrb[0].mxu0
    %v3558 = vadd.f32 0.0, %v3557
    %v3559 = vpop.f32.mrb[0].mxu0
    %3560 = vmatprep.mubr.f32.mxu0 0.0
    %3561 = vmatmul.mubr.f32.gmra.mrb[0].mxu0 %v3421
    %v3562 = vpop.f32.mrb[0].mxu0
    %v3563 = vadd.f32 0.0, %v3562
    %v3564 = vpop.f32.mrb[0].mxu0
    %3565 = vmatprep.mubr.f32.mxu0 0.0
    %3566 = vmatmul.mubr.f32.gmra.mrb[0].mxu0 %v3424
    %v3567 = vpop.f32.mrb[0].mxu0
    %v3568 = vadd.f32 0.0, %v3567
    %v3569 = vpop.f32.mrb[0].mxu0
    %3570 = vdwg.mxu0
    %v3571 = vadd.f32 %v3341, %v3493
    %v3572 = vadd.f32 %v3342, %v3498
    %v3573 = vadd.f32 %v3343, %v3503
    %v3574 = vadd.f32 %v3344, %v3508
    %v3575 = vadd.f32 %v3345, %v3513
    %v3576 = vadd.f32 %v3346, %v3518
    %v3577 = vadd.f32 %v3347, %v3523
    %v3578 = vadd.f32 %v3348, %v3528
    %v3579 = vadd.f32 %v3349, %v3533
    %v3580 = vadd.f32 %v3350, %v3538
    %v3581 = vadd.f32 %v3351, %v3543
    %v3582 = vadd.f32 %v3352, %v3548
    %v3583 = vadd.f32 %v3353, %v3553
    %v3584 = vadd.f32 %v3354, %v3558
    %v3585 = vadd.f32 %v3355, %v3563
    %v3586 = vadd.f32 %v3356, %v3568
    %v3587 = vld [vmem:[%s1493] sm:$0xff]
    %v3588 = vld [vmem:[%s1493 + $0x10] sm:$0xff]
    %v3589 = vld [vmem:[%s1493 + $0x20] sm:$0xff]
    %v3590 = vld [vmem:[%s1493 + $0x30] sm:$0xff]
    %v3591 = vld [vmem:[%s1493 + $0x40] sm:$0xff]
    %v3592 = vld [vmem:[%s1493 + $0x50] sm:$0xff]
    %v3593 = vld [vmem:[%s1493 + $0x60] sm:$0xff]
    %v3594 = vld [vmem:[%s1493 + $0x70] sm:$0xff]
    %v3595 = vld [vmem:[%s1493 + $0xa0] sm:$0xff]
    %v3596 = vld [vmem:[%s1493 + $0xb0] sm:$0xff]
    %v3597 = vld [vmem:[%s1493 + $0xc0] sm:$0xff]
    %v3598 = vld [vmem:[%s1493 + $0xd0] sm:$0xff]
    %v3599 = vld [vmem:[%s1493 + $0xe0] sm:$0xff]
    %v3600 = vld [vmem:[%s1493 + $0xf0] sm:$0xff]
    %v3601 = vld [vmem:[%s1493 + $0x100] sm:$0xff]
    %v3602 = vld [vmem:[%s1493 + $0x110] sm:$0xff]
    %s3603 = scalar_lea.vmem %s3, 192
    %v3604 = vld [vmem:[%s3603] sm:$0xff]
    %v3605 = vld [vmem:[%s3603 + $0x8] sm:$0xff]
    %v3606 = vld [vmem:[%s3603 + $0x10] sm:$0xff]
    %v3607 = vld [vmem:[%s3603 + $0x18] sm:$0xff]
    %v3609 = vsel %vm2223, %v3587, 0
    %v3612 = vsel %vm2223, %v3588, 0
    %v3615 = vsel %vm2223, %v3589, 0
    %v3618 = vsel %vm2223, %v3590, 0
    %v3621 = vsel %vm2223, %v3591, 0
    %v3624 = vsel %vm2223, %v3592, 0
    %v3627 = vsel %vm2223, %v3593, 0
    %v3630 = vsel %vm2223, %v3594, 0
    %v3633 = vsel %vm2223, %v3595, 0
    %v3636 = vsel %vm2223, %v3596, 0
    %v3639 = vsel %vm2223, %v3597, 0
    %v3642 = vsel %vm2223, %v3598, 0
    %v3645 = vsel %vm2223, %v3599, 0
    %v3648 = vsel %vm2223, %v3600, 0
    %v3651 = vsel %vm2223, %v3601, 0
    %v3654 = vsel %vm2223, %v3602, 0
    %3656 = vmatprep.subr.mxu0 0.0
    %3657 = vmatpush1.msra.mxu0 %v3604
    %3658 = vmatprep.subr.mxu0 0.0
    %3659 = vmatpush1.msra.mxu0 %v3605
    %3660 = vmatprep.subr.mxu0 0.0
    %3661 = vmatpush1.msra.mxu0 %v3606
    %3662 = vmatprep.subr.mxu0 0.0
    %3663 = vmatpush1.msra.mxu0 %v3607
    %3664 = vmatprep.subr.mxu0 0.0
    %3665 = vmatpush1.msra.mxu0 0.0
    %3666 = vmatprep.subr.mxu0 0.0
    %3667 = vmatpush1.msra.mxu0 0.0
    %3668 = vmatprep.subr.mxu0 0.0
    %3669 = vmatpush1.msra.mxu0 0.0
    %3670 = vmatprep.subr.mxu0 0.0
    %3671 = vmatpush1.msra.mxu0 0.0
    %3672 = vmatprep.subr.mxu0 0.0
    %3673 = vmatpush1.msra.mxu0 0.0
    %3674 = vmatprep.subr.mxu0 0.0
    %3675 = vmatpush1.msra.mxu0 0.0
    %3676 = vmatprep.subr.mxu0 0.0
    %3677 = vmatpush1.msra.mxu0 0.0
    %3678 = vmatprep.subr.mxu0 0.0
    %3679 = vmatpush1.msra.mxu0 0.0
    %3680 = vmatprep.subr.mxu0 0.0
    %3681 = vmatpush1.msra.mxu0 0.0
    %3682 = vmatprep.subr.mxu0 0.0
    %3683 = vmatpush1.msra.mxu0 0.0
    %3684 = vmatprep.subr.mxu0 0.0
    %3685 = vmatpush1.msra.mxu0 0.0
    %3686 = vmatprep.subr.mxu0 0.0
    %3687 = vmatpush1.msra.mxu0 0.0
    %3688 = vmatprep.subr.mxu0 0.0
    %3689 = vmatpush1.msra.mxu0 0.0
    %3690 = vmatprep.subr.mxu0 0.0
    %3691 = vmatpush1.msra.mxu0 0.0
    %3692 = vmatprep.subr.mxu0 0.0
    %3693 = vmatpush1.msra.mxu0 0.0
    %3694 = vmatprep.subr.mxu0 0.0
    %3695 = vmatpush1.msra.mxu0 0.0
    %3696 = vmatprep.subr.mxu0 0.0
    %3697 = vmatpush1.msra.mxu0 0.0
    %3698 = vmatprep.subr.mxu0 0.0
    %3699 = vmatpush1.msra.mxu0 0.0
    %3700 = vmatprep.subr.mxu0 0.0
    %3701 = vmatpush1.msra.mxu0 0.0
    %3702 = vmatprep.subr.mxu0 0.0
    %3703 = vmatpush1.msra.mxu0 0.0
    %3704 = vmatprep.subr.mxu0 0.0
    %3705 = vmatpush1.msra.mxu0 0.0
    %3706 = vmatprep.subr.mxu0 0.0
    %3707 = vmatpush1.msra.mxu0 0.0
    %3708 = vmatprep.subr.mxu0 0.0
    %3709 = vmatpush1.msra.mxu0 0.0
    %3710 = vmatprep.subr.mxu0 0.0
    %3711 = vmatpush1.msra.mxu0 0.0
    %3712 = vmatprep.subr.mxu0 0.0
    %3713 = vmatpush1.msra.mxu0 0.0
    %3714 = vmatprep.subr.mxu0 0.0
    %3715 = vmatpush1.msra.mxu0 0.0
    %3716 = vmatprep.subr.mxu0 0.0
    %3717 = vmatpush1.msra.mxu0 0.0
    %3718 = vmatprep.subr.mxu0 0.0
    %3719 = vmatpush1.msra.mxu0 0.0
    %3720 = vmatprep.mubr.f32.mxu0 0.0
    %3721 = vmatmul.mubr.f32.gmra.mrb[0].mxu0 %v3609
    %v3722 = vpop.f32.mrb[0].mxu0
    %v3723 = vadd.f32 0.0, %v3722
    %v3724 = vpop.f32.mrb[0].mxu0
    %3725 = vmatprep.mubr.f32.mxu0 0.0
    %3726 = vmatmul.mubr.f32.gmra.mrb[0].mxu0 %v3612
    %v3727 = vpop.f32.mrb[0].mxu0
    %v3728 = vadd.f32 0.0, %v3727
    %v3729 = vpop.f32.mrb[0].mxu0
    %3730 = vmatprep.mubr.f32.mxu0 0.0
    %3731 = vmatmul.mubr.f32.gmra.mrb[0].mxu0 %v3615
    %v3732 = vpop.f32.mrb[0].mxu0
    %v3733 = vadd.f32 0.0, %v3732
    %v3734 = vpop.f32.mrb[0].mxu0
    %3735 = vmatprep.mubr.f32.mxu0 0.0
    %3736 = vmatmul.mubr.f32.gmra.mrb[0].mxu0 %v3618
    %v3737 = vpop.f32.mrb[0].mxu0
    %v3738 = vadd.f32 0.0, %v3737
    %v3739 = vpop.f32.mrb[0].mxu0
    %3740 = vmatprep.mubr.f32.mxu0 0.0
    %3741 = vmatmul.mubr.f32.gmra.mrb[0].mxu0 %v3621
    %v3742 = vpop.f32.mrb[0].mxu0
    %v3743 = vadd.f32 0.0, %v3742
    %v3744 = vpop.f32.mrb[0].mxu0
    %3745 = vmatprep.mubr.f32.mxu0 0.0
    %3746 = vmatmul.mubr.f32.gmra.mrb[0].mxu0 %v3624
    %v3747 = vpop.f32.mrb[0].mxu0
    %v3748 = vadd.f32 0.0, %v3747
    %v3749 = vpop.f32.mrb[0].mxu0
    %3750 = vmatprep.mubr.f32.mxu0 0.0
    %3751 = vmatmul.mubr.f32.gmra.mrb[0].mxu0 %v3627
    %v3752 = vpop.f32.mrb[0].mxu0
    %v3753 = vadd.f32 0.0, %v3752
    %v3754 = vpop.f32.mrb[0].mxu0
    %3755 = vmatprep.mubr.f32.mxu0 0.0
    %3756 = vmatmul.mubr.f32.gmra.mrb[0].mxu0 %v3630
    %v3757 = vpop.f32.mrb[0].mxu0
    %v3758 = vadd.f32 0.0, %v3757
    %v3759 = vpop.f32.mrb[0].mxu0
    %3760 = vmatprep.mubr.f32.mxu0 0.0
    %3761 = vmatmul.mubr.f32.gmra.mrb[0].mxu0 %v3633
    %v3762 = vpop.f32.mrb[0].mxu0
    %v3763 = vadd.f32 0.0, %v3762
    %v3764 = vpop.f32.mrb[0].mxu0
    %3765 = vmatprep.mubr.f32.mxu0 0.0
    %3766 = vmatmul.mubr.f32.gmra.mrb[0].mxu0 %v3636
    %v3767 = vpop.f32.mrb[0].mxu0
    %v3768 = vadd.f32 0.0, %v3767
    %v3769 = vpop.f32.mrb[0].mxu0
    %3770 = vmatprep.mubr.f32.mxu0 0.0
    %3771 = vmatmul.mubr.f32.gmra.mrb[0].mxu0 %v3639
    %v3772 = vpop.f32.mrb[0].mxu0
    %v3773 = vadd.f32 0.0, %v3772
    %v3774 = vpop.f32.mrb[0].mxu0
    %3775 = vmatprep.mubr.f32.mxu0 0.0
    %3776 = vmatmul.mubr.f32.gmra.mrb[0].mxu0 %v3642
    %v3777 = vpop.f32.mrb[0].mxu0
    %v3778 = vadd.f32 0.0, %v3777
    %v3779 = vpop.f32.mrb[0].mxu0
    %3780 = vmatprep.mubr.f32.mxu0 0.0
    %3781 = vmatmul.mubr.f32.gmra.mrb[0].mxu0 %v3645
    %v3782 = vpop.f32.mrb[0].mxu0
    %v3783 = vadd.f32 0.0, %v3782
    %v3784 = vpop.f32.mrb[0].mxu0
    %3785 = vmatprep.mubr.f32.mxu0 0.0
    %3786 = vmatmul.mubr.f32.gmra.mrb[0].mxu0 %v3648
    %v3787 = vpop.f32.mrb[0].mxu0
    %v3788 = vadd.f32 0.0, %v3787
    %v3789 = vpop.f32.mrb[0].mxu0
    %3790 = vmatprep.mubr.f32.mxu0 0.0
    %3791 = vmatmul.mubr.f32.gmra.mrb[0].mxu0 %v3651
    %v3792 = vpop.f32.mrb[0].mxu0
    %v3793 = vadd.f32 0.0, %v3792
    %v3794 = vpop.f32.mrb[0].mxu0
    %3795 = vmatprep.mubr.f32.mxu0 0.0
    %3796 = vmatmul.mubr.f32.gmra.mrb[0].mxu0 %v3654
    %v3797 = vpop.f32.mrb[0].mxu0
    %v3798 = vadd.f32 0.0, %v3797
    %v3799 = vpop.f32.mrb[0].mxu0
    %3800 = vdwg.mxu0
    %v3801 = vadd.f32 %v3571, %v3723
    %v3802 = vadd.f32 %v3572, %v3728
    %v3803 = vadd.f32 %v3573, %v3733
    %v3804 = vadd.f32 %v3574, %v3738
    %v3805 = vadd.f32 %v3575, %v3743
    %v3806 = vadd.f32 %v3576, %v3748
    %v3807 = vadd.f32 %v3577, %v3753
    %v3808 = vadd.f32 %v3578, %v3758
    %v3809 = vadd.f32 %v3579, %v3763
    %v3810 = vadd.f32 %v3580, %v3768
    %v3811 = vadd.f32 %v3581, %v3773
    %v3812 = vadd.f32 %v3582, %v3778
    %v3813 = vadd.f32 %v3583, %v3783
    %v3814 = vadd.f32 %v3584, %v3788
    %v3815 = vadd.f32 %v3585, %v3793
    %v3816 = vadd.f32 %v3586, %v3798
    %v3817 = vld [vmem:[%s1493 + $0x1] sm:$0xff]
    %v3818 = vld [vmem:[%s1493 + $0x11] sm:$0xff]
    %v3819 = vld [vmem:[%s1493 + $0x21] sm:$0xff]
    %v3820 = vld [vmem:[%s1493 + $0x31] sm:$0xff]
    %v3821 = vld [vmem:[%s1493 + $0x41] sm:$0xff]
    %v3822 = vld [vmem:[%s1493 + $0x51] sm:$0xff]
    %v3823 = vld [vmem:[%s1493 + $0x61] sm:$0xff]
    %v3824 = vld [vmem:[%s1493 + $0x71] sm:$0xff]
    %v3825 = vld [vmem:[%s1493 + $0xa1] sm:$0xff]
    %v3826 = vld [vmem:[%s1493 + $0xb1] sm:$0xff]
    %v3827 = vld [vmem:[%s1493 + $0xc1] sm:$0xff]
    %v3828 = vld [vmem:[%s1493 + $0xd1] sm:$0xff]
    %v3829 = vld [vmem:[%s1493 + $0xe1] sm:$0xff]
    %v3830 = vld [vmem:[%s1493 + $0xf1] sm:$0xff]
    %v3831 = vld [vmem:[%s1493 + $0x101] sm:$0xff]
    %v3832 = vld [vmem:[%s1493 + $0x111] sm:$0xff]
    %s3833 = scalar_lea.vmem %s3, 224
    %v3834 = vld [vmem:[%s3833] sm:$0xff]
    %v3835 = vld [vmem:[%s3833 + $0x8] sm:$0xff]
    %v3836 = vld [vmem:[%s3833 + $0x10] sm:$0xff]
    %v3837 = vld [vmem:[%s3833 + $0x18] sm:$0xff]
    %v3839 = vsel %vm2223, %v3817, 0
    %v3842 = vsel %vm2223, %v3818, 0
    %v3845 = vsel %vm2223, %v3819, 0
    %v3848 = vsel %vm2223, %v3820, 0
    %v3851 = vsel %vm2223, %v3821, 0
    %v3854 = vsel %vm2223, %v3822, 0
    %v3857 = vsel %vm2223, %v3823, 0
    %v3860 = vsel %vm2223, %v3824, 0
    %v3863 = vsel %vm2223, %v3825, 0
    %v3866 = vsel %vm2223, %v3826, 0
    %v3869 = vsel %vm2223, %v3827, 0
    %v3872 = vsel %vm2223, %v3828, 0
    %v3875 = vsel %vm2223, %v3829, 0
    %v3878 = vsel %vm2223, %v3830, 0
    %v3881 = vsel %vm2223, %v3831, 0
    %v3884 = vsel %vm2223, %v3832, 0
    %3886 = vmatprep.subr.mxu0 0.0
    %3887 = vmatpush1.msra.mxu0 %v3834
    %3888 = vmatprep.subr.mxu0 0.0
    %3889 = vmatpush1.msra.mxu0 %v3835
    %3890 = vmatprep.subr.mxu0 0.0
    %3891 = vmatpush1.msra.mxu0 %v3836
    %3892 = vmatprep.subr.mxu0 0.0
    %3893 = vmatpush1.msra.mxu0 %v3837
    %3894 = vmatprep.subr.mxu0 0.0
    %3895 = vmatpush1.msra.mxu0 0.0
    %3896 = vmatprep.subr.mxu0 0.0
    %3897 = vmatpush1.msra.mxu0 0.0
    %3898 = vmatprep.subr.mxu0 0.0
    %3899 = vmatpush1.msra.mxu0 0.0
    %3900 = vmatprep.subr.mxu0 0.0
    %3901 = vmatpush1.msra.mxu0 0.0
    %3902 = vmatprep.subr.mxu0 0.0
    %3903 = vmatpush1.msra.mxu0 0.0
    %3904 = vmatprep.subr.mxu0 0.0
    %3905 = vmatpush1.msra.mxu0 0.0
    %3906 = vmatprep.subr.mxu0 0.0
    %3907 = vmatpush1.msra.mxu0 0.0
    %3908 = vmatprep.subr.mxu0 0.0
    %3909 = vmatpush1.msra.mxu0 0.0
    %3910 = vmatprep.subr.mxu0 0.0
    %3911 = vmatpush1.msra.mxu0 0.0
    %3912 = vmatprep.subr.mxu0 0.0
    %3913 = vmatpush1.msra.mxu0 0.0
    %3914 = vmatprep.subr.mxu0 0.0
    %3915 = vmatpush1.msra.mxu0 0.0
    %3916 = vmatprep.subr.mxu0 0.0
    %3917 = vmatpush1.msra.mxu0 0.0
    %3918 = vmatprep.subr.mxu0 0.0
    %3919 = vmatpush1.msra.mxu0 0.0
    %3920 = vmatprep.subr.mxu0 0.0
    %3921 = vmatpush1.msra.mxu0 0.0
    %3922 = vmatprep.subr.mxu0 0.0
    %3923 = vmatpush1.msra.mxu0 0.0
    %3924 = vmatprep.subr.mxu0 0.0
    %3925 = vmatpush1.msra.mxu0 0.0
    %3926 = vmatprep.subr.mxu0 0.0
    %3927 = vmatpush1.msra.mxu0 0.0
    %3928 = vmatprep.subr.mxu0 0.0
    %3929 = vmatpush1.msra.mxu0 0.0
    %3930 = vmatprep.subr.mxu0 0.0
    %3931 = vmatpush1.msra.mxu0 0.0
    %3932 = vmatprep.subr.mxu0 0.0
    %3933 = vmatpush1.msra.mxu0 0.0
    %3934 = vmatprep.subr.mxu0 0.0
    %3935 = vmatpush1.msra.mxu0 0.0
    %3936 = vmatprep.subr.mxu0 0.0
    %3937 = vmatpush1.msra.mxu0 0.0
    %3938 = vmatprep.subr.mxu0 0.0
    %3939 = vmatpush1.msra.mxu0 0.0
    %3940 = vmatprep.subr.mxu0 0.0
    %3941 = vmatpush1.msra.mxu0 0.0
    %3942 = vmatprep.subr.mxu0 0.0
    %3943 = vmatpush1.msra.mxu0 0.0
    %3944 = vmatprep.subr.mxu0 0.0
    %3945 = vmatpush1.msra.mxu0 0.0
    %3946 = vmatprep.subr.mxu0 0.0
    %3947 = vmatpush1.msra.mxu0 0.0
    %3948 = vmatprep.subr.mxu0 0.0
    %3949 = vmatpush1.msra.mxu0 0.0
    %3950 = vmatprep.mubr.f32.mxu0 0.0
    %3951 = vmatmul.mubr.f32.gmra.mrb[0].mxu0 %v3839
    %v3952 = vpop.f32.mrb[0].mxu0
    %v3953 = vadd.f32 0.0, %v3952
    %v3954 = vpop.f32.mrb[0].mxu0
    %3955 = vmatprep.mubr.f32.mxu0 0.0
    %3956 = vmatmul.mubr.f32.gmra.mrb[0].mxu0 %v3842
    %v3957 = vpop.f32.mrb[0].mxu0
    %v3958 = vadd.f32 0.0, %v3957
    %v3959 = vpop.f32.mrb[0].mxu0
    %3960 = vmatprep.mubr.f32.mxu0 0.0
    %3961 = vmatmul.mubr.f32.gmra.mrb[0].mxu0 %v3845
    %v3962 = vpop.f32.mrb[0].mxu0
    %v3963 = vadd.f32 0.0, %v3962
    %v3964 = vpop.f32.mrb[0].mxu0
    %3965 = vmatprep.mubr.f32.mxu0 0.0
    %3966 = vmatmul.mubr.f32.gmra.mrb[0].mxu0 %v3848
    %v3967 = vpop.f32.mrb[0].mxu0
    %v3968 = vadd.f32 0.0, %v3967
    %v3969 = vpop.f32.mrb[0].mxu0
    %3970 = vmatprep.mubr.f32.mxu0 0.0
    %3971 = vmatmul.mubr.f32.gmra.mrb[0].mxu0 %v3851
    %v3972 = vpop.f32.mrb[0].mxu0
    %v3973 = vadd.f32 0.0, %v3972
    %v3974 = vpop.f32.mrb[0].mxu0
    %3975 = vmatprep.mubr.f32.mxu0 0.0
    %3976 = vmatmul.mubr.f32.gmra.mrb[0].mxu0 %v3854
    %v3977 = vpop.f32.mrb[0].mxu0
    %v3978 = vadd.f32 0.0, %v3977
    %v3979 = vpop.f32.mrb[0].mxu0
    %3980 = vmatprep.mubr.f32.mxu0 0.0
    %3981 = vmatmul.mubr.f32.gmra.mrb[0].mxu0 %v3857
    %v3982 = vpop.f32.mrb[0].mxu0
    %v3983 = vadd.f32 0.0, %v3982
    %v3984 = vpop.f32.mrb[0].mxu0
    %3985 = vmatprep.mubr.f32.mxu0 0.0
    %3986 = vmatmul.mubr.f32.gmra.mrb[0].mxu0 %v3860
    %v3987 = vpop.f32.mrb[0].mxu0
    %v3988 = vadd.f32 0.0, %v3987
    %v3989 = vpop.f32.mrb[0].mxu0
    %3990 = vmatprep.mubr.f32.mxu0 0.0
    %3991 = vmatmul.mubr.f32.gmra.mrb[0].mxu0 %v3863
    %v3992 = vpop.f32.mrb[0].mxu0
    %v3993 = vadd.f32 0.0, %v3992
    %v3994 = vpop.f32.mrb[0].mxu0
    %3995 = vmatprep.mubr.f32.mxu0 0.0
    %3996 = vmatmul.mubr.f32.gmra.mrb[0].mxu0 %v3866
    %v3997 = vpop.f32.mrb[0].mxu0
    %v3998 = vadd.f32 0.0, %v3997
    %v3999 = vpop.f32.mrb[0].mxu0
    %4000 = vmatprep.mubr.f32.mxu0 0.0
    %4001 = vmatmul.mubr.f32.gmra.mrb[0].mxu0 %v3869
    %v4002 = vpop.f32.mrb[0].mxu0
    %v4003 = vadd.f32 0.0, %v4002
    %v4004 = vpop.f32.mrb[0].mxu0
    %4005 = vmatprep.mubr.f32.mxu0 0.0
    %4006 = vmatmul.mubr.f32.gmra.mrb[0].mxu0 %v3872
    %v4007 = vpop.f32.mrb[0].mxu0
    %v4008 = vadd.f32 0.0, %v4007
    %v4009 = vpop.f32.mrb[0].mxu0
    %4010 = vmatprep.mubr.f32.mxu0 0.0
    %4011 = vmatmul.mubr.f32.gmra.mrb[0].mxu0 %v3875
    %v4012 = vpop.f32.mrb[0].mxu0
    %v4013 = vadd.f32 0.0, %v4012
    %v4014 = vpop.f32.mrb[0].mxu0
    %4015 = vmatprep.mubr.f32.mxu0 0.0
    %4016 = vmatmul.mubr.f32.gmra.mrb[0].mxu0 %v3878
    %v4017 = vpop.f32.mrb[0].mxu0
    %v4018 = vadd.f32 0.0, %v4017
    %v4019 = vpop.f32.mrb[0].mxu0
    %4020 = vmatprep.mubr.f32.mxu0 0.0
    %4021 = vmatmul.mubr.f32.gmra.mrb[0].mxu0 %v3881
    %v4022 = vpop.f32.mrb[0].mxu0
    %v4023 = vadd.f32 0.0, %v4022
    %v4024 = vpop.f32.mrb[0].mxu0
    %4025 = vmatprep.mubr.f32.mxu0 0.0
    %4026 = vmatmul.mubr.f32.gmra.mrb[0].mxu0 %v3884
    %v4027 = vpop.f32.mrb[0].mxu0
    %v4028 = vadd.f32 0.0, %v4027
    %v4029 = vpop.f32.mrb[0].mxu0
    %4030 = vdwg.mxu0
    %v4031 = vadd.f32 %v3801, %v3953
    %v4032 = vadd.f32 %v3802, %v3958
    %v4033 = vadd.f32 %v3803, %v3963
    %v4034 = vadd.f32 %v3804, %v3968
    %v4035 = vadd.f32 %v3805, %v3973
    %v4036 = vadd.f32 %v3806, %v3978
    %v4037 = vadd.f32 %v3807, %v3983
    %v4038 = vadd.f32 %v3808, %v3988
    %v4039 = vadd.f32 %v3809, %v3993
    %v4040 = vadd.f32 %v3810, %v3998
    %v4041 = vadd.f32 %v3811, %v4003
    %v4042 = vadd.f32 %v3812, %v4008
    %v4043 = vadd.f32 %v3813, %v4013
    %v4044 = vadd.f32 %v3814, %v4018
    %v4045 = vadd.f32 %v3815, %v4023
    %v4046 = vadd.f32 %v3816, %v4028
    %v4047 = vld [vmem:[%s1493 + $0x2] sm:$0xff]
    %v4048 = vld [vmem:[%s1493 + $0x12] sm:$0xff]
    %v4049 = vld [vmem:[%s1493 + $0x22] sm:$0xff]
    %v4050 = vld [vmem:[%s1493 + $0x32] sm:$0xff]
    %v4051 = vld [vmem:[%s1493 + $0x42] sm:$0xff]
    %v4052 = vld [vmem:[%s1493 + $0x52] sm:$0xff]
    %v4053 = vld [vmem:[%s1493 + $0x62] sm:$0xff]
    %v4054 = vld [vmem:[%s1493 + $0x72] sm:$0xff]
    %v4055 = vld [vmem:[%s1493 + $0xa2] sm:$0xff]
    %v4056 = vld [vmem:[%s1493 + $0xb2] sm:$0xff]
    %v4057 = vld [vmem:[%s1493 + $0xc2] sm:$0xff]
    %v4058 = vld [vmem:[%s1493 + $0xd2] sm:$0xff]
    %v4059 = vld [vmem:[%s1493 + $0xe2] sm:$0xff]
    %v4060 = vld [vmem:[%s1493 + $0xf2] sm:$0xff]
    %v4061 = vld [vmem:[%s1493 + $0x102] sm:$0xff]
    %v4062 = vld [vmem:[%s1493 + $0x112] sm:$0xff]
    %s4063 = scalar_lea.vmem %s3, 256
    %v4064 = vld [vmem:[%s4063] sm:$0xff]
    %v4065 = vld [vmem:[%s4063 + $0x8] sm:$0xff]
    %v4066 = vld [vmem:[%s4063 + $0x10] sm:$0xff]
    %v4067 = vld [vmem:[%s4063 + $0x18] sm:$0xff]
    %v4069 = vsel %vm2223, %v4047, 0
    %v4072 = vsel %vm2223, %v4048, 0
    %v4075 = vsel %vm2223, %v4049, 0
    %v4078 = vsel %vm2223, %v4050, 0
    %v4081 = vsel %vm2223, %v4051, 0
    %v4084 = vsel %vm2223, %v4052, 0
    %v4087 = vsel %vm2223, %v4053, 0
    %v4090 = vsel %vm2223, %v4054, 0
    %v4093 = vsel %vm2223, %v4055, 0
    %v4096 = vsel %vm2223, %v4056, 0
    %v4099 = vsel %vm2223, %v4057, 0
    %v4102 = vsel %vm2223, %v4058, 0
    %v4105 = vsel %vm2223, %v4059, 0
    %v4108 = vsel %vm2223, %v4060, 0
    %v4111 = vsel %vm2223, %v4061, 0
    %v4114 = vsel %vm2223, %v4062, 0
    %4116 = vmatprep.subr.mxu0 0.0
    %4117 = vmatpush1.msra.mxu0 %v4064
    %4118 = vmatprep.subr.mxu0 0.0
    %4119 = vmatpush1.msra.mxu0 %v4065
    %4120 = vmatprep.subr.mxu0 0.0
    %4121 = vmatpush1.msra.mxu0 %v4066
    %4122 = vmatprep.subr.mxu0 0.0
    %4123 = vmatpush1.msra.mxu0 %v4067
    %4124 = vmatprep.subr.mxu0 0.0
    %4125 = vmatpush1.msra.mxu0 0.0
    %4126 = vmatprep.subr.mxu0 0.0
    %4127 = vmatpush1.msra.mxu0 0.0
    %4128 = vmatprep.subr.mxu0 0.0
    %4129 = vmatpush1.msra.mxu0 0.0
    %4130 = vmatprep.subr.mxu0 0.0
    %4131 = vmatpush1.msra.mxu0 0.0
    %4132 = vmatprep.subr.mxu0 0.0
    %4133 = vmatpush1.msra.mxu0 0.0
    %4134 = vmatprep.subr.mxu0 0.0
    %4135 = vmatpush1.msra.mxu0 0.0
    %4136 = vmatprep.subr.mxu0 0.0
    %4137 = vmatpush1.msra.mxu0 0.0
    %4138 = vmatprep.subr.mxu0 0.0
    %4139 = vmatpush1.msra.mxu0 0.0
    %4140 = vmatprep.subr.mxu0 0.0
    %4141 = vmatpush1.msra.mxu0 0.0
    %4142 = vmatprep.subr.mxu0 0.0
    %4143 = vmatpush1.msra.mxu0 0.0
    %4144 = vmatprep.subr.mxu0 0.0
    %4145 = vmatpush1.msra.mxu0 0.0
    %4146 = vmatprep.subr.mxu0 0.0
    %4147 = vmatpush1.msra.mxu0 0.0
    %4148 = vmatprep.subr.mxu0 0.0
    %4149 = vmatpush1.msra.mxu0 0.0
    %4150 = vmatprep.subr.mxu0 0.0
    %4151 = vmatpush1.msra.mxu0 0.0
    %4152 = vmatprep.subr.mxu0 0.0
    %4153 = vmatpush1.msra.mxu0 0.0
    %4154 = vmatprep.subr.mxu0 0.0
    %4155 = vmatpush1.msra.mxu0 0.0
    %4156 = vmatprep.subr.mxu0 0.0
    %4157 = vmatpush1.msra.mxu0 0.0
    %4158 = vmatprep.subr.mxu0 0.0
    %4159 = vmatpush1.msra.mxu0 0.0
    %4160 = vmatprep.subr.mxu0 0.0
    %4161 = vmatpush1.msra.mxu0 0.0
    %4162 = vmatprep.subr.mxu0 0.0
    %4163 = vmatpush1.msra.mxu0 0.0
    %4164 = vmatprep.subr.mxu0 0.0
    %4165 = vmatpush1.msra.mxu0 0.0
    %4166 = vmatprep.subr.mxu0 0.0
    %4167 = vmatpush1.msra.mxu0 0.0
    %4168 = vmatprep.subr.mxu0 0.0
    %4169 = vmatpush1.msra.mxu0 0.0
    %4170 = vmatprep.subr.mxu0 0.0
    %4171 = vmatpush1.msra.mxu0 0.0
    %4172 = vmatprep.subr.mxu0 0.0
    %4173 = vmatpush1.msra.mxu0 0.0
    %4174 = vmatprep.subr.mxu0 0.0
    %4175 = vmatpush1.msra.mxu0 0.0
    %4176 = vmatprep.subr.mxu0 0.0
    %4177 = vmatpush1.msra.mxu0 0.0
    %4178 = vmatprep.subr.mxu0 0.0
    %4179 = vmatpush1.msra.mxu0 0.0
    %4180 = vmatprep.mubr.f32.mxu0 0.0
    %4181 = vmatmul.mubr.f32.gmra.mrb[0].mxu0 %v4069
    %v4182 = vpop.f32.mrb[0].mxu0
    %v4183 = vadd.f32 0.0, %v4182
    %v4184 = vpop.f32.mrb[0].mxu0
    %4185 = vmatprep.mubr.f32.mxu0 0.0
    %4186 = vmatmul.mubr.f32.gmra.mrb[0].mxu0 %v4072
    %v4187 = vpop.f32.mrb[0].mxu0
    %v4188 = vadd.f32 0.0, %v4187
    %v4189 = vpop.f32.mrb[0].mxu0
    %4190 = vmatprep.mubr.f32.mxu0 0.0
    %4191 = vmatmul.mubr.f32.gmra.mrb[0].mxu0 %v4075
    %v4192 = vpop.f32.mrb[0].mxu0
    %v4193 = vadd.f32 0.0, %v4192
    %v4194 = vpop.f32.mrb[0].mxu0
    %4195 = vmatprep.mubr.f32.mxu0 0.0
    %4196 = vmatmul.mubr.f32.gmra.mrb[0].mxu0 %v4078
    %v4197 = vpop.f32.mrb[0].mxu0
    %v4198 = vadd.f32 0.0, %v4197
    %v4199 = vpop.f32.mrb[0].mxu0
    %4200 = vmatprep.mubr.f32.mxu0 0.0
    %4201 = vmatmul.mubr.f32.gmra.mrb[0].mxu0 %v4081
    %v4202 = vpop.f32.mrb[0].mxu0
    %v4203 = vadd.f32 0.0, %v4202
    %v4204 = vpop.f32.mrb[0].mxu0
    %4205 = vmatprep.mubr.f32.mxu0 0.0
    %4206 = vmatmul.mubr.f32.gmra.mrb[0].mxu0 %v4084
    %v4207 = vpop.f32.mrb[0].mxu0
    %v4208 = vadd.f32 0.0, %v4207
    %v4209 = vpop.f32.mrb[0].mxu0
    %4210 = vmatprep.mubr.f32.mxu0 0.0
    %4211 = vmatmul.mubr.f32.gmra.mrb[0].mxu0 %v4087
    %v4212 = vpop.f32.mrb[0].mxu0
    %v4213 = vadd.f32 0.0, %v4212
    %v4214 = vpop.f32.mrb[0].mxu0
    %4215 = vmatprep.mubr.f32.mxu0 0.0
    %4216 = vmatmul.mubr.f32.gmra.mrb[0].mxu0 %v4090
    %v4217 = vpop.f32.mrb[0].mxu0
    %v4218 = vadd.f32 0.0, %v4217
    %v4219 = vpop.f32.mrb[0].mxu0
    %4220 = vmatprep.mubr.f32.mxu0 0.0
    %4221 = vmatmul.mubr.f32.gmra.mrb[0].mxu0 %v4093
    %v4222 = vpop.f32.mrb[0].mxu0
    %v4223 = vadd.f32 0.0, %v4222
    %v4224 = vpop.f32.mrb[0].mxu0
    %4225 = vmatprep.mubr.f32.mxu0 0.0
    %4226 = vmatmul.mubr.f32.gmra.mrb[0].mxu0 %v4096
    %v4227 = vpop.f32.mrb[0].mxu0
    %v4228 = vadd.f32 0.0, %v4227
    %v4229 = vpop.f32.mrb[0].mxu0
    %4230 = vmatprep.mubr.f32.mxu0 0.0
    %4231 = vmatmul.mubr.f32.gmra.mrb[0].mxu0 %v4099
    %v4232 = vpop.f32.mrb[0].mxu0
    %v4233 = vadd.f32 0.0, %v4232
    %v4234 = vpop.f32.mrb[0].mxu0
    %4235 = vmatprep.mubr.f32.mxu0 0.0
    %4236 = vmatmul.mubr.f32.gmra.mrb[0].mxu0 %v4102
    %v4237 = vpop.f32.mrb[0].mxu0
    %v4238 = vadd.f32 0.0, %v4237
    %v4239 = vpop.f32.mrb[0].mxu0
    %4240 = vmatprep.mubr.f32.mxu0 0.0
    %4241 = vmatmul.mubr.f32.gmra.mrb[0].mxu0 %v4105
    %v4242 = vpop.f32.mrb[0].mxu0
    %v4243 = vadd.f32 0.0, %v4242
    %v4244 = vpop.f32.mrb[0].mxu0
    %4245 = vmatprep.mubr.f32.mxu0 0.0
    %4246 = vmatmul.mubr.f32.gmra.mrb[0].mxu0 %v4108
    %v4247 = vpop.f32.mrb[0].mxu0
    %v4248 = vadd.f32 0.0, %v4247
    %v4249 = vpop.f32.mrb[0].mxu0
    %4250 = vmatprep.mubr.f32.mxu0 0.0
    %4251 = vmatmul.mubr.f32.gmra.mrb[0].mxu0 %v4111
    %v4252 = vpop.f32.mrb[0].mxu0
    %v4253 = vadd.f32 0.0, %v4252
    %v4254 = vpop.f32.mrb[0].mxu0
    %4255 = vmatprep.mubr.f32.mxu0 0.0
    %4256 = vmatmul.mubr.f32.gmra.mrb[0].mxu0 %v4114
    %v4257 = vpop.f32.mrb[0].mxu0
    %v4258 = vadd.f32 0.0, %v4257
    %v4259 = vpop.f32.mrb[0].mxu0
    %4260 = vdwg.mxu0
    %v4261 = vadd.f32 %v4031, %v4183
    %v4262 = vadd.f32 %v4032, %v4188
    %v4263 = vadd.f32 %v4033, %v4193
    %v4264 = vadd.f32 %v4034, %v4198
    %v4265 = vadd.f32 %v4035, %v4203
    %v4266 = vadd.f32 %v4036, %v4208
    %v4267 = vadd.f32 %v4037, %v4213
    %v4268 = vadd.f32 %v4038, %v4218
    %v4269 = vadd.f32 %v4039, %v4223
    %v4270 = vadd.f32 %v4040, %v4228
    %v4271 = vadd.f32 %v4041, %v4233
    %v4272 = vadd.f32 %v4042, %v4238
    %v4273 = vadd.f32 %v4043, %v4243
    %v4274 = vadd.f32 %v4044, %v4248
    %v4275 = vadd.f32 %v4045, %v4253
    %v4276 = vadd.f32 %v4046, %v4258
    %v4277 = vld [vmem:[%s4] sm:$0x1]
    %v4279 = vlaneseq
    %v4280 = vshrl.u32 %v4279, 7
    %v4281 = vsub.s32 0, %v4280
    %v4282 = vrot.slane %v4277, %v4281
    %v4284 = vadd.f32 %v4261, %v4282
    %v4285 = vadd.f32 %v4262, %v4282
    %v4286 = vadd.f32 %v4263, %v4282
    %v4287 = vadd.f32 %v4264, %v4282
    %v4288 = vadd.f32 %v4265, %v4282
    %v4289 = vadd.f32 %v4266, %v4282
    %v4290 = vadd.f32 %v4267, %v4282
    %v4291 = vadd.f32 %v4268, %v4282
    %v4292 = vadd.f32 %v4269, %v4282
    %v4293 = vadd.f32 %v4270, %v4282
    %v4294 = vadd.f32 %v4271, %v4282
    %v4295 = vadd.f32 %v4272, %v4282
    %v4296 = vadd.f32 %v4273, %v4282
    %v4297 = vadd.f32 %v4274, %v4282
    %v4298 = vadd.f32 %v4275, %v4282
    %v4299 = vadd.f32 %v4276, %v4282
    %v4300 = vmax.f32 %v4284, 0.0
    %v4301 = vmax.f32 %v4285, 0.0
    %v4302 = vmax.f32 %v4286, 0.0
    %v4303 = vmax.f32 %v4287, 0.0
    %v4304 = vmax.f32 %v4288, 0.0
    %v4305 = vmax.f32 %v4289, 0.0
    %v4306 = vmax.f32 %v4290, 0.0
    %v4307 = vmax.f32 %v4291, 0.0
    %v4308 = vmax.f32 %v4292, 0.0
    %v4309 = vmax.f32 %v4293, 0.0
    %v4310 = vmax.f32 %v4294, 0.0
    %v4311 = vmax.f32 %v4295, 0.0
    %v4312 = vmax.f32 %v4296, 0.0
    %v4313 = vmax.f32 %v4297, 0.0
    %v4314 = vmax.f32 %v4298, 0.0
    %v4315 = vmax.f32 %v4299, 0.0
    %4316 = vst.msk [vmem:[%s127 + $0x1] sm:$0xff] %vm69, %v4300
    %4317 = vst.msk [vmem:[%s127 + $0x11] sm:$0xff] %vm69, %v4301
    %4318 = vst.msk [vmem:[%s127 + $0x21] sm:$0xff] %vm69, %v4302
    %4319 = vst.msk [vmem:[%s127 + $0x31] sm:$0xff] %vm69, %v4303
    %4320 = vst.msk [vmem:[%s127 + $0x41] sm:$0xff] %vm69, %v4304
    %4321 = vst.msk [vmem:[%s127 + $0x51] sm:$0xff] %vm69, %v4305
    %4322 = vst.msk [vmem:[%s127 + $0x61] sm:$0xff] %vm69, %v4306
    %4323 = vst.msk [vmem:[%s127 + $0x71] sm:$0xff] %vm69, %v4307
    %4324 = vst.msk [vmem:[%s127 + $0xa1] sm:$0xff] %vm69, %v4308
    %4325 = vst.msk [vmem:[%s127 + $0xb1] sm:$0xff] %vm69, %v4309
    %4326 = vst.msk [vmem:[%s127 + $0xc1] sm:$0xff] %vm69, %v4310
    %4327 = vst.msk [vmem:[%s127 + $0xd1] sm:$0xff] %vm69, %v4311
    %4328 = vst.msk [vmem:[%s127 + $0xe1] sm:$0xff] %vm69, %v4312
    %4329 = vst.msk [vmem:[%s127 + $0xf1] sm:$0xff] %vm69, %v4313
    %4330 = vst.msk [vmem:[%s127 + $0x101] sm:$0xff] %vm69, %v4314
    %4331 = vst.msk [vmem:[%s127 + $0x111] sm:$0xff] %vm69, %v4315
    %v4332 = vld [vmem:[#allocation2] sm:$0xff]
    %v4333 = vld [vmem:[#allocation2 + $0x10] sm:$0xff]
    %v4334 = vld [vmem:[#allocation2 + $0x20] sm:$0xff]
    %v4335 = vld [vmem:[#allocation2 + $0x30] sm:$0xff]
    %v4336 = vld [vmem:[#allocation2 + $0x40] sm:$0xff]
    %v4337 = vld [vmem:[#allocation2 + $0x50] sm:$0xff]
    %v4338 = vld [vmem:[#allocation2 + $0x60] sm:$0xff]
    %v4339 = vld [vmem:[#allocation2 + $0x70] sm:$0xff]
    %v4340 = vld [vmem:[#allocation2 + $0xa0] sm:$0xff]
    %v4341 = vld [vmem:[#allocation2 + $0xb0] sm:$0xff]
    %v4342 = vld [vmem:[#allocation2 + $0xc0] sm:$0xff]
    %v4343 = vld [vmem:[#allocation2 + $0xd0] sm:$0xff]
    %v4344 = vld [vmem:[#allocation2 + $0xe0] sm:$0xff]
    %v4345 = vld [vmem:[#allocation2 + $0xf0] sm:$0xff]
    %v4346 = vld [vmem:[#allocation2 + $0x100] sm:$0xff]
    %v4347 = vld [vmem:[#allocation2 + $0x110] sm:$0xff]
    %v4348 = vld [vmem:[%s5] sm:$0xff]
    %v4349 = vld [vmem:[%s5 + $0x8] sm:$0xff]
    %v4350 = vld [vmem:[%s5 + $0x10] sm:$0xff]
    %v4351 = vld [vmem:[%s5 + $0x18] sm:$0xff]
    %v4352 = vld [vmem:[%s5 + $0x20] sm:$0xff]
    %v4353 = vld [vmem:[%s5 + $0x28] sm:$0xff]
    %v4354 = vld [vmem:[%s5 + $0x30] sm:$0xff]
    %v4355 = vld [vmem:[%s5 + $0x38] sm:$0xff]
    %v4356 = vld [vmem:[#allocation2 + $0x1] sm:$0xff]
    %v4357 = vld [vmem:[#allocation2 + $0x11] sm:$0xff]
    %v4358 = vld [vmem:[#allocation2 + $0x21] sm:$0xff]
    %v4359 = vld [vmem:[#allocation2 + $0x31] sm:$0xff]
    %v4360 = vld [vmem:[#allocation2 + $0x41] sm:$0xff]
    %v4361 = vld [vmem:[#allocation2 + $0x51] sm:$0xff]
    %v4362 = vld [vmem:[#allocation2 + $0x61] sm:$0xff]
    %v4363 = vld [vmem:[#allocation2 + $0x71] sm:$0xff]
    %v4364 = vld [vmem:[#allocation2 + $0xa1] sm:$0xff]
    %v4365 = vld [vmem:[#allocation2 + $0xb1] sm:$0xff]
    %v4366 = vld [vmem:[#allocation2 + $0xc1] sm:$0xff]
    %v4367 = vld [vmem:[#allocation2 + $0xd1] sm:$0xff]
    %v4368 = vld [vmem:[#allocation2 + $0xe1] sm:$0xff]
    %v4369 = vld [vmem:[#allocation2 + $0xf1] sm:$0xff]
    %v4370 = vld [vmem:[#allocation2 + $0x101] sm:$0xff]
    %v4371 = vld [vmem:[#allocation2 + $0x111] sm:$0xff]
    %s4372 = scalar_lea.vmem %s5, 64
    %v4373 = vld [vmem:[%s4372] sm:$0xff]
    %v4374 = vld [vmem:[%s4372 + $0x8] sm:$0xff]
    %v4375 = vld [vmem:[%s4372 + $0x10] sm:$0xff]
    %v4376 = vld [vmem:[%s4372 + $0x18] sm:$0xff]
    %v4377 = vld [vmem:[%s4372 + $0x20] sm:$0xff]
    %v4378 = vld [vmem:[%s4372 + $0x28] sm:$0xff]
    %v4379 = vld [vmem:[%s4372 + $0x30] sm:$0xff]
    %v4380 = vld [vmem:[%s4372 + $0x38] sm:$0xff]
    %v4382 = vsel %vm69, %v4356, 0
    %v4385 = vsel %vm69, %v4357, 0
    %v4388 = vsel %vm69, %v4358, 0
    %v4391 = vsel %vm69, %v4359, 0
    %v4394 = vsel %vm69, %v4360, 0
    %v4397 = vsel %vm69, %v4361, 0
    %v4400 = vsel %vm69, %v4362, 0
    %v4403 = vsel %vm69, %v4363, 0
    %v4406 = vsel %vm69, %v4364, 0
    %v4409 = vsel %vm69, %v4365, 0
    %v4412 = vsel %vm69, %v4366, 0
    %v4415 = vsel %vm69, %v4367, 0
    %v4418 = vsel %vm69, %v4368, 0
    %v4421 = vsel %vm69, %v4369, 0
    %v4424 = vsel %vm69, %v4370, 0
    %v4427 = vsel %vm69, %v4371, 0
    %4429 = vmatprep.subr.mxu0 0.0
    %4430 = vmatpush1.msra.mxu0 %v4373
    %4431 = vmatprep.subr.mxu0 0.0
    %4432 = vmatpush1.msra.mxu0 %v4374
    %4433 = vmatprep.subr.mxu0 0.0
    %4434 = vmatpush1.msra.mxu0 %v4375
    %4435 = vmatprep.subr.mxu0 0.0
    %4436 = vmatpush1.msra.mxu0 %v4376
    %4437 = vmatprep.subr.mxu0 0.0
    %4438 = vmatpush1.msra.mxu0 %v4377
    %4439 = vmatprep.subr.mxu0 0.0
    %4440 = vmatpush1.msra.mxu0 %v4378
    %4441 = vmatprep.subr.mxu0 0.0
    %4442 = vmatpush1.msra.mxu0 %v4379
    %4443 = vmatprep.subr.mxu0 0.0
    %4444 = vmatpush1.msra.mxu0 %v4380
    %4445 = vmatprep.subr.mxu0 0.0
    %4446 = vmatpush1.msra.mxu0 0.0
    %4447 = vmatprep.subr.mxu0 0.0
    %4448 = vmatpush1.msra.mxu0 0.0
    %4449 = vmatprep.subr.mxu0 0.0
    %4450 = vmatpush1.msra.mxu0 0.0
    %4451 = vmatprep.subr.mxu0 0.0
    %4452 = vmatpush1.msra.mxu0 0.0
    %4453 = vmatprep.subr.mxu0 0.0
    %4454 = vmatpush1.msra.mxu0 0.0
    %4455 = vmatprep.subr.mxu0 0.0
    %4456 = vmatpush1.msra.mxu0 0.0
    %4457 = vmatprep.subr.mxu0 0.0
    %4458 = vmatpush1.msra.mxu0 0.0
    %4459 = vmatprep.subr.mxu0 0.0
    %4460 = vmatpush1.msra.mxu0 0.0
    %4461 = vmatprep.subr.mxu0 0.0
    %4462 = vmatpush1.msra.mxu0 0.0
    %4463 = vmatprep.subr.mxu0 0.0
    %4464 = vmatpush1.msra.mxu0 0.0
    %4465 = vmatprep.subr.mxu0 0.0
    %4466 = vmatpush1.msra.mxu0 0.0
    %4467 = vmatprep.subr.mxu0 0.0
    %4468 = vmatpush1.msra.mxu0 0.0
    %4469 = vmatprep.subr.mxu0 0.0
    %4470 = vmatpush1.msra.mxu0 0.0
    %4471 = vmatprep.subr.mxu0 0.0
    %4472 = vmatpush1.msra.mxu0 0.0
    %4473 = vmatprep.subr.mxu0 0.0
    %4474 = vmatpush1.msra.mxu0 0.0
    %4475 = vmatprep.subr.mxu0 0.0
    %4476 = vmatpush1.msra.mxu0 0.0
    %4477 = vmatprep.subr.mxu0 0.0
    %4478 = vmatpush1.msra.mxu0 0.0
    %4479 = vmatprep.subr.mxu0 0.0
    %4480 = vmatpush1.msra.mxu0 0.0
    %4481 = vmatprep.subr.mxu0 0.0
    %4482 = vmatpush1.msra.mxu0 0.0
    %4483 = vmatprep.subr.mxu0 0.0
    %4484 = vmatpush1.msra.mxu0 0.0
    %4485 = vmatprep.subr.mxu0 0.0
    %4486 = vmatpush1.msra.mxu0 0.0
    %4487 = vmatprep.subr.mxu0 0.0
    %4488 = vmatpush1.msra.mxu0 0.0
    %4489 = vmatprep.subr.mxu0 0.0
    %4490 = vmatpush1.msra.mxu0 0.0
    %4491 = vmatprep.subr.mxu0 0.0
    %4492 = vmatpush1.msra.mxu0 0.0
    %4493 = vmatprep.mubr.f32.mxu0 0.0
    %4494 = vmatmul.mubr.f32.gmra.mrb[0].mxu0 %v4382
    %v4495 = vpop.f32.mrb[0].mxu0
    %v4496 = vadd.f32 0.0, %v4495
    %v4497 = vpop.f32.mrb[0].mxu0
    %4498 = vmatprep.mubr.f32.mxu0 0.0
    %4499 = vmatmul.mubr.f32.gmra.mrb[0].mxu0 %v4385
    %v4500 = vpop.f32.mrb[0].mxu0
    %v4501 = vadd.f32 0.0, %v4500
    %v4502 = vpop.f32.mrb[0].mxu0
    %4503 = vmatprep.mubr.f32.mxu0 0.0
    %4504 = vmatmul.mubr.f32.gmra.mrb[0].mxu0 %v4388
    %v4505 = vpop.f32.mrb[0].mxu0
    %v4506 = vadd.f32 0.0, %v4505
    %v4507 = vpop.f32.mrb[0].mxu0
    %4508 = vmatprep.mubr.f32.mxu0 0.0
    %4509 = vmatmul.mubr.f32.gmra.mrb[0].mxu0 %v4391
    %v4510 = vpop.f32.mrb[0].mxu0
    %v4511 = vadd.f32 0.0, %v4510
    %v4512 = vpop.f32.mrb[0].mxu0
    %4513 = vmatprep.mubr.f32.mxu0 0.0
    %4514 = vmatmul.mubr.f32.gmra.mrb[0].mxu0 %v4394
    %v4515 = vpop.f32.mrb[0].mxu0
    %v4516 = vadd.f32 0.0, %v4515
    %v4517 = vpop.f32.mrb[0].mxu0
    %4518 = vmatprep.mubr.f32.mxu0 0.0
    %4519 = vmatmul.mubr.f32.gmra.mrb[0].mxu0 %v4397
    %v4520 = vpop.f32.mrb[0].mxu0
    %v4521 = vadd.f32 0.0, %v4520
    %v4522 = vpop.f32.mrb[0].mxu0
    %4523 = vmatprep.mubr.f32.mxu0 0.0
    %4524 = vmatmul.mubr.f32.gmra.mrb[0].mxu0 %v4400
    %v4525 = vpop.f32.mrb[0].mxu0
    %v4526 = vadd.f32 0.0, %v4525
    %v4527 = vpop.f32.mrb[0].mxu0
    %4528 = vmatprep.mubr.f32.mxu0 0.0
    %4529 = vmatmul.mubr.f32.gmra.mrb[0].mxu0 %v4403
    %v4530 = vpop.f32.mrb[0].mxu0
    %v4531 = vadd.f32 0.0, %v4530
    %v4532 = vpop.f32.mrb[0].mxu0
    %4533 = vmatprep.mubr.f32.mxu0 0.0
    %4534 = vmatmul.mubr.f32.gmra.mrb[0].mxu0 %v4406
    %v4535 = vpop.f32.mrb[0].mxu0
    %v4536 = vadd.f32 0.0, %v4535
    %v4537 = vpop.f32.mrb[0].mxu0
    %4538 = vmatprep.mubr.f32.mxu0 0.0
    %4539 = vmatmul.mubr.f32.gmra.mrb[0].mxu0 %v4409
    %v4540 = vpop.f32.mrb[0].mxu0
    %v4541 = vadd.f32 0.0, %v4540
    %v4542 = vpop.f32.mrb[0].mxu0
    %4543 = vmatprep.mubr.f32.mxu0 0.0
    %4544 = vmatmul.mubr.f32.gmra.mrb[0].mxu0 %v4412
    %v4545 = vpop.f32.mrb[0].mxu0
    %v4546 = vadd.f32 0.0, %v4545
    %v4547 = vpop.f32.mrb[0].mxu0
    %4548 = vmatprep.mubr.f32.mxu0 0.0
    %4549 = vmatmul.mubr.f32.gmra.mrb[0].mxu0 %v4415
    %v4550 = vpop.f32.mrb[0].mxu0
    %v4551 = vadd.f32 0.0, %v4550
    %v4552 = vpop.f32.mrb[0].mxu0
    %4553 = vmatprep.mubr.f32.mxu0 0.0
    %4554 = vmatmul.mubr.f32.gmra.mrb[0].mxu0 %v4418
    %v4555 = vpop.f32.mrb[0].mxu0
    %v4556 = vadd.f32 0.0, %v4555
    %v4557 = vpop.f32.mrb[0].mxu0
    %4558 = vmatprep.mubr.f32.mxu0 0.0
    %4559 = vmatmul.mubr.f32.gmra.mrb[0].mxu0 %v4421
    %v4560 = vpop.f32.mrb[0].mxu0
    %v4561 = vadd.f32 0.0, %v4560
    %v4562 = vpop.f32.mrb[0].mxu0
    %4563 = vmatprep.mubr.f32.mxu0 0.0
    %4564 = vmatmul.mubr.f32.gmra.mrb[0].mxu0 %v4424
    %v4565 = vpop.f32.mrb[0].mxu0
    %v4566 = vadd.f32 0.0, %v4565
    %v4567 = vpop.f32.mrb[0].mxu0
    %4568 = vmatprep.mubr.f32.mxu0 0.0
    %4569 = vmatmul.mubr.f32.gmra.mrb[0].mxu0 %v4427
    %v4570 = vpop.f32.mrb[0].mxu0
    %v4571 = vadd.f32 0.0, %v4570
    %v4572 = vpop.f32.mrb[0].mxu0
    %4573 = vdwg.mxu0
    %v4575 = vsel %vm69, %v4332, 0
    %v4578 = vsel %vm69, %v4333, 0
    %v4581 = vsel %vm69, %v4334, 0
    %v4584 = vsel %vm69, %v4335, 0
    %v4587 = vsel %vm69, %v4336, 0
    %v4590 = vsel %vm69, %v4337, 0
    %v4593 = vsel %vm69, %v4338, 0
    %v4596 = vsel %vm69, %v4339, 0
    %v4599 = vsel %vm69, %v4340, 0
    %v4602 = vsel %vm69, %v4341, 0
    %v4605 = vsel %vm69, %v4342, 0
    %v4608 = vsel %vm69, %v4343, 0
    %v4611 = vsel %vm69, %v4344, 0
    %v4614 = vsel %vm69, %v4345, 0
    %v4617 = vsel %vm69, %v4346, 0
    %v4620 = vsel %vm69, %v4347, 0
    %4622 = vmatprep.subr.mxu0 0.0
    %4623 = vmatpush1.msra.mxu0 %v4348
    %4624 = vmatprep.subr.mxu0 0.0
    %4625 = vmatpush1.msra.mxu0 %v4349
    %4626 = vmatprep.subr.mxu0 0.0
    %4627 = vmatpush1.msra.mxu0 %v4350
    %4628 = vmatprep.subr.mxu0 0.0
    %4629 = vmatpush1.msra.mxu0 %v4351
    %4630 = vmatprep.subr.mxu0 0.0
    %4631 = vmatpush1.msra.mxu0 %v4352
    %4632 = vmatprep.subr.mxu0 0.0
    %4633 = vmatpush1.msra.mxu0 %v4353
    %4634 = vmatprep.subr.mxu0 0.0
    %4635 = vmatpush1.msra.mxu0 %v4354
    %4636 = vmatprep.subr.mxu0 0.0
    %4637 = vmatpush1.msra.mxu0 %v4355
    %4638 = vmatprep.subr.mxu0 0.0
    %4639 = vmatpush1.msra.mxu0 0.0
    %4640 = vmatprep.subr.mxu0 0.0
    %4641 = vmatpush1.msra.mxu0 0.0
    %4642 = vmatprep.subr.mxu0 0.0
    %4643 = vmatpush1.msra.mxu0 0.0
    %4644 = vmatprep.subr.mxu0 0.0
    %4645 = vmatpush1.msra.mxu0 0.0
    %4646 = vmatprep.subr.mxu0 0.0
    %4647 = vmatpush1.msra.mxu0 0.0
    %4648 = vmatprep.subr.mxu0 0.0
    %4649 = vmatpush1.msra.mxu0 0.0
    %4650 = vmatprep.subr.mxu0 0.0
    %4651 = vmatpush1.msra.mxu0 0.0
    %4652 = vmatprep.subr.mxu0 0.0
    %4653 = vmatpush1.msra.mxu0 0.0
    %4654 = vmatprep.subr.mxu0 0.0
    %4655 = vmatpush1.msra.mxu0 0.0
    %4656 = vmatprep.subr.mxu0 0.0
    %4657 = vmatpush1.msra.mxu0 0.0
    %4658 = vmatprep.subr.mxu0 0.0
    %4659 = vmatpush1.msra.mxu0 0.0
    %4660 = vmatprep.subr.mxu0 0.0
    %4661 = vmatpush1.msra.mxu0 0.0
    %4662 = vmatprep.subr.mxu0 0.0
    %4663 = vmatpush1.msra.mxu0 0.0
    %4664 = vmatprep.subr.mxu0 0.0
    %4665 = vmatpush1.msra.mxu0 0.0
    %4666 = vmatprep.subr.mxu0 0.0
    %4667 = vmatpush1.msra.mxu0 0.0
    %4668 = vmatprep.subr.mxu0 0.0
    %4669 = vmatpush1.msra.mxu0 0.0
    %4670 = vmatprep.subr.mxu0 0.0
    %4671 = vmatpush1.msra.mxu0 0.0
    %4672 = vmatprep.subr.mxu0 0.0
    %4673 = vmatpush1.msra.mxu0 0.0
    %4674 = vmatprep.subr.mxu0 0.0
    %4675 = vmatpush1.msra.mxu0 0.0
    %4676 = vmatprep.subr.mxu0 0.0
    %4677 = vmatpush1.msra.mxu0 0.0
    %4678 = vmatprep.subr.mxu0 0.0
    %4679 = vmatpush1.msra.mxu0 0.0
    %4680 = vmatprep.subr.mxu0 0.0
    %4681 = vmatpush1.msra.mxu0 0.0
    %4682 = vmatprep.subr.mxu0 0.0
    %4683 = vmatpush1.msra.mxu0 0.0
    %4684 = vmatprep.subr.mxu0 0.0
    %4685 = vmatpush1.msra.mxu0 0.0
    %4686 = vmatprep.mubr.f32.mxu0 0.0
    %4687 = vmatmul.mubr.f32.gmra.mrb[0].mxu0 %v4575
    %v4688 = vpop.f32.mrb[0].mxu0
    %v4689 = vadd.f32 %v4496, %v4688
    %v4690 = vpop.f32.mrb[0].mxu0
    %4691 = vmatprep.mubr.f32.mxu0 0.0
    %4692 = vmatmul.mubr.f32.gmra.mrb[0].mxu0 %v4578
    %v4693 = vpop.f32.mrb[0].mxu0
    %v4694 = vadd.f32 %v4501, %v4693
    %v4695 = vpop.f32.mrb[0].mxu0
    %4696 = vmatprep.mubr.f32.mxu0 0.0
    %4697 = vmatmul.mubr.f32.gmra.mrb[0].mxu0 %v4581
    %v4698 = vpop.f32.mrb[0].mxu0
    %v4699 = vadd.f32 %v4506, %v4698
    %v4700 = vpop.f32.mrb[0].mxu0
    %4701 = vmatprep.mubr.f32.mxu0 0.0
    %4702 = vmatmul.mubr.f32.gmra.mrb[0].mxu0 %v4584
    %v4703 = vpop.f32.mrb[0].mxu0
    %v4704 = vadd.f32 %v4511, %v4703
    %v4705 = vpop.f32.mrb[0].mxu0
    %4706 = vmatprep.mubr.f32.mxu0 0.0
    %4707 = vmatmul.mubr.f32.gmra.mrb[0].mxu0 %v4587
    %v4708 = vpop.f32.mrb[0].mxu0
    %v4709 = vadd.f32 %v4516, %v4708
    %v4710 = vpop.f32.mrb[0].mxu0
    %4711 = vmatprep.mubr.f32.mxu0 0.0
    %4712 = vmatmul.mubr.f32.gmra.mrb[0].mxu0 %v4590
    %v4713 = vpop.f32.mrb[0].mxu0
    %v4714 = vadd.f32 %v4521, %v4713
    %v4715 = vpop.f32.mrb[0].mxu0
    %4716 = vmatprep.mubr.f32.mxu0 0.0
    %4717 = vmatmul.mubr.f32.gmra.mrb[0].mxu0 %v4593
    %v4718 = vpop.f32.mrb[0].mxu0
    %v4719 = vadd.f32 %v4526, %v4718
    %v4720 = vpop.f32.mrb[0].mxu0
    %4721 = vmatprep.mubr.f32.mxu0 0.0
    %4722 = vmatmul.mubr.f32.gmra.mrb[0].mxu0 %v4596
    %v4723 = vpop.f32.mrb[0].mxu0
    %v4724 = vadd.f32 %v4531, %v4723
    %v4725 = vpop.f32.mrb[0].mxu0
    %4726 = vmatprep.mubr.f32.mxu0 0.0
    %4727 = vmatmul.mubr.f32.gmra.mrb[0].mxu0 %v4599
    %v4728 = vpop.f32.mrb[0].mxu0
    %v4729 = vadd.f32 %v4536, %v4728
    %v4730 = vpop.f32.mrb[0].mxu0
    %4731 = vmatprep.mubr.f32.mxu0 0.0
    %4732 = vmatmul.mubr.f32.gmra.mrb[0].mxu0 %v4602
    %v4733 = vpop.f32.mrb[0].mxu0
    %v4734 = vadd.f32 %v4541, %v4733
    %v4735 = vpop.f32.mrb[0].mxu0
    %4736 = vmatprep.mubr.f32.mxu0 0.0
    %4737 = vmatmul.mubr.f32.gmra.mrb[0].mxu0 %v4605
    %v4738 = vpop.f32.mrb[0].mxu0
    %v4739 = vadd.f32 %v4546, %v4738
    %v4740 = vpop.f32.mrb[0].mxu0
    %4741 = vmatprep.mubr.f32.mxu0 0.0
    %4742 = vmatmul.mubr.f32.gmra.mrb[0].mxu0 %v4608
    %v4743 = vpop.f32.mrb[0].mxu0
    %v4744 = vadd.f32 %v4551, %v4743
    %v4745 = vpop.f32.mrb[0].mxu0
    %4746 = vmatprep.mubr.f32.mxu0 0.0
    %4747 = vmatmul.mubr.f32.gmra.mrb[0].mxu0 %v4611
    %v4748 = vpop.f32.mrb[0].mxu0
    %v4749 = vadd.f32 %v4556, %v4748
    %v4750 = vpop.f32.mrb[0].mxu0
    %4751 = vmatprep.mubr.f32.mxu0 0.0
    %4752 = vmatmul.mubr.f32.gmra.mrb[0].mxu0 %v4614
    %v4753 = vpop.f32.mrb[0].mxu0
    %v4754 = vadd.f32 %v4561, %v4753
    %v4755 = vpop.f32.mrb[0].mxu0
    %4756 = vmatprep.mubr.f32.mxu0 0.0
    %4757 = vmatmul.mubr.f32.gmra.mrb[0].mxu0 %v4617
    %v4758 = vpop.f32.mrb[0].mxu0
    %v4759 = vadd.f32 %v4566, %v4758
    %v4760 = vpop.f32.mrb[0].mxu0
    %4761 = vmatprep.mubr.f32.mxu0 0.0
    %4762 = vmatmul.mubr.f32.gmra.mrb[0].mxu0 %v4620
    %v4763 = vpop.f32.mrb[0].mxu0
    %v4764 = vadd.f32 %v4571, %v4763
    %v4765 = vpop.f32.mrb[0].mxu0
    %4766 = vdwg.mxu0
    %v4767 = vld [vmem:[#allocation2 + $0x2] sm:$0xff]
    %v4768 = vld [vmem:[#allocation2 + $0x12] sm:$0xff]
    %v4769 = vld [vmem:[#allocation2 + $0x22] sm:$0xff]
    %v4770 = vld [vmem:[#allocation2 + $0x32] sm:$0xff]
    %v4771 = vld [vmem:[#allocation2 + $0x42] sm:$0xff]
    %v4772 = vld [vmem:[#allocation2 + $0x52] sm:$0xff]
    %v4773 = vld [vmem:[#allocation2 + $0x62] sm:$0xff]
    %v4774 = vld [vmem:[#allocation2 + $0x72] sm:$0xff]
    %v4775 = vld [vmem:[#allocation2 + $0xa2] sm:$0xff]
    %v4776 = vld [vmem:[#allocation2 + $0xb2] sm:$0xff]
    %v4777 = vld [vmem:[#allocation2 + $0xc2] sm:$0xff]
    %v4778 = vld [vmem:[#allocation2 + $0xd2] sm:$0xff]
    %v4779 = vld [vmem:[#allocation2 + $0xe2] sm:$0xff]
    %v4780 = vld [vmem:[#allocation2 + $0xf2] sm:$0xff]
    %v4781 = vld [vmem:[#allocation2 + $0x102] sm:$0xff]
    %v4782 = vld [vmem:[#allocation2 + $0x112] sm:$0xff]
    %s4783 = scalar_lea.vmem %s5, 128
    %v4784 = vld [vmem:[%s4783] sm:$0xff]
    %v4785 = vld [vmem:[%s4783 + $0x8] sm:$0xff]
    %v4786 = vld [vmem:[%s4783 + $0x10] sm:$0xff]
    %v4787 = vld [vmem:[%s4783 + $0x18] sm:$0xff]
    %v4788 = vld [vmem:[%s4783 + $0x20] sm:$0xff]
    %v4789 = vld [vmem:[%s4783 + $0x28] sm:$0xff]
    %v4790 = vld [vmem:[%s4783 + $0x30] sm:$0xff]
    %v4791 = vld [vmem:[%s4783 + $0x38] sm:$0xff]
    %v4793 = vsel %vm69, %v4767, 0
    %v4796 = vsel %vm69, %v4768, 0
    %v4799 = vsel %vm69, %v4769, 0
    %v4802 = vsel %vm69, %v4770, 0
    %v4805 = vsel %vm69, %v4771, 0
    %v4808 = vsel %vm69, %v4772, 0
    %v4811 = vsel %vm69, %v4773, 0
    %v4814 = vsel %vm69, %v4774, 0
    %v4817 = vsel %vm69, %v4775, 0
    %v4820 = vsel %vm69, %v4776, 0
    %v4823 = vsel %vm69, %v4777, 0
    %v4826 = vsel %vm69, %v4778, 0
    %v4829 = vsel %vm69, %v4779, 0
    %v4832 = vsel %vm69, %v4780, 0
    %v4835 = vsel %vm69, %v4781, 0
    %v4838 = vsel %vm69, %v4782, 0
    %4840 = vmatprep.subr.mxu0 0.0
    %4841 = vmatpush1.msra.mxu0 %v4784
    %4842 = vmatprep.subr.mxu0 0.0
    %4843 = vmatpush1.msra.mxu0 %v4785
    %4844 = vmatprep.subr.mxu0 0.0
    %4845 = vmatpush1.msra.mxu0 %v4786
    %4846 = vmatprep.subr.mxu0 0.0
    %4847 = vmatpush1.msra.mxu0 %v4787
    %4848 = vmatprep.subr.mxu0 0.0
    %4849 = vmatpush1.msra.mxu0 %v4788
    %4850 = vmatprep.subr.mxu0 0.0
    %4851 = vmatpush1.msra.mxu0 %v4789
    %4852 = vmatprep.subr.mxu0 0.0
    %4853 = vmatpush1.msra.mxu0 %v4790
    %4854 = vmatprep.subr.mxu0 0.0
    %4855 = vmatpush1.msra.mxu0 %v4791
    %4856 = vmatprep.subr.mxu0 0.0
    %4857 = vmatpush1.msra.mxu0 0.0
    %4858 = vmatprep.subr.mxu0 0.0
    %4859 = vmatpush1.msra.mxu0 0.0
    %4860 = vmatprep.subr.mxu0 0.0
    %4861 = vmatpush1.msra.mxu0 0.0
    %4862 = vmatprep.subr.mxu0 0.0
    %4863 = vmatpush1.msra.mxu0 0.0
    %4864 = vmatprep.subr.mxu0 0.0
    %4865 = vmatpush1.msra.mxu0 0.0
    %4866 = vmatprep.subr.mxu0 0.0
    %4867 = vmatpush1.msra.mxu0 0.0
    %4868 = vmatprep.subr.mxu0 0.0
    %4869 = vmatpush1.msra.mxu0 0.0
    %4870 = vmatprep.subr.mxu0 0.0
    %4871 = vmatpush1.msra.mxu0 0.0
    %4872 = vmatprep.subr.mxu0 0.0
    %4873 = vmatpush1.msra.mxu0 0.0
    %4874 = vmatprep.subr.mxu0 0.0
    %4875 = vmatpush1.msra.mxu0 0.0
    %4876 = vmatprep.subr.mxu0 0.0
    %4877 = vmatpush1.msra.mxu0 0.0
    %4878 = vmatprep.subr.mxu0 0.0
    %4879 = vmatpush1.msra.mxu0 0.0
    %4880 = vmatprep.subr.mxu0 0.0
    %4881 = vmatpush1.msra.mxu0 0.0
    %4882 = vmatprep.subr.mxu0 0.0
    %4883 = vmatpush1.msra.mxu0 0.0
    %4884 = vmatprep.subr.mxu0 0.0
    %4885 = vmatpush1.msra.mxu0 0.0
    %4886 = vmatprep.subr.mxu0 0.0
    %4887 = vmatpush1.msra.mxu0 0.0
    %4888 = vmatprep.subr.mxu0 0.0
    %4889 = vmatpush1.msra.mxu0 0.0
    %4890 = vmatprep.subr.mxu0 0.0
    %4891 = vmatpush1.msra.mxu0 0.0
    %4892 = vmatprep.subr.mxu0 0.0
    %4893 = vmatpush1.msra.mxu0 0.0
    %4894 = vmatprep.subr.mxu0 0.0
    %4895 = vmatpush1.msra.mxu0 0.0
    %4896 = vmatprep.subr.mxu0 0.0
    %4897 = vmatpush1.msra.mxu0 0.0
    %4898 = vmatprep.subr.mxu0 0.0
    %4899 = vmatpush1.msra.mxu0 0.0
    %4900 = vmatprep.subr.mxu0 0.0
    %4901 = vmatpush1.msra.mxu0 0.0
    %4902 = vmatprep.subr.mxu0 0.0
    %4903 = vmatpush1.msra.mxu0 0.0
    %4904 = vmatprep.mubr.f32.mxu0 0.0
    %4905 = vmatmul.mubr.f32.gmra.mrb[0].mxu0 %v4793
    %v4906 = vpop.f32.mrb[0].mxu0
    %v4907 = vadd.f32 0.0, %v4906
    %v4908 = vpop.f32.mrb[0].mxu0
    %4909 = vmatprep.mubr.f32.mxu0 0.0
    %4910 = vmatmul.mubr.f32.gmra.mrb[0].mxu0 %v4796
    %v4911 = vpop.f32.mrb[0].mxu0
    %v4912 = vadd.f32 0.0, %v4911
    %v4913 = vpop.f32.mrb[0].mxu0
    %4914 = vmatprep.mubr.f32.mxu0 0.0
    %4915 = vmatmul.mubr.f32.gmra.mrb[0].mxu0 %v4799
    %v4916 = vpop.f32.mrb[0].mxu0
    %v4917 = vadd.f32 0.0, %v4916
    %v4918 = vpop.f32.mrb[0].mxu0
    %4919 = vmatprep.mubr.f32.mxu0 0.0
    %4920 = vmatmul.mubr.f32.gmra.mrb[0].mxu0 %v4802
    %v4921 = vpop.f32.mrb[0].mxu0
    %v4922 = vadd.f32 0.0, %v4921
    %v4923 = vpop.f32.mrb[0].mxu0
    %4924 = vmatprep.mubr.f32.mxu0 0.0
    %4925 = vmatmul.mubr.f32.gmra.mrb[0].mxu0 %v4805
    %v4926 = vpop.f32.mrb[0].mxu0
    %v4927 = vadd.f32 0.0, %v4926
    %v4928 = vpop.f32.mrb[0].mxu0
    %4929 = vmatprep.mubr.f32.mxu0 0.0
    %4930 = vmatmul.mubr.f32.gmra.mrb[0].mxu0 %v4808
    %v4931 = vpop.f32.mrb[0].mxu0
    %v4932 = vadd.f32 0.0, %v4931
    %v4933 = vpop.f32.mrb[0].mxu0
    %4934 = vmatprep.mubr.f32.mxu0 0.0
    %4935 = vmatmul.mubr.f32.gmra.mrb[0].mxu0 %v4811
    %v4936 = vpop.f32.mrb[0].mxu0
    %v4937 = vadd.f32 0.0, %v4936
    %v4938 = vpop.f32.mrb[0].mxu0
    %4939 = vmatprep.mubr.f32.mxu0 0.0
    %4940 = vmatmul.mubr.f32.gmra.mrb[0].mxu0 %v4814
    %v4941 = vpop.f32.mrb[0].mxu0
    %v4942 = vadd.f32 0.0, %v4941
    %v4943 = vpop.f32.mrb[0].mxu0
    %4944 = vmatprep.mubr.f32.mxu0 0.0
    %4945 = vmatmul.mubr.f32.gmra.mrb[0].mxu0 %v4817
    %v4946 = vpop.f32.mrb[0].mxu0
    %v4947 = vadd.f32 0.0, %v4946
    %v4948 = vpop.f32.mrb[0].mxu0
    %4949 = vmatprep.mubr.f32.mxu0 0.0
    %4950 = vmatmul.mubr.f32.gmra.mrb[0].mxu0 %v4820
    %v4951 = vpop.f32.mrb[0].mxu0
    %v4952 = vadd.f32 0.0, %v4951
    %v4953 = vpop.f32.mrb[0].mxu0
    %4954 = vmatprep.mubr.f32.mxu0 0.0
    %4955 = vmatmul.mubr.f32.gmra.mrb[0].mxu0 %v4823
    %v4956 = vpop.f32.mrb[0].mxu0
    %v4957 = vadd.f32 0.0, %v4956
    %v4958 = vpop.f32.mrb[0].mxu0
    %4959 = vmatprep.mubr.f32.mxu0 0.0
    %4960 = vmatmul.mubr.f32.gmra.mrb[0].mxu0 %v4826
    %v4961 = vpop.f32.mrb[0].mxu0
    %v4962 = vadd.f32 0.0, %v4961
    %v4963 = vpop.f32.mrb[0].mxu0
    %4964 = vmatprep.mubr.f32.mxu0 0.0
    %4965 = vmatmul.mubr.f32.gmra.mrb[0].mxu0 %v4829
    %v4966 = vpop.f32.mrb[0].mxu0
    %v4967 = vadd.f32 0.0, %v4966
    %v4968 = vpop.f32.mrb[0].mxu0
    %4969 = vmatprep.mubr.f32.mxu0 0.0
    %4970 = vmatmul.mubr.f32.gmra.mrb[0].mxu0 %v4832
    %v4971 = vpop.f32.mrb[0].mxu0
    %v4972 = vadd.f32 0.0, %v4971
    %v4973 = vpop.f32.mrb[0].mxu0
    %4974 = vmatprep.mubr.f32.mxu0 0.0
    %4975 = vmatmul.mubr.f32.gmra.mrb[0].mxu0 %v4835
    %v4976 = vpop.f32.mrb[0].mxu0
    %v4977 = vadd.f32 0.0, %v4976
    %v4978 = vpop.f32.mrb[0].mxu0
    %4979 = vmatprep.mubr.f32.mxu0 0.0
    %4980 = vmatmul.mubr.f32.gmra.mrb[0].mxu0 %v4838
    %v4981 = vpop.f32.mrb[0].mxu0
    %v4982 = vadd.f32 0.0, %v4981
    %v4983 = vpop.f32.mrb[0].mxu0
    %4984 = vdwg.mxu0
    %v4985 = vadd.f32 %v4689, %v4907
    %v4986 = vadd.f32 %v4694, %v4912
    %v4987 = vadd.f32 %v4699, %v4917
    %v4988 = vadd.f32 %v4704, %v4922
    %v4989 = vadd.f32 %v4709, %v4927
    %v4990 = vadd.f32 %v4714, %v4932
    %v4991 = vadd.f32 %v4719, %v4937
    %v4992 = vadd.f32 %v4724, %v4942
    %v4993 = vadd.f32 %v4729, %v4947
    %v4994 = vadd.f32 %v4734, %v4952
    %v4995 = vadd.f32 %v4739, %v4957
    %v4996 = vadd.f32 %v4744, %v4962
    %v4997 = vadd.f32 %v4749, %v4967
    %v4998 = vadd.f32 %v4754, %v4972
    %v4999 = vadd.f32 %v4759, %v4977
    %v5000 = vadd.f32 %v4764, %v4982
    %v5001 = vld [vmem:[%s127] sm:$0xff]
    %v5002 = vld [vmem:[%s127 + $0x10] sm:$0xff]
    %v5003 = vld [vmem:[%s127 + $0x20] sm:$0xff]
    %v5004 = vld [vmem:[%s127 + $0x30] sm:$0xff]
    %v5005 = vld [vmem:[%s127 + $0x40] sm:$0xff]
    %v5006 = vld [vmem:[%s127 + $0x50] sm:$0xff]
    %v5007 = vld [vmem:[%s127 + $0x60] sm:$0xff]
    %v5008 = vld [vmem:[%s127 + $0x70] sm:$0xff]
    %v5009 = vld [vmem:[%s127 + $0xa0] sm:$0xff]
    %v5010 = vld [vmem:[%s127 + $0xb0] sm:$0xff]
    %v5011 = vld [vmem:[%s127 + $0xc0] sm:$0xff]
    %v5012 = vld [vmem:[%s127 + $0xd0] sm:$0xff]
    %v5013 = vld [vmem:[%s127 + $0xe0] sm:$0xff]
    %v5014 = vld [vmem:[%s127 + $0xf0] sm:$0xff]
    %v5015 = vld [vmem:[%s127 + $0x100] sm:$0xff]
    %v5016 = vld [vmem:[%s127 + $0x110] sm:$0xff]
    %s5017 = scalar_lea.vmem %s5, 192
    %v5018 = vld [vmem:[%s5017] sm:$0xff]
    %v5019 = vld [vmem:[%s5017 + $0x8] sm:$0xff]
    %v5020 = vld [vmem:[%s5017 + $0x10] sm:$0xff]
    %v5021 = vld [vmem:[%s5017 + $0x18] sm:$0xff]
    %v5022 = vld [vmem:[%s5017 + $0x20] sm:$0xff]
    %v5023 = vld [vmem:[%s5017 + $0x28] sm:$0xff]
    %v5024 = vld [vmem:[%s5017 + $0x30] sm:$0xff]
    %v5025 = vld [vmem:[%s5017 + $0x38] sm:$0xff]
    %v5027 = vsel %vm69, %v5001, 0
    %v5030 = vsel %vm69, %v5002, 0
    %v5033 = vsel %vm69, %v5003, 0
    %v5036 = vsel %vm69, %v5004, 0
    %v5039 = vsel %vm69, %v5005, 0
    %v5042 = vsel %vm69, %v5006, 0
    %v5045 = vsel %vm69, %v5007, 0
    %v5048 = vsel %vm69, %v5008, 0
    %v5051 = vsel %vm69, %v5009, 0
    %v5054 = vsel %vm69, %v5010, 0
    %v5057 = vsel %vm69, %v5011, 0
    %v5060 = vsel %vm69, %v5012, 0
    %v5063 = vsel %vm69, %v5013, 0
    %v5066 = vsel %vm69, %v5014, 0
    %v5069 = vsel %vm69, %v5015, 0
    %v5072 = vsel %vm69, %v5016, 0
    %5074 = vmatprep.subr.mxu0 0.0
    %5075 = vmatpush1.msra.mxu0 %v5018
    %5076 = vmatprep.subr.mxu0 0.0
    %5077 = vmatpush1.msra.mxu0 %v5019
    %5078 = vmatprep.subr.mxu0 0.0
    %5079 = vmatpush1.msra.mxu0 %v5020
    %5080 = vmatprep.subr.mxu0 0.0
    %5081 = vmatpush1.msra.mxu0 %v5021
    %5082 = vmatprep.subr.mxu0 0.0
    %5083 = vmatpush1.msra.mxu0 %v5022
    %5084 = vmatprep.subr.mxu0 0.0
    %5085 = vmatpush1.msra.mxu0 %v5023
    %5086 = vmatprep.subr.mxu0 0.0
    %5087 = vmatpush1.msra.mxu0 %v5024
    %5088 = vmatprep.subr.mxu0 0.0
    %5089 = vmatpush1.msra.mxu0 %v5025
    %5090 = vmatprep.subr.mxu0 0.0
    %5091 = vmatpush1.msra.mxu0 0.0
    %5092 = vmatprep.subr.mxu0 0.0
    %5093 = vmatpush1.msra.mxu0 0.0
    %5094 = vmatprep.subr.mxu0 0.0
    %5095 = vmatpush1.msra.mxu0 0.0
    %5096 = vmatprep.subr.mxu0 0.0
    %5097 = vmatpush1.msra.mxu0 0.0
    %5098 = vmatprep.subr.mxu0 0.0
    %5099 = vmatpush1.msra.mxu0 0.0
    %5100 = vmatprep.subr.mxu0 0.0
    %5101 = vmatpush1.msra.mxu0 0.0
    %5102 = vmatprep.subr.mxu0 0.0
    %5103 = vmatpush1.msra.mxu0 0.0
    %5104 = vmatprep.subr.mxu0 0.0
    %5105 = vmatpush1.msra.mxu0 0.0
    %5106 = vmatprep.subr.mxu0 0.0
    %5107 = vmatpush1.msra.mxu0 0.0
    %5108 = vmatprep.subr.mxu0 0.0
    %5109 = vmatpush1.msra.mxu0 0.0
    %5110 = vmatprep.subr.mxu0 0.0
    %5111 = vmatpush1.msra.mxu0 0.0
    %5112 = vmatprep.subr.mxu0 0.0
    %5113 = vmatpush1.msra.mxu0 0.0
    %5114 = vmatprep.subr.mxu0 0.0
    %5115 = vmatpush1.msra.mxu0 0.0
    %5116 = vmatprep.subr.mxu0 0.0
    %5117 = vmatpush1.msra.mxu0 0.0
    %5118 = vmatprep.subr.mxu0 0.0
    %5119 = vmatpush1.msra.mxu0 0.0
    %5120 = vmatprep.subr.mxu0 0.0
    %5121 = vmatpush1.msra.mxu0 0.0
    %5122 = vmatprep.subr.mxu0 0.0
    %5123 = vmatpush1.msra.mxu0 0.0
    %5124 = vmatprep.subr.mxu0 0.0
    %5125 = vmatpush1.msra.mxu0 0.0
    %5126 = vmatprep.subr.mxu0 0.0
    %5127 = vmatpush1.msra.mxu0 0.0
    %5128 = vmatprep.subr.mxu0 0.0
    %5129 = vmatpush1.msra.mxu0 0.0
    %5130 = vmatprep.subr.mxu0 0.0
    %5131 = vmatpush1.msra.mxu0 0.0
    %5132 = vmatprep.subr.mxu0 0.0
    %5133 = vmatpush1.msra.mxu0 0.0
    %5134 = vmatprep.subr.mxu0 0.0
    %5135 = vmatpush1.msra.mxu0 0.0
    %5136 = vmatprep.subr.mxu0 0.0
    %5137 = vmatpush1.msra.mxu0 0.0
    %5138 = vmatprep.mubr.f32.mxu0 0.0
    %5139 = vmatmul.mubr.f32.gmra.mrb[0].mxu0 %v5027
    %v5140 = vpop.f32.mrb[0].mxu0
    %v5141 = vadd.f32 0.0, %v5140
    %v5142 = vpop.f32.mrb[0].mxu0
    %5143 = vmatprep.mubr.f32.mxu0 0.0
    %5144 = vmatmul.mubr.f32.gmra.mrb[0].mxu0 %v5030
    %v5145 = vpop.f32.mrb[0].mxu0
    %v5146 = vadd.f32 0.0, %v5145
    %v5147 = vpop.f32.mrb[0].mxu0
    %5148 = vmatprep.mubr.f32.mxu0 0.0
    %5149 = vmatmul.mubr.f32.gmra.mrb[0].mxu0 %v5033
    %v5150 = vpop.f32.mrb[0].mxu0
    %v5151 = vadd.f32 0.0, %v5150
    %v5152 = vpop.f32.mrb[0].mxu0
    %5153 = vmatprep.mubr.f32.mxu0 0.0
    %5154 = vmatmul.mubr.f32.gmra.mrb[0].mxu0 %v5036
    %v5155 = vpop.f32.mrb[0].mxu0
    %v5156 = vadd.f32 0.0, %v5155
    %v5157 = vpop.f32.mrb[0].mxu0
    %5158 = vmatprep.mubr.f32.mxu0 0.0
    %5159 = vmatmul.mubr.f32.gmra.mrb[0].mxu0 %v5039
    %v5160 = vpop.f32.mrb[0].mxu0
    %v5161 = vadd.f32 0.0, %v5160
    %v5162 = vpop.f32.mrb[0].mxu0
    %5163 = vmatprep.mubr.f32.mxu0 0.0
    %5164 = vmatmul.mubr.f32.gmra.mrb[0].mxu0 %v5042
    %v5165 = vpop.f32.mrb[0].mxu0
    %v5166 = vadd.f32 0.0, %v5165
    %v5167 = vpop.f32.mrb[0].mxu0
    %5168 = vmatprep.mubr.f32.mxu0 0.0
    %5169 = vmatmul.mubr.f32.gmra.mrb[0].mxu0 %v5045
    %v5170 = vpop.f32.mrb[0].mxu0
    %v5171 = vadd.f32 0.0, %v5170
    %v5172 = vpop.f32.mrb[0].mxu0
    %5173 = vmatprep.mubr.f32.mxu0 0.0
    %5174 = vmatmul.mubr.f32.gmra.mrb[0].mxu0 %v5048
    %v5175 = vpop.f32.mrb[0].mxu0
    %v5176 = vadd.f32 0.0, %v5175
    %v5177 = vpop.f32.mrb[0].mxu0
    %5178 = vmatprep.mubr.f32.mxu0 0.0
    %5179 = vmatmul.mubr.f32.gmra.mrb[0].mxu0 %v5051
    %v5180 = vpop.f32.mrb[0].mxu0
    %v5181 = vadd.f32 0.0, %v5180
    %v5182 = vpop.f32.mrb[0].mxu0
    %5183 = vmatprep.mubr.f32.mxu0 0.0
    %5184 = vmatmul.mubr.f32.gmra.mrb[0].mxu0 %v5054
    %v5185 = vpop.f32.mrb[0].mxu0
    %v5186 = vadd.f32 0.0, %v5185
    %v5187 = vpop.f32.mrb[0].mxu0
    %5188 = vmatprep.mubr.f32.mxu0 0.0
    %5189 = vmatmul.mubr.f32.gmra.mrb[0].mxu0 %v5057
    %v5190 = vpop.f32.mrb[0].mxu0
    %v5191 = vadd.f32 0.0, %v5190
    %v5192 = vpop.f32.mrb[0].mxu0
    %5193 = vmatprep.mubr.f32.mxu0 0.0
    %5194 = vmatmul.mubr.f32.gmra.mrb[0].mxu0 %v5060
    %v5195 = vpop.f32.mrb[0].mxu0
    %v5196 = vadd.f32 0.0, %v5195
    %v5197 = vpop.f32.mrb[0].mxu0
    %5198 = vmatprep.mubr.f32.mxu0 0.0
    %5199 = vmatmul.mubr.f32.gmra.mrb[0].mxu0 %v5063
    %v5200 = vpop.f32.mrb[0].mxu0
    %v5201 = vadd.f32 0.0, %v5200
    %v5202 = vpop.f32.mrb[0].mxu0
    %5203 = vmatprep.mubr.f32.mxu0 0.0
    %5204 = vmatmul.mubr.f32.gmra.mrb[0].mxu0 %v5066
    %v5205 = vpop.f32.mrb[0].mxu0
    %v5206 = vadd.f32 0.0, %v5205
    %v5207 = vpop.f32.mrb[0].mxu0
    %5208 = vmatprep.mubr.f32.mxu0 0.0
    %5209 = vmatmul.mubr.f32.gmra.mrb[0].mxu0 %v5069
    %v5210 = vpop.f32.mrb[0].mxu0
    %v5211 = vadd.f32 0.0, %v5210
    %v5212 = vpop.f32.mrb[0].mxu0
    %5213 = vmatprep.mubr.f32.mxu0 0.0
    %5214 = vmatmul.mubr.f32.gmra.mrb[0].mxu0 %v5072
    %v5215 = vpop.f32.mrb[0].mxu0
    %v5216 = vadd.f32 0.0, %v5215
    %v5217 = vpop.f32.mrb[0].mxu0
    %5218 = vdwg.mxu0
    %v5219 = vadd.f32 %v4985, %v5141
    %v5220 = vadd.f32 %v4986, %v5146
    %v5221 = vadd.f32 %v4987, %v5151
    %v5222 = vadd.f32 %v4988, %v5156
    %v5223 = vadd.f32 %v4989, %v5161
    %v5224 = vadd.f32 %v4990, %v5166
    %v5225 = vadd.f32 %v4991, %v5171
    %v5226 = vadd.f32 %v4992, %v5176
    %v5227 = vadd.f32 %v4993, %v5181
    %v5228 = vadd.f32 %v4994, %v5186
    %v5229 = vadd.f32 %v4995, %v5191
    %v5230 = vadd.f32 %v4996, %v5196
    %v5231 = vadd.f32 %v4997, %v5201
    %v5232 = vadd.f32 %v4998, %v5206
    %v5233 = vadd.f32 %v4999, %v5211
    %v5234 = vadd.f32 %v5000, %v5216
    %v5235 = vld [vmem:[%s127 + $0x1] sm:$0xff]
    %v5236 = vld [vmem:[%s127 + $0x11] sm:$0xff]
    %v5237 = vld [vmem:[%s127 + $0x21] sm:$0xff]
    %v5238 = vld [vmem:[%s127 + $0x31] sm:$0xff]
    %v5239 = vld [vmem:[%s127 + $0x41] sm:$0xff]
    %v5240 = vld [vmem:[%s127 + $0x51] sm:$0xff]
    %v5241 = vld [vmem:[%s127 + $0x61] sm:$0xff]
    %v5242 = vld [vmem:[%s127 + $0x71] sm:$0xff]
    %v5243 = vld [vmem:[%s127 + $0xa1] sm:$0xff]
    %v5244 = vld [vmem:[%s127 + $0xb1] sm:$0xff]
    %v5245 = vld [vmem:[%s127 + $0xc1] sm:$0xff]
    %v5246 = vld [vmem:[%s127 + $0xd1] sm:$0xff]
    %v5247 = vld [vmem:[%s127 + $0xe1] sm:$0xff]
    %v5248 = vld [vmem:[%s127 + $0xf1] sm:$0xff]
    %v5249 = vld [vmem:[%s127 + $0x101] sm:$0xff]
    %v5250 = vld [vmem:[%s127 + $0x111] sm:$0xff]
    %s5251 = scalar_lea.vmem %s5, 256
    %v5252 = vld [vmem:[%s5251] sm:$0xff]
    %v5253 = vld [vmem:[%s5251 + $0x8] sm:$0xff]
    %v5254 = vld [vmem:[%s5251 + $0x10] sm:$0xff]
    %v5255 = vld [vmem:[%s5251 + $0x18] sm:$0xff]
    %v5256 = vld [vmem:[%s5251 + $0x20] sm:$0xff]
    %v5257 = vld [vmem:[%s5251 + $0x28] sm:$0xff]
    %v5258 = vld [vmem:[%s5251 + $0x30] sm:$0xff]
    %v5259 = vld [vmem:[%s5251 + $0x38] sm:$0xff]
    %v5261 = vsel %vm69, %v5235, 0
    %v5264 = vsel %vm69, %v5236, 0
    %v5267 = vsel %vm69, %v5237, 0
    %v5270 = vsel %vm69, %v5238, 0
    %v5273 = vsel %vm69, %v5239, 0
    %v5276 = vsel %vm69, %v5240, 0
    %v5279 = vsel %vm69, %v5241, 0
    %v5282 = vsel %vm69, %v5242, 0
    %v5285 = vsel %vm69, %v5243, 0
    %v5288 = vsel %vm69, %v5244, 0
    %v5291 = vsel %vm69, %v5245, 0
    %v5294 = vsel %vm69, %v5246, 0
    %v5297 = vsel %vm69, %v5247, 0
    %v5300 = vsel %vm69, %v5248, 0
    %v5303 = vsel %vm69, %v5249, 0
    %v5306 = vsel %vm69, %v5250, 0
    %5308 = vmatprep.subr.mxu0 0.0
    %5309 = vmatpush1.msra.mxu0 %v5252
    %5310 = vmatprep.subr.mxu0 0.0
    %5311 = vmatpush1.msra.mxu0 %v5253
    %5312 = vmatprep.subr.mxu0 0.0
    %5313 = vmatpush1.msra.mxu0 %v5254
    %5314 = vmatprep.subr.mxu0 0.0
    %5315 = vmatpush1.msra.mxu0 %v5255
    %5316 = vmatprep.subr.mxu0 0.0
    %5317 = vmatpush1.msra.mxu0 %v5256
    %5318 = vmatprep.subr.mxu0 0.0
    %5319 = vmatpush1.msra.mxu0 %v5257
    %5320 = vmatprep.subr.mxu0 0.0
    %5321 = vmatpush1.msra.mxu0 %v5258
    %5322 = vmatprep.subr.mxu0 0.0
    %5323 = vmatpush1.msra.mxu0 %v5259
    %5324 = vmatprep.subr.mxu0 0.0
    %5325 = vmatpush1.msra.mxu0 0.0
    %5326 = vmatprep.subr.mxu0 0.0
    %5327 = vmatpush1.msra.mxu0 0.0
    %5328 = vmatprep.subr.mxu0 0.0
    %5329 = vmatpush1.msra.mxu0 0.0
    %5330 = vmatprep.subr.mxu0 0.0
    %5331 = vmatpush1.msra.mxu0 0.0
    %5332 = vmatprep.subr.mxu0 0.0
    %5333 = vmatpush1.msra.mxu0 0.0
    %5334 = vmatprep.subr.mxu0 0.0
    %5335 = vmatpush1.msra.mxu0 0.0
    %5336 = vmatprep.subr.mxu0 0.0
    %5337 = vmatpush1.msra.mxu0 0.0
    %5338 = vmatprep.subr.mxu0 0.0
    %5339 = vmatpush1.msra.mxu0 0.0
    %5340 = vmatprep.subr.mxu0 0.0
    %5341 = vmatpush1.msra.mxu0 0.0
    %5342 = vmatprep.subr.mxu0 0.0
    %5343 = vmatpush1.msra.mxu0 0.0
    %5344 = vmatprep.subr.mxu0 0.0
    %5345 = vmatpush1.msra.mxu0 0.0
    %5346 = vmatprep.subr.mxu0 0.0
    %5347 = vmatpush1.msra.mxu0 0.0
    %5348 = vmatprep.subr.mxu0 0.0
    %5349 = vmatpush1.msra.mxu0 0.0
    %5350 = vmatprep.subr.mxu0 0.0
    %5351 = vmatpush1.msra.mxu0 0.0
    %5352 = vmatprep.subr.mxu0 0.0
    %5353 = vmatpush1.msra.mxu0 0.0
    %5354 = vmatprep.subr.mxu0 0.0
    %5355 = vmatpush1.msra.mxu0 0.0
    %5356 = vmatprep.subr.mxu0 0.0
    %5357 = vmatpush1.msra.mxu0 0.0
    %5358 = vmatprep.subr.mxu0 0.0
    %5359 = vmatpush1.msra.mxu0 0.0
    %5360 = vmatprep.subr.mxu0 0.0
    %5361 = vmatpush1.msra.mxu0 0.0
    %5362 = vmatprep.subr.mxu0 0.0
    %5363 = vmatpush1.msra.mxu0 0.0
    %5364 = vmatprep.subr.mxu0 0.0
    %5365 = vmatpush1.msra.mxu0 0.0
    %5366 = vmatprep.subr.mxu0 0.0
    %5367 = vmatpush1.msra.mxu0 0.0
    %5368 = vmatprep.subr.mxu0 0.0
    %5369 = vmatpush1.msra.mxu0 0.0
    %5370 = vmatprep.subr.mxu0 0.0
    %5371 = vmatpush1.msra.mxu0 0.0
    %5372 = vmatprep.mubr.f32.mxu0 0.0
    %5373 = vmatmul.mubr.f32.gmra.mrb[0].mxu0 %v5261
    %v5374 = vpop.f32.mrb[0].mxu0
    %v5375 = vadd.f32 0.0, %v5374
    %v5376 = vpop.f32.mrb[0].mxu0
    %5377 = vmatprep.mubr.f32.mxu0 0.0
    %5378 = vmatmul.mubr.f32.gmra.mrb[0].mxu0 %v5264
    %v5379 = vpop.f32.mrb[0].mxu0
    %v5380 = vadd.f32 0.0, %v5379
    %v5381 = vpop.f32.mrb[0].mxu0
    %5382 = vmatprep.mubr.f32.mxu0 0.0
    %5383 = vmatmul.mubr.f32.gmra.mrb[0].mxu0 %v5267
    %v5384 = vpop.f32.mrb[0].mxu0
    %v5385 = vadd.f32 0.0, %v5384
    %v5386 = vpop.f32.mrb[0].mxu0
    %5387 = vmatprep.mubr.f32.mxu0 0.0
    %5388 = vmatmul.mubr.f32.gmra.mrb[0].mxu0 %v5270
    %v5389 = vpop.f32.mrb[0].mxu0
    %v5390 = vadd.f32 0.0, %v5389
    %v5391 = vpop.f32.mrb[0].mxu0
    %5392 = vmatprep.mubr.f32.mxu0 0.0
    %5393 = vmatmul.mubr.f32.gmra.mrb[0].mxu0 %v5273
    %v5394 = vpop.f32.mrb[0].mxu0
    %v5395 = vadd.f32 0.0, %v5394
    %v5396 = vpop.f32.mrb[0].mxu0
    %5397 = vmatprep.mubr.f32.mxu0 0.0
    %5398 = vmatmul.mubr.f32.gmra.mrb[0].mxu0 %v5276
    %v5399 = vpop.f32.mrb[0].mxu0
    %v5400 = vadd.f32 0.0, %v5399
    %v5401 = vpop.f32.mrb[0].mxu0
    %5402 = vmatprep.mubr.f32.mxu0 0.0
    %5403 = vmatmul.mubr.f32.gmra.mrb[0].mxu0 %v5279
    %v5404 = vpop.f32.mrb[0].mxu0
    %v5405 = vadd.f32 0.0, %v5404
    %v5406 = vpop.f32.mrb[0].mxu0
    %5407 = vmatprep.mubr.f32.mxu0 0.0
    %5408 = vmatmul.mubr.f32.gmra.mrb[0].mxu0 %v5282
    %v5409 = vpop.f32.mrb[0].mxu0
    %v5410 = vadd.f32 0.0, %v5409
    %v5411 = vpop.f32.mrb[0].mxu0
    %5412 = vmatprep.mubr.f32.mxu0 0.0
    %5413 = vmatmul.mubr.f32.gmra.mrb[0].mxu0 %v5285
    %v5414 = vpop.f32.mrb[0].mxu0
    %v5415 = vadd.f32 0.0, %v5414
    %v5416 = vpop.f32.mrb[0].mxu0
    %5417 = vmatprep.mubr.f32.mxu0 0.0
    %5418 = vmatmul.mubr.f32.gmra.mrb[0].mxu0 %v5288
    %v5419 = vpop.f32.mrb[0].mxu0
    %v5420 = vadd.f32 0.0, %v5419
    %v5421 = vpop.f32.mrb[0].mxu0
    %5422 = vmatprep.mubr.f32.mxu0 0.0
    %5423 = vmatmul.mubr.f32.gmra.mrb[0].mxu0 %v5291
    %v5424 = vpop.f32.mrb[0].mxu0
    %v5425 = vadd.f32 0.0, %v5424
    %v5426 = vpop.f32.mrb[0].mxu0
    %5427 = vmatprep.mubr.f32.mxu0 0.0
    %5428 = vmatmul.mubr.f32.gmra.mrb[0].mxu0 %v5294
    %v5429 = vpop.f32.mrb[0].mxu0
    %v5430 = vadd.f32 0.0, %v5429
    %v5431 = vpop.f32.mrb[0].mxu0
    %5432 = vmatprep.mubr.f32.mxu0 0.0
    %5433 = vmatmul.mubr.f32.gmra.mrb[0].mxu0 %v5297
    %v5434 = vpop.f32.mrb[0].mxu0
    %v5435 = vadd.f32 0.0, %v5434
    %v5436 = vpop.f32.mrb[0].mxu0
    %5437 = vmatprep.mubr.f32.mxu0 0.0
    %5438 = vmatmul.mubr.f32.gmra.mrb[0].mxu0 %v5300
    %v5439 = vpop.f32.mrb[0].mxu0
    %v5440 = vadd.f32 0.0, %v5439
    %v5441 = vpop.f32.mrb[0].mxu0
    %5442 = vmatprep.mubr.f32.mxu0 0.0
    %5443 = vmatmul.mubr.f32.gmra.mrb[0].mxu0 %v5303
    %v5444 = vpop.f32.mrb[0].mxu0
    %v5445 = vadd.f32 0.0, %v5444
    %v5446 = vpop.f32.mrb[0].mxu0
    %5447 = vmatprep.mubr.f32.mxu0 0.0
    %5448 = vmatmul.mubr.f32.gmra.mrb[0].mxu0 %v5306
    %v5449 = vpop.f32.mrb[0].mxu0
    %v5450 = vadd.f32 0.0, %v5449
    %v5451 = vpop.f32.mrb[0].mxu0
    %5452 = vdwg.mxu0
    %v5453 = vadd.f32 %v5219, %v5375
    %v5454 = vadd.f32 %v5220, %v5380
    %v5455 = vadd.f32 %v5221, %v5385
    %v5456 = vadd.f32 %v5222, %v5390
    %v5457 = vadd.f32 %v5223, %v5395
    %v5458 = vadd.f32 %v5224, %v5400
    %v5459 = vadd.f32 %v5225, %v5405
    %v5460 = vadd.f32 %v5226, %v5410
    %v5461 = vadd.f32 %v5227, %v5415
    %v5462 = vadd.f32 %v5228, %v5420
    %v5463 = vadd.f32 %v5229, %v5425
    %v5464 = vadd.f32 %v5230, %v5430
    %v5465 = vadd.f32 %v5231, %v5435
    %v5466 = vadd.f32 %v5232, %v5440
    %v5467 = vadd.f32 %v5233, %v5445
    %v5468 = vadd.f32 %v5234, %v5450
    %v5469 = vld [vmem:[%s127 + $0x2] sm:$0xff]
    %v5470 = vld [vmem:[%s127 + $0x12] sm:$0xff]
    %v5471 = vld [vmem:[%s127 + $0x22] sm:$0xff]
    %v5472 = vld [vmem:[%s127 + $0x32] sm:$0xff]
    %v5473 = vld [vmem:[%s127 + $0x42] sm:$0xff]
    %v5474 = vld [vmem:[%s127 + $0x52] sm:$0xff]
    %v5475 = vld [vmem:[%s127 + $0x62] sm:$0xff]
    %v5476 = vld [vmem:[%s127 + $0x72] sm:$0xff]
    %v5477 = vld [vmem:[%s127 + $0xa2] sm:$0xff]
    %v5478 = vld [vmem:[%s127 + $0xb2] sm:$0xff]
    %v5479 = vld [vmem:[%s127 + $0xc2] sm:$0xff]
    %v5480 = vld [vmem:[%s127 + $0xd2] sm:$0xff]
    %v5481 = vld [vmem:[%s127 + $0xe2] sm:$0xff]
    %v5482 = vld [vmem:[%s127 + $0xf2] sm:$0xff]
    %v5483 = vld [vmem:[%s127 + $0x102] sm:$0xff]
    %v5484 = vld [vmem:[%s127 + $0x112] sm:$0xff]
    %s5485 = scalar_lea.vmem %s5, 320
    %v5486 = vld [vmem:[%s5485] sm:$0xff]
    %v5487 = vld [vmem:[%s5485 + $0x8] sm:$0xff]
    %v5488 = vld [vmem:[%s5485 + $0x10] sm:$0xff]
    %v5489 = vld [vmem:[%s5485 + $0x18] sm:$0xff]
    %v5490 = vld [vmem:[%s5485 + $0x20] sm:$0xff]
    %v5491 = vld [vmem:[%s5485 + $0x28] sm:$0xff]
    %v5492 = vld [vmem:[%s5485 + $0x30] sm:$0xff]
    %v5493 = vld [vmem:[%s5485 + $0x38] sm:$0xff]
    %v5495 = vsel %vm69, %v5469, 0
    %v5498 = vsel %vm69, %v5470, 0
    %v5501 = vsel %vm69, %v5471, 0
    %v5504 = vsel %vm69, %v5472, 0
    %v5507 = vsel %vm69, %v5473, 0
    %v5510 = vsel %vm69, %v5474, 0
    %v5513 = vsel %vm69, %v5475, 0
    %v5516 = vsel %vm69, %v5476, 0
    %v5519 = vsel %vm69, %v5477, 0
    %v5522 = vsel %vm69, %v5478, 0
    %v5525 = vsel %vm69, %v5479, 0
    %v5528 = vsel %vm69, %v5480, 0
    %v5531 = vsel %vm69, %v5481, 0
    %v5534 = vsel %vm69, %v5482, 0
    %v5537 = vsel %vm69, %v5483, 0
    %v5540 = vsel %vm69, %v5484, 0
    %5542 = vmatprep.subr.mxu0 0.0
    %5543 = vmatpush1.msra.mxu0 %v5486
    %5544 = vmatprep.subr.mxu0 0.0
    %5545 = vmatpush1.msra.mxu0 %v5487
    %5546 = vmatprep.subr.mxu0 0.0
    %5547 = vmatpush1.msra.mxu0 %v5488
    %5548 = vmatprep.subr.mxu0 0.0
    %5549 = vmatpush1.msra.mxu0 %v5489
    %5550 = vmatprep.subr.mxu0 0.0
    %5551 = vmatpush1.msra.mxu0 %v5490
    %5552 = vmatprep.subr.mxu0 0.0
    %5553 = vmatpush1.msra.mxu0 %v5491
    %5554 = vmatprep.subr.mxu0 0.0
    %5555 = vmatpush1.msra.mxu0 %v5492
    %5556 = vmatprep.subr.mxu0 0.0
    %5557 = vmatpush1.msra.mxu0 %v5493
    %5558 = vmatprep.subr.mxu0 0.0
    %5559 = vmatpush1.msra.mxu0 0.0
    %5560 = vmatprep.subr.mxu0 0.0
    %5561 = vmatpush1.msra.mxu0 0.0
    %5562 = vmatprep.subr.mxu0 0.0
    %5563 = vmatpush1.msra.mxu0 0.0
    %5564 = vmatprep.subr.mxu0 0.0
    %5565 = vmatpush1.msra.mxu0 0.0
    %5566 = vmatprep.subr.mxu0 0.0
    %5567 = vmatpush1.msra.mxu0 0.0
    %5568 = vmatprep.subr.mxu0 0.0
    %5569 = vmatpush1.msra.mxu0 0.0
    %5570 = vmatprep.subr.mxu0 0.0
    %5571 = vmatpush1.msra.mxu0 0.0
    %5572 = vmatprep.subr.mxu0 0.0
    %5573 = vmatpush1.msra.mxu0 0.0
    %5574 = vmatprep.subr.mxu0 0.0
    %5575 = vmatpush1.msra.mxu0 0.0
    %5576 = vmatprep.subr.mxu0 0.0
    %5577 = vmatpush1.msra.mxu0 0.0
    %5578 = vmatprep.subr.mxu0 0.0
    %5579 = vmatpush1.msra.mxu0 0.0
    %5580 = vmatprep.subr.mxu0 0.0
    %5581 = vmatpush1.msra.mxu0 0.0
    %5582 = vmatprep.subr.mxu0 0.0
    %5583 = vmatpush1.msra.mxu0 0.0
    %5584 = vmatprep.subr.mxu0 0.0
    %5585 = vmatpush1.msra.mxu0 0.0
    %5586 = vmatprep.subr.mxu0 0.0
    %5587 = vmatpush1.msra.mxu0 0.0
    %5588 = vmatprep.subr.mxu0 0.0
    %5589 = vmatpush1.msra.mxu0 0.0
    %5590 = vmatprep.subr.mxu0 0.0
    %5591 = vmatpush1.msra.mxu0 0.0
    %5592 = vmatprep.subr.mxu0 0.0
    %5593 = vmatpush1.msra.mxu0 0.0
    %5594 = vmatprep.subr.mxu0 0.0
    %5595 = vmatpush1.msra.mxu0 0.0
    %5596 = vmatprep.subr.mxu0 0.0
    %5597 = vmatpush1.msra.mxu0 0.0
    %5598 = vmatprep.subr.mxu0 0.0
    %5599 = vmatpush1.msra.mxu0 0.0
    %5600 = vmatprep.subr.mxu0 0.0
    %5601 = vmatpush1.msra.mxu0 0.0
    %5602 = vmatprep.subr.mxu0 0.0
    %5603 = vmatpush1.msra.mxu0 0.0
    %5604 = vmatprep.subr.mxu0 0.0
    %5605 = vmatpush1.msra.mxu0 0.0
    %5606 = vmatprep.mubr.f32.mxu0 0.0
    %5607 = vmatmul.mubr.f32.gmra.mrb[0].mxu0 %v5495
    %v5608 = vpop.f32.mrb[0].mxu0
    %v5609 = vadd.f32 0.0, %v5608
    %v5610 = vpop.f32.mrb[0].mxu0
    %5611 = vmatprep.mubr.f32.mxu0 0.0
    %5612 = vmatmul.mubr.f32.gmra.mrb[0].mxu0 %v5498
    %v5613 = vpop.f32.mrb[0].mxu0
    %v5614 = vadd.f32 0.0, %v5613
    %v5615 = vpop.f32.mrb[0].mxu0
    %5616 = vmatprep.mubr.f32.mxu0 0.0
    %5617 = vmatmul.mubr.f32.gmra.mrb[0].mxu0 %v5501
    %v5618 = vpop.f32.mrb[0].mxu0
    %v5619 = vadd.f32 0.0, %v5618
    %v5620 = vpop.f32.mrb[0].mxu0
    %5621 = vmatprep.mubr.f32.mxu0 0.0
    %5622 = vmatmul.mubr.f32.gmra.mrb[0].mxu0 %v5504
    %v5623 = vpop.f32.mrb[0].mxu0
    %v5624 = vadd.f32 0.0, %v5623
    %v5625 = vpop.f32.mrb[0].mxu0
    %5626 = vmatprep.mubr.f32.mxu0 0.0
    %5627 = vmatmul.mubr.f32.gmra.mrb[0].mxu0 %v5507
    %v5628 = vpop.f32.mrb[0].mxu0
    %v5629 = vadd.f32 0.0, %v5628
    %v5630 = vpop.f32.mrb[0].mxu0
    %5631 = vmatprep.mubr.f32.mxu0 0.0
    %5632 = vmatmul.mubr.f32.gmra.mrb[0].mxu0 %v5510
    %v5633 = vpop.f32.mrb[0].mxu0
    %v5634 = vadd.f32 0.0, %v5633
    %v5635 = vpop.f32.mrb[0].mxu0
    %5636 = vmatprep.mubr.f32.mxu0 0.0
    %5637 = vmatmul.mubr.f32.gmra.mrb[0].mxu0 %v5513
    %v5638 = vpop.f32.mrb[0].mxu0
    %v5639 = vadd.f32 0.0, %v5638
    %v5640 = vpop.f32.mrb[0].mxu0
    %5641 = vmatprep.mubr.f32.mxu0 0.0
    %5642 = vmatmul.mubr.f32.gmra.mrb[0].mxu0 %v5516
    %v5643 = vpop.f32.mrb[0].mxu0
    %v5644 = vadd.f32 0.0, %v5643
    %v5645 = vpop.f32.mrb[0].mxu0
    %5646 = vmatprep.mubr.f32.mxu0 0.0
    %5647 = vmatmul.mubr.f32.gmra.mrb[0].mxu0 %v5519
    %v5648 = vpop.f32.mrb[0].mxu0
    %v5649 = vadd.f32 0.0, %v5648
    %v5650 = vpop.f32.mrb[0].mxu0
    %5651 = vmatprep.mubr.f32.mxu0 0.0
    %5652 = vmatmul.mubr.f32.gmra.mrb[0].mxu0 %v5522
    %v5653 = vpop.f32.mrb[0].mxu0
    %v5654 = vadd.f32 0.0, %v5653
    %v5655 = vpop.f32.mrb[0].mxu0
    %5656 = vmatprep.mubr.f32.mxu0 0.0
    %5657 = vmatmul.mubr.f32.gmra.mrb[0].mxu0 %v5525
    %v5658 = vpop.f32.mrb[0].mxu0
    %v5659 = vadd.f32 0.0, %v5658
    %v5660 = vpop.f32.mrb[0].mxu0
    %5661 = vmatprep.mubr.f32.mxu0 0.0
    %5662 = vmatmul.mubr.f32.gmra.mrb[0].mxu0 %v5528
    %v5663 = vpop.f32.mrb[0].mxu0
    %v5664 = vadd.f32 0.0, %v5663
    %v5665 = vpop.f32.mrb[0].mxu0
    %5666 = vmatprep.mubr.f32.mxu0 0.0
    %5667 = vmatmul.mubr.f32.gmra.mrb[0].mxu0 %v5531
    %v5668 = vpop.f32.mrb[0].mxu0
    %v5669 = vadd.f32 0.0, %v5668
    %v5670 = vpop.f32.mrb[0].mxu0
    %5671 = vmatprep.mubr.f32.mxu0 0.0
    %5672 = vmatmul.mubr.f32.gmra.mrb[0].mxu0 %v5534
    %v5673 = vpop.f32.mrb[0].mxu0
    %v5674 = vadd.f32 0.0, %v5673
    %v5675 = vpop.f32.mrb[0].mxu0
    %5676 = vmatprep.mubr.f32.mxu0 0.0
    %5677 = vmatmul.mubr.f32.gmra.mrb[0].mxu0 %v5537
    %v5678 = vpop.f32.mrb[0].mxu0
    %v5679 = vadd.f32 0.0, %v5678
    %v5680 = vpop.f32.mrb[0].mxu0
    %5681 = vmatprep.mubr.f32.mxu0 0.0
    %5682 = vmatmul.mubr.f32.gmra.mrb[0].mxu0 %v5540
    %v5683 = vpop.f32.mrb[0].mxu0
    %v5684 = vadd.f32 0.0, %v5683
    %v5685 = vpop.f32.mrb[0].mxu0
    %5686 = vdwg.mxu0
    %v5687 = vadd.f32 %v5453, %v5609
    %v5688 = vadd.f32 %v5454, %v5614
    %v5689 = vadd.f32 %v5455, %v5619
    %v5690 = vadd.f32 %v5456, %v5624
    %v5691 = vadd.f32 %v5457, %v5629
    %v5692 = vadd.f32 %v5458, %v5634
    %v5693 = vadd.f32 %v5459, %v5639
    %v5694 = vadd.f32 %v5460, %v5644
    %v5695 = vadd.f32 %v5461, %v5649
    %v5696 = vadd.f32 %v5462, %v5654
    %v5697 = vadd.f32 %v5463, %v5659
    %v5698 = vadd.f32 %v5464, %v5664
    %v5699 = vadd.f32 %v5465, %v5669
    %v5700 = vadd.f32 %v5466, %v5674
    %v5701 = vadd.f32 %v5467, %v5679
    %v5702 = vadd.f32 %v5468, %v5684
    %v5703 = vld [vmem:[%s1493] sm:$0xff]
    %v5704 = vld [vmem:[%s1493 + $0x10] sm:$0xff]
    %v5705 = vld [vmem:[%s1493 + $0x20] sm:$0xff]
    %v5706 = vld [vmem:[%s1493 + $0x30] sm:$0xff]
    %v5707 = vld [vmem:[%s1493 + $0x40] sm:$0xff]
    %v5708 = vld [vmem:[%s1493 + $0x50] sm:$0xff]
    %v5709 = vld [vmem:[%s1493 + $0x60] sm:$0xff]
    %v5710 = vld [vmem:[%s1493 + $0x70] sm:$0xff]
    %v5711 = vld [vmem:[%s1493 + $0xa0] sm:$0xff]
    %v5712 = vld [vmem:[%s1493 + $0xb0] sm:$0xff]
    %v5713 = vld [vmem:[%s1493 + $0xc0] sm:$0xff]
    %v5714 = vld [vmem:[%s1493 + $0xd0] sm:$0xff]
    %v5715 = vld [vmem:[%s1493 + $0xe0] sm:$0xff]
    %v5716 = vld [vmem:[%s1493 + $0xf0] sm:$0xff]
    %v5717 = vld [vmem:[%s1493 + $0x100] sm:$0xff]
    %v5718 = vld [vmem:[%s1493 + $0x110] sm:$0xff]
    %s5719 = scalar_lea.vmem %s5, 384
    %v5720 = vld [vmem:[%s5719] sm:$0xff]
    %v5721 = vld [vmem:[%s5719 + $0x8] sm:$0xff]
    %v5722 = vld [vmem:[%s5719 + $0x10] sm:$0xff]
    %v5723 = vld [vmem:[%s5719 + $0x18] sm:$0xff]
    %v5724 = vld [vmem:[%s5719 + $0x20] sm:$0xff]
    %v5725 = vld [vmem:[%s5719 + $0x28] sm:$0xff]
    %v5726 = vld [vmem:[%s5719 + $0x30] sm:$0xff]
    %v5727 = vld [vmem:[%s5719 + $0x38] sm:$0xff]
    %v5729 = vsel %vm69, %v5703, 0
    %v5732 = vsel %vm69, %v5704, 0
    %v5735 = vsel %vm69, %v5705, 0
    %v5738 = vsel %vm69, %v5706, 0
    %v5741 = vsel %vm69, %v5707, 0
    %v5744 = vsel %vm69, %v5708, 0
    %v5747 = vsel %vm69, %v5709, 0
    %v5750 = vsel %vm69, %v5710, 0
    %v5753 = vsel %vm69, %v5711, 0
    %v5756 = vsel %vm69, %v5712, 0
    %v5759 = vsel %vm69, %v5713, 0
    %v5762 = vsel %vm69, %v5714, 0
    %v5765 = vsel %vm69, %v5715, 0
    %v5768 = vsel %vm69, %v5716, 0
    %v5771 = vsel %vm69, %v5717, 0
    %v5774 = vsel %vm69, %v5718, 0
    %5776 = vmatprep.subr.mxu0 0.0
    %5777 = vmatpush1.msra.mxu0 %v5720
    %5778 = vmatprep.subr.mxu0 0.0
    %5779 = vmatpush1.msra.mxu0 %v5721
    %5780 = vmatprep.subr.mxu0 0.0
    %5781 = vmatpush1.msra.mxu0 %v5722
    %5782 = vmatprep.subr.mxu0 0.0
    %5783 = vmatpush1.msra.mxu0 %v5723
    %5784 = vmatprep.subr.mxu0 0.0
    %5785 = vmatpush1.msra.mxu0 %v5724
    %5786 = vmatprep.subr.mxu0 0.0
    %5787 = vmatpush1.msra.mxu0 %v5725
    %5788 = vmatprep.subr.mxu0 0.0
    %5789 = vmatpush1.msra.mxu0 %v5726
    %5790 = vmatprep.subr.mxu0 0.0
    %5791 = vmatpush1.msra.mxu0 %v5727
    %5792 = vmatprep.subr.mxu0 0.0
    %5793 = vmatpush1.msra.mxu0 0.0
    %5794 = vmatprep.subr.mxu0 0.0
    %5795 = vmatpush1.msra.mxu0 0.0
    %5796 = vmatprep.subr.mxu0 0.0
    %5797 = vmatpush1.msra.mxu0 0.0
    %5798 = vmatprep.subr.mxu0 0.0
    %5799 = vmatpush1.msra.mxu0 0.0
    %5800 = vmatprep.subr.mxu0 0.0
    %5801 = vmatpush1.msra.mxu0 0.0
    %5802 = vmatprep.subr.mxu0 0.0
    %5803 = vmatpush1.msra.mxu0 0.0
    %5804 = vmatprep.subr.mxu0 0.0
    %5805 = vmatpush1.msra.mxu0 0.0
    %5806 = vmatprep.subr.mxu0 0.0
    %5807 = vmatpush1.msra.mxu0 0.0
    %5808 = vmatprep.subr.mxu0 0.0
    %5809 = vmatpush1.msra.mxu0 0.0
    %5810 = vmatprep.subr.mxu0 0.0
    %5811 = vmatpush1.msra.mxu0 0.0
    %5812 = vmatprep.subr.mxu0 0.0
    %5813 = vmatpush1.msra.mxu0 0.0
    %5814 = vmatprep.subr.mxu0 0.0
    %5815 = vmatpush1.msra.mxu0 0.0
    %5816 = vmatprep.subr.mxu0 0.0
    %5817 = vmatpush1.msra.mxu0 0.0
    %5818 = vmatprep.subr.mxu0 0.0
    %5819 = vmatpush1.msra.mxu0 0.0
    %5820 = vmatprep.subr.mxu0 0.0
    %5821 = vmatpush1.msra.mxu0 0.0
    %5822 = vmatprep.subr.mxu0 0.0
    %5823 = vmatpush1.msra.mxu0 0.0
    %5824 = vmatprep.subr.mxu0 0.0
    %5825 = vmatpush1.msra.mxu0 0.0
    %5826 = vmatprep.subr.mxu0 0.0
    %5827 = vmatpush1.msra.mxu0 0.0
    %5828 = vmatprep.subr.mxu0 0.0
    %5829 = vmatpush1.msra.mxu0 0.0
    %5830 = vmatprep.subr.mxu0 0.0
    %5831 = vmatpush1.msra.mxu0 0.0
    %5832 = vmatprep.subr.mxu0 0.0
    %5833 = vmatpush1.msra.mxu0 0.0
    %5834 = vmatprep.subr.mxu0 0.0
    %5835 = vmatpush1.msra.mxu0 0.0
    %5836 = vmatprep.subr.mxu0 0.0
    %5837 = vmatpush1.msra.mxu0 0.0
    %5838 = vmatprep.subr.mxu0 0.0
    %5839 = vmatpush1.msra.mxu0 0.0
    %5840 = vmatprep.mubr.f32.mxu0 0.0
    %5841 = vmatmul.mubr.f32.gmra.mrb[0].mxu0 %v5729
    %v5842 = vpop.f32.mrb[0].mxu0
    %v5843 = vadd.f32 0.0, %v5842
    %v5844 = vpop.f32.mrb[0].mxu0
    %5845 = vmatprep.mubr.f32.mxu0 0.0
    %5846 = vmatmul.mubr.f32.gmra.mrb[0].mxu0 %v5732
    %v5847 = vpop.f32.mrb[0].mxu0
    %v5848 = vadd.f32 0.0, %v5847
    %v5849 = vpop.f32.mrb[0].mxu0
    %5850 = vmatprep.mubr.f32.mxu0 0.0
    %5851 = vmatmul.mubr.f32.gmra.mrb[0].mxu0 %v5735
    %v5852 = vpop.f32.mrb[0].mxu0
    %v5853 = vadd.f32 0.0, %v5852
    %v5854 = vpop.f32.mrb[0].mxu0
    %5855 = vmatprep.mubr.f32.mxu0 0.0
    %5856 = vmatmul.mubr.f32.gmra.mrb[0].mxu0 %v5738
    %v5857 = vpop.f32.mrb[0].mxu0
    %v5858 = vadd.f32 0.0, %v5857
    %v5859 = vpop.f32.mrb[0].mxu0
    %5860 = vmatprep.mubr.f32.mxu0 0.0
    %5861 = vmatmul.mubr.f32.gmra.mrb[0].mxu0 %v5741
    %v5862 = vpop.f32.mrb[0].mxu0
    %v5863 = vadd.f32 0.0, %v5862
    %v5864 = vpop.f32.mrb[0].mxu0
    %5865 = vmatprep.mubr.f32.mxu0 0.0
    %5866 = vmatmul.mubr.f32.gmra.mrb[0].mxu0 %v5744
    %v5867 = vpop.f32.mrb[0].mxu0
    %v5868 = vadd.f32 0.0, %v5867
    %v5869 = vpop.f32.mrb[0].mxu0
    %5870 = vmatprep.mubr.f32.mxu0 0.0
    %5871 = vmatmul.mubr.f32.gmra.mrb[0].mxu0 %v5747
    %v5872 = vpop.f32.mrb[0].mxu0
    %v5873 = vadd.f32 0.0, %v5872
    %v5874 = vpop.f32.mrb[0].mxu0
    %5875 = vmatprep.mubr.f32.mxu0 0.0
    %5876 = vmatmul.mubr.f32.gmra.mrb[0].mxu0 %v5750
    %v5877 = vpop.f32.mrb[0].mxu0
    %v5878 = vadd.f32 0.0, %v5877
    %v5879 = vpop.f32.mrb[0].mxu0
    %5880 = vmatprep.mubr.f32.mxu0 0.0
    %5881 = vmatmul.mubr.f32.gmra.mrb[0].mxu0 %v5753
    %v5882 = vpop.f32.mrb[0].mxu0
    %v5883 = vadd.f32 0.0, %v5882
    %v5884 = vpop.f32.mrb[0].mxu0
    %5885 = vmatprep.mubr.f32.mxu0 0.0
    %5886 = vmatmul.mubr.f32.gmra.mrb[0].mxu0 %v5756
    %v5887 = vpop.f32.mrb[0].mxu0
    %v5888 = vadd.f32 0.0, %v5887
    %v5889 = vpop.f32.mrb[0].mxu0
    %5890 = vmatprep.mubr.f32.mxu0 0.0
    %5891 = vmatmul.mubr.f32.gmra.mrb[0].mxu0 %v5759
    %v5892 = vpop.f32.mrb[0].mxu0
    %v5893 = vadd.f32 0.0, %v5892
    %v5894 = vpop.f32.mrb[0].mxu0
    %5895 = vmatprep.mubr.f32.mxu0 0.0
    %5896 = vmatmul.mubr.f32.gmra.mrb[0].mxu0 %v5762
    %v5897 = vpop.f32.mrb[0].mxu0
    %v5898 = vadd.f32 0.0, %v5897
    %v5899 = vpop.f32.mrb[0].mxu0
    %5900 = vmatprep.mubr.f32.mxu0 0.0
    %5901 = vmatmul.mubr.f32.gmra.mrb[0].mxu0 %v5765
    %v5902 = vpop.f32.mrb[0].mxu0
    %v5903 = vadd.f32 0.0, %v5902
    %v5904 = vpop.f32.mrb[0].mxu0
    %5905 = vmatprep.mubr.f32.mxu0 0.0
    %5906 = vmatmul.mubr.f32.gmra.mrb[0].mxu0 %v5768
    %v5907 = vpop.f32.mrb[0].mxu0
    %v5908 = vadd.f32 0.0, %v5907
    %v5909 = vpop.f32.mrb[0].mxu0
    %5910 = vmatprep.mubr.f32.mxu0 0.0
    %5911 = vmatmul.mubr.f32.gmra.mrb[0].mxu0 %v5771
    %v5912 = vpop.f32.mrb[0].mxu0
    %v5913 = vadd.f32 0.0, %v5912
    %v5914 = vpop.f32.mrb[0].mxu0
    %5915 = vmatprep.mubr.f32.mxu0 0.0
    %5916 = vmatmul.mubr.f32.gmra.mrb[0].mxu0 %v5774
    %v5917 = vpop.f32.mrb[0].mxu0
    %v5918 = vadd.f32 0.0, %v5917
    %v5919 = vpop.f32.mrb[0].mxu0
    %5920 = vdwg.mxu0
    %v5921 = vadd.f32 %v5687, %v5843
    %v5922 = vadd.f32 %v5688, %v5848
    %v5923 = vadd.f32 %v5689, %v5853
    %v5924 = vadd.f32 %v5690, %v5858
    %v5925 = vadd.f32 %v5691, %v5863
    %v5926 = vadd.f32 %v5692, %v5868
    %v5927 = vadd.f32 %v5693, %v5873
    %v5928 = vadd.f32 %v5694, %v5878
    %v5929 = vadd.f32 %v5695, %v5883
    %v5930 = vadd.f32 %v5696, %v5888
    %v5931 = vadd.f32 %v5697, %v5893
    %v5932 = vadd.f32 %v5698, %v5898
    %v5933 = vadd.f32 %v5699, %v5903
    %v5934 = vadd.f32 %v5700, %v5908
    %v5935 = vadd.f32 %v5701, %v5913
    %v5936 = vadd.f32 %v5702, %v5918
    %v5937 = vld [vmem:[%s1493 + $0x1] sm:$0xff]
    %v5938 = vld [vmem:[%s1493 + $0x11] sm:$0xff]
    %v5939 = vld [vmem:[%s1493 + $0x21] sm:$0xff]
    %v5940 = vld [vmem:[%s1493 + $0x31] sm:$0xff]
    %v5941 = vld [vmem:[%s1493 + $0x41] sm:$0xff]
    %v5942 = vld [vmem:[%s1493 + $0x51] sm:$0xff]
    %v5943 = vld [vmem:[%s1493 + $0x61] sm:$0xff]
    %v5944 = vld [vmem:[%s1493 + $0x71] sm:$0xff]
    %v5945 = vld [vmem:[%s1493 + $0xa1] sm:$0xff]
    %v5946 = vld [vmem:[%s1493 + $0xb1] sm:$0xff]
    %v5947 = vld [vmem:[%s1493 + $0xc1] sm:$0xff]
    %v5948 = vld [vmem:[%s1493 + $0xd1] sm:$0xff]
    %v5949 = vld [vmem:[%s1493 + $0xe1] sm:$0xff]
    %v5950 = vld [vmem:[%s1493 + $0xf1] sm:$0xff]
    %v5951 = vld [vmem:[%s1493 + $0x101] sm:$0xff]
    %v5952 = vld [vmem:[%s1493 + $0x111] sm:$0xff]
    %s5953 = scalar_lea.vmem %s5, 448
    %v5954 = vld [vmem:[%s5953] sm:$0xff]
    %v5955 = vld [vmem:[%s5953 + $0x8] sm:$0xff]
    %v5956 = vld [vmem:[%s5953 + $0x10] sm:$0xff]
    %v5957 = vld [vmem:[%s5953 + $0x18] sm:$0xff]
    %v5958 = vld [vmem:[%s5953 + $0x20] sm:$0xff]
    %v5959 = vld [vmem:[%s5953 + $0x28] sm:$0xff]
    %v5960 = vld [vmem:[%s5953 + $0x30] sm:$0xff]
    %v5961 = vld [vmem:[%s5953 + $0x38] sm:$0xff]
    %v5963 = vsel %vm69, %v5937, 0
    %v5966 = vsel %vm69, %v5938, 0
    %v5969 = vsel %vm69, %v5939, 0
    %v5972 = vsel %vm69, %v5940, 0
    %v5975 = vsel %vm69, %v5941, 0
    %v5978 = vsel %vm69, %v5942, 0
    %v5981 = vsel %vm69, %v5943, 0
    %v5984 = vsel %vm69, %v5944, 0
    %v5987 = vsel %vm69, %v5945, 0
    %v5990 = vsel %vm69, %v5946, 0
    %v5993 = vsel %vm69, %v5947, 0
    %v5996 = vsel %vm69, %v5948, 0
    %v5999 = vsel %vm69, %v5949, 0
    %v6002 = vsel %vm69, %v5950, 0
    %v6005 = vsel %vm69, %v5951, 0
    %v6008 = vsel %vm69, %v5952, 0
    %6010 = vmatprep.subr.mxu0 0.0
    %6011 = vmatpush1.msra.mxu0 %v5954
    %6012 = vmatprep.subr.mxu0 0.0
    %6013 = vmatpush1.msra.mxu0 %v5955
    %6014 = vmatprep.subr.mxu0 0.0
    %6015 = vmatpush1.msra.mxu0 %v5956
    %6016 = vmatprep.subr.mxu0 0.0
    %6017 = vmatpush1.msra.mxu0 %v5957
    %6018 = vmatprep.subr.mxu0 0.0
    %6019 = vmatpush1.msra.mxu0 %v5958
    %6020 = vmatprep.subr.mxu0 0.0
    %6021 = vmatpush1.msra.mxu0 %v5959
    %6022 = vmatprep.subr.mxu0 0.0
    %6023 = vmatpush1.msra.mxu0 %v5960
    %6024 = vmatprep.subr.mxu0 0.0
    %6025 = vmatpush1.msra.mxu0 %v5961
    %6026 = vmatprep.subr.mxu0 0.0
    %6027 = vmatpush1.msra.mxu0 0.0
    %6028 = vmatprep.subr.mxu0 0.0
    %6029 = vmatpush1.msra.mxu0 0.0
    %6030 = vmatprep.subr.mxu0 0.0
    %6031 = vmatpush1.msra.mxu0 0.0
    %6032 = vmatprep.subr.mxu0 0.0
    %6033 = vmatpush1.msra.mxu0 0.0
    %6034 = vmatprep.subr.mxu0 0.0
    %6035 = vmatpush1.msra.mxu0 0.0
    %6036 = vmatprep.subr.mxu0 0.0
    %6037 = vmatpush1.msra.mxu0 0.0
    %6038 = vmatprep.subr.mxu0 0.0
    %6039 = vmatpush1.msra.mxu0 0.0
    %6040 = vmatprep.subr.mxu0 0.0
    %6041 = vmatpush1.msra.mxu0 0.0
    %6042 = vmatprep.subr.mxu0 0.0
    %6043 = vmatpush1.msra.mxu0 0.0
    %6044 = vmatprep.subr.mxu0 0.0
    %6045 = vmatpush1.msra.mxu0 0.0
    %6046 = vmatprep.subr.mxu0 0.0
    %6047 = vmatpush1.msra.mxu0 0.0
    %6048 = vmatprep.subr.mxu0 0.0
    %6049 = vmatpush1.msra.mxu0 0.0
    %6050 = vmatprep.subr.mxu0 0.0
    %6051 = vmatpush1.msra.mxu0 0.0
    %6052 = vmatprep.subr.mxu0 0.0
    %6053 = vmatpush1.msra.mxu0 0.0
    %6054 = vmatprep.subr.mxu0 0.0
    %6055 = vmatpush1.msra.mxu0 0.0
    %6056 = vmatprep.subr.mxu0 0.0
    %6057 = vmatpush1.msra.mxu0 0.0
    %6058 = vmatprep.subr.mxu0 0.0
    %6059 = vmatpush1.msra.mxu0 0.0
    %6060 = vmatprep.subr.mxu0 0.0
    %6061 = vmatpush1.msra.mxu0 0.0
    %6062 = vmatprep.subr.mxu0 0.0
    %6063 = vmatpush1.msra.mxu0 0.0
    %6064 = vmatprep.subr.mxu0 0.0
    %6065 = vmatpush1.msra.mxu0 0.0
    %6066 = vmatprep.subr.mxu0 0.0
    %6067 = vmatpush1.msra.mxu0 0.0
    %6068 = vmatprep.subr.mxu0 0.0
    %6069 = vmatpush1.msra.mxu0 0.0
    %6070 = vmatprep.subr.mxu0 0.0
    %6071 = vmatpush1.msra.mxu0 0.0
    %6072 = vmatprep.subr.mxu0 0.0
    %6073 = vmatpush1.msra.mxu0 0.0
    %6074 = vmatprep.mubr.f32.mxu0 0.0
    %6075 = vmatmul.mubr.f32.gmra.mrb[0].mxu0 %v5963
    %v6076 = vpop.f32.mrb[0].mxu0
    %v6077 = vadd.f32 0.0, %v6076
    %v6078 = vpop.f32.mrb[0].mxu0
    %6079 = vmatprep.mubr.f32.mxu0 0.0
    %6080 = vmatmul.mubr.f32.gmra.mrb[0].mxu0 %v5966
    %v6081 = vpop.f32.mrb[0].mxu0
    %v6082 = vadd.f32 0.0, %v6081
    %v6083 = vpop.f32.mrb[0].mxu0
    %6084 = vmatprep.mubr.f32.mxu0 0.0
    %6085 = vmatmul.mubr.f32.gmra.mrb[0].mxu0 %v5969
    %v6086 = vpop.f32.mrb[0].mxu0
    %v6087 = vadd.f32 0.0, %v6086
    %v6088 = vpop.f32.mrb[0].mxu0
    %6089 = vmatprep.mubr.f32.mxu0 0.0
    %6090 = vmatmul.mubr.f32.gmra.mrb[0].mxu0 %v5972
    %v6091 = vpop.f32.mrb[0].mxu0
    %v6092 = vadd.f32 0.0, %v6091
    %v6093 = vpop.f32.mrb[0].mxu0
    %6094 = vmatprep.mubr.f32.mxu0 0.0
    %6095 = vmatmul.mubr.f32.gmra.mrb[0].mxu0 %v5975
    %v6096 = vpop.f32.mrb[0].mxu0
    %v6097 = vadd.f32 0.0, %v6096
    %v6098 = vpop.f32.mrb[0].mxu0
    %6099 = vmatprep.mubr.f32.mxu0 0.0
    %6100 = vmatmul.mubr.f32.gmra.mrb[0].mxu0 %v5978
    %v6101 = vpop.f32.mrb[0].mxu0
    %v6102 = vadd.f32 0.0, %v6101
    %v6103 = vpop.f32.mrb[0].mxu0
    %6104 = vmatprep.mubr.f32.mxu0 0.0
    %6105 = vmatmul.mubr.f32.gmra.mrb[0].mxu0 %v5981
    %v6106 = vpop.f32.mrb[0].mxu0
    %v6107 = vadd.f32 0.0, %v6106
    %v6108 = vpop.f32.mrb[0].mxu0
    %6109 = vmatprep.mubr.f32.mxu0 0.0
    %6110 = vmatmul.mubr.f32.gmra.mrb[0].mxu0 %v5984
    %v6111 = vpop.f32.mrb[0].mxu0
    %v6112 = vadd.f32 0.0, %v6111
    %v6113 = vpop.f32.mrb[0].mxu0
    %6114 = vmatprep.mubr.f32.mxu0 0.0
    %6115 = vmatmul.mubr.f32.gmra.mrb[0].mxu0 %v5987
    %v6116 = vpop.f32.mrb[0].mxu0
    %v6117 = vadd.f32 0.0, %v6116
    %v6118 = vpop.f32.mrb[0].mxu0
    %6119 = vmatprep.mubr.f32.mxu0 0.0
    %6120 = vmatmul.mubr.f32.gmra.mrb[0].mxu0 %v5990
    %v6121 = vpop.f32.mrb[0].mxu0
    %v6122 = vadd.f32 0.0, %v6121
    %v6123 = vpop.f32.mrb[0].mxu0
    %6124 = vmatprep.mubr.f32.mxu0 0.0
    %6125 = vmatmul.mubr.f32.gmra.mrb[0].mxu0 %v5993
    %v6126 = vpop.f32.mrb[0].mxu0
    %v6127 = vadd.f32 0.0, %v6126
    %v6128 = vpop.f32.mrb[0].mxu0
    %6129 = vmatprep.mubr.f32.mxu0 0.0
    %6130 = vmatmul.mubr.f32.gmra.mrb[0].mxu0 %v5996
    %v6131 = vpop.f32.mrb[0].mxu0
    %v6132 = vadd.f32 0.0, %v6131
    %v6133 = vpop.f32.mrb[0].mxu0
    %6134 = vmatprep.mubr.f32.mxu0 0.0
    %6135 = vmatmul.mubr.f32.gmra.mrb[0].mxu0 %v5999
    %v6136 = vpop.f32.mrb[0].mxu0
    %v6137 = vadd.f32 0.0, %v6136
    %v6138 = vpop.f32.mrb[0].mxu0
    %6139 = vmatprep.mubr.f32.mxu0 0.0
    %6140 = vmatmul.mubr.f32.gmra.mrb[0].mxu0 %v6002
    %v6141 = vpop.f32.mrb[0].mxu0
    %v6142 = vadd.f32 0.0, %v6141
    %v6143 = vpop.f32.mrb[0].mxu0
    %6144 = vmatprep.mubr.f32.mxu0 0.0
    %6145 = vmatmul.mubr.f32.gmra.mrb[0].mxu0 %v6005
    %v6146 = vpop.f32.mrb[0].mxu0
    %v6147 = vadd.f32 0.0, %v6146
    %v6148 = vpop.f32.mrb[0].mxu0
    %6149 = vmatprep.mubr.f32.mxu0 0.0
    %6150 = vmatmul.mubr.f32.gmra.mrb[0].mxu0 %v6008
    %v6151 = vpop.f32.mrb[0].mxu0
    %v6152 = vadd.f32 0.0, %v6151
    %v6153 = vpop.f32.mrb[0].mxu0
    %6154 = vdwg.mxu0
    %v6155 = vadd.f32 %v5921, %v6077
    %v6156 = vadd.f32 %v5922, %v6082
    %v6157 = vadd.f32 %v5923, %v6087
    %v6158 = vadd.f32 %v5924, %v6092
    %v6159 = vadd.f32 %v5925, %v6097
    %v6160 = vadd.f32 %v5926, %v6102
    %v6161 = vadd.f32 %v5927, %v6107
    %v6162 = vadd.f32 %v5928, %v6112
    %v6163 = vadd.f32 %v5929, %v6117
    %v6164 = vadd.f32 %v5930, %v6122
    %v6165 = vadd.f32 %v5931, %v6127
    %v6166 = vadd.f32 %v5932, %v6132
    %v6167 = vadd.f32 %v5933, %v6137
    %v6168 = vadd.f32 %v5934, %v6142
    %v6169 = vadd.f32 %v5935, %v6147
    %v6170 = vadd.f32 %v5936, %v6152
    %v6171 = vld [vmem:[%s1493 + $0x2] sm:$0xff]
    %v6172 = vld [vmem:[%s1493 + $0x12] sm:$0xff]
    %v6173 = vld [vmem:[%s1493 + $0x22] sm:$0xff]
    %v6174 = vld [vmem:[%s1493 + $0x32] sm:$0xff]
    %v6175 = vld [vmem:[%s1493 + $0x42] sm:$0xff]
    %v6176 = vld [vmem:[%s1493 + $0x52] sm:$0xff]
    %v6177 = vld [vmem:[%s1493 + $0x62] sm:$0xff]
    %v6178 = vld [vmem:[%s1493 + $0x72] sm:$0xff]
    %v6179 = vld [vmem:[%s1493 + $0xa2] sm:$0xff]
    %v6180 = vld [vmem:[%s1493 + $0xb2] sm:$0xff]
    %v6181 = vld [vmem:[%s1493 + $0xc2] sm:$0xff]
    %v6182 = vld [vmem:[%s1493 + $0xd2] sm:$0xff]
    %v6183 = vld [vmem:[%s1493 + $0xe2] sm:$0xff]
    %v6184 = vld [vmem:[%s1493 + $0xf2] sm:$0xff]
    %v6185 = vld [vmem:[%s1493 + $0x102] sm:$0xff]
    %v6186 = vld [vmem:[%s1493 + $0x112] sm:$0xff]
    %s6187 = scalar_lea.vmem %s5, 512
    %v6188 = vld [vmem:[%s6187] sm:$0xff]
    %v6189 = vld [vmem:[%s6187 + $0x8] sm:$0xff]
    %v6190 = vld [vmem:[%s6187 + $0x10] sm:$0xff]
    %v6191 = vld [vmem:[%s6187 + $0x18] sm:$0xff]
    %v6192 = vld [vmem:[%s6187 + $0x20] sm:$0xff]
    %v6193 = vld [vmem:[%s6187 + $0x28] sm:$0xff]
    %v6194 = vld [vmem:[%s6187 + $0x30] sm:$0xff]
    %v6195 = vld [vmem:[%s6187 + $0x38] sm:$0xff]
    %v6197 = vsel %vm69, %v6171, 0
    %v6200 = vsel %vm69, %v6172, 0
    %v6203 = vsel %vm69, %v6173, 0
    %v6206 = vsel %vm69, %v6174, 0
    %v6209 = vsel %vm69, %v6175, 0
    %v6212 = vsel %vm69, %v6176, 0
    %v6215 = vsel %vm69, %v6177, 0
    %v6218 = vsel %vm69, %v6178, 0
    %v6221 = vsel %vm69, %v6179, 0
    %v6224 = vsel %vm69, %v6180, 0
    %v6227 = vsel %vm69, %v6181, 0
    %v6230 = vsel %vm69, %v6182, 0
    %v6233 = vsel %vm69, %v6183, 0
    %v6236 = vsel %vm69, %v6184, 0
    %v6239 = vsel %vm69, %v6185, 0
    %v6242 = vsel %vm69, %v6186, 0
    %6244 = vmatprep.subr.mxu0 0.0
    %6245 = vmatpush1.msra.mxu0 %v6188
    %6246 = vmatprep.subr.mxu0 0.0
    %6247 = vmatpush1.msra.mxu0 %v6189
    %6248 = vmatprep.subr.mxu0 0.0
    %6249 = vmatpush1.msra.mxu0 %v6190
    %6250 = vmatprep.subr.mxu0 0.0
    %6251 = vmatpush1.msra.mxu0 %v6191
    %6252 = vmatprep.subr.mxu0 0.0
    %6253 = vmatpush1.msra.mxu0 %v6192
    %6254 = vmatprep.subr.mxu0 0.0
    %6255 = vmatpush1.msra.mxu0 %v6193
    %6256 = vmatprep.subr.mxu0 0.0
    %6257 = vmatpush1.msra.mxu0 %v6194
    %6258 = vmatprep.subr.mxu0 0.0
    %6259 = vmatpush1.msra.mxu0 %v6195
    %6260 = vmatprep.subr.mxu0 0.0
    %6261 = vmatpush1.msra.mxu0 0.0
    %6262 = vmatprep.subr.mxu0 0.0
    %6263 = vmatpush1.msra.mxu0 0.0
    %6264 = vmatprep.subr.mxu0 0.0
    %6265 = vmatpush1.msra.mxu0 0.0
    %6266 = vmatprep.subr.mxu0 0.0
    %6267 = vmatpush1.msra.mxu0 0.0
    %6268 = vmatprep.subr.mxu0 0.0
    %6269 = vmatpush1.msra.mxu0 0.0
    %6270 = vmatprep.subr.mxu0 0.0
    %6271 = vmatpush1.msra.mxu0 0.0
    %6272 = vmatprep.subr.mxu0 0.0
    %6273 = vmatpush1.msra.mxu0 0.0
    %6274 = vmatprep.subr.mxu0 0.0
    %6275 = vmatpush1.msra.mxu0 0.0
    %6276 = vmatprep.subr.mxu0 0.0
    %6277 = vmatpush1.msra.mxu0 0.0
    %6278 = vmatprep.subr.mxu0 0.0
    %6279 = vmatpush1.msra.mxu0 0.0
    %6280 = vmatprep.subr.mxu0 0.0
    %6281 = vmatpush1.msra.mxu0 0.0
    %6282 = vmatprep.subr.mxu0 0.0
    %6283 = vmatpush1.msra.mxu0 0.0
    %6284 = vmatprep.subr.mxu0 0.0
    %6285 = vmatpush1.msra.mxu0 0.0
    %6286 = vmatprep.subr.mxu0 0.0
    %6287 = vmatpush1.msra.mxu0 0.0
    %6288 = vmatprep.subr.mxu0 0.0
    %6289 = vmatpush1.msra.mxu0 0.0
    %6290 = vmatprep.subr.mxu0 0.0
    %6291 = vmatpush1.msra.mxu0 0.0
    %6292 = vmatprep.subr.mxu0 0.0
    %6293 = vmatpush1.msra.mxu0 0.0
    %6294 = vmatprep.subr.mxu0 0.0
    %6295 = vmatpush1.msra.mxu0 0.0
    %6296 = vmatprep.subr.mxu0 0.0
    %6297 = vmatpush1.msra.mxu0 0.0
    %6298 = vmatprep.subr.mxu0 0.0
    %6299 = vmatpush1.msra.mxu0 0.0
    %6300 = vmatprep.subr.mxu0 0.0
    %6301 = vmatpush1.msra.mxu0 0.0
    %6302 = vmatprep.subr.mxu0 0.0
    %6303 = vmatpush1.msra.mxu0 0.0
    %6304 = vmatprep.subr.mxu0 0.0
    %6305 = vmatpush1.msra.mxu0 0.0
    %6306 = vmatprep.subr.mxu0 0.0
    %6307 = vmatpush1.msra.mxu0 0.0
    %6308 = vmatprep.mubr.f32.mxu0 0.0
    %6309 = vmatmul.mubr.f32.gmra.mrb[0].mxu0 %v6197
    %v6310 = vpop.f32.mrb[0].mxu0
    %v6311 = vadd.f32 0.0, %v6310
    %v6312 = vpop.f32.mrb[0].mxu0
    %6313 = vmatprep.mubr.f32.mxu0 0.0
    %6314 = vmatmul.mubr.f32.gmra.mrb[0].mxu0 %v6200
    %v6315 = vpop.f32.mrb[0].mxu0
    %v6316 = vadd.f32 0.0, %v6315
    %v6317 = vpop.f32.mrb[0].mxu0
    %6318 = vmatprep.mubr.f32.mxu0 0.0
    %6319 = vmatmul.mubr.f32.gmra.mrb[0].mxu0 %v6203
    %v6320 = vpop.f32.mrb[0].mxu0
    %v6321 = vadd.f32 0.0, %v6320
    %v6322 = vpop.f32.mrb[0].mxu0
    %6323 = vmatprep.mubr.f32.mxu0 0.0
    %6324 = vmatmul.mubr.f32.gmra.mrb[0].mxu0 %v6206
    %v6325 = vpop.f32.mrb[0].mxu0
    %v6326 = vadd.f32 0.0, %v6325
    %v6327 = vpop.f32.mrb[0].mxu0
    %6328 = vmatprep.mubr.f32.mxu0 0.0
    %6329 = vmatmul.mubr.f32.gmra.mrb[0].mxu0 %v6209
    %v6330 = vpop.f32.mrb[0].mxu0
    %v6331 = vadd.f32 0.0, %v6330
    %v6332 = vpop.f32.mrb[0].mxu0
    %6333 = vmatprep.mubr.f32.mxu0 0.0
    %6334 = vmatmul.mubr.f32.gmra.mrb[0].mxu0 %v6212
    %v6335 = vpop.f32.mrb[0].mxu0
    %v6336 = vadd.f32 0.0, %v6335
    %v6337 = vpop.f32.mrb[0].mxu0
    %6338 = vmatprep.mubr.f32.mxu0 0.0
    %6339 = vmatmul.mubr.f32.gmra.mrb[0].mxu0 %v6215
    %v6340 = vpop.f32.mrb[0].mxu0
    %v6341 = vadd.f32 0.0, %v6340
    %v6342 = vpop.f32.mrb[0].mxu0
    %6343 = vmatprep.mubr.f32.mxu0 0.0
    %6344 = vmatmul.mubr.f32.gmra.mrb[0].mxu0 %v6218
    %v6345 = vpop.f32.mrb[0].mxu0
    %v6346 = vadd.f32 0.0, %v6345
    %v6347 = vpop.f32.mrb[0].mxu0
    %6348 = vmatprep.mubr.f32.mxu0 0.0
    %6349 = vmatmul.mubr.f32.gmra.mrb[0].mxu0 %v6221
    %v6350 = vpop.f32.mrb[0].mxu0
    %v6351 = vadd.f32 0.0, %v6350
    %v6352 = vpop.f32.mrb[0].mxu0
    %6353 = vmatprep.mubr.f32.mxu0 0.0
    %6354 = vmatmul.mubr.f32.gmra.mrb[0].mxu0 %v6224
    %v6355 = vpop.f32.mrb[0].mxu0
    %v6356 = vadd.f32 0.0, %v6355
    %v6357 = vpop.f32.mrb[0].mxu0
    %6358 = vmatprep.mubr.f32.mxu0 0.0
    %6359 = vmatmul.mubr.f32.gmra.mrb[0].mxu0 %v6227
    %v6360 = vpop.f32.mrb[0].mxu0
    %v6361 = vadd.f32 0.0, %v6360
    %v6362 = vpop.f32.mrb[0].mxu0
    %6363 = vmatprep.mubr.f32.mxu0 0.0
    %6364 = vmatmul.mubr.f32.gmra.mrb[0].mxu0 %v6230
    %v6365 = vpop.f32.mrb[0].mxu0
    %v6366 = vadd.f32 0.0, %v6365
    %v6367 = vpop.f32.mrb[0].mxu0
    %6368 = vmatprep.mubr.f32.mxu0 0.0
    %6369 = vmatmul.mubr.f32.gmra.mrb[0].mxu0 %v6233
    %v6370 = vpop.f32.mrb[0].mxu0
    %v6371 = vadd.f32 0.0, %v6370
    %v6372 = vpop.f32.mrb[0].mxu0
    %6373 = vmatprep.mubr.f32.mxu0 0.0
    %6374 = vmatmul.mubr.f32.gmra.mrb[0].mxu0 %v6236
    %v6375 = vpop.f32.mrb[0].mxu0
    %v6376 = vadd.f32 0.0, %v6375
    %v6377 = vpop.f32.mrb[0].mxu0
    %6378 = vmatprep.mubr.f32.mxu0 0.0
    %6379 = vmatmul.mubr.f32.gmra.mrb[0].mxu0 %v6239
    %v6380 = vpop.f32.mrb[0].mxu0
    %v6381 = vadd.f32 0.0, %v6380
    %v6382 = vpop.f32.mrb[0].mxu0
    %6383 = vmatprep.mubr.f32.mxu0 0.0
    %6384 = vmatmul.mubr.f32.gmra.mrb[0].mxu0 %v6242
    %v6385 = vpop.f32.mrb[0].mxu0
    %v6386 = vadd.f32 0.0, %v6385
    %v6387 = vpop.f32.mrb[0].mxu0
    %6388 = vdwg.mxu0
    %v6389 = vadd.f32 %v6155, %v6311
    %v6390 = vadd.f32 %v6156, %v6316
    %v6391 = vadd.f32 %v6157, %v6321
    %v6392 = vadd.f32 %v6158, %v6326
    %v6393 = vadd.f32 %v6159, %v6331
    %v6394 = vadd.f32 %v6160, %v6336
    %v6395 = vadd.f32 %v6161, %v6341
    %v6396 = vadd.f32 %v6162, %v6346
    %v6397 = vadd.f32 %v6163, %v6351
    %v6398 = vadd.f32 %v6164, %v6356
    %v6399 = vadd.f32 %v6165, %v6361
    %v6400 = vadd.f32 %v6166, %v6366
    %v6401 = vadd.f32 %v6167, %v6371
    %v6402 = vadd.f32 %v6168, %v6376
    %v6403 = vadd.f32 %v6169, %v6381
    %v6404 = vadd.f32 %v6170, %v6386
    %v6405 = vld [vmem:[%s6] sm:$0x1]
    %v6407 = vlaneseq
    %v6408 = vshrl.u32 %v6407, 7
    %v6409 = vsub.s32 0, %v6408
    %v6410 = vrot.slane %v6405, %v6409
    %v6412 = vadd.f32 %v6389, %v6410
    %v6413 = vadd.f32 %v6390, %v6410
    %v6414 = vadd.f32 %v6391, %v6410
    %v6415 = vadd.f32 %v6392, %v6410
    %v6416 = vadd.f32 %v6393, %v6410
    %v6417 = vadd.f32 %v6394, %v6410
    %v6418 = vadd.f32 %v6395, %v6410
    %v6419 = vadd.f32 %v6396, %v6410
    %v6420 = vadd.f32 %v6397, %v6410
    %v6421 = vadd.f32 %v6398, %v6410
    %v6422 = vadd.f32 %v6399, %v6410
    %v6423 = vadd.f32 %v6400, %v6410
    %v6424 = vadd.f32 %v6401, %v6410
    %v6425 = vadd.f32 %v6402, %v6410
    %v6426 = vadd.f32 %v6403, %v6410
    %v6427 = vadd.f32 %v6404, %v6410
    %v6428 = vmax.f32 %v6412, 0.0
    %v6429 = vmax.f32 %v6413, 0.0
    %v6430 = vmax.f32 %v6414, 0.0
    %v6431 = vmax.f32 %v6415, 0.0
    %v6432 = vmax.f32 %v6416, 0.0
    %v6433 = vmax.f32 %v6417, 0.0
    %v6434 = vmax.f32 %v6418, 0.0
    %v6435 = vmax.f32 %v6419, 0.0
    %v6436 = vmax.f32 %v6420, 0.0
    %v6437 = vmax.f32 %v6421, 0.0
    %v6438 = vmax.f32 %v6422, 0.0
    %v6439 = vmax.f32 %v6423, 0.0
    %v6440 = vmax.f32 %v6424, 0.0
    %v6441 = vmax.f32 %v6425, 0.0
    %v6442 = vmax.f32 %v6426, 0.0
    %v6443 = vmax.f32 %v6427, 0.0
    %v6444 = vld [vmem:[%s7] sm:$0x3f]
    %v6445 = vld [vmem:[%s8] sm:$0x3f]
    %v6446 = vld [vmem:[%s13] sm:$0x1]
    %6448 = vset.pattern.permute.xlu0 0
    %6449 = vperm.xlu0 %6448, %v6445
    %v6450 = vpop.permute.xlu0 %6449
    %6452 = vmatprep.subr.mxu0 0.0
    %6453 = vmatpush1.xpose.msra.mxu0 %v6428
    %6454 = vmatprep.subr.mxu0 0.0
    %6455 = vmatpush1.xpose.msra.mxu0 %v6429
    %6456 = vmatprep.subr.mxu0 0.0
    %6457 = vmatpush1.xpose.msra.mxu0 %v6430
    %6458 = vmatprep.subr.mxu0 0.0
    %6459 = vmatpush1.xpose.msra.mxu0 %v6431
    %6460 = vmatprep.subr.mxu0 0.0
    %6461 = vmatpush1.xpose.msra.mxu0 %v6432
    %6462 = vmatprep.subr.mxu0 0.0
    %6463 = vmatpush1.xpose.msra.mxu0 %v6433
    %6464 = vmatprep.subr.mxu0 0.0
    %6465 = vmatpush1.xpose.msra.mxu0 %v6434
    %6466 = vmatprep.subr.mxu0 0.0
    %6467 = vmatpush1.xpose.msra.mxu0 %v6435
    %6468 = vmatprep.subr.mxu0 0.0
    %6469 = vmatpush1.xpose.msra.mxu0 0.0
    %6470 = vmatprep.subr.mxu0 0.0
    %6471 = vmatpush1.xpose.msra.mxu0 0.0
    %6472 = vmatprep.subr.mxu0 0.0
    %6473 = vmatpush1.xpose.msra.mxu0 0.0
    %6474 = vmatprep.subr.mxu0 0.0
    %6475 = vmatpush1.xpose.msra.mxu0 0.0
    %6476 = vmatprep.subr.mxu0 0.0
    %6477 = vmatpush1.xpose.msra.mxu0 0.0
    %6478 = vmatprep.subr.mxu0 0.0
    %6479 = vmatpush1.xpose.msra.mxu0 0.0
    %6480 = vmatprep.subr.mxu0 0.0
    %6481 = vmatpush1.xpose.msra.mxu0 0.0
    %6482 = vmatprep.subr.mxu0 0.0
    %6483 = vmatpush1.xpose.msra.mxu0 0.0
    %6484 = vmatprep.subr.mxu0 0.0
    %6485 = vmatpush1.xpose.msra.mxu0 0.0
    %6486 = vmatprep.subr.mxu0 0.0
    %6487 = vmatpush1.xpose.msra.mxu0 0.0
    %6488 = vmatprep.subr.mxu0 0.0
    %6489 = vmatpush1.xpose.msra.mxu0 0.0
    %6490 = vmatprep.subr.mxu0 0.0
    %6491 = vmatpush1.xpose.msra.mxu0 0.0
    %6492 = vmatprep.subr.mxu0 0.0
    %6493 = vmatpush1.xpose.msra.mxu0 0.0
    %6494 = vmatprep.subr.mxu0 0.0
    %6495 = vmatpush1.xpose.msra.mxu0 0.0
    %6496 = vmatprep.subr.mxu0 0.0
    %6497 = vmatpush1.xpose.msra.mxu0 0.0
    %6498 = vmatprep.subr.mxu0 0.0
    %6499 = vmatpush1.xpose.msra.mxu0 0.0
    %6500 = vmatprep.subr.mxu0 0.0
    %6501 = vmatpush1.xpose.msra.mxu0 0.0
    %6502 = vmatprep.subr.mxu0 0.0
    %6503 = vmatpush1.xpose.msra.mxu0 0.0
    %6504 = vmatprep.subr.mxu0 0.0
    %6505 = vmatpush1.xpose.msra.mxu0 0.0
    %6506 = vmatprep.subr.mxu0 0.0
    %6507 = vmatpush1.xpose.msra.mxu0 0.0
    %6508 = vmatprep.subr.mxu0 0.0
    %6509 = vmatpush1.xpose.msra.mxu0 0.0
    %6510 = vmatprep.subr.mxu0 0.0
    %6511 = vmatpush1.xpose.msra.mxu0 0.0
    %6512 = vmatprep.subr.mxu0 0.0
    %6513 = vmatpush1.xpose.msra.mxu0 0.0
    %6514 = vmatprep.subr.mxu0 0.0
    %6515 = vmatpush1.xpose.msra.mxu0 0.0
    %6516 = vmatprep.mubr.f32.mxu0 0.0
    %6517 = vmatmul.mubr.f32.gmra.mrb[0].mxu0 %v6444
    %v6518 = vpop.f32.mrb[0].mxu0
    %v6519 = vadd.f32 %v6450, %v6518
    %v6520 = vpop.f32.mrb[0].mxu0
    %6521 = vdwg.mxu0
    %v6522 = vmax.f32 %v6519, 0.0
    %v6523 = vld [vmem:[%s10] sm:$0x1]
    %v6524 = vld [vmem:[%s9] sm:$0xff]
    %v6525 = vld [vmem:[%s9 + $0x8] sm:$0xff]
    %v6526 = vld [vmem:[%s9 + $0x10] sm:$0xff]
    %v6527 = vld [vmem:[%s9 + $0x18] sm:$0xff]
    %v6528 = vld [vmem:[%s9 + $0x20] sm:$0xff]
    %v6529 = vld [vmem:[%s9 + $0x28] sm:$0xff]
    %v6530 = vld [vmem:[%s9 + $0x30] sm:$0xff]
    %v6531 = vld [vmem:[%s9 + $0x38] sm:$0xff]
    %v6533 = vsel %vm69, %v6522, 0
    %6535 = vmatprep.subr.mxu0 0.0
    %6536 = vmatpush1.msra.mxu0 %v6524
    %6537 = vmatprep.subr.mxu0 0.0
    %6538 = vmatpush1.msra.mxu0 %v6525
    %6539 = vmatprep.subr.mxu0 0.0
    %6540 = vmatpush1.msra.mxu0 %v6526
    %6541 = vmatprep.subr.mxu0 0.0
    %6542 = vmatpush1.msra.mxu0 %v6527
    %6543 = vmatprep.subr.mxu0 0.0
    %6544 = vmatpush1.msra.mxu0 %v6528
    %6545 = vmatprep.subr.mxu0 0.0
    %6546 = vmatpush1.msra.mxu0 %v6529
    %6547 = vmatprep.subr.mxu0 0.0
    %6548 = vmatpush1.msra.mxu0 %v6530
    %6549 = vmatprep.subr.mxu0 0.0
    %6550 = vmatpush1.msra.mxu0 %v6531
    %6551 = vmatprep.subr.mxu0 0.0
    %6552 = vmatpush1.msra.mxu0 0.0
    %6553 = vmatprep.subr.mxu0 0.0
    %6554 = vmatpush1.msra.mxu0 0.0
    %6555 = vmatprep.subr.mxu0 0.0
    %6556 = vmatpush1.msra.mxu0 0.0
    %6557 = vmatprep.subr.mxu0 0.0
    %6558 = vmatpush1.msra.mxu0 0.0
    %6559 = vmatprep.subr.mxu0 0.0
    %6560 = vmatpush1.msra.mxu0 0.0
    %6561 = vmatprep.subr.mxu0 0.0
    %6562 = vmatpush1.msra.mxu0 0.0
    %6563 = vmatprep.subr.mxu0 0.0
    %6564 = vmatpush1.msra.mxu0 0.0
    %6565 = vmatprep.subr.mxu0 0.0
    %6566 = vmatpush1.msra.mxu0 0.0
    %6567 = vmatprep.subr.mxu0 0.0
    %6568 = vmatpush1.msra.mxu0 0.0
    %6569 = vmatprep.subr.mxu0 0.0
    %6570 = vmatpush1.msra.mxu0 0.0
    %6571 = vmatprep.subr.mxu0 0.0
    %6572 = vmatpush1.msra.mxu0 0.0
    %6573 = vmatprep.subr.mxu0 0.0
    %6574 = vmatpush1.msra.mxu0 0.0
    %6575 = vmatprep.subr.mxu0 0.0
    %6576 = vmatpush1.msra.mxu0 0.0
    %6577 = vmatprep.subr.mxu0 0.0
    %6578 = vmatpush1.msra.mxu0 0.0
    %6579 = vmatprep.subr.mxu0 0.0
    %6580 = vmatpush1.msra.mxu0 0.0
    %6581 = vmatprep.subr.mxu0 0.0
    %6582 = vmatpush1.msra.mxu0 0.0
    %6583 = vmatprep.subr.mxu0 0.0
    %6584 = vmatpush1.msra.mxu0 0.0
    %6585 = vmatprep.subr.mxu0 0.0
    %6586 = vmatpush1.msra.mxu0 0.0
    %6587 = vmatprep.subr.mxu0 0.0
    %6588 = vmatpush1.msra.mxu0 0.0
    %6589 = vmatprep.subr.mxu0 0.0
    %6590 = vmatpush1.msra.mxu0 0.0
    %6591 = vmatprep.subr.mxu0 0.0
    %6592 = vmatpush1.msra.mxu0 0.0
    %6593 = vmatprep.subr.mxu0 0.0
    %6594 = vmatpush1.msra.mxu0 0.0
    %6595 = vmatprep.subr.mxu0 0.0
    %6596 = vmatpush1.msra.mxu0 0.0
    %6597 = vmatprep.subr.mxu0 0.0
    %6598 = vmatpush1.msra.mxu0 0.0
    %6599 = vmatprep.mubr.f32.mxu0 0.0
    %6600 = vmatmul.mubr.f32.gmra.mrb[0].mxu0 %v6533
    %v6601 = vpop.f32.mrb[0].mxu0
    %v6602 = vadd.f32 0.0, %v6601
    %v6603 = vpop.f32.mrb[0].mxu0
    %6604 = vdwg.mxu0
    %v6605 = vadd.f32 %v6523, %v6602
    %v6606 = vld [vmem:[%s9 + $0x40] sm:$0xff]
    %v6607 = vld [vmem:[%s9 + $0x48] sm:$0xff]
    %v6608 = vld [vmem:[%s9 + $0x50] sm:$0xff]
    %v6609 = vld [vmem:[%s9 + $0x58] sm:$0xff]
    %v6610 = vld [vmem:[%s9 + $0x60] sm:$0xff]
    %v6611 = vld [vmem:[%s9 + $0x68] sm:$0xff]
    %v6612 = vld [vmem:[%s9 + $0x70] sm:$0xff]
    %v6613 = vld [vmem:[%s9 + $0x78] sm:$0xff]
    %v6614 = vrot.slane %v6522, 1
    %v6615 = vsel %vm69, %v6614, 0
    %6617 = vmatprep.subr.mxu0 0.0
    %6618 = vmatpush1.msra.mxu0 %v6606
    %6619 = vmatprep.subr.mxu0 0.0
    %6620 = vmatpush1.msra.mxu0 %v6607
    %6621 = vmatprep.subr.mxu0 0.0
    %6622 = vmatpush1.msra.mxu0 %v6608
    %6623 = vmatprep.subr.mxu0 0.0
    %6624 = vmatpush1.msra.mxu0 %v6609
    %6625 = vmatprep.subr.mxu0 0.0
    %6626 = vmatpush1.msra.mxu0 %v6610
    %6627 = vmatprep.subr.mxu0 0.0
    %6628 = vmatpush1.msra.mxu0 %v6611
    %6629 = vmatprep.subr.mxu0 0.0
    %6630 = vmatpush1.msra.mxu0 %v6612
    %6631 = vmatprep.subr.mxu0 0.0
    %6632 = vmatpush1.msra.mxu0 %v6613
    %6633 = vmatprep.subr.mxu0 0.0
    %6634 = vmatpush1.msra.mxu0 0.0
    %6635 = vmatprep.subr.mxu0 0.0
    %6636 = vmatpush1.msra.mxu0 0.0
    %6637 = vmatprep.subr.mxu0 0.0
    %6638 = vmatpush1.msra.mxu0 0.0
    %6639 = vmatprep.subr.mxu0 0.0
    %6640 = vmatpush1.msra.mxu0 0.0
    %6641 = vmatprep.subr.mxu0 0.0
    %6642 = vmatpush1.msra.mxu0 0.0
    %6643 = vmatprep.subr.mxu0 0.0
    %6644 = vmatpush1.msra.mxu0 0.0
    %6645 = vmatprep.subr.mxu0 0.0
    %6646 = vmatpush1.msra.mxu0 0.0
    %6647 = vmatprep.subr.mxu0 0.0
    %6648 = vmatpush1.msra.mxu0 0.0
    %6649 = vmatprep.subr.mxu0 0.0
    %6650 = vmatpush1.msra.mxu0 0.0
    %6651 = vmatprep.subr.mxu0 0.0
    %6652 = vmatpush1.msra.mxu0 0.0
    %6653 = vmatprep.subr.mxu0 0.0
    %6654 = vmatpush1.msra.mxu0 0.0
    %6655 = vmatprep.subr.mxu0 0.0
    %6656 = vmatpush1.msra.mxu0 0.0
    %6657 = vmatprep.subr.mxu0 0.0
    %6658 = vmatpush1.msra.mxu0 0.0
    %6659 = vmatprep.subr.mxu0 0.0
    %6660 = vmatpush1.msra.mxu0 0.0
    %6661 = vmatprep.subr.mxu0 0.0
    %6662 = vmatpush1.msra.mxu0 0.0
    %6663 = vmatprep.subr.mxu0 0.0
    %6664 = vmatpush1.msra.mxu0 0.0
    %6665 = vmatprep.subr.mxu0 0.0
    %6666 = vmatpush1.msra.mxu0 0.0
    %6667 = vmatprep.subr.mxu0 0.0
    %6668 = vmatpush1.msra.mxu0 0.0
    %6669 = vmatprep.subr.mxu0 0.0
    %6670 = vmatpush1.msra.mxu0 0.0
    %6671 = vmatprep.subr.mxu0 0.0
    %6672 = vmatpush1.msra.mxu0 0.0
    %6673 = vmatprep.subr.mxu0 0.0
    %6674 = vmatpush1.msra.mxu0 0.0
    %6675 = vmatprep.subr.mxu0 0.0
    %6676 = vmatpush1.msra.mxu0 0.0
    %6677 = vmatprep.subr.mxu0 0.0
    %6678 = vmatpush1.msra.mxu0 0.0
    %6679 = vmatprep.subr.mxu0 0.0
    %6680 = vmatpush1.msra.mxu0 0.0
    %6681 = vmatprep.mubr.f32.mxu0 0.0
    %6682 = vmatmul.mubr.f32.gmra.mrb[0].mxu0 %v6615
    %v6683 = vpop.f32.mrb[0].mxu0
    %v6684 = vadd.f32 0.0, %v6683
    %v6685 = vpop.f32.mrb[0].mxu0
    %6686 = vdwg.mxu0
    %v6687 = vadd.f32 %v6605, %v6684
    %v6688 = vld [vmem:[%s9 + $0x80] sm:$0xff]
    %v6689 = vld [vmem:[%s9 + $0x88] sm:$0xff]
    %v6690 = vld [vmem:[%s9 + $0x90] sm:$0xff]
    %v6691 = vld [vmem:[%s9 + $0x98] sm:$0xff]
    %v6692 = vld [vmem:[%s9 + $0xa0] sm:$0xff]
    %v6693 = vld [vmem:[%s9 + $0xa8] sm:$0xff]
    %v6694 = vld [vmem:[%s9 + $0xb0] sm:$0xff]
    %v6695 = vld [vmem:[%s9 + $0xb8] sm:$0xff]
    %v6696 = vrot.slane %v6522, 2
    %v6697 = vsel %vm69, %v6696, 0
    %6699 = vmatprep.subr.mxu0 0.0
    %6700 = vmatpush1.msra.mxu0 %v6688
    %6701 = vmatprep.subr.mxu0 0.0
    %6702 = vmatpush1.msra.mxu0 %v6689
    %6703 = vmatprep.subr.mxu0 0.0
    %6704 = vmatpush1.msra.mxu0 %v6690
    %6705 = vmatprep.subr.mxu0 0.0
    %6706 = vmatpush1.msra.mxu0 %v6691
    %6707 = vmatprep.subr.mxu0 0.0
    %6708 = vmatpush1.msra.mxu0 %v6692
    %6709 = vmatprep.subr.mxu0 0.0
    %6710 = vmatpush1.msra.mxu0 %v6693
    %6711 = vmatprep.subr.mxu0 0.0
    %6712 = vmatpush1.msra.mxu0 %v6694
    %6713 = vmatprep.subr.mxu0 0.0
    %6714 = vmatpush1.msra.mxu0 %v6695
    %6715 = vmatprep.subr.mxu0 0.0
    %6716 = vmatpush1.msra.mxu0 0.0
    %6717 = vmatprep.subr.mxu0 0.0
    %6718 = vmatpush1.msra.mxu0 0.0
    %6719 = vmatprep.subr.mxu0 0.0
    %6720 = vmatpush1.msra.mxu0 0.0
    %6721 = vmatprep.subr.mxu0 0.0
    %6722 = vmatpush1.msra.mxu0 0.0
    %6723 = vmatprep.subr.mxu0 0.0
    %6724 = vmatpush1.msra.mxu0 0.0
    %6725 = vmatprep.subr.mxu0 0.0
    %6726 = vmatpush1.msra.mxu0 0.0
    %6727 = vmatprep.subr.mxu0 0.0
    %6728 = vmatpush1.msra.mxu0 0.0
    %6729 = vmatprep.subr.mxu0 0.0
    %6730 = vmatpush1.msra.mxu0 0.0
    %6731 = vmatprep.subr.mxu0 0.0
    %6732 = vmatpush1.msra.mxu0 0.0
    %6733 = vmatprep.subr.mxu0 0.0
    %6734 = vmatpush1.msra.mxu0 0.0
    %6735 = vmatprep.subr.mxu0 0.0
    %6736 = vmatpush1.msra.mxu0 0.0
    %6737 = vmatprep.subr.mxu0 0.0
    %6738 = vmatpush1.msra.mxu0 0.0
    %6739 = vmatprep.subr.mxu0 0.0
    %6740 = vmatpush1.msra.mxu0 0.0
    %6741 = vmatprep.subr.mxu0 0.0
    %6742 = vmatpush1.msra.mxu0 0.0
    %6743 = vmatprep.subr.mxu0 0.0
    %6744 = vmatpush1.msra.mxu0 0.0
    %6745 = vmatprep.subr.mxu0 0.0
    %6746 = vmatpush1.msra.mxu0 0.0
    %6747 = vmatprep.subr.mxu0 0.0
    %6748 = vmatpush1.msra.mxu0 0.0
    %6749 = vmatprep.subr.mxu0 0.0
    %6750 = vmatpush1.msra.mxu0 0.0
    %6751 = vmatprep.subr.mxu0 0.0
    %6752 = vmatpush1.msra.mxu0 0.0
    %6753 = vmatprep.subr.mxu0 0.0
    %6754 = vmatpush1.msra.mxu0 0.0
    %6755 = vmatprep.subr.mxu0 0.0
    %6756 = vmatpush1.msra.mxu0 0.0
    %6757 = vmatprep.subr.mxu0 0.0
    %6758 = vmatpush1.msra.mxu0 0.0
    %6759 = vmatprep.subr.mxu0 0.0
    %6760 = vmatpush1.msra.mxu0 0.0
    %6761 = vmatprep.subr.mxu0 0.0
    %6762 = vmatpush1.msra.mxu0 0.0
    %6763 = vmatprep.mubr.f32.mxu0 0.0
    %6764 = vmatmul.mubr.f32.gmra.mrb[0].mxu0 %v6697
    %v6765 = vpop.f32.mrb[0].mxu0
    %v6766 = vadd.f32 0.0, %v6765
    %v6767 = vpop.f32.mrb[0].mxu0
    %6768 = vdwg.mxu0
    %v6769 = vadd.f32 %v6687, %v6766
    %v6770 = vld [vmem:[%s9 + $0xc0] sm:$0xff]
    %v6771 = vld [vmem:[%s9 + $0xc8] sm:$0xff]
    %v6772 = vld [vmem:[%s9 + $0xd0] sm:$0xff]
    %v6773 = vld [vmem:[%s9 + $0xd8] sm:$0xff]
    %v6774 = vld [vmem:[%s9 + $0xe0] sm:$0xff]
    %v6775 = vld [vmem:[%s9 + $0xe8] sm:$0xff]
    %v6776 = vld [vmem:[%s9 + $0xf0] sm:$0xff]
    %v6777 = vld [vmem:[%s9 + $0xf8] sm:$0xff]
    %v6778 = vrot.slane %v6522, 3
    %v6779 = vsel %vm69, %v6778, 0
    %6781 = vmatprep.subr.mxu0 0.0
    %6782 = vmatpush1.msra.mxu0 %v6770
    %6783 = vmatprep.subr.mxu0 0.0
    %6784 = vmatpush1.msra.mxu0 %v6771
    %6785 = vmatprep.subr.mxu0 0.0
    %6786 = vmatpush1.msra.mxu0 %v6772
    %6787 = vmatprep.subr.mxu0 0.0
    %6788 = vmatpush1.msra.mxu0 %v6773
    %6789 = vmatprep.subr.mxu0 0.0
    %6790 = vmatpush1.msra.mxu0 %v6774
    %6791 = vmatprep.subr.mxu0 0.0
    %6792 = vmatpush1.msra.mxu0 %v6775
    %6793 = vmatprep.subr.mxu0 0.0
    %6794 = vmatpush1.msra.mxu0 %v6776
    %6795 = vmatprep.subr.mxu0 0.0
    %6796 = vmatpush1.msra.mxu0 %v6777
    %6797 = vmatprep.subr.mxu0 0.0
    %6798 = vmatpush1.msra.mxu0 0.0
    %6799 = vmatprep.subr.mxu0 0.0
    %6800 = vmatpush1.msra.mxu0 0.0
    %6801 = vmatprep.subr.mxu0 0.0
    %6802 = vmatpush1.msra.mxu0 0.0
    %6803 = vmatprep.subr.mxu0 0.0
    %6804 = vmatpush1.msra.mxu0 0.0
    %6805 = vmatprep.subr.mxu0 0.0
    %6806 = vmatpush1.msra.mxu0 0.0
    %6807 = vmatprep.subr.mxu0 0.0
    %6808 = vmatpush1.msra.mxu0 0.0
    %6809 = vmatprep.subr.mxu0 0.0
    %6810 = vmatpush1.msra.mxu0 0.0
    %6811 = vmatprep.subr.mxu0 0.0
    %6812 = vmatpush1.msra.mxu0 0.0
    %6813 = vmatprep.subr.mxu0 0.0
    %6814 = vmatpush1.msra.mxu0 0.0
    %6815 = vmatprep.subr.mxu0 0.0
    %6816 = vmatpush1.msra.mxu0 0.0
    %6817 = vmatprep.subr.mxu0 0.0
    %6818 = vmatpush1.msra.mxu0 0.0
    %6819 = vmatprep.subr.mxu0 0.0
    %6820 = vmatpush1.msra.mxu0 0.0
    %6821 = vmatprep.subr.mxu0 0.0
    %6822 = vmatpush1.msra.mxu0 0.0
    %6823 = vmatprep.subr.mxu0 0.0
    %6824 = vmatpush1.msra.mxu0 0.0
    %6825 = vmatprep.subr.mxu0 0.0
    %6826 = vmatpush1.msra.mxu0 0.0
    %6827 = vmatprep.subr.mxu0 0.0
    %6828 = vmatpush1.msra.mxu0 0.0
    %6829 = vmatprep.subr.mxu0 0.0
    %6830 = vmatpush1.msra.mxu0 0.0
    %6831 = vmatprep.subr.mxu0 0.0
    %6832 = vmatpush1.msra.mxu0 0.0
    %6833 = vmatprep.subr.mxu0 0.0
    %6834 = vmatpush1.msra.mxu0 0.0
    %6835 = vmatprep.subr.mxu0 0.0
    %6836 = vmatpush1.msra.mxu0 0.0
    %6837 = vmatprep.subr.mxu0 0.0
    %6838 = vmatpush1.msra.mxu0 0.0
    %6839 = vmatprep.subr.mxu0 0.0
    %6840 = vmatpush1.msra.mxu0 0.0
    %6841 = vmatprep.subr.mxu0 0.0
    %6842 = vmatpush1.msra.mxu0 0.0
    %6843 = vmatprep.subr.mxu0 0.0
    %6844 = vmatpush1.msra.mxu0 0.0
    %6845 = vmatprep.mubr.f32.mxu0 0.0
    %6846 = vmatmul.mubr.f32.gmra.mrb[0].mxu0 %v6779
    %v6847 = vpop.f32.mrb[0].mxu0
    %v6848 = vadd.f32 0.0, %v6847
    %v6849 = vpop.f32.mrb[0].mxu0
    %6850 = vdwg.mxu0
    %v6851 = vadd.f32 %v6769, %v6848
    %vm6852 = vcmask 516096
    %v6853 = vsel %vm6852, %v6851, -inf
    %6854 = vmax.xlane.f32.xlu0 %v6853
    %v6855 = vpop.xlane.xlu0 %6854
    %v6856 = vsub.f32 %v6851, %v6855
    %v6857 = vmul.f32 %v6856, 1.442695
    %v6858 = vpow.pop %v6857
    %v6859 = vsel %vm6852, %v6858, 0.0
    %6860 = vadd.xlane.f32.xlu0 %v6859
    %v6861 = vpop.xlane.xlu0 %6860
    %v6862 = vlog2.pop %v6861
    %v6863 = vmul.f32 %v6862, 0.6931472
    %v6864 = vsub.f32 %v6856, %v6863
    %6865 = vst.msk [vmem:[#allocation7] sm:$0x1] %vm6852, %v6864
    %v6866 = vld [vmem:[%s12] sm:$0x1]
    %v6867 = vld [vmem:[%s11] sm:$0xff]
    %v6868 = vld [vmem:[%s11 + $0x8] sm:$0xff]
    %v6869 = vld [vmem:[%s11 + $0x10] sm:$0xff]
    %v6870 = vld [vmem:[%s11 + $0x18] sm:$0xff]
    %v6871 = vld [vmem:[%s11 + $0x20] sm:$0xff]
    %v6872 = vld [vmem:[%s11 + $0x28] sm:$0xff]
    %v6873 = vld [vmem:[%s11 + $0x30] sm:$0xff]
    %v6874 = vld [vmem:[%s11 + $0x38] sm:$0xff]
    %v6875 = vrot.slane %v6522, 4
    %v6876 = vsel %vm69, %v6875, 0
    %6878 = vmatprep.subr.mxu0 0.0
    %6879 = vmatpush1.msra.mxu0 %v6867
    %6880 = vmatprep.subr.mxu0 0.0
    %6881 = vmatpush1.msra.mxu0 %v6868
    %6882 = vmatprep.subr.mxu0 0.0
    %6883 = vmatpush1.msra.mxu0 %v6869
    %6884 = vmatprep.subr.mxu0 0.0
    %6885 = vmatpush1.msra.mxu0 %v6870
    %6886 = vmatprep.subr.mxu0 0.0
    %6887 = vmatpush1.msra.mxu0 %v6871
    %6888 = vmatprep.subr.mxu0 0.0
    %6889 = vmatpush1.msra.mxu0 %v6872
    %6890 = vmatprep.subr.mxu0 0.0
    %6891 = vmatpush1.msra.mxu0 %v6873
    %6892 = vmatprep.subr.mxu0 0.0
    %6893 = vmatpush1.msra.mxu0 %v6874
    %6894 = vmatprep.subr.mxu0 0.0
    %6895 = vmatpush1.msra.mxu0 0.0
    %6896 = vmatprep.subr.mxu0 0.0
    %6897 = vmatpush1.msra.mxu0 0.0
    %6898 = vmatprep.subr.mxu0 0.0
    %6899 = vmatpush1.msra.mxu0 0.0
    %6900 = vmatprep.subr.mxu0 0.0
    %6901 = vmatpush1.msra.mxu0 0.0
    %6902 = vmatprep.subr.mxu0 0.0
    %6903 = vmatpush1.msra.mxu0 0.0
    %6904 = vmatprep.subr.mxu0 0.0
    %6905 = vmatpush1.msra.mxu0 0.0
    %6906 = vmatprep.subr.mxu0 0.0
    %6907 = vmatpush1.msra.mxu0 0.0
    %6908 = vmatprep.subr.mxu0 0.0
    %6909 = vmatpush1.msra.mxu0 0.0
    %6910 = vmatprep.subr.mxu0 0.0
    %6911 = vmatpush1.msra.mxu0 0.0
    %6912 = vmatprep.subr.mxu0 0.0
    %6913 = vmatpush1.msra.mxu0 0.0
    %6914 = vmatprep.subr.mxu0 0.0
    %6915 = vmatpush1.msra.mxu0 0.0
    %6916 = vmatprep.subr.mxu0 0.0
    %6917 = vmatpush1.msra.mxu0 0.0
    %6918 = vmatprep.subr.mxu0 0.0
    %6919 = vmatpush1.msra.mxu0 0.0
    %6920 = vmatprep.subr.mxu0 0.0
    %6921 = vmatpush1.msra.mxu0 0.0
    %6922 = vmatprep.subr.mxu0 0.0
    %6923 = vmatpush1.msra.mxu0 0.0
    %6924 = vmatprep.subr.mxu0 0.0
    %6925 = vmatpush1.msra.mxu0 0.0
    %6926 = vmatprep.subr.mxu0 0.0
    %6927 = vmatpush1.msra.mxu0 0.0
    %6928 = vmatprep.subr.mxu0 0.0
    %6929 = vmatpush1.msra.mxu0 0.0
    %6930 = vmatprep.subr.mxu0 0.0
    %6931 = vmatpush1.msra.mxu0 0.0
    %6932 = vmatprep.subr.mxu0 0.0
    %6933 = vmatpush1.msra.mxu0 0.0
    %6934 = vmatprep.subr.mxu0 0.0
    %6935 = vmatpush1.msra.mxu0 0.0
    %6936 = vmatprep.subr.mxu0 0.0
    %6937 = vmatpush1.msra.mxu0 0.0
    %6938 = vmatprep.subr.mxu0 0.0
    %6939 = vmatpush1.msra.mxu0 0.0
    %6940 = vmatprep.subr.mxu0 0.0
    %6941 = vmatpush1.msra.mxu0 0.0
    %6942 = vmatprep.mubr.f32.mxu0 0.0
    %6943 = vmatmul.mubr.f32.gmra.mrb[0].mxu0 %v6876
    %v6944 = vpop.f32.mrb[0].mxu0
    %v6945 = vadd.f32 0.0, %v6944
    %v6946 = vpop.f32.mrb[0].mxu0
    %6947 = vdwg.mxu0
    %v6948 = vadd.f32 %v6866, %v6945
    %v6949 = vld [vmem:[%s11 + $0x40] sm:$0xff]
    %v6950 = vld [vmem:[%s11 + $0x48] sm:$0xff]
    %v6951 = vld [vmem:[%s11 + $0x50] sm:$0xff]
    %v6952 = vld [vmem:[%s11 + $0x58] sm:$0xff]
    %v6953 = vld [vmem:[%s11 + $0x60] sm:$0xff]
    %v6954 = vld [vmem:[%s11 + $0x68] sm:$0xff]
    %v6955 = vld [vmem:[%s11 + $0x70] sm:$0xff]
    %v6956 = vld [vmem:[%s11 + $0x78] sm:$0xff]
    %v6957 = vrot.slane %v6522, 5
    %v6958 = vsel %vm69, %v6957, 0
    %6960 = vmatprep.subr.mxu0 0.0
    %6961 = vmatpush1.msra.mxu0 %v6949
    %6962 = vmatprep.subr.mxu0 0.0
    %6963 = vmatpush1.msra.mxu0 %v6950
    %6964 = vmatprep.subr.mxu0 0.0
    %6965 = vmatpush1.msra.mxu0 %v6951
    %6966 = vmatprep.subr.mxu0 0.0
    %6967 = vmatpush1.msra.mxu0 %v6952
    %6968 = vmatprep.subr.mxu0 0.0
    %6969 = vmatpush1.msra.mxu0 %v6953
    %6970 = vmatprep.subr.mxu0 0.0
    %6971 = vmatpush1.msra.mxu0 %v6954
    %6972 = vmatprep.subr.mxu0 0.0
    %6973 = vmatpush1.msra.mxu0 %v6955
    %6974 = vmatprep.subr.mxu0 0.0
    %6975 = vmatpush1.msra.mxu0 %v6956
    %6976 = vmatprep.subr.mxu0 0.0
    %6977 = vmatpush1.msra.mxu0 0.0
    %6978 = vmatprep.subr.mxu0 0.0
    %6979 = vmatpush1.msra.mxu0 0.0
    %6980 = vmatprep.subr.mxu0 0.0
    %6981 = vmatpush1.msra.mxu0 0.0
    %6982 = vmatprep.subr.mxu0 0.0
    %6983 = vmatpush1.msra.mxu0 0.0
    %6984 = vmatprep.subr.mxu0 0.0
    %6985 = vmatpush1.msra.mxu0 0.0
    %6986 = vmatprep.subr.mxu0 0.0
    %6987 = vmatpush1.msra.mxu0 0.0
    %6988 = vmatprep.subr.mxu0 0.0
    %6989 = vmatpush1.msra.mxu0 0.0
    %6990 = vmatprep.subr.mxu0 0.0
    %6991 = vmatpush1.msra.mxu0 0.0
    %6992 = vmatprep.subr.mxu0 0.0
    %6993 = vmatpush1.msra.mxu0 0.0
    %6994 = vmatprep.subr.mxu0 0.0
    %6995 = vmatpush1.msra.mxu0 0.0
    %6996 = vmatprep.subr.mxu0 0.0
    %6997 = vmatpush1.msra.mxu0 0.0
    %6998 = vmatprep.subr.mxu0 0.0
    %6999 = vmatpush1.msra.mxu0 0.0
    %7000 = vmatprep.subr.mxu0 0.0
    %7001 = vmatpush1.msra.mxu0 0.0
    %7002 = vmatprep.subr.mxu0 0.0
    %7003 = vmatpush1.msra.mxu0 0.0
    %7004 = vmatprep.subr.mxu0 0.0
    %7005 = vmatpush1.msra.mxu0 0.0
    %7006 = vmatprep.subr.mxu0 0.0
    %7007 = vmatpush1.msra.mxu0 0.0
    %7008 = vmatprep.subr.mxu0 0.0
    %7009 = vmatpush1.msra.mxu0 0.0
    %7010 = vmatprep.subr.mxu0 0.0
    %7011 = vmatpush1.msra.mxu0 0.0
    %7012 = vmatprep.subr.mxu0 0.0
    %7013 = vmatpush1.msra.mxu0 0.0
    %7014 = vmatprep.subr.mxu0 0.0
    %7015 = vmatpush1.msra.mxu0 0.0
    %7016 = vmatprep.subr.mxu0 0.0
    %7017 = vmatpush1.msra.mxu0 0.0
    %7018 = vmatprep.subr.mxu0 0.0
    %7019 = vmatpush1.msra.mxu0 0.0
    %7020 = vmatprep.subr.mxu0 0.0
    %7021 = vmatpush1.msra.mxu0 0.0
    %7022 = vmatprep.subr.mxu0 0.0
    %7023 = vmatpush1.msra.mxu0 0.0
    %7024 = vmatprep.mubr.f32.mxu0 0.0
    %7025 = vmatmul.mubr.f32.gmra.mrb[0].mxu0 %v6958
    %v7026 = vpop.f32.mrb[0].mxu0
    %v7027 = vadd.f32 0.0, %v7026
    %v7028 = vpop.f32.mrb[0].mxu0
    %7029 = vdwg.mxu0
    %v7030 = vadd.f32 %v6948, %v7027
    %v7031 = vmax.f32 %v7030, 0.0
    %v7032 = vmul.f32 %v7031, %v6446
    %v7033 = vsel %vm6852, %v7032, 0.0
    %7034 = vadd.xlane.f32.xlu0 %v7033
    %v7035 = vpop.xlane.xlu0 %7034
    %v7036 = vld [vmem:[#allocation3] sm:$0x1]
    %v7037 = vadd.f32 %v7035, %v7036
    %v7038 = vtanh.pop %v7037
    %vm7039 = vcmask 0
    %7040 = vst.msk [vmem:[%s16] sm:$0x1] %vm7039, %v7038
    %7041 = vmatprep.subr.mxu0 0.0
    %7042 = vmatpush1.xpose.msra.mxu0 %v6436
    %7043 = vmatprep.subr.mxu0 0.0
    %7044 = vmatpush1.xpose.msra.mxu0 %v6437
    %7045 = vmatprep.subr.mxu0 0.0
    %7046 = vmatpush1.xpose.msra.mxu0 %v6438
    %7047 = vmatprep.subr.mxu0 0.0
    %7048 = vmatpush1.xpose.msra.mxu0 %v6439
    %7049 = vmatprep.subr.mxu0 0.0
    %7050 = vmatpush1.xpose.msra.mxu0 %v6440
    %7051 = vmatprep.subr.mxu0 0.0
    %7052 = vmatpush1.xpose.msra.mxu0 %v6441
    %7053 = vmatprep.subr.mxu0 0.0
    %7054 = vmatpush1.xpose.msra.mxu0 %v6442
    %7055 = vmatprep.subr.mxu0 0.0
    %7056 = vmatpush1.xpose.msra.mxu0 %v6443
    %7057 = vmatprep.subr.mxu0 0.0
    %7058 = vmatpush1.xpose.msra.mxu0 0.0
    %7059 = vmatprep.subr.mxu0 0.0
    %7060 = vmatpush1.xpose.msra.mxu0 0.0
    %7061 = vmatprep.subr.mxu0 0.0
    %7062 = vmatpush1.xpose.msra.mxu0 0.0
    %7063 = vmatprep.subr.mxu0 0.0
    %7064 = vmatpush1.xpose.msra.mxu0 0.0
    %7065 = vmatprep.subr.mxu0 0.0
    %7066 = vmatpush1.xpose.msra.mxu0 0.0
    %7067 = vmatprep.subr.mxu0 0.0
    %7068 = vmatpush1.xpose.msra.mxu0 0.0
    %7069 = vmatprep.subr.mxu0 0.0
    %7070 = vmatpush1.xpose.msra.mxu0 0.0
    %7071 = vmatprep.subr.mxu0 0.0
    %7072 = vmatpush1.xpose.msra.mxu0 0.0
    %7073 = vmatprep.subr.mxu0 0.0
    %7074 = vmatpush1.xpose.msra.mxu0 0.0
    %7075 = vmatprep.subr.mxu0 0.0
    %7076 = vmatpush1.xpose.msra.mxu0 0.0
    %7077 = vmatprep.subr.mxu0 0.0
    %7078 = vmatpush1.xpose.msra.mxu0 0.0
    %7079 = vmatprep.subr.mxu0 0.0
    %7080 = vmatpush1.xpose.msra.mxu0 0.0
    %7081 = vmatprep.subr.mxu0 0.0
    %7082 = vmatpush1.xpose.msra.mxu0 0.0
    %7083 = vmatprep.subr.mxu0 0.0
    %7084 = vmatpush1.xpose.msra.mxu0 0.0
    %7085 = vmatprep.subr.mxu0 0.0
    %7086 = vmatpush1.xpose.msra.mxu0 0.0
    %7087 = vmatprep.subr.mxu0 0.0
    %7088 = vmatpush1.xpose.msra.mxu0 0.0
    %7089 = vmatprep.subr.mxu0 0.0
    %7090 = vmatpush1.xpose.msra.mxu0 0.0
    %7091 = vmatprep.subr.mxu0 0.0
    %7092 = vmatpush1.xpose.msra.mxu0 0.0
    %7093 = vmatprep.subr.mxu0 0.0
    %7094 = vmatpush1.xpose.msra.mxu0 0.0
    %7095 = vmatprep.subr.mxu0 0.0
    %7096 = vmatpush1.xpose.msra.mxu0 0.0
    %7097 = vmatprep.subr.mxu0 0.0
    %7098 = vmatpush1.xpose.msra.mxu0 0.0
    %7099 = vmatprep.subr.mxu0 0.0
    %7100 = vmatpush1.xpose.msra.mxu0 0.0
    %7101 = vmatprep.subr.mxu0 0.0
    %7102 = vmatpush1.xpose.msra.mxu0 0.0
    %7103 = vmatprep.subr.mxu0 0.0
    %7104 = vmatpush1.xpose.msra.mxu0 0.0
    %7105 = vmatprep.mubr.f32.mxu0 0.0
    %7106 = vmatmul.mubr.f32.gmra.mrb[0].mxu0 %v6444
    %v7107 = vpop.f32.mrb[0].mxu0
    %v7108 = vadd.f32 %v6450, %v7107
    %v7109 = vpop.f32.mrb[0].mxu0
    %7110 = vdwg.mxu0
    %v7111 = vmax.f32 %v7108, 0.0
    %v7112 = vld [vmem:[%s10] sm:$0x1]
    %v7113 = vld [vmem:[%s9] sm:$0xff]
    %v7114 = vld [vmem:[%s9 + $0x8] sm:$0xff]
    %v7115 = vld [vmem:[%s9 + $0x10] sm:$0xff]
    %v7116 = vld [vmem:[%s9 + $0x18] sm:$0xff]
    %v7117 = vld [vmem:[%s9 + $0x20] sm:$0xff]
    %v7118 = vld [vmem:[%s9 + $0x28] sm:$0xff]
    %v7119 = vld [vmem:[%s9 + $0x30] sm:$0xff]
    %v7120 = vld [vmem:[%s9 + $0x38] sm:$0xff]
    %v7122 = vsel %vm69, %v7111, 0
    %7124 = vmatprep.subr.mxu0 0.0
    %7125 = vmatpush1.msra.mxu0 %v7113
    %7126 = vmatprep.subr.mxu0 0.0
    %7127 = vmatpush1.msra.mxu0 %v7114
    %7128 = vmatprep.subr.mxu0 0.0
    %7129 = vmatpush1.msra.mxu0 %v7115
    %7130 = vmatprep.subr.mxu0 0.0
    %7131 = vmatpush1.msra.mxu0 %v7116
    %7132 = vmatprep.subr.mxu0 0.0
    %7133 = vmatpush1.msra.mxu0 %v7117
    %7134 = vmatprep.subr.mxu0 0.0
    %7135 = vmatpush1.msra.mxu0 %v7118
    %7136 = vmatprep.subr.mxu0 0.0
    %7137 = vmatpush1.msra.mxu0 %v7119
    %7138 = vmatprep.subr.mxu0 0.0
    %7139 = vmatpush1.msra.mxu0 %v7120
    %7140 = vmatprep.subr.mxu0 0.0
    %7141 = vmatpush1.msra.mxu0 0.0
    %7142 = vmatprep.subr.mxu0 0.0
    %7143 = vmatpush1.msra.mxu0 0.0
    %7144 = vmatprep.subr.mxu0 0.0
    %7145 = vmatpush1.msra.mxu0 0.0
    %7146 = vmatprep.subr.mxu0 0.0
    %7147 = vmatpush1.msra.mxu0 0.0
    %7148 = vmatprep.subr.mxu0 0.0
    %7149 = vmatpush1.msra.mxu0 0.0
    %7150 = vmatprep.subr.mxu0 0.0
    %7151 = vmatpush1.msra.mxu0 0.0
    %7152 = vmatprep.subr.mxu0 0.0
    %7153 = vmatpush1.msra.mxu0 0.0
    %7154 = vmatprep.subr.mxu0 0.0
    %7155 = vmatpush1.msra.mxu0 0.0
    %7156 = vmatprep.subr.mxu0 0.0
    %7157 = vmatpush1.msra.mxu0 0.0
    %7158 = vmatprep.subr.mxu0 0.0
    %7159 = vmatpush1.msra.mxu0 0.0
    %7160 = vmatprep.subr.mxu0 0.0
    %7161 = vmatpush1.msra.mxu0 0.0
    %7162 = vmatprep.subr.mxu0 0.0
    %7163 = vmatpush1.msra.mxu0 0.0
    %7164 = vmatprep.subr.mxu0 0.0
    %7165 = vmatpush1.msra.mxu0 0.0
    %7166 = vmatprep.subr.mxu0 0.0
    %7167 = vmatpush1.msra.mxu0 0.0
    %7168 = vmatprep.subr.mxu0 0.0
    %7169 = vmatpush1.msra.mxu0 0.0
    %7170 = vmatprep.subr.mxu0 0.0
    %7171 = vmatpush1.msra.mxu0 0.0
    %7172 = vmatprep.subr.mxu0 0.0
    %7173 = vmatpush1.msra.mxu0 0.0
    %7174 = vmatprep.subr.mxu0 0.0
    %7175 = vmatpush1.msra.mxu0 0.0
    %7176 = vmatprep.subr.mxu0 0.0
    %7177 = vmatpush1.msra.mxu0 0.0
    %7178 = vmatprep.subr.mxu0 0.0
    %7179 = vmatpush1.msra.mxu0 0.0
    %7180 = vmatprep.subr.mxu0 0.0
    %7181 = vmatpush1.msra.mxu0 0.0
    %7182 = vmatprep.subr.mxu0 0.0
    %7183 = vmatpush1.msra.mxu0 0.0
    %7184 = vmatprep.subr.mxu0 0.0
    %7185 = vmatpush1.msra.mxu0 0.0
    %7186 = vmatprep.subr.mxu0 0.0
    %7187 = vmatpush1.msra.mxu0 0.0
    %7188 = vmatprep.mubr.f32.mxu0 0.0
    %7189 = vmatmul.mubr.f32.gmra.mrb[0].mxu0 %v7122
    %v7190 = vpop.f32.mrb[0].mxu0
    %v7191 = vadd.f32 0.0, %v7190
    %v7192 = vpop.f32.mrb[0].mxu0
    %7193 = vdwg.mxu0
    %v7194 = vadd.f32 %v7112, %v7191
    %v7195 = vld [vmem:[%s9 + $0x40] sm:$0xff]
    %v7196 = vld [vmem:[%s9 + $0x48] sm:$0xff]
    %v7197 = vld [vmem:[%s9 + $0x50] sm:$0xff]
    %v7198 = vld [vmem:[%s9 + $0x58] sm:$0xff]
    %v7199 = vld [vmem:[%s9 + $0x60] sm:$0xff]
    %v7200 = vld [vmem:[%s9 + $0x68] sm:$0xff]
    %v7201 = vld [vmem:[%s9 + $0x70] sm:$0xff]
    %v7202 = vld [vmem:[%s9 + $0x78] sm:$0xff]
    %v7203 = vrot.slane %v7111, 1
    %v7204 = vsel %vm69, %v7203, 0
    %7206 = vmatprep.subr.mxu0 0.0
    %7207 = vmatpush1.msra.mxu0 %v7195
    %7208 = vmatprep.subr.mxu0 0.0
    %7209 = vmatpush1.msra.mxu0 %v7196
    %7210 = vmatprep.subr.mxu0 0.0
    %7211 = vmatpush1.msra.mxu0 %v7197
    %7212 = vmatprep.subr.mxu0 0.0
    %7213 = vmatpush1.msra.mxu0 %v7198
    %7214 = vmatprep.subr.mxu0 0.0
    %7215 = vmatpush1.msra.mxu0 %v7199
    %7216 = vmatprep.subr.mxu0 0.0
    %7217 = vmatpush1.msra.mxu0 %v7200
    %7218 = vmatprep.subr.mxu0 0.0
    %7219 = vmatpush1.msra.mxu0 %v7201
    %7220 = vmatprep.subr.mxu0 0.0
    %7221 = vmatpush1.msra.mxu0 %v7202
    %7222 = vmatprep.subr.mxu0 0.0
    %7223 = vmatpush1.msra.mxu0 0.0
    %7224 = vmatprep.subr.mxu0 0.0
    %7225 = vmatpush1.msra.mxu0 0.0
    %7226 = vmatprep.subr.mxu0 0.0
    %7227 = vmatpush1.msra.mxu0 0.0
    %7228 = vmatprep.subr.mxu0 0.0
    %7229 = vmatpush1.msra.mxu0 0.0
    %7230 = vmatprep.subr.mxu0 0.0
    %7231 = vmatpush1.msra.mxu0 0.0
    %7232 = vmatprep.subr.mxu0 0.0
    %7233 = vmatpush1.msra.mxu0 0.0
    %7234 = vmatprep.subr.mxu0 0.0
    %7235 = vmatpush1.msra.mxu0 0.0
    %7236 = vmatprep.subr.mxu0 0.0
    %7237 = vmatpush1.msra.mxu0 0.0
    %7238 = vmatprep.subr.mxu0 0.0
    %7239 = vmatpush1.msra.mxu0 0.0
    %7240 = vmatprep.subr.mxu0 0.0
    %7241 = vmatpush1.msra.mxu0 0.0
    %7242 = vmatprep.subr.mxu0 0.0
    %7243 = vmatpush1.msra.mxu0 0.0
    %7244 = vmatprep.subr.mxu0 0.0
    %7245 = vmatpush1.msra.mxu0 0.0
    %7246 = vmatprep.subr.mxu0 0.0
    %7247 = vmatpush1.msra.mxu0 0.0
    %7248 = vmatprep.subr.mxu0 0.0
    %7249 = vmatpush1.msra.mxu0 0.0
    %7250 = vmatprep.subr.mxu0 0.0
    %7251 = vmatpush1.msra.mxu0 0.0
    %7252 = vmatprep.subr.mxu0 0.0
    %7253 = vmatpush1.msra.mxu0 0.0
    %7254 = vmatprep.subr.mxu0 0.0
    %7255 = vmatpush1.msra.mxu0 0.0
    %7256 = vmatprep.subr.mxu0 0.0
    %7257 = vmatpush1.msra.mxu0 0.0
    %7258 = vmatprep.subr.mxu0 0.0
    %7259 = vmatpush1.msra.mxu0 0.0
    %7260 = vmatprep.subr.mxu0 0.0
    %7261 = vmatpush1.msra.mxu0 0.0
    %7262 = vmatprep.subr.mxu0 0.0
    %7263 = vmatpush1.msra.mxu0 0.0
    %7264 = vmatprep.subr.mxu0 0.0
    %7265 = vmatpush1.msra.mxu0 0.0
    %7266 = vmatprep.subr.mxu0 0.0
    %7267 = vmatpush1.msra.mxu0 0.0
    %7268 = vmatprep.subr.mxu0 0.0
    %7269 = vmatpush1.msra.mxu0 0.0
    %7270 = vmatprep.mubr.f32.mxu0 0.0
    %7271 = vmatmul.mubr.f32.gmra.mrb[0].mxu0 %v7204
    %v7272 = vpop.f32.mrb[0].mxu0
    %v7273 = vadd.f32 0.0, %v7272
    %v7274 = vpop.f32.mrb[0].mxu0
    %7275 = vdwg.mxu0
    %v7276 = vadd.f32 %v7194, %v7273
    %v7277 = vld [vmem:[%s9 + $0x80] sm:$0xff]
    %v7278 = vld [vmem:[%s9 + $0x88] sm:$0xff]
    %v7279 = vld [vmem:[%s9 + $0x90] sm:$0xff]
    %v7280 = vld [vmem:[%s9 + $0x98] sm:$0xff]
    %v7281 = vld [vmem:[%s9 + $0xa0] sm:$0xff]
    %v7282 = vld [vmem:[%s9 + $0xa8] sm:$0xff]
    %v7283 = vld [vmem:[%s9 + $0xb0] sm:$0xff]
    %v7284 = vld [vmem:[%s9 + $0xb8] sm:$0xff]
    %v7285 = vrot.slane %v7111, 2
    %v7286 = vsel %vm69, %v7285, 0
    %7288 = vmatprep.subr.mxu0 0.0
    %7289 = vmatpush1.msra.mxu0 %v7277
    %7290 = vmatprep.subr.mxu0 0.0
    %7291 = vmatpush1.msra.mxu0 %v7278
    %7292 = vmatprep.subr.mxu0 0.0
    %7293 = vmatpush1.msra.mxu0 %v7279
    %7294 = vmatprep.subr.mxu0 0.0
    %7295 = vmatpush1.msra.mxu0 %v7280
    %7296 = vmatprep.subr.mxu0 0.0
    %7297 = vmatpush1.msra.mxu0 %v7281
    %7298 = vmatprep.subr.mxu0 0.0
    %7299 = vmatpush1.msra.mxu0 %v7282
    %7300 = vmatprep.subr.mxu0 0.0
    %7301 = vmatpush1.msra.mxu0 %v7283
    %7302 = vmatprep.subr.mxu0 0.0
    %7303 = vmatpush1.msra.mxu0 %v7284
    %7304 = vmatprep.subr.mxu0 0.0
    %7305 = vmatpush1.msra.mxu0 0.0
    %7306 = vmatprep.subr.mxu0 0.0
    %7307 = vmatpush1.msra.mxu0 0.0
    %7308 = vmatprep.subr.mxu0 0.0
    %7309 = vmatpush1.msra.mxu0 0.0
    %7310 = vmatprep.subr.mxu0 0.0
    %7311 = vmatpush1.msra.mxu0 0.0
    %7312 = vmatprep.subr.mxu0 0.0
    %7313 = vmatpush1.msra.mxu0 0.0
    %7314 = vmatprep.subr.mxu0 0.0
    %7315 = vmatpush1.msra.mxu0 0.0
    %7316 = vmatprep.subr.mxu0 0.0
    %7317 = vmatpush1.msra.mxu0 0.0
    %7318 = vmatprep.subr.mxu0 0.0
    %7319 = vmatpush1.msra.mxu0 0.0
    %7320 = vmatprep.subr.mxu0 0.0
    %7321 = vmatpush1.msra.mxu0 0.0
    %7322 = vmatprep.subr.mxu0 0.0
    %7323 = vmatpush1.msra.mxu0 0.0
    %7324 = vmatprep.subr.mxu0 0.0
    %7325 = vmatpush1.msra.mxu0 0.0
    %7326 = vmatprep.subr.mxu0 0.0
    %7327 = vmatpush1.msra.mxu0 0.0
    %7328 = vmatprep.subr.mxu0 0.0
    %7329 = vmatpush1.msra.mxu0 0.0
    %7330 = vmatprep.subr.mxu0 0.0
    %7331 = vmatpush1.msra.mxu0 0.0
    %7332 = vmatprep.subr.mxu0 0.0
    %7333 = vmatpush1.msra.mxu0 0.0
    %7334 = vmatprep.subr.mxu0 0.0
    %7335 = vmatpush1.msra.mxu0 0.0
    %7336 = vmatprep.subr.mxu0 0.0
    %7337 = vmatpush1.msra.mxu0 0.0
    %7338 = vmatprep.subr.mxu0 0.0
    %7339 = vmatpush1.msra.mxu0 0.0
    %7340 = vmatprep.subr.mxu0 0.0
    %7341 = vmatpush1.msra.mxu0 0.0
    %7342 = vmatprep.subr.mxu0 0.0
    %7343 = vmatpush1.msra.mxu0 0.0
    %7344 = vmatprep.subr.mxu0 0.0
    %7345 = vmatpush1.msra.mxu0 0.0
    %7346 = vmatprep.subr.mxu0 0.0
    %7347 = vmatpush1.msra.mxu0 0.0
    %7348 = vmatprep.subr.mxu0 0.0
    %7349 = vmatpush1.msra.mxu0 0.0
    %7350 = vmatprep.subr.mxu0 0.0
    %7351 = vmatpush1.msra.mxu0 0.0
    %7352 = vmatprep.mubr.f32.mxu0 0.0
    %7353 = vmatmul.mubr.f32.gmra.mrb[0].mxu0 %v7286
    %v7354 = vpop.f32.mrb[0].mxu0
    %v7355 = vadd.f32 0.0, %v7354
    %v7356 = vpop.f32.mrb[0].mxu0
    %7357 = vdwg.mxu0
    %v7358 = vadd.f32 %v7276, %v7355
    %v7359 = vld [vmem:[%s9 + $0xc0] sm:$0xff]
    %v7360 = vld [vmem:[%s9 + $0xc8] sm:$0xff]
    %v7361 = vld [vmem:[%s9 + $0xd0] sm:$0xff]
    %v7362 = vld [vmem:[%s9 + $0xd8] sm:$0xff]
    %v7363 = vld [vmem:[%s9 + $0xe0] sm:$0xff]
    %v7364 = vld [vmem:[%s9 + $0xe8] sm:$0xff]
    %v7365 = vld [vmem:[%s9 + $0xf0] sm:$0xff]
    %v7366 = vld [vmem:[%s9 + $0xf8] sm:$0xff]
    %v7367 = vrot.slane %v7111, 3
    %v7368 = vsel %vm69, %v7367, 0
    %7370 = vmatprep.subr.mxu0 0.0
    %7371 = vmatpush1.msra.mxu0 %v7359
    %7372 = vmatprep.subr.mxu0 0.0
    %7373 = vmatpush1.msra.mxu0 %v7360
    %7374 = vmatprep.subr.mxu0 0.0
    %7375 = vmatpush1.msra.mxu0 %v7361
    %7376 = vmatprep.subr.mxu0 0.0
    %7377 = vmatpush1.msra.mxu0 %v7362
    %7378 = vmatprep.subr.mxu0 0.0
    %7379 = vmatpush1.msra.mxu0 %v7363
    %7380 = vmatprep.subr.mxu0 0.0
    %7381 = vmatpush1.msra.mxu0 %v7364
    %7382 = vmatprep.subr.mxu0 0.0
    %7383 = vmatpush1.msra.mxu0 %v7365
    %7384 = vmatprep.subr.mxu0 0.0
    %7385 = vmatpush1.msra.mxu0 %v7366
    %7386 = vmatprep.subr.mxu0 0.0
    %7387 = vmatpush1.msra.mxu0 0.0
    %7388 = vmatprep.subr.mxu0 0.0
    %7389 = vmatpush1.msra.mxu0 0.0
    %7390 = vmatprep.subr.mxu0 0.0
    %7391 = vmatpush1.msra.mxu0 0.0
    %7392 = vmatprep.subr.mxu0 0.0
    %7393 = vmatpush1.msra.mxu0 0.0
    %7394 = vmatprep.subr.mxu0 0.0
    %7395 = vmatpush1.msra.mxu0 0.0
    %7396 = vmatprep.subr.mxu0 0.0
    %7397 = vmatpush1.msra.mxu0 0.0
    %7398 = vmatprep.subr.mxu0 0.0
    %7399 = vmatpush1.msra.mxu0 0.0
    %7400 = vmatprep.subr.mxu0 0.0
    %7401 = vmatpush1.msra.mxu0 0.0
    %7402 = vmatprep.subr.mxu0 0.0
    %7403 = vmatpush1.msra.mxu0 0.0
    %7404 = vmatprep.subr.mxu0 0.0
    %7405 = vmatpush1.msra.mxu0 0.0
    %7406 = vmatprep.subr.mxu0 0.0
    %7407 = vmatpush1.msra.mxu0 0.0
    %7408 = vmatprep.subr.mxu0 0.0
    %7409 = vmatpush1.msra.mxu0 0.0
    %7410 = vmatprep.subr.mxu0 0.0
    %7411 = vmatpush1.msra.mxu0 0.0
    %7412 = vmatprep.subr.mxu0 0.0
    %7413 = vmatpush1.msra.mxu0 0.0
    %7414 = vmatprep.subr.mxu0 0.0
    %7415 = vmatpush1.msra.mxu0 0.0
    %7416 = vmatprep.subr.mxu0 0.0
    %7417 = vmatpush1.msra.mxu0 0.0
    %7418 = vmatprep.subr.mxu0 0.0
    %7419 = vmatpush1.msra.mxu0 0.0
    %7420 = vmatprep.subr.mxu0 0.0
    %7421 = vmatpush1.msra.mxu0 0.0
    %7422 = vmatprep.subr.mxu0 0.0
    %7423 = vmatpush1.msra.mxu0 0.0
    %7424 = vmatprep.subr.mxu0 0.0
    %7425 = vmatpush1.msra.mxu0 0.0
    %7426 = vmatprep.subr.mxu0 0.0
    %7427 = vmatpush1.msra.mxu0 0.0
    %7428 = vmatprep.subr.mxu0 0.0
    %7429 = vmatpush1.msra.mxu0 0.0
    %7430 = vmatprep.subr.mxu0 0.0
    %7431 = vmatpush1.msra.mxu0 0.0
    %7432 = vmatprep.subr.mxu0 0.0
    %7433 = vmatpush1.msra.mxu0 0.0
    %7434 = vmatprep.mubr.f32.mxu0 0.0
    %7435 = vmatmul.mubr.f32.gmra.mrb[0].mxu0 %v7368
    %v7436 = vpop.f32.mrb[0].mxu0
    %v7437 = vadd.f32 0.0, %v7436
    %v7438 = vpop.f32.mrb[0].mxu0
    %7439 = vdwg.mxu0
    %v7440 = vadd.f32 %v7358, %v7437
    %v7441 = vsel %vm6852, %v7440, -inf
    %7442 = vmax.xlane.f32.xlu0 %v7441
    %v7443 = vpop.xlane.xlu0 %7442
    %v7444 = vsub.f32 %v7440, %v7443
    %v7445 = vmul.f32 %v7444, 1.442695
    %v7446 = vpow.pop %v7445
    %v7447 = vsel %vm6852, %v7446, 0.0
    %7448 = vadd.xlane.f32.xlu0 %v7447
    %v7449 = vpop.xlane.xlu0 %7448
    %v7450 = vlog2.pop %v7449
    %v7451 = vmul.f32 %v7450, 0.6931472
    %v7452 = vsub.f32 %v7444, %v7451
    %7453 = vst.msk [vmem:[#allocation7 + $0x1] sm:$0x1] %vm6852, %v7452
    %v7454 = vld [vmem:[%s12] sm:$0x1]
    %v7455 = vld [vmem:[%s11] sm:$0xff]
    %v7456 = vld [vmem:[%s11 + $0x8] sm:$0xff]
    %v7457 = vld [vmem:[%s11 + $0x10] sm:$0xff]
    %v7458 = vld [vmem:[%s11 + $0x18] sm:$0xff]
    %v7459 = vld [vmem:[%s11 + $0x20] sm:$0xff]
    %v7460 = vld [vmem:[%s11 + $0x28] sm:$0xff]
    %v7461 = vld [vmem:[%s11 + $0x30] sm:$0xff]
    %v7462 = vld [vmem:[%s11 + $0x38] sm:$0xff]
    %v7463 = vrot.slane %v7111, 4
    %v7464 = vsel %vm69, %v7463, 0
    %7466 = vmatprep.subr.mxu0 0.0
    %7467 = vmatpush1.msra.mxu0 %v7455
    %7468 = vmatprep.subr.mxu0 0.0
    %7469 = vmatpush1.msra.mxu0 %v7456
    %7470 = vmatprep.subr.mxu0 0.0
    %7471 = vmatpush1.msra.mxu0 %v7457
    %7472 = vmatprep.subr.mxu0 0.0
    %7473 = vmatpush1.msra.mxu0 %v7458
    %7474 = vmatprep.subr.mxu0 0.0
    %7475 = vmatpush1.msra.mxu0 %v7459
    %7476 = vmatprep.subr.mxu0 0.0
    %7477 = vmatpush1.msra.mxu0 %v7460
    %7478 = vmatprep.subr.mxu0 0.0
    %7479 = vmatpush1.msra.mxu0 %v7461
    %7480 = vmatprep.subr.mxu0 0.0
    %7481 = vmatpush1.msra.mxu0 %v7462
    %7482 = vmatprep.subr.mxu0 0.0
    %7483 = vmatpush1.msra.mxu0 0.0
    %7484 = vmatprep.subr.mxu0 0.0
    %7485 = vmatpush1.msra.mxu0 0.0
    %7486 = vmatprep.subr.mxu0 0.0
    %7487 = vmatpush1.msra.mxu0 0.0
    %7488 = vmatprep.subr.mxu0 0.0
    %7489 = vmatpush1.msra.mxu0 0.0
    %7490 = vmatprep.subr.mxu0 0.0
    %7491 = vmatpush1.msra.mxu0 0.0
    %7492 = vmatprep.subr.mxu0 0.0
    %7493 = vmatpush1.msra.mxu0 0.0
    %7494 = vmatprep.subr.mxu0 0.0
    %7495 = vmatpush1.msra.mxu0 0.0
    %7496 = vmatprep.subr.mxu0 0.0
    %7497 = vmatpush1.msra.mxu0 0.0
    %7498 = vmatprep.subr.mxu0 0.0
    %7499 = vmatpush1.msra.mxu0 0.0
    %7500 = vmatprep.subr.mxu0 0.0
    %7501 = vmatpush1.msra.mxu0 0.0
    %7502 = vmatprep.subr.mxu0 0.0
    %7503 = vmatpush1.msra.mxu0 0.0
    %7504 = vmatprep.subr.mxu0 0.0
    %7505 = vmatpush1.msra.mxu0 0.0
    %7506 = vmatprep.subr.mxu0 0.0
    %7507 = vmatpush1.msra.mxu0 0.0
    %7508 = vmatprep.subr.mxu0 0.0
    %7509 = vmatpush1.msra.mxu0 0.0
    %7510 = vmatprep.subr.mxu0 0.0
    %7511 = vmatpush1.msra.mxu0 0.0
    %7512 = vmatprep.subr.mxu0 0.0
    %7513 = vmatpush1.msra.mxu0 0.0
    %7514 = vmatprep.subr.mxu0 0.0
    %7515 = vmatpush1.msra.mxu0 0.0
    %7516 = vmatprep.subr.mxu0 0.0
    %7517 = vmatpush1.msra.mxu0 0.0
    %7518 = vmatprep.subr.mxu0 0.0
    %7519 = vmatpush1.msra.mxu0 0.0
    %7520 = vmatprep.subr.mxu0 0.0
    %7521 = vmatpush1.msra.mxu0 0.0
    %7522 = vmatprep.subr.mxu0 0.0
    %7523 = vmatpush1.msra.mxu0 0.0
    %7524 = vmatprep.subr.mxu0 0.0
    %7525 = vmatpush1.msra.mxu0 0.0
    %7526 = vmatprep.subr.mxu0 0.0
    %7527 = vmatpush1.msra.mxu0 0.0
    %7528 = vmatprep.subr.mxu0 0.0
    %7529 = vmatpush1.msra.mxu0 0.0
    %7530 = vmatprep.mubr.f32.mxu0 0.0
    %7531 = vmatmul.mubr.f32.gmra.mrb[0].mxu0 %v7464
    %v7532 = vpop.f32.mrb[0].mxu0
    %v7533 = vadd.f32 0.0, %v7532
    %v7534 = vpop.f32.mrb[0].mxu0
    %7535 = vdwg.mxu0
    %v7536 = vadd.f32 %v7454, %v7533
    %v7537 = vld [vmem:[%s11 + $0x40] sm:$0xff]
    %v7538 = vld [vmem:[%s11 + $0x48] sm:$0xff]
    %v7539 = vld [vmem:[%s11 + $0x50] sm:$0xff]
    %v7540 = vld [vmem:[%s11 + $0x58] sm:$0xff]
    %v7541 = vld [vmem:[%s11 + $0x60] sm:$0xff]
    %v7542 = vld [vmem:[%s11 + $0x68] sm:$0xff]
    %v7543 = vld [vmem:[%s11 + $0x70] sm:$0xff]
    %v7544 = vld [vmem:[%s11 + $0x78] sm:$0xff]
    %v7545 = vrot.slane %v7111, 5
    %v7546 = vsel %vm69, %v7545, 0
    %7548 = vmatprep.subr.mxu0 0.0
    %7549 = vmatpush1.msra.mxu0 %v7537
    %7550 = vmatprep.subr.mxu0 0.0
    %7551 = vmatpush1.msra.mxu0 %v7538
    %7552 = vmatprep.subr.mxu0 0.0
    %7553 = vmatpush1.msra.mxu0 %v7539
    %7554 = vmatprep.subr.mxu0 0.0
    %7555 = vmatpush1.msra.mxu0 %v7540
    %7556 = vmatprep.subr.mxu0 0.0
    %7557 = vmatpush1.msra.mxu0 %v7541
    %7558 = vmatprep.subr.mxu0 0.0
    %7559 = vmatpush1.msra.mxu0 %v7542
    %7560 = vmatprep.subr.mxu0 0.0
    %7561 = vmatpush1.msra.mxu0 %v7543
    %7562 = vmatprep.subr.mxu0 0.0
    %7563 = vmatpush1.msra.mxu0 %v7544
    %7564 = vmatprep.subr.mxu0 0.0
    %7565 = vmatpush1.msra.mxu0 0.0
    %7566 = vmatprep.subr.mxu0 0.0
    %7567 = vmatpush1.msra.mxu0 0.0
    %7568 = vmatprep.subr.mxu0 0.0
    %7569 = vmatpush1.msra.mxu0 0.0
    %7570 = vmatprep.subr.mxu0 0.0
    %7571 = vmatpush1.msra.mxu0 0.0
    %7572 = vmatprep.subr.mxu0 0.0
    %7573 = vmatpush1.msra.mxu0 0.0
    %7574 = vmatprep.subr.mxu0 0.0
    %7575 = vmatpush1.msra.mxu0 0.0
    %7576 = vmatprep.subr.mxu0 0.0
    %7577 = vmatpush1.msra.mxu0 0.0
    %7578 = vmatprep.subr.mxu0 0.0
    %7579 = vmatpush1.msra.mxu0 0.0
    %7580 = vmatprep.subr.mxu0 0.0
    %7581 = vmatpush1.msra.mxu0 0.0
    %7582 = vmatprep.subr.mxu0 0.0
    %7583 = vmatpush1.msra.mxu0 0.0
    %7584 = vmatprep.subr.mxu0 0.0
    %7585 = vmatpush1.msra.mxu0 0.0
    %7586 = vmatprep.subr.mxu0 0.0
    %7587 = vmatpush1.msra.mxu0 0.0
    %7588 = vmatprep.subr.mxu0 0.0
    %7589 = vmatpush1.msra.mxu0 0.0
    %7590 = vmatprep.subr.mxu0 0.0
    %7591 = vmatpush1.msra.mxu0 0.0
    %7592 = vmatprep.subr.mxu0 0.0
    %7593 = vmatpush1.msra.mxu0 0.0
    %7594 = vmatprep.subr.mxu0 0.0
    %7595 = vmatpush1.msra.mxu0 0.0
    %7596 = vmatprep.subr.mxu0 0.0
    %7597 = vmatpush1.msra.mxu0 0.0
    %7598 = vmatprep.subr.mxu0 0.0
    %7599 = vmatpush1.msra.mxu0 0.0
    %7600 = vmatprep.subr.mxu0 0.0
    %7601 = vmatpush1.msra.mxu0 0.0
    %7602 = vmatprep.subr.mxu0 0.0
    %7603 = vmatpush1.msra.mxu0 0.0
    %7604 = vmatprep.subr.mxu0 0.0
    %7605 = vmatpush1.msra.mxu0 0.0
    %7606 = vmatprep.subr.mxu0 0.0
    %7607 = vmatpush1.msra.mxu0 0.0
    %7608 = vmatprep.subr.mxu0 0.0
    %7609 = vmatpush1.msra.mxu0 0.0
    %7610 = vmatprep.subr.mxu0 0.0
    %7611 = vmatpush1.msra.mxu0 0.0
    %7612 = vmatprep.mubr.f32.mxu0 0.0
    %7613 = vmatmul.mubr.f32.gmra.mrb[0].mxu0 %v7546
    %v7614 = vpop.f32.mrb[0].mxu0
    %v7615 = vadd.f32 0.0, %v7614
    %v7616 = vpop.f32.mrb[0].mxu0
    %7617 = vdwg.mxu0
    %v7618 = vadd.f32 %v7536, %v7615
    %v7619 = vmax.f32 %v7618, 0.0
    %v7620 = vmul.f32 %v7619, %v6446
    %v7621 = vsel %vm6852, %v7620, 0.0
    %7622 = vadd.xlane.f32.xlu0 %v7621
    %v7623 = vpop.xlane.xlu0 %7622
    %v7624 = vld [vmem:[#allocation3] sm:$0x1]
    %v7625 = vadd.f32 %v7623, %v7624
    %v7626 = vtanh.pop %v7625
    %7627 = vst.msk [vmem:[%s16 + $0x1] sm:$0x1] %vm7039, %v7626
    // Predicated region
    $region66: #{net_forward.1} parent=1 // pred_check
      _
    $region67: #{net_forward.1} parent=1 // pred_check_branch
      %7629 = sbr.rel (0) target = $region69
    $region68: #{net_forward.1} parent=1 // pred_region
      %s7631 = ssub.s32 32, 32
      %7632 = vsyncadd [#allocation6], %s7631
      %s7634 = sshll.u32 [#allocation7], 4
      %s7635 = int_to_ptr.vmem [resolvable:$true] %s7634
      %7637 = dma.vmem_to_hbm [thread:$0]  %s7635, 32, %s15, [#allocation6]
    $region69: #{net_forward.1} parent=1 // pred_fallthru
      _
    // Predicated region
    $region70: #{net_forward.1} parent=1 // pred_check
      _
    $region71: #{net_forward.1} parent=1 // pred_check_branch
      %7639 = sbr.rel (0) target = $region73
    $region72: #{net_forward.1} parent=1 // pred_region
      _
    $region73: #{net_forward.1} parent=1 // pred_fallthru
      _
    // Predicated region
    $region74: #{net_forward.1} parent=1 // pred_check
      _
    $region75: #{net_forward.1} parent=1 // pred_check_branch
      %7641 = sbr.rel (0) target = $region77
    $region76: #{net_forward.1} parent=1 // pred_region
      %7642 = dma.done [#allocation6], 32
    $region77: #{net_forward.1} parent=1 // pred_fallthru
      _
    // Predicated region
    $region78: #{net_forward.1} parent=1 // pred_check
      _
    $region79: #{net_forward.1} parent=1 // pred_check_branch
      %7644 = sbr.rel (0) target = $region81
    $region80: #{net_forward.1} parent=1 // pred_region
      _
    $region81: #{net_forward.1} parent=1 // pred_fallthru
      _
    %7645 = vsyncpa [#allocation5], 1
    %7646 = vsyncpa [#allocation6], 1

</llo_original>
